<compile_context>
chip_gen: v7x
topology: tpu7x:2x2x1
jax: 0.10.0
libtpu: 0.0.40
codegen_flags: <defaults>
</compile_context>

<pallas_src>
import functools
import jax
import jax.numpy as jnp
from jax.experimental import pallas as pl
from jax.experimental.pallas import tpu as pltpu


_TILE_M = 512                       # row tile for matmul-style kernels (mult of 8/128)
_VMEM_LIMIT = 32 * 1024 * 1024      # explicit scoped-VMEM cap (safe on v5e/v6e/v7x)


def _round_up(x, m):
    return (x + m - 1) // m * m


def _cparams(n_parallel):
    return pltpu.CompilerParams(
        dimension_semantics=("parallel",) * n_parallel,
        vmem_limit_bytes=_VMEM_LIMIT)


# ----------------------------- Pallas kernels -----------------------------

def _mm_bias_act_kernel(x_ref, w_ref, b_ref, o_ref, *, relu):
    # Y = X @ W (bf16 MXU operands, f32 accumulate), + folded-BN bias, opt ReLU.
    y = jnp.dot(x_ref[...].astype(jnp.bfloat16), w_ref[...],
                preferred_element_type=jnp.float32)
    y = y + b_ref[...]
    if relu:
        y = jnp.maximum(y, 0.0)
    o_ref[...] = y


def _conv1_kernel(t_ref, w_ref, b_ref, o_ref):
    # Stem 3x3 conv: accumulate 9 small matmuls (one per kernel tap) in-kernel.
    acc = jnp.dot(t_ref[0].astype(jnp.bfloat16), w_ref[0],
                  preferred_element_type=jnp.float32)
    for k in range(1, 9):
        acc = acc + jnp.dot(t_ref[k].astype(jnp.bfloat16), w_ref[k],
                            preferred_element_type=jnp.float32)
    o_ref[...] = jnp.maximum(acc + b_ref[...], 0.0)


def _dw3x3_bn_kernel(ph_ref, w_ref, b_ref, o_ref, *, stride, Ho, Wo):
    # Depthwise 3x3 MAC from phase-decomposed halo block; BN scale pre-folded.
    s = stride
    acc = None
    for ky in range(3):
        for kx in range(3):
            p = (ky % s) * s + (kx % s)
            tap = ph_ref[p, ky // s:ky // s + Ho, kx // s:kx // s + Wo, :]
            term = tap * w_ref[ky * 3 + kx]
            acc = term if acc is None else acc + term
    o_ref[...] = acc + b_ref[...]


def _maxpool3x3_kernel(ph_ref, o_ref, *, stride, Ho, Wo):
    s = stride
    m = None
    for ky in range(3):
        for kx in range(3):
            p = (ky % s) * s + (kx % s)
            tap = ph_ref[p, ky // s:ky // s + Ho, kx // s:kx // s + Wo, :]
            m = tap if m is None else jnp.maximum(m, tap)
    o_ref[...] = m


def _conv5_gap_kernel(x_ref, w_ref, b_ref, omid_ref, opool_ref):
    # Fused conv5 (1x1) + BN + ReLU + global-average-pool for one batch element.
    y = jnp.dot(x_ref[0].astype(jnp.bfloat16), w_ref[...],
                preferred_element_type=jnp.float32)
    y = jnp.maximum(y + b_ref[...], 0.0)
    omid_ref[0] = y
    opool_ref[0] = jnp.mean(y, axis=0, keepdims=True)


# ----------------------------- Kernel wrappers -----------------------------

def matmul_bias_act(x, w, bias, relu):
    """x: (M, K) f32, w: (K, N) bf16 (BN scale folded), bias: (N,) f32."""
    M, K = x.shape
    N = w.shape[1]
    tm = min(_TILE_M, _round_up(M, 8))
    Mp = _round_up(M, tm)
    if Mp != M:
        x = jnp.pad(x, ((0, Mp - M), (0, 0)))
    y = pl.pallas_call(
        functools.partial(_mm_bias_act_kernel, relu=relu),
        out_shape=jax.ShapeDtypeStruct((Mp, N), jnp.float32),
        grid=(Mp // tm,),
        in_specs=[
            pl.BlockSpec((tm, K), lambda i: (i, 0)),
            pl.BlockSpec((K, N), lambda i: (0, 0)),
            pl.BlockSpec((1, N), lambda i: (0, 0)),
        ],
        out_specs=pl.BlockSpec((tm, N), lambda i: (i, 0)),
        compiler_params=_cparams(1),
    )(x, w, bias.reshape(1, N))
    return y[:M]


def pointwise_conv_bn(x, w, bias, relu):
    B, H, W, Cin = x.shape
    y = matmul_bias_act(x.reshape(B * H * W, Cin), w, bias, relu)
    return y.reshape(B, H, W, -1)


def conv1_bn_relu(x, w, bias, stride=2):
    """Stem 3x3 conv (channel mixing) + folded BN + ReLU.
    x: (B,H,W,Cin) NHWC, w: (9, Cin, 24) bf16, bias: (24,) f32."""
    B, H, W, Cin = x.shape
    N = w.shape[-1]
    xp = jnp.pad(x, ((0, 0), (1, 1), (1, 1), (0, 0)))
    Ho = (H + 2 - 3) // stride + 1
    Wo = (W + 2 - 3) // stride + 1
    taps = [xp[:, ky:ky + (Ho - 1) * stride + 1:stride,
               kx:kx + (Wo - 1) * stride + 1:stride, :]
            for ky in range(3) for kx in range(3)]
    taps = jnp.stack(taps, axis=0).reshape(9, B * Ho * Wo, Cin)
    M = B * Ho * Wo
    tm = min(_TILE_M, _round_up(M, 8))
    Mp = _round_up(M, tm)
    if Mp != M:
        taps = jnp.pad(taps, ((0, 0), (0, Mp - M), (0, 0)))
    y = pl.pallas_call(
        _conv1_kernel,
        out_shape=jax.ShapeDtypeStruct((Mp, N), jnp.float32),
        grid=(Mp // tm,),
        in_specs=[
            pl.BlockSpec((9, tm, Cin), lambda i: (0, i, 0)),
            pl.BlockSpec((9, Cin, N), lambda i: (0, 0, 0)),
            pl.BlockSpec((1, N), lambda i: (0, 0)),
        ],
        out_specs=pl.BlockSpec((tm, N), lambda i: (i, 0)),
        compiler_params=_cparams(1),
    )(taps, w, bias.reshape(1, N))
    return y[:M].reshape(B, Ho, Wo, N)


def _build_phases(x, stride, pad_value):
    """Spatially pad by 1 and decompose into stride-phases so the kernel can
    form all nine 3x3 taps with static, unit-stride slices (1x HBM traffic).
    Returns (phases (B*s*s, Hh, Wh, C), Ho, Wo)."""
    B, H, W, C = x.shape
    s = stride
    Ho = (H + 2 - 3) // s + 1
    Wo = (W + 2 - 3) // s + 1
    Hp = _round_up(H + 2, s)
    Wp = _round_up(W + 2, s)
    xp = jnp.pad(x, ((0, 0), (1, Hp - H - 1), (1, Wp - W - 1), (0, 0)),
                 constant_values=pad_value)
    Hh, Wh = Hp // s, Wp // s
    ph = xp.reshape(B, Hh, s, Wh, s, C)
    ph = jnp.transpose(ph, (0, 2, 4, 1, 3, 5)).reshape(B * s * s, Hh, Wh, C)
    return ph, Ho, Wo


def depthwise_conv_bn(x, w, bias, stride):
    """3x3 depthwise conv + folded BN. x: (B,H,W,C), w: (9,1,C), bias: (1,C)."""
    B, H, W, C = x.shape
    s = stride
    ph, Ho, Wo = _build_phases(x, s, 0.0)
    Hh, Wh = ph.shape[1], ph.shape[2]
    out = pl.pallas_call(
        functools.partial(_dw3x3_bn_kernel, stride=s, Ho=Ho, Wo=Wo),
        out_shape=jax.ShapeDtypeStruct((B * Ho, Wo, C), jnp.float32),
        grid=(B,),
        in_specs=[
            pl.BlockSpec((s * s, Hh, Wh, C), lambda b: (b, 0, 0, 0)),
            pl.BlockSpec((9, 1, C), lambda b: (0, 0, 0)),
            pl.BlockSpec((1, C), lambda b: (0, 0)),
        ],
        out_specs=pl.BlockSpec((Ho, Wo, C), lambda b: (b, 0, 0)),
        compiler_params=_cparams(1),
    )(ph, w, bias)
    return out.reshape(B, Ho, Wo, C)


def maxpool3x3s2(x):
    B, H, W, C = x.shape
    s = 2
    ph, Ho, Wo = _build_phases(x, s, -1e30)
    Hh, Wh = ph.shape[1], ph.shape[2]
    out = pl.pallas_call(
        functools.partial(_maxpool3x3_kernel, stride=s, Ho=Ho, Wo=Wo),
        out_shape=jax.ShapeDtypeStruct((B * Ho, Wo, C), jnp.float32),
        grid=(B,),
        in_specs=[pl.BlockSpec((s * s, Hh, Wh, C), lambda b: (b, 0, 0, 0))],
        out_specs=pl.BlockSpec((Ho, Wo, C), lambda b: (b, 0, 0)),
        compiler_params=_cparams(1),
    )(ph)
    return out.reshape(B, Ho, Wo, C)


def conv5_bn_relu_gap(x, w, bias):
    """Fused conv5(1x1)+BN+ReLU and AdaptiveAvgPool2d((1,1)) -> (pooled, x_mid)."""
    B, H, W, K = x.shape
    N = w.shape[1]
    HW = H * W
    xr = x.reshape(B, HW, K)
    omid, opool = pl.pallas_call(
        _conv5_gap_kernel,
        out_shape=(jax.ShapeDtypeStruct((B, HW, N), jnp.float32),
                   jax.ShapeDtypeStruct((B, 1, N), jnp.float32)),
        grid=(B,),
        in_specs=[
            pl.BlockSpec((1, HW, K), lambda b: (b, 0, 0)),
            pl.BlockSpec((K, N), lambda b: (0, 0)),
            pl.BlockSpec((1, N), lambda b: (0, 0)),
        ],
        out_specs=(pl.BlockSpec((1, HW, N), lambda b: (b, 0, 0)),
                   pl.BlockSpec((1, 1, N), lambda b: (b, 0, 0))),
        compiler_params=_cparams(1),
    )(xr, w, bias.reshape(1, N))
    return opool.reshape(B, N), omid.reshape(B, H, W, N)


def channel_shuffle(x, groups=2):
    B, H, W, C = x.shape
    x = x.reshape(B, H, W, groups, C // groups)
    x = jnp.swapaxes(x, 3, 4)
    return x.reshape(B, H, W, C)


# ----------------------------- Parameters (synthetic, deterministic) ------

class ParamGen:
    def __init__(self, key):
        self.key = key

    def _next(self):
        self.key, sub = jax.random.split(self.key)
        return sub

    def conv(self, shape):
        return jax.random.normal(self._next(), shape, jnp.float32) * 0.1

    def bn(self, c, eps=1e-5):
        gamma = jax.random.uniform(self._next(), (c,), jnp.float32, 0.5, 1.5)
        beta = jax.random.normal(self._next(), (c,), jnp.float32) * 0.1
        mean = jax.random.normal(self._next(), (c,), jnp.float32) * 0.1
        var = jax.random.uniform(self._next(), (c,), jnp.float32, 0.5, 1.5)
        scale = gamma / jnp.sqrt(var + eps)
        bias = beta - mean * scale
        return scale, bias


def _fold_pw(pg, cin, cout):
    # 1x1 conv weight with BN scale folded in; bf16 for the MXU, bias stays f32.
    w = pg.conv((cin, cout))
    scale, bias = pg.bn(cout)
    return (w * scale[None, :]).astype(jnp.bfloat16), bias


def _fold_dw(pg, c):
    # depthwise 3x3 weight (9 taps x C) with BN scale folded; kept f32 (VPU path).
    w = pg.conv((9, c))
    scale, bias = pg.bn(c)
    return (w * scale[None, :]).reshape(9, 1, c), bias.reshape(1, c)


def _fold_conv1(pg, cin, cout=24):
    w = pg.conv((9, cin, cout))
    scale, bias = pg.bn(cout)
    return (w * scale[None, None, :]).astype(jnp.bfloat16), bias


def make_block_params(pg, inp, oup, stride):
    bf = oup // 2
    p = {"stride": stride}
    if stride > 1:
        p["b1_dw_w"], p["b1_dw_b"] = _fold_dw(pg, inp)
        p["b1_pw_w"], p["b1_pw_b"] = _fold_pw(pg, inp, bf)
        in2 = inp
    else:
        in2 = bf
    p["b2_pw1_w"], p["b2_pw1_b"] = _fold_pw(pg, in2, bf)
    p["b2_dw_w"], p["b2_dw_b"] = _fold_dw(pg, bf)
    p["b2_pw2_w"], p["b2_pw2_b"] = _fold_pw(pg, bf, bf)
    return p


def init_params(key, in_channel, num_classes):
    pg = ParamGen(key)
    params = {}
    params["conv1_w"], params["conv1_b"] = _fold_conv1(pg, in_channel, 24)
    params["conv5_w"], params["conv5_b"] = _fold_pw(pg, 192, 1024)
    # heads declared in __init__ but unused in forward (kept for completeness)
    params["cls_w"] = pg.conv((1024, num_classes))
    params["cls_b"] = jnp.zeros((num_classes,), jnp.float32)
    params["reg_w"] = pg.conv((1024, 1))
    params["reg_b"] = jnp.zeros((1,), jnp.float32)
    stages = []
    # shufflenet_v2_x0_5: stages_repeats=[4,8,4], stages_out_channels=[24,48,96,192,1024]
    for inp, oup, repeats in [(24, 48, 4), (48, 96, 8), (96, 192, 4)]:
        blocks = [make_block_params(pg, inp, oup, 2)]
        for _ in range(repeats - 1):
            blocks.append(make_block_params(pg, oup, oup, 1))
        stages.append(blocks)
    params["stages"] = stages
    return params


# ----------------------------- Model forward -------------------------------

def apply_block(x, p):
    stride = p["stride"]
    if stride > 1:
        b1 = depthwise_conv_bn(x, p["b1_dw_w"], p["b1_dw_b"], stride)
        x1 = pointwise_conv_bn(b1, p["b1_pw_w"], p["b1_pw_b"], relu=True)
        x2 = x
    else:
        C = x.shape[-1]
        x1 = x[..., : C // 2]
        x2 = x[..., C // 2:]
    b2 = pointwise_conv_bn(x2, p["b2_pw1_w"], p["b2_pw1_b"], relu=True)
    b2 = depthwise_conv_bn(b2, p["b2_dw_w"], p["b2_dw_b"], stride)
    b2 = pointwise_conv_bn(b2, p["b2_pw2_w"], p["b2_pw2_b"], relu=True)
    out = jnp.concatenate([x1, b2], axis=-1)
    return channel_shuffle(out, 2)


def custom_branch_forward(x_nchw, params):
    x = jnp.transpose(x_nchw, (0, 2, 3, 1))                       # NCHW -> NHWC
    x = conv1_bn_relu(x, params["conv1_w"], params["conv1_b"], stride=2)
    x = maxpool3x3s2(x)
    for blocks in params["stages"]:
        for p in blocks:
            x = apply_block(x, p)
    pooled, x_mid_nhwc = conv5_bn_relu_gap(x, params["conv5_w"], params["conv5_b"])
    x_mid = jnp.transpose(x_mid_nhwc, (0, 3, 1, 2))               # back to NCHW
    return pooled, x_mid


# ----------------------------- Demo ----------------------------------------

if __name__ == "__main__":
    key = jax.random.PRNGKey(0)
    k_in, k_par = jax.random.split(key)

    B, Cin, H, W = 2, 4, 16, 16
    num_classes = 3
    x = jax.random.normal(k_in, (B, Cin, H, W), jnp.float32)      # NCHW like PyTorch
    params = init_params(k_par, Cin, num_classes)

    fwd = jax.jit(lambda inp: custom_branch_forward(inp, params))
    pooled, x_mid = fwd(x)
    pooled, x_mid = jax.block_until_ready((pooled, x_mid))

    assert pooled.shape == (B, 1024), pooled.shape
    assert x_mid.shape == (B, 1024, 1, 1), x_mid.shape
    assert bool(jnp.all(jnp.isfinite(pooled))) and bool(jnp.all(jnp.isfinite(x_mid)))
    print("KERNEL_OK")
</pallas_src>

<mosaic_0001>
module attributes {stable_mosaic.version = 11 : i64} {
  func.func @_conv1_kernel(%arg0: i32, %arg1: memref<9x128x4xf32, #tpu.memory_space<vmem>>, %arg2: memref<9x4x24xbf16, #tpu.memory_space<vmem>>, %arg3: memref<1x24xf32, #tpu.memory_space<vmem>>, %arg4: memref<128x24xf32, #tpu.memory_space<vmem>>) attributes {dimension_semantics = [#tpu.dimension_semantics<parallel>], iteration_bounds = array<i64: 1>, scalar_prefetch = 0 : i64, scratch_operands = 0 : i64, tpu.core_type = #tpu.core_type<tc>, window_params = [{transform_indices = @transform_0, window_bounds = array<i64: 9, 128, 4>}, {pipeline_mode = #tpu.pipeline_mode<synchronous>, transform_indices = @transform_1, window_bounds = array<i64: 9, 4, 24>}, {pipeline_mode = #tpu.pipeline_mode<synchronous>, transform_indices = @transform_2, window_bounds = array<i64: 1, 24>}, {transform_indices = @transform_3, window_bounds = array<i64: 128, 24>}]} {
    %c0 = arith.constant 0 : index
    %c0_0 = arith.constant 0 : index
    %c0_1 = arith.constant 0 : index
    %0 = vector.load %arg1[%c0, %c0_0, %c0_1] : memref<9x128x4xf32, #tpu.memory_space<vmem>>, vector<1x128x4xf32>
    %1 = vector.shape_cast %0 : vector<1x128x4xf32> to vector<128x4xf32>
    %2 = arith.truncf %1 : vector<128x4xf32> to vector<128x4xbf16>
    %c0_2 = arith.constant 0 : index
    %c0_3 = arith.constant 0 : index
    %c0_4 = arith.constant 0 : index
    %3 = vector.load %arg2[%c0_2, %c0_3, %c0_4] : memref<9x4x24xbf16, #tpu.memory_space<vmem>>, vector<1x4x24xbf16>
    %4 = vector.shape_cast %3 : vector<1x4x24xbf16> to vector<4x24xbf16>
    %cst = arith.constant dense<0.000000e+00> : vector<128x24xf32>
    %5 = tpu.matmul %2, %4, %cst {dimension_numbers = #tpu.dot_dimension_numbers<[1], [0], [0], [1], [0, 0, 1, 1], [], []>} : vector<128x4xbf16>, vector<4x24xbf16>, vector<128x24xf32> -> vector<128x24xf32>
    %c1 = arith.constant 1 : index
    %c0_5 = arith.constant 0 : index
    %c0_6 = arith.constant 0 : index
    %6 = vector.load %arg1[%c1, %c0_5, %c0_6] : memref<9x128x4xf32, #tpu.memory_space<vmem>>, vector<1x128x4xf32>
    %7 = vector.shape_cast %6 : vector<1x128x4xf32> to vector<128x4xf32>
    %8 = arith.truncf %7 : vector<128x4xf32> to vector<128x4xbf16>
    %c1_7 = arith.constant 1 : index
    %c0_8 = arith.constant 0 : index
    %c0_9 = arith.constant 0 : index
    %9 = vector.load %arg2[%c1_7, %c0_8, %c0_9] : memref<9x4x24xbf16, #tpu.memory_space<vmem>>, vector<1x4x24xbf16>
    %10 = vector.shape_cast %9 : vector<1x4x24xbf16> to vector<4x24xbf16>
    %cst_10 = arith.constant dense<0.000000e+00> : vector<128x24xf32>
    %11 = tpu.matmul %8, %10, %cst_10 {dimension_numbers = #tpu.dot_dimension_numbers<[1], [0], [0], [1], [0, 0, 1, 1], [], []>} : vector<128x4xbf16>, vector<4x24xbf16>, vector<128x24xf32> -> vector<128x24xf32>
    %12 = arith.addf %5, %11 : vector<128x24xf32>
    %c2 = arith.constant 2 : index
    %c0_11 = arith.constant 0 : index
    %c0_12 = arith.constant 0 : index
    %13 = vector.load %arg1[%c2, %c0_11, %c0_12] : memref<9x128x4xf32, #tpu.memory_space<vmem>>, vector<1x128x4xf32>
    %14 = vector.shape_cast %13 : vector<1x128x4xf32> to vector<128x4xf32>
    %15 = arith.truncf %14 : vector<128x4xf32> to vector<128x4xbf16>
    %c2_13 = arith.constant 2 : index
    %c0_14 = arith.constant 0 : index
    %c0_15 = arith.constant 0 : index
    %16 = vector.load %arg2[%c2_13, %c0_14, %c0_15] : memref<9x4x24xbf16, #tpu.memory_space<vmem>>, vector<1x4x24xbf16>
    %17 = vector.shape_cast %16 : vector<1x4x24xbf16> to vector<4x24xbf16>
    %cst_16 = arith.constant dense<0.000000e+00> : vector<128x24xf32>
    %18 = tpu.matmul %15, %17, %cst_16 {dimension_numbers = #tpu.dot_dimension_numbers<[1], [0], [0], [1], [0, 0, 1, 1], [], []>} : vector<128x4xbf16>, vector<4x24xbf16>, vector<128x24xf32> -> vector<128x24xf32>
    %19 = arith.addf %12, %18 : vector<128x24xf32>
    %c3 = arith.constant 3 : index
    %c0_17 = arith.constant 0 : index
    %c0_18 = arith.constant 0 : index
    %20 = vector.load %arg1[%c3, %c0_17, %c0_18] : memref<9x128x4xf32, #tpu.memory_space<vmem>>, vector<1x128x4xf32>
    %21 = vector.shape_cast %20 : vector<1x128x4xf32> to vector<128x4xf32>
    %22 = arith.truncf %21 : vector<128x4xf32> to vector<128x4xbf16>
    %c3_19 = arith.constant 3 : index
    %c0_20 = arith.constant 0 : index
    %c0_21 = arith.constant 0 : index
    %23 = vector.load %arg2[%c3_19, %c0_20, %c0_21] : memref<9x4x24xbf16, #tpu.memory_space<vmem>>, vector<1x4x24xbf16>
    %24 = vector.shape_cast %23 : vector<1x4x24xbf16> to vector<4x24xbf16>
    %cst_22 = arith.constant dense<0.000000e+00> : vector<128x24xf32>
    %25 = tpu.matmul %22, %24, %cst_22 {dimension_numbers = #tpu.dot_dimension_numbers<[1], [0], [0], [1], [0, 0, 1, 1], [], []>} : vector<128x4xbf16>, vector<4x24xbf16>, vector<128x24xf32> -> vector<128x24xf32>
    %26 = arith.addf %19, %25 : vector<128x24xf32>
    %c4 = arith.constant 4 : index
    %c0_23 = arith.constant 0 : index
    %c0_24 = arith.constant 0 : index
    %27 = vector.load %arg1[%c4, %c0_23, %c0_24] : memref<9x128x4xf32, #tpu.memory_space<vmem>>, vector<1x128x4xf32>
    %28 = vector.shape_cast %27 : vector<1x128x4xf32> to vector<128x4xf32>
    %29 = arith.truncf %28 : vector<128x4xf32> to vector<128x4xbf16>
    %c4_25 = arith.constant 4 : index
    %c0_26 = arith.constant 0 : index
    %c0_27 = arith.constant 0 : index
    %30 = vector.load %arg2[%c4_25, %c0_26, %c0_27] : memref<9x4x24xbf16, #tpu.memory_space<vmem>>, vector<1x4x24xbf16>
    %31 = vector.shape_cast %30 : vector<1x4x24xbf16> to vector<4x24xbf16>
    %cst_28 = arith.constant dense<0.000000e+00> : vector<128x24xf32>
    %32 = tpu.matmul %29, %31, %cst_28 {dimension_numbers = #tpu.dot_dimension_numbers<[1], [0], [0], [1], [0, 0, 1, 1], [], []>} : vector<128x4xbf16>, vector<4x24xbf16>, vector<128x24xf32> -> vector<128x24xf32>
    %33 = arith.addf %26, %32 : vector<128x24xf32>
    %c5 = arith.constant 5 : index
    %c0_29 = arith.constant 0 : index
    %c0_30 = arith.constant 0 : index
    %34 = vector.load %arg1[%c5, %c0_29, %c0_30] : memref<9x128x4xf32, #tpu.memory_space<vmem>>, vector<1x128x4xf32>
    %35 = vector.shape_cast %34 : vector<1x128x4xf32> to vector<128x4xf32>
    %36 = arith.truncf %35 : vector<128x4xf32> to vector<128x4xbf16>
    %c5_31 = arith.constant 5 : index
    %c0_32 = arith.constant 0 : index
    %c0_33 = arith.constant 0 : index
    %37 = vector.load %arg2[%c5_31, %c0_32, %c0_33] : memref<9x4x24xbf16, #tpu.memory_space<vmem>>, vector<1x4x24xbf16>
    %38 = vector.shape_cast %37 : vector<1x4x24xbf16> to vector<4x24xbf16>
    %cst_34 = arith.constant dense<0.000000e+00> : vector<128x24xf32>
    %39 = tpu.matmul %36, %38, %cst_34 {dimension_numbers = #tpu.dot_dimension_numbers<[1], [0], [0], [1], [0, 0, 1, 1], [], []>} : vector<128x4xbf16>, vector<4x24xbf16>, vector<128x24xf32> -> vector<128x24xf32>
    %40 = arith.addf %33, %39 : vector<128x24xf32>
    %c6 = arith.constant 6 : index
    %c0_35 = arith.constant 0 : index
    %c0_36 = arith.constant 0 : index
    %41 = vector.load %arg1[%c6, %c0_35, %c0_36] : memref<9x128x4xf32, #tpu.memory_space<vmem>>, vector<1x128x4xf32>
    %42 = vector.shape_cast %41 : vector<1x128x4xf32> to vector<128x4xf32>
    %43 = arith.truncf %42 : vector<128x4xf32> to vector<128x4xbf16>
    %c6_37 = arith.constant 6 : index
    %c0_38 = arith.constant 0 : index
    %c0_39 = arith.constant 0 : index
    %44 = vector.load %arg2[%c6_37, %c0_38, %c0_39] : memref<9x4x24xbf16, #tpu.memory_space<vmem>>, vector<1x4x24xbf16>
    %45 = vector.shape_cast %44 : vector<1x4x24xbf16> to vector<4x24xbf16>
    %cst_40 = arith.constant dense<0.000000e+00> : vector<128x24xf32>
    %46 = tpu.matmul %43, %45, %cst_40 {dimension_numbers = #tpu.dot_dimension_numbers<[1], [0], [0], [1], [0, 0, 1, 1], [], []>} : vector<128x4xbf16>, vector<4x24xbf16>, vector<128x24xf32> -> vector<128x24xf32>
    %47 = arith.addf %40, %46 : vector<128x24xf32>
    %c7 = arith.constant 7 : index
    %c0_41 = arith.constant 0 : index
    %c0_42 = arith.constant 0 : index
    %48 = vector.load %arg1[%c7, %c0_41, %c0_42] : memref<9x128x4xf32, #tpu.memory_space<vmem>>, vector<1x128x4xf32>
    %49 = vector.shape_cast %48 : vector<1x128x4xf32> to vector<128x4xf32>
    %50 = arith.truncf %49 : vector<128x4xf32> to vector<128x4xbf16>
    %c7_43 = arith.constant 7 : index
    %c0_44 = arith.constant 0 : index
    %c0_45 = arith.constant 0 : index
    %51 = vector.load %arg2[%c7_43, %c0_44, %c0_45] : memref<9x4x24xbf16, #tpu.memory_space<vmem>>, vector<1x4x24xbf16>
    %52 = vector.shape_cast %51 : vector<1x4x24xbf16> to vector<4x24xbf16>
    %cst_46 = arith.constant dense<0.000000e+00> : vector<128x24xf32>
    %53 = tpu.matmul %50, %52, %cst_46 {dimension_numbers = #tpu.dot_dimension_numbers<[1], [0], [0], [1], [0, 0, 1, 1], [], []>} : vector<128x4xbf16>, vector<4x24xbf16>, vector<128x24xf32> -> vector<128x24xf32>
    %54 = arith.addf %47, %53 : vector<128x24xf32>
    %c8 = arith.constant 8 : index
    %c0_47 = arith.constant 0 : index
    %c0_48 = arith.constant 0 : index
    %55 = vector.load %arg1[%c8, %c0_47, %c0_48] : memref<9x128x4xf32, #tpu.memory_space<vmem>>, vector<1x128x4xf32>
    %56 = vector.shape_cast %55 : vector<1x128x4xf32> to vector<128x4xf32>
    %57 = arith.truncf %56 : vector<128x4xf32> to vector<128x4xbf16>
    %c8_49 = arith.constant 8 : index
    %c0_50 = arith.constant 0 : index
    %c0_51 = arith.constant 0 : index
    %58 = vector.load %arg2[%c8_49, %c0_50, %c0_51] : memref<9x4x24xbf16, #tpu.memory_space<vmem>>, vector<1x4x24xbf16>
    %59 = vector.shape_cast %58 : vector<1x4x24xbf16> to vector<4x24xbf16>
    %cst_52 = arith.constant dense<0.000000e+00> : vector<128x24xf32>
    %60 = tpu.matmul %57, %59, %cst_52 {dimension_numbers = #tpu.dot_dimension_numbers<[1], [0], [0], [1], [0, 0, 1, 1], [], []>} : vector<128x4xbf16>, vector<4x24xbf16>, vector<128x24xf32> -> vector<128x24xf32>
    %61 = arith.addf %54, %60 : vector<128x24xf32>
    %c0_53 = arith.constant 0 : index
    %c0_54 = arith.constant 0 : index
    %62 = vector.load %arg3[%c0_53, %c0_54] : memref<1x24xf32, #tpu.memory_space<vmem>>, vector<1x24xf32>
    %63 = vector.broadcast %62 : vector<1x24xf32> to vector<128x24xf32>
    %64 = arith.addf %61, %63 : vector<128x24xf32>
    %cst_55 = arith.constant 0.000000e+00 : f32
    %65 = vector.broadcast %cst_55 : f32 to vector<128x24xf32>
    %66 = arith.maximumf %64, %65 : vector<128x24xf32>
    %c0_56 = arith.constant 0 : index
    %c0_57 = arith.constant 0 : index
    %67 = vector.load %arg4[%c0_56, %c0_57] : memref<128x24xf32, #tpu.memory_space<vmem>>, vector<128x24xf32>
    tpu.vector_store %arg4[%c0_56, %c0_57], %66 {strides = array<i32>} : memref<128x24xf32, #tpu.memory_space<vmem>>, vector<128x24xf32>,
    return
  }
  func.func @transform_0(%arg0: i32) -> (i32, i32, i32) {
    %c0_i32 = arith.constant 0 : i32
    %c0_i32_0 = arith.constant 0 : i32
    %c0_i32_1 = arith.constant 0 : i32
    return %c0_i32, %arg0, %c0_i32_0 : i32, i32, i32
  }
  func.func @transform_1(%arg0: i32) -> (i32, i32, i32) {
    %c0_i32 = arith.constant 0 : i32
    %c0_i32_0 = arith.constant 0 : i32
    %c0_i32_1 = arith.constant 0 : i32
    %c0_i32_2 = arith.constant 0 : i32
    return %c0_i32, %c0_i32_0, %c0_i32_1 : i32, i32, i32
  }
  func.func @transform_2(%arg0: i32) -> (i32, i32) {
    %c0_i32 = arith.constant 0 : i32
    %c0_i32_0 = arith.constant 0 : i32
    %c0_i32_1 = arith.constant 0 : i32
    return %c0_i32, %c0_i32_0 : i32, i32
  }
  func.func @transform_3(%arg0: i32) -> (i32, i32) {
    %c0_i32 = arith.constant 0 : i32
    %c0_i32_0 = arith.constant 0 : i32
    return %arg0, %c0_i32 : i32, i32
  }
}

module attributes {stable_mosaic.version = 11 : i64} {
  func.func @_maxpool3x3_kernel(%arg0: i32, %arg1: memref<4x5x5x24xf32, #tpu.memory_space<vmem>>, %arg2: memref<4x4x24xf32, #tpu.memory_space<vmem>>) attributes {dimension_semantics = [#tpu.dimension_semantics<parallel>], iteration_bounds = array<i64: 2>, scalar_prefetch = 0 : i64, scratch_operands = 0 : i64, tpu.core_type = #tpu.core_type<tc>, window_params = [{transform_indices = @transform_0, window_bounds = array<i64: 4, 5, 5, 24>}, {transform_indices = @transform_1, window_bounds = array<i64: 4, 4, 24>}]} {
    %c0 = arith.constant 0 : index
    %c0_0 = arith.constant 0 : index
    %c0_1 = arith.constant 0 : index
    %c0_2 = arith.constant 0 : index
    %0 = vector.load %arg1[%c0, %c0_0, %c0_1, %c0_2] : memref<4x5x5x24xf32, #tpu.memory_space<vmem>>, vector<1x4x4x24xf32>
    %1 = vector.shape_cast %0 : vector<1x4x4x24xf32> to vector<4x4x24xf32>
    %c1 = arith.constant 1 : index
    %c0_3 = arith.constant 0 : index
    %c0_4 = arith.constant 0 : index
    %c0_5 = arith.constant 0 : index
    %2 = vector.load %arg1[%c1, %c0_3, %c0_4, %c0_5] : memref<4x5x5x24xf32, #tpu.memory_space<vmem>>, vector<1x4x4x24xf32>
    %3 = vector.shape_cast %2 : vector<1x4x4x24xf32> to vector<4x4x24xf32>
    %4 = arith.maximumf %1, %3 : vector<4x4x24xf32>
    %c0_6 = arith.constant 0 : index
    %c0_7 = arith.constant 0 : index
    %c1_8 = arith.constant 1 : index
    %c0_9 = arith.constant 0 : index
    %5 = vector.load %arg1[%c0_6, %c0_7, %c1_8, %c0_9] : memref<4x5x5x24xf32, #tpu.memory_space<vmem>>, vector<1x4x4x24xf32>
    %6 = vector.shape_cast %5 : vector<1x4x4x24xf32> to vector<4x4x24xf32>
    %7 = arith.maximumf %4, %6 : vector<4x4x24xf32>
    %c2 = arith.constant 2 : index
    %c0_10 = arith.constant 0 : index
    %c0_11 = arith.constant 0 : index
    %c0_12 = arith.constant 0 : index
    %8 = vector.load %arg1[%c2, %c0_10, %c0_11, %c0_12] : memref<4x5x5x24xf32, #tpu.memory_space<vmem>>, vector<1x4x4x24xf32>
    %9 = vector.shape_cast %8 : vector<1x4x4x24xf32> to vector<4x4x24xf32>
    %10 = arith.maximumf %7, %9 : vector<4x4x24xf32>
    %c3 = arith.constant 3 : index
    %c0_13 = arith.constant 0 : index
    %c0_14 = arith.constant 0 : index
    %c0_15 = arith.constant 0 : index
    %11 = vector.load %arg1[%c3, %c0_13, %c0_14, %c0_15] : memref<4x5x5x24xf32, #tpu.memory_space<vmem>>, vector<1x4x4x24xf32>
    %12 = vector.shape_cast %11 : vector<1x4x4x24xf32> to vector<4x4x24xf32>
    %13 = arith.maximumf %10, %12 : vector<4x4x24xf32>
    %c2_16 = arith.constant 2 : index
    %c0_17 = arith.constant 0 : index
    %c1_18 = arith.constant 1 : index
    %c0_19 = arith.constant 0 : index
    %14 = vector.load %arg1[%c2_16, %c0_17, %c1_18, %c0_19] : memref<4x5x5x24xf32, #tpu.memory_space<vmem>>, vector<1x4x4x24xf32>
    %15 = vector.shape_cast %14 : vector<1x4x4x24xf32> to vector<4x4x24xf32>
    %16 = arith.maximumf %13, %15 : vector<4x4x24xf32>
    %c0_20 = arith.constant 0 : index
    %c1_21 = arith.constant 1 : index
    %c0_22 = arith.constant 0 : index
    %c0_23 = arith.constant 0 : index
    %17 = vector.load %arg1[%c0_20, %c1_21, %c0_22, %c0_23] : memref<4x5x5x24xf32, #tpu.memory_space<vmem>>, vector<1x4x4x24xf32>
    %18 = vector.shape_cast %17 : vector<1x4x4x24xf32> to vector<4x4x24xf32>
    %19 = arith.maximumf %16, %18 : vector<4x4x24xf32>
    %c1_24 = arith.constant 1 : index
    %c1_25 = arith.constant 1 : index
    %c0_26 = arith.constant 0 : index
    %c0_27 = arith.constant 0 : index
    %20 = vector.load %arg1[%c1_24, %c1_25, %c0_26, %c0_27] : memref<4x5x5x24xf32, #tpu.memory_space<vmem>>, vector<1x4x4x24xf32>
    %21 = vector.shape_cast %20 : vector<1x4x4x24xf32> to vector<4x4x24xf32>
    %22 = arith.maximumf %19, %21 : vector<4x4x24xf32>
    %c0_28 = arith.constant 0 : index
    %c1_29 = arith.constant 1 : index
    %c1_30 = arith.constant 1 : index
    %c0_31 = arith.constant 0 : index
    %23 = vector.load %arg1[%c0_28, %c1_29, %c1_30, %c0_31] : memref<4x5x5x24xf32, #tpu.memory_space<vmem>>, vector<1x4x4x24xf32>
    %24 = vector.shape_cast %23 : vector<1x4x4x24xf32> to vector<4x4x24xf32>
    %25 = arith.maximumf %22, %24 : vector<4x4x24xf32>
    %c0_32 = arith.constant 0 : index
    %c0_33 = arith.constant 0 : index
    %c0_34 = arith.constant 0 : index
    %26 = vector.load %arg2[%c0_32, %c0_33, %c0_34] : memref<4x4x24xf32, #tpu.memory_space<vmem>>, vector<4x4x24xf32>
    tpu.vector_store %arg2[%c0_32, %c0_33, %c0_34], %25 {strides = array<i32>} : memref<4x4x24xf32, #tpu.memory_space<vmem>>, vector<4x4x24xf32>,
    return
  }
  func.func @transform_0(%arg0: i32) -> (i32, i32, i32, i32) {
    %c0_i32 = arith.constant 0 : i32
    %c0_i32_0 = arith.constant 0 : i32
    %c0_i32_1 = arith.constant 0 : i32
    %c0_i32_2 = arith.constant 0 : i32
    return %arg0, %c0_i32, %c0_i32_0, %c0_i32_1 : i32, i32, i32, i32
  }
  func.func @transform_1(%arg0: i32) -> (i32, i32, i32) {
    %c0_i32 = arith.constant 0 : i32
    %c0_i32_0 = arith.constant 0 : i32
    %c0_i32_1 = arith.constant 0 : i32
    return %arg0, %c0_i32, %c0_i32_0 : i32, i32, i32
  }
}

module attributes {stable_mosaic.version = 11 : i64} {
  func.func @_mm_bias_act_kernel(%arg0: i32, %arg1: memref<32x24xf32, #tpu.memory_space<vmem>>, %arg2: memref<24x24xbf16, #tpu.memory_space<vmem>>, %arg3: memref<1x24xf32, #tpu.memory_space<vmem>>, %arg4: memref<32x24xf32, #tpu.memory_space<vmem>>) attributes {dimension_semantics = [#tpu.dimension_semantics<parallel>], iteration_bounds = array<i64: 1>, scalar_prefetch = 0 : i64, scratch_operands = 0 : i64, tpu.core_type = #tpu.core_type<tc>, window_params = [{transform_indices = @transform_0, window_bounds = array<i64: 32, 24>}, {pipeline_mode = #tpu.pipeline_mode<synchronous>, transform_indices = @transform_1, window_bounds = array<i64: 24, 24>}, {pipeline_mode = #tpu.pipeline_mode<synchronous>, transform_indices = @transform_2, window_bounds = array<i64: 1, 24>}, {transform_indices = @transform_3, window_bounds = array<i64: 32, 24>}]} {
    %c0 = arith.constant 0 : index
    %c0_0 = arith.constant 0 : index
    %0 = vector.load %arg1[%c0, %c0_0] : memref<32x24xf32, #tpu.memory_space<vmem>>, vector<32x24xf32>
    %1 = arith.truncf %0 : vector<32x24xf32> to vector<32x24xbf16>
    %c0_1 = arith.constant 0 : index
    %c0_2 = arith.constant 0 : index
    %2 = vector.load %arg2[%c0_1, %c0_2] : memref<24x24xbf16, #tpu.memory_space<vmem>>, vector<24x24xbf16>
    %cst = arith.constant dense<0.000000e+00> : vector<32x24xf32>
    %3 = tpu.matmul %1, %2, %cst {dimension_numbers = #tpu.dot_dimension_numbers<[1], [0], [0], [1], [0, 0, 1, 1], [], []>} : vector<32x24xbf16>, vector<24x24xbf16>, vector<32x24xf32> -> vector<32x24xf32>
    %c0_3 = arith.constant 0 : index
    %c0_4 = arith.constant 0 : index
    %4 = vector.load %arg3[%c0_3, %c0_4] : memref<1x24xf32, #tpu.memory_space<vmem>>, vector<1x24xf32>
    %5 = vector.broadcast %4 : vector<1x24xf32> to vector<32x24xf32>
    %6 = arith.addf %3, %5 : vector<32x24xf32>
    %cst_5 = arith.constant 0.000000e+00 : f32
    %7 = vector.broadcast %cst_5 : f32 to vector<32x24xf32>
    %8 = arith.maximumf %6, %7 : vector<32x24xf32>
    %c0_6 = arith.constant 0 : index
    %c0_7 = arith.constant 0 : index
    %9 = vector.load %arg4[%c0_6, %c0_7] : memref<32x24xf32, #tpu.memory_space<vmem>>, vector<32x24xf32>
    tpu.vector_store %arg4[%c0_6, %c0_7], %8 {strides = array<i32>} : memref<32x24xf32, #tpu.memory_space<vmem>>, vector<32x24xf32>,
    return
  }
  func.func @transform_0(%arg0: i32) -> (i32, i32) {
    %c0_i32 = arith.constant 0 : i32
    %c0_i32_0 = arith.constant 0 : i32
    return %arg0, %c0_i32 : i32, i32
  }
  func.func @transform_1(%arg0: i32) -> (i32, i32) {
    %c0_i32 = arith.constant 0 : i32
    %c0_i32_0 = arith.constant 0 : i32
    %c0_i32_1 = arith.constant 0 : i32
    return %c0_i32, %c0_i32_0 : i32, i32
  }
  func.func @transform_2(%arg0: i32) -> (i32, i32) {
    %c0_i32 = arith.constant 0 : i32
    %c0_i32_0 = arith.constant 0 : i32
    %c0_i32_1 = arith.constant 0 : i32
    return %c0_i32, %c0_i32_0 : i32, i32
  }
  func.func @transform_3(%arg0: i32) -> (i32, i32) {
    %c0_i32 = arith.constant 0 : i32
    %c0_i32_0 = arith.constant 0 : i32
    return %arg0, %c0_i32 : i32, i32
  }
}

module attributes {stable_mosaic.version = 11 : i64} {
  func.func @_dw3x3_bn_kernel(%arg0: i32, %arg1: memref<4x3x3x24xf32, #tpu.memory_space<vmem>>, %arg2: memref<9x1x24xf32, #tpu.memory_space<vmem>>, %arg3: memref<1x24xf32, #tpu.memory_space<vmem>>, %arg4: memref<2x2x24xf32, #tpu.memory_space<vmem>>) attributes {dimension_semantics = [#tpu.dimension_semantics<parallel>], iteration_bounds = array<i64: 2>, scalar_prefetch = 0 : i64, scratch_operands = 0 : i64, tpu.core_type = #tpu.core_type<tc>, window_params = [{transform_indices = @transform_0, window_bounds = array<i64: 4, 3, 3, 24>}, {pipeline_mode = #tpu.pipeline_mode<synchronous>, transform_indices = @transform_1, window_bounds = array<i64: 9, 1, 24>}, {pipeline_mode = #tpu.pipeline_mode<synchronous>, transform_indices = @transform_2, window_bounds = array<i64: 1, 24>}, {transform_indices = @transform_3, window_bounds = array<i64: 2, 2, 24>}]} {
    %c0 = arith.constant 0 : index
    %c0_0 = arith.constant 0 : index
    %c0_1 = arith.constant 0 : index
    %c0_2 = arith.constant 0 : index
    %0 = vector.load %arg1[%c0, %c0_0, %c0_1, %c0_2] : memref<4x3x3x24xf32, #tpu.memory_space<vmem>>, vector<1x2x2x24xf32>
    %1 = vector.shape_cast %0 : vector<1x2x2x24xf32> to vector<2x2x24xf32>
    %c0_3 = arith.constant 0 : index
    %c0_4 = arith.constant 0 : index
    %c0_5 = arith.constant 0 : index
    %2 = vector.load %arg2[%c0_3, %c0_4, %c0_5] : memref<9x1x24xf32, #tpu.memory_space<vmem>>, vector<1x1x24xf32>
    %3 = vector.shape_cast %2 : vector<1x1x24xf32> to vector<1x24xf32>
    %4 = vector.shape_cast %3 : vector<1x24xf32> to vector<1x1x24xf32>
    %5 = vector.broadcast %4 : vector<1x1x24xf32> to vector<2x2x24xf32>
    %6 = arith.mulf %1, %5 : vector<2x2x24xf32>
    %c1 = arith.constant 1 : index
    %c0_6 = arith.constant 0 : index
    %c0_7 = arith.constant 0 : index
    %c0_8 = arith.constant 0 : index
    %7 = vector.load %arg1[%c1, %c0_6, %c0_7, %c0_8] : memref<4x3x3x24xf32, #tpu.memory_space<vmem>>, vector<1x2x2x24xf32>
    %8 = vector.shape_cast %7 : vector<1x2x2x24xf32> to vector<2x2x24xf32>
    %c1_9 = arith.constant 1 : index
    %c0_10 = arith.constant 0 : index
    %c0_11 = arith.constant 0 : index
    %9 = vector.load %arg2[%c1_9, %c0_10, %c0_11] : memref<9x1x24xf32, #tpu.memory_space<vmem>>, vector<1x1x24xf32>
    %10 = vector.shape_cast %9 : vector<1x1x24xf32> to vector<1x24xf32>
    %11 = vector.shape_cast %10 : vector<1x24xf32> to vector<1x1x24xf32>
    %12 = vector.broadcast %11 : vector<1x1x24xf32> to vector<2x2x24xf32>
    %13 = arith.mulf %8, %12 : vector<2x2x24xf32>
    %14 = arith.addf %6, %13 : vector<2x2x24xf32>
    %c0_12 = arith.constant 0 : index
    %c0_13 = arith.constant 0 : index
    %c1_14 = arith.constant 1 : index
    %c0_15 = arith.constant 0 : index
    %15 = vector.load %arg1[%c0_12, %c0_13, %c1_14, %c0_15] : memref<4x3x3x24xf32, #tpu.memory_space<vmem>>, vector<1x2x2x24xf32>
    %16 = vector.shape_cast %15 : vector<1x2x2x24xf32> to vector<2x2x24xf32>
    %c2 = arith.constant 2 : index
    %c0_16 = arith.constant 0 : index
    %c0_17 = arith.constant 0 : index
    %17 = vector.load %arg2[%c2, %c0_16, %c0_17] : memref<9x1x24xf32, #tpu.memory_space<vmem>>, vector<1x1x24xf32>
    %18 = vector.shape_cast %17 : vector<1x1x24xf32> to vector<1x24xf32>
    %19 = vector.shape_cast %18 : vector<1x24xf32> to vector<1x1x24xf32>
    %20 = vector.broadcast %19 : vector<1x1x24xf32> to vector<2x2x24xf32>
    %21 = arith.mulf %16, %20 : vector<2x2x24xf32>
    %22 = arith.addf %14, %21 : vector<2x2x24xf32>
    %c2_18 = arith.constant 2 : index
    %c0_19 = arith.constant 0 : index
    %c0_20 = arith.constant 0 : index
    %c0_21 = arith.constant 0 : index
    %23 = vector.load %arg1[%c2_18, %c0_19, %c0_20, %c0_21] : memref<4x3x3x24xf32, #tpu.memory_space<vmem>>, vector<1x2x2x24xf32>
    %24 = vector.shape_cast %23 : vector<1x2x2x24xf32> to vector<2x2x24xf32>
    %c3 = arith.constant 3 : index
    %c0_22 = arith.constant 0 : index
    %c0_23 = arith.constant 0 : index
    %25 = vector.load %arg2[%c3, %c0_22, %c0_23] : memref<9x1x24xf32, #tpu.memory_space<vmem>>, vector<1x1x24xf32>
    %26 = vector.shape_cast %25 : vector<1x1x24xf32> to vector<1x24xf32>
    %27 = vector.shape_cast %26 : vector<1x24xf32> to vector<1x1x24xf32>
    %28 = vector.broadcast %27 : vector<1x1x24xf32> to vector<2x2x24xf32>
    %29 = arith.mulf %24, %28 : vector<2x2x24xf32>
    %30 = arith.addf %22, %29 : vector<2x2x24xf32>
    %c3_24 = arith.constant 3 : index
    %c0_25 = arith.constant 0 : index
    %c0_26 = arith.constant 0 : index
    %c0_27 = arith.constant 0 : index
    %31 = vector.load %arg1[%c3_24, %c0_25, %c0_26, %c0_27] : memref<4x3x3x24xf32, #tpu.memory_space<vmem>>, vector<1x2x2x24xf32>
    %32 = vector.shape_cast %31 : vector<1x2x2x24xf32> to vector<2x2x24xf32>
    %c4 = arith.constant 4 : index
    %c0_28 = arith.constant 0 : index
    %c0_29 = arith.constant 0 : index
    %33 = vector.load %arg2[%c4, %c0_28, %c0_29] : memref<9x1x24xf32, #tpu.memory_space<vmem>>, vector<1x1x24xf32>
    %34 = vector.shape_cast %33 : vector<1x1x24xf32> to vector<1x24xf32>
    %35 = vector.shape_cast %34 : vector<1x24xf32> to vector<1x1x24xf32>
    %36 = vector.broadcast %35 : vector<1x1x24xf32> to vector<2x2x24xf32>
    %37 = arith.mulf %32, %36 : vector<2x2x24xf32>
    %38 = arith.addf %30, %37 : vector<2x2x24xf32>
    %c2_30 = arith.constant 2 : index
    %c0_31 = arith.constant 0 : index
    %c1_32 = arith.constant 1 : index
    %c0_33 = arith.constant 0 : index
    %39 = vector.load %arg1[%c2_30, %c0_31, %c1_32, %c0_33] : memref<4x3x3x24xf32, #tpu.memory_space<vmem>>, vector<1x2x2x24xf32>
    %40 = vector.shape_cast %39 : vector<1x2x2x24xf32> to vector<2x2x24xf32>
    %c5 = arith.constant 5 : index
    %c0_34 = arith.constant 0 : index
    %c0_35 = arith.constant 0 : index
    %41 = vector.load %arg2[%c5, %c0_34, %c0_35] : memref<9x1x24xf32, #tpu.memory_space<vmem>>, vector<1x1x24xf32>
    %42 = vector.shape_cast %41 : vector<1x1x24xf32> to vector<1x24xf32>
    %43 = vector.shape_cast %42 : vector<1x24xf32> to vector<1x1x24xf32>
    %44 = vector.broadcast %43 : vector<1x1x24xf32> to vector<2x2x24xf32>
    %45 = arith.mulf %40, %44 : vector<2x2x24xf32>
    %46 = arith.addf %38, %45 : vector<2x2x24xf32>
    %c0_36 = arith.constant 0 : index
    %c1_37 = arith.constant 1 : index
    %c0_38 = arith.constant 0 : index
    %c0_39 = arith.constant 0 : index
    %47 = vector.load %arg1[%c0_36, %c1_37, %c0_38, %c0_39] : memref<4x3x3x24xf32, #tpu.memory_space<vmem>>, vector<1x2x2x24xf32>
    %48 = vector.shape_cast %47 : vector<1x2x2x24xf32> to vector<2x2x24xf32>
    %c6 = arith.constant 6 : index
    %c0_40 = arith.constant 0 : index
    %c0_41 = arith.constant 0 : index
    %49 = vector.load %arg2[%c6, %c0_40, %c0_41] : memref<9x1x24xf32, #tpu.memory_space<vmem>>, vector<1x1x24xf32>
    %50 = vector.shape_cast %49 : vector<1x1x24xf32> to vector<1x24xf32>
    %51 = vector.shape_cast %50 : vector<1x24xf32> to vector<1x1x24xf32>
    %52 = vector.broadcast %51 : vector<1x1x24xf32> to vector<2x2x24xf32>
    %53 = arith.mulf %48, %52 : vector<2x2x24xf32>
    %54 = arith.addf %46, %53 : vector<2x2x24xf32>
    %c1_42 = arith.constant 1 : index
    %c1_43 = arith.constant 1 : index
    %c0_44 = arith.constant 0 : index
    %c0_45 = arith.constant 0 : index
    %55 = vector.load %arg1[%c1_42, %c1_43, %c0_44, %c0_45] : memref<4x3x3x24xf32, #tpu.memory_space<vmem>>, vector<1x2x2x24xf32>
    %56 = vector.shape_cast %55 : vector<1x2x2x24xf32> to vector<2x2x24xf32>
    %c7 = arith.constant 7 : index
    %c0_46 = arith.constant 0 : index
    %c0_47 = arith.constant 0 : index
    %57 = vector.load %arg2[%c7, %c0_46, %c0_47] : memref<9x1x24xf32, #tpu.memory_space<vmem>>, vector<1x1x24xf32>
    %58 = vector.shape_cast %57 : vector<1x1x24xf32> to vector<1x24xf32>
    %59 = vector.shape_cast %58 : vector<1x24xf32> to vector<1x1x24xf32>
    %60 = vector.broadcast %59 : vector<1x1x24xf32> to vector<2x2x24xf32>
    %61 = arith.mulf %56, %60 : vector<2x2x24xf32>
    %62 = arith.addf %54, %61 : vector<2x2x24xf32>
    %c0_48 = arith.constant 0 : index
    %c1_49 = arith.constant 1 : index
    %c1_50 = arith.constant 1 : index
    %c0_51 = arith.constant 0 : index
    %63 = vector.load %arg1[%c0_48, %c1_49, %c1_50, %c0_51] : memref<4x3x3x24xf32, #tpu.memory_space<vmem>>, vector<1x2x2x24xf32>
    %64 = vector.shape_cast %63 : vector<1x2x2x24xf32> to vector<2x2x24xf32>
    %c8 = arith.constant 8 : index
    %c0_52 = arith.constant 0 : index
    %c0_53 = arith.constant 0 : index
    %65 = vector.load %arg2[%c8, %c0_52, %c0_53] : memref<9x1x24xf32, #tpu.memory_space<vmem>>, vector<1x1x24xf32>
    %66 = vector.shape_cast %65 : vector<1x1x24xf32> to vector<1x24xf32>
    %67 = vector.shape_cast %66 : vector<1x24xf32> to vector<1x1x24xf32>
    %68 = vector.broadcast %67 : vector<1x1x24xf32> to vector<2x2x24xf32>
    %69 = arith.mulf %64, %68 : vector<2x2x24xf32>
    %70 = arith.addf %62, %69 : vector<2x2x24xf32>
    %c0_54 = arith.constant 0 : index
    %c0_55 = arith.constant 0 : index
    %71 = vector.load %arg3[%c0_54, %c0_55] : memref<1x24xf32, #tpu.memory_space<vmem>>, vector<1x24xf32>
    %72 = vector.shape_cast %71 : vector<1x24xf32> to vector<1x1x24xf32>
    %73 = vector.broadcast %72 : vector<1x1x24xf32> to vector<2x2x24xf32>
    %74 = arith.addf %70, %73 : vector<2x2x24xf32>
    %c0_56 = arith.constant 0 : index
    %c0_57 = arith.constant 0 : index
    %c0_58 = arith.constant 0 : index
    %75 = vector.load %arg4[%c0_56, %c0_57, %c0_58] : memref<2x2x24xf32, #tpu.memory_space<vmem>>, vector<2x2x24xf32>
    tpu.vector_store %arg4[%c0_56, %c0_57, %c0_58], %74 {strides = array<i32>} : memref<2x2x24xf32, #tpu.memory_space<vmem>>, vector<2x2x24xf32>,
    return
  }
  func.func @transform_0(%arg0: i32) -> (i32, i32, i32, i32) {
    %c0_i32 = arith.constant 0 : i32
    %c0_i32_0 = arith.constant 0 : i32
    %c0_i32_1 = arith.constant 0 : i32
    %c0_i32_2 = arith.constant 0 : i32
    return %arg0, %c0_i32, %c0_i32_0, %c0_i32_1 : i32, i32, i32, i32
  }
  func.func @transform_1(%arg0: i32) -> (i32, i32, i32) {
    %c0_i32 = arith.constant 0 : i32
    %c0_i32_0 = arith.constant 0 : i32
    %c0_i32_1 = arith.constant 0 : i32
    %c0_i32_2 = arith.constant 0 : i32
    return %c0_i32, %c0_i32_0, %c0_i32_1 : i32, i32, i32
  }
  func.func @transform_2(%arg0: i32) -> (i32, i32) {
    %c0_i32 = arith.constant 0 : i32
    %c0_i32_0 = arith.constant 0 : i32
    %c0_i32_1 = arith.constant 0 : i32
    return %c0_i32, %c0_i32_0 : i32, i32
  }
  func.func @transform_3(%arg0: i32) -> (i32, i32, i32) {
    %c0_i32 = arith.constant 0 : i32
    %c0_i32_0 = arith.constant 0 : i32
    %c0_i32_1 = arith.constant 0 : i32
    return %arg0, %c0_i32, %c0_i32_0 : i32, i32, i32
  }
}

module attributes {stable_mosaic.version = 11 : i64} {
  func.func @_mm_bias_act_kernel(%arg0: i32, %arg1: memref<8x24xf32, #tpu.memory_space<vmem>>, %arg2: memref<24x24xbf16, #tpu.memory_space<vmem>>, %arg3: memref<1x24xf32, #tpu.memory_space<vmem>>, %arg4: memref<8x24xf32, #tpu.memory_space<vmem>>) attributes {dimension_semantics = [#tpu.dimension_semantics<parallel>], iteration_bounds = array<i64: 1>, scalar_prefetch = 0 : i64, scratch_operands = 0 : i64, tpu.core_type = #tpu.core_type<tc>, window_params = [{transform_indices = @transform_0, window_bounds = array<i64: 8, 24>}, {pipeline_mode = #tpu.pipeline_mode<synchronous>, transform_indices = @transform_1, window_bounds = array<i64: 24, 24>}, {pipeline_mode = #tpu.pipeline_mode<synchronous>, transform_indices = @transform_2, window_bounds = array<i64: 1, 24>}, {transform_indices = @transform_3, window_bounds = array<i64: 8, 24>}]} {
    %c0 = arith.constant 0 : index
    %c0_0 = arith.constant 0 : index
    %0 = vector.load %arg1[%c0, %c0_0] : memref<8x24xf32, #tpu.memory_space<vmem>>, vector<8x24xf32>
    %1 = arith.truncf %0 : vector<8x24xf32> to vector<8x24xbf16>
    %c0_1 = arith.constant 0 : index
    %c0_2 = arith.constant 0 : index
    %2 = vector.load %arg2[%c0_1, %c0_2] : memref<24x24xbf16, #tpu.memory_space<vmem>>, vector<24x24xbf16>
    %cst = arith.constant dense<0.000000e+00> : vector<8x24xf32>
    %3 = tpu.matmul %1, %2, %cst {dimension_numbers = #tpu.dot_dimension_numbers<[1], [0], [0], [1], [0, 0, 1, 1], [], []>} : vector<8x24xbf16>, vector<24x24xbf16>, vector<8x24xf32> -> vector<8x24xf32>
    %c0_3 = arith.constant 0 : index
    %c0_4 = arith.constant 0 : index
    %4 = vector.load %arg3[%c0_3, %c0_4] : memref<1x24xf32, #tpu.memory_space<vmem>>, vector<1x24xf32>
    %5 = vector.broadcast %4 : vector<1x24xf32> to vector<8x24xf32>
    %6 = arith.addf %3, %5 : vector<8x24xf32>
    %cst_5 = arith.constant 0.000000e+00 : f32
    %7 = vector.broadcast %cst_5 : f32 to vector<8x24xf32>
    %8 = arith.maximumf %6, %7 : vector<8x24xf32>
    %c0_6 = arith.constant 0 : index
    %c0_7 = arith.constant 0 : index
    %9 = vector.load %arg4[%c0_6, %c0_7] : memref<8x24xf32, #tpu.memory_space<vmem>>, vector<8x24xf32>
    tpu.vector_store %arg4[%c0_6, %c0_7], %8 {strides = array<i32>} : memref<8x24xf32, #tpu.memory_space<vmem>>, vector<8x24xf32>,
    return
  }
  func.func @transform_0(%arg0: i32) -> (i32, i32) {
    %c0_i32 = arith.constant 0 : i32
    %c0_i32_0 = arith.constant 0 : i32
    return %arg0, %c0_i32 : i32, i32
  }
  func.func @transform_1(%arg0: i32) -> (i32, i32) {
    %c0_i32 = arith.constant 0 : i32
    %c0_i32_0 = arith.constant 0 : i32
    %c0_i32_1 = arith.constant 0 : i32
    return %c0_i32, %c0_i32_0 : i32, i32
  }
  func.func @transform_2(%arg0: i32) -> (i32, i32) {
    %c0_i32 = arith.constant 0 : i32
    %c0_i32_0 = arith.constant 0 : i32
    %c0_i32_1 = arith.constant 0 : i32
    return %c0_i32, %c0_i32_0 : i32, i32
  }
  func.func @transform_3(%arg0: i32) -> (i32, i32) {
    %c0_i32 = arith.constant 0 : i32
    %c0_i32_0 = arith.constant 0 : i32
    return %arg0, %c0_i32 : i32, i32
  }
}

module attributes {stable_mosaic.version = 11 : i64} {
  func.func @_dw3x3_bn_kernel(%arg0: i32, %arg1: memref<1x4x4x24xf32, #tpu.memory_space<vmem>>, %arg2: memref<9x1x24xf32, #tpu.memory_space<vmem>>, %arg3: memref<1x24xf32, #tpu.memory_space<vmem>>, %arg4: memref<2x2x24xf32, #tpu.memory_space<vmem>>) attributes {dimension_semantics = [#tpu.dimension_semantics<parallel>], iteration_bounds = array<i64: 2>, scalar_prefetch = 0 : i64, scratch_operands = 0 : i64, tpu.core_type = #tpu.core_type<tc>, window_params = [{transform_indices = @transform_0, window_bounds = array<i64: 1, 4, 4, 24>}, {pipeline_mode = #tpu.pipeline_mode<synchronous>, transform_indices = @transform_1, window_bounds = array<i64: 9, 1, 24>}, {pipeline_mode = #tpu.pipeline_mode<synchronous>, transform_indices = @transform_2, window_bounds = array<i64: 1, 24>}, {transform_indices = @transform_3, window_bounds = array<i64: 2, 2, 24>}]} {
    %c0 = arith.constant 0 : index
    %c0_0 = arith.constant 0 : index
    %c0_1 = arith.constant 0 : index
    %c0_2 = arith.constant 0 : index
    %0 = vector.load %arg1[%c0, %c0_0, %c0_1, %c0_2] : memref<1x4x4x24xf32, #tpu.memory_space<vmem>>, vector<1x2x2x24xf32>
    %1 = vector.shape_cast %0 : vector<1x2x2x24xf32> to vector<2x2x24xf32>
    %c0_3 = arith.constant 0 : index
    %c0_4 = arith.constant 0 : index
    %c0_5 = arith.constant 0 : index
    %2 = vector.load %arg2[%c0_3, %c0_4, %c0_5] : memref<9x1x24xf32, #tpu.memory_space<vmem>>, vector<1x1x24xf32>
    %3 = vector.shape_cast %2 : vector<1x1x24xf32> to vector<1x24xf32>
    %4 = vector.shape_cast %3 : vector<1x24xf32> to vector<1x1x24xf32>
    %5 = vector.broadcast %4 : vector<1x1x24xf32> to vector<2x2x24xf32>
    %6 = arith.mulf %1, %5 : vector<2x2x24xf32>
    %c0_6 = arith.constant 0 : index
    %c0_7 = arith.constant 0 : index
    %c1 = arith.constant 1 : index
    %c0_8 = arith.constant 0 : index
    %7 = vector.load %arg1[%c0_6, %c0_7, %c1, %c0_8] : memref<1x4x4x24xf32, #tpu.memory_space<vmem>>, vector<1x2x2x24xf32>
    %8 = vector.shape_cast %7 : vector<1x2x2x24xf32> to vector<2x2x24xf32>
    %c1_9 = arith.constant 1 : index
    %c0_10 = arith.constant 0 : index
    %c0_11 = arith.constant 0 : index
    %9 = vector.load %arg2[%c1_9, %c0_10, %c0_11] : memref<9x1x24xf32, #tpu.memory_space<vmem>>, vector<1x1x24xf32>
    %10 = vector.shape_cast %9 : vector<1x1x24xf32> to vector<1x24xf32>
    %11 = vector.shape_cast %10 : vector<1x24xf32> to vector<1x1x24xf32>
    %12 = vector.broadcast %11 : vector<1x1x24xf32> to vector<2x2x24xf32>
    %13 = arith.mulf %8, %12 : vector<2x2x24xf32>
    %14 = arith.addf %6, %13 : vector<2x2x24xf32>
    %c0_12 = arith.constant 0 : index
    %c0_13 = arith.constant 0 : index
    %c2 = arith.constant 2 : index
    %c0_14 = arith.constant 0 : index
    %15 = vector.load %arg1[%c0_12, %c0_13, %c2, %c0_14] : memref<1x4x4x24xf32, #tpu.memory_space<vmem>>, vector<1x2x2x24xf32>
    %16 = vector.shape_cast %15 : vector<1x2x2x24xf32> to vector<2x2x24xf32>
    %c2_15 = arith.constant 2 : index
    %c0_16 = arith.constant 0 : index
    %c0_17 = arith.constant 0 : index
    %17 = vector.load %arg2[%c2_15, %c0_16, %c0_17] : memref<9x1x24xf32, #tpu.memory_space<vmem>>, vector<1x1x24xf32>
    %18 = vector.shape_cast %17 : vector<1x1x24xf32> to vector<1x24xf32>
    %19 = vector.shape_cast %18 : vector<1x24xf32> to vector<1x1x24xf32>
    %20 = vector.broadcast %19 : vector<1x1x24xf32> to vector<2x2x24xf32>
    %21 = arith.mulf %16, %20 : vector<2x2x24xf32>
    %22 = arith.addf %14, %21 : vector<2x2x24xf32>
    %c0_18 = arith.constant 0 : index
    %c1_19 = arith.constant 1 : index
    %c0_20 = arith.constant 0 : index
    %c0_21 = arith.constant 0 : index
    %23 = vector.load %arg1[%c0_18, %c1_19, %c0_20, %c0_21] : memref<1x4x4x24xf32, #tpu.memory_space<vmem>>, vector<1x2x2x24xf32>
    %24 = vector.shape_cast %23 : vector<1x2x2x24xf32> to vector<2x2x24xf32>
    %c3 = arith.constant 3 : index
    %c0_22 = arith.constant 0 : index
    %c0_23 = arith.constant 0 : index
    %25 = vector.load %arg2[%c3, %c0_22, %c0_23] : memref<9x1x24xf32, #tpu.memory_space<vmem>>, vector<1x1x24xf32>
    %26 = vector.shape_cast %25 : vector<1x1x24xf32> to vector<1x24xf32>
    %27 = vector.shape_cast %26 : vector<1x24xf32> to vector<1x1x24xf32>
    %28 = vector.broadcast %27 : vector<1x1x24xf32> to vector<2x2x24xf32>
    %29 = arith.mulf %24, %28 : vector<2x2x24xf32>
    %30 = arith.addf %22, %29 : vector<2x2x24xf32>
    %c0_24 = arith.constant 0 : index
    %c1_25 = arith.constant 1 : index
    %c1_26 = arith.constant 1 : index
    %c0_27 = arith.constant 0 : index
    %31 = vector.load %arg1[%c0_24, %c1_25, %c1_26, %c0_27] : memref<1x4x4x24xf32, #tpu.memory_space<vmem>>, vector<1x2x2x24xf32>
    %32 = vector.shape_cast %31 : vector<1x2x2x24xf32> to vector<2x2x24xf32>
    %c4 = arith.constant 4 : index
    %c0_28 = arith.constant 0 : index
    %c0_29 = arith.constant 0 : index
    %33 = vector.load %arg2[%c4, %c0_28, %c0_29] : memref<9x1x24xf32, #tpu.memory_space<vmem>>, vector<1x1x24xf32>
    %34 = vector.shape_cast %33 : vector<1x1x24xf32> to vector<1x24xf32>
    %35 = vector.shape_cast %34 : vector<1x24xf32> to vector<1x1x24xf32>
    %36 = vector.broadcast %35 : vector<1x1x24xf32> to vector<2x2x24xf32>
    %37 = arith.mulf %32, %36 : vector<2x2x24xf32>
    %38 = arith.addf %30, %37 : vector<2x2x24xf32>
    %c0_30 = arith.constant 0 : index
    %c1_31 = arith.constant 1 : index
    %c2_32 = arith.constant 2 : index
    %c0_33 = arith.constant 0 : index
    %39 = vector.load %arg1[%c0_30, %c1_31, %c2_32, %c0_33] : memref<1x4x4x24xf32, #tpu.memory_space<vmem>>, vector<1x2x2x24xf32>
    %40 = vector.shape_cast %39 : vector<1x2x2x24xf32> to vector<2x2x24xf32>
    %c5 = arith.constant 5 : index
    %c0_34 = arith.constant 0 : index
    %c0_35 = arith.constant 0 : index
    %41 = vector.load %arg2[%c5, %c0_34, %c0_35] : memref<9x1x24xf32, #tpu.memory_space<vmem>>, vector<1x1x24xf32>
    %42 = vector.shape_cast %41 : vector<1x1x24xf32> to vector<1x24xf32>
    %43 = vector.shape_cast %42 : vector<1x24xf32> to vector<1x1x24xf32>
    %44 = vector.broadcast %43 : vector<1x1x24xf32> to vector<2x2x24xf32>
    %45 = arith.mulf %40, %44 : vector<2x2x24xf32>
    %46 = arith.addf %38, %45 : vector<2x2x24xf32>
    %c0_36 = arith.constant 0 : index
    %c2_37 = arith.constant 2 : index
    %c0_38 = arith.constant 0 : index
    %c0_39 = arith.constant 0 : index
    %47 = vector.load %arg1[%c0_36, %c2_37, %c0_38, %c0_39] : memref<1x4x4x24xf32, #tpu.memory_space<vmem>>, vector<1x2x2x24xf32>
    %48 = vector.shape_cast %47 : vector<1x2x2x24xf32> to vector<2x2x24xf32>
    %c6 = arith.constant 6 : index
    %c0_40 = arith.constant 0 : index
    %c0_41 = arith.constant 0 : index
    %49 = vector.load %arg2[%c6, %c0_40, %c0_41] : memref<9x1x24xf32, #tpu.memory_space<vmem>>, vector<1x1x24xf32>
    %50 = vector.shape_cast %49 : vector<1x1x24xf32> to vector<1x24xf32>
    %51 = vector.shape_cast %50 : vector<1x24xf32> to vector<1x1x24xf32>
    %52 = vector.broadcast %51 : vector<1x1x24xf32> to vector<2x2x24xf32>
    %53 = arith.mulf %48, %52 : vector<2x2x24xf32>
    %54 = arith.addf %46, %53 : vector<2x2x24xf32>
    %c0_42 = arith.constant 0 : index
    %c2_43 = arith.constant 2 : index
    %c1_44 = arith.constant 1 : index
    %c0_45 = arith.constant 0 : index
    %55 = vector.load %arg1[%c0_42, %c2_43, %c1_44, %c0_45] : memref<1x4x4x24xf32, #tpu.memory_space<vmem>>, vector<1x2x2x24xf32>
    %56 = vector.shape_cast %55 : vector<1x2x2x24xf32> to vector<2x2x24xf32>
    %c7 = arith.constant 7 : index
    %c0_46 = arith.constant 0 : index
    %c0_47 = arith.constant 0 : index
    %57 = vector.load %arg2[%c7, %c0_46, %c0_47] : memref<9x1x24xf32, #tpu.memory_space<vmem>>, vector<1x1x24xf32>
    %58 = vector.shape_cast %57 : vector<1x1x24xf32> to vector<1x24xf32>
    %59 = vector.shape_cast %58 : vector<1x24xf32> to vector<1x1x24xf32>
    %60 = vector.broadcast %59 : vector<1x1x24xf32> to vector<2x2x24xf32>
    %61 = arith.mulf %56, %60 : vector<2x2x24xf32>
    %62 = arith.addf %54, %61 : vector<2x2x24xf32>
    %c0_48 = arith.constant 0 : index
    %c2_49 = arith.constant 2 : index
    %c2_50 = arith.constant 2 : index
    %c0_51 = arith.constant 0 : index
    %63 = vector.load %arg1[%c0_48, %c2_49, %c2_50, %c0_51] : memref<1x4x4x24xf32, #tpu.memory_space<vmem>>, vector<1x2x2x24xf32>
    %64 = vector.shape_cast %63 : vector<1x2x2x24xf32> to vector<2x2x24xf32>
    %c8 = arith.constant 8 : index
    %c0_52 = arith.constant 0 : index
    %c0_53 = arith.constant 0 : index
    %65 = vector.load %arg2[%c8, %c0_52, %c0_53] : memref<9x1x24xf32, #tpu.memory_space<vmem>>, vector<1x1x24xf32>
    %66 = vector.shape_cast %65 : vector<1x1x24xf32> to vector<1x24xf32>
    %67 = vector.shape_cast %66 : vector<1x24xf32> to vector<1x1x24xf32>
    %68 = vector.broadcast %67 : vector<1x1x24xf32> to vector<2x2x24xf32>
    %69 = arith.mulf %64, %68 : vector<2x2x24xf32>
    %70 = arith.addf %62, %69 : vector<2x2x24xf32>
    %c0_54 = arith.constant 0 : index
    %c0_55 = arith.constant 0 : index
    %71 = vector.load %arg3[%c0_54, %c0_55] : memref<1x24xf32, #tpu.memory_space<vmem>>, vector<1x24xf32>
    %72 = vector.shape_cast %71 : vector<1x24xf32> to vector<1x1x24xf32>
    %73 = vector.broadcast %72 : vector<1x1x24xf32> to vector<2x2x24xf32>
    %74 = arith.addf %70, %73 : vector<2x2x24xf32>
    %c0_56 = arith.constant 0 : index
    %c0_57 = arith.constant 0 : index
    %c0_58 = arith.constant 0 : index
    %75 = vector.load %arg4[%c0_56, %c0_57, %c0_58] : memref<2x2x24xf32, #tpu.memory_space<vmem>>, vector<2x2x24xf32>
    tpu.vector_store %arg4[%c0_56, %c0_57, %c0_58], %74 {strides = array<i32>} : memref<2x2x24xf32, #tpu.memory_space<vmem>>, vector<2x2x24xf32>,
    return
  }
  func.func @transform_0(%arg0: i32) -> (i32, i32, i32, i32) {
    %c0_i32 = arith.constant 0 : i32
    %c0_i32_0 = arith.constant 0 : i32
    %c0_i32_1 = arith.constant 0 : i32
    %c0_i32_2 = arith.constant 0 : i32
    return %arg0, %c0_i32, %c0_i32_0, %c0_i32_1 : i32, i32, i32, i32
  }
  func.func @transform_1(%arg0: i32) -> (i32, i32, i32) {
    %c0_i32 = arith.constant 0 : i32
    %c0_i32_0 = arith.constant 0 : i32
    %c0_i32_1 = arith.constant 0 : i32
    %c0_i32_2 = arith.constant 0 : i32
    return %c0_i32, %c0_i32_0, %c0_i32_1 : i32, i32, i32
  }
  func.func @transform_2(%arg0: i32) -> (i32, i32) {
    %c0_i32 = arith.constant 0 : i32
    %c0_i32_0 = arith.constant 0 : i32
    %c0_i32_1 = arith.constant 0 : i32
    return %c0_i32, %c0_i32_0 : i32, i32
  }
  func.func @transform_3(%arg0: i32) -> (i32, i32, i32) {
    %c0_i32 = arith.constant 0 : i32
    %c0_i32_0 = arith.constant 0 : i32
    %c0_i32_1 = arith.constant 0 : i32
    return %arg0, %c0_i32, %c0_i32_0 : i32, i32, i32
  }
}

module attributes {stable_mosaic.version = 11 : i64} {
  func.func @_dw3x3_bn_kernel(%arg0: i32, %arg1: memref<4x2x2x48xf32, #tpu.memory_space<vmem>>, %arg2: memref<9x1x48xf32, #tpu.memory_space<vmem>>, %arg3: memref<1x48xf32, #tpu.memory_space<vmem>>, %arg4: memref<1x1x48xf32, #tpu.memory_space<vmem>>) attributes {dimension_semantics = [#tpu.dimension_semantics<parallel>], iteration_bounds = array<i64: 2>, scalar_prefetch = 0 : i64, scratch_operands = 0 : i64, tpu.core_type = #tpu.core_type<tc>, window_params = [{transform_indices = @transform_0, window_bounds = array<i64: 4, 2, 2, 48>}, {pipeline_mode = #tpu.pipeline_mode<synchronous>, transform_indices = @transform_1, window_bounds = array<i64: 9, 1, 48>}, {pipeline_mode = #tpu.pipeline_mode<synchronous>, transform_indices = @transform_2, window_bounds = array<i64: 1, 48>}, {transform_indices = @transform_3, window_bounds = array<i64: 1, 1, 48>}]} {
    %c0 = arith.constant 0 : index
    %c0_0 = arith.constant 0 : index
    %c0_1 = arith.constant 0 : index
    %c0_2 = arith.constant 0 : index
    %0 = vector.load %arg1[%c0, %c0_0, %c0_1, %c0_2] : memref<4x2x2x48xf32, #tpu.memory_space<vmem>>, vector<1x1x1x48xf32>
    %1 = vector.shape_cast %0 : vector<1x1x1x48xf32> to vector<1x1x48xf32>
    %c0_3 = arith.constant 0 : index
    %c0_4 = arith.constant 0 : index
    %c0_5 = arith.constant 0 : index
    %2 = vector.load %arg2[%c0_3, %c0_4, %c0_5] : memref<9x1x48xf32, #tpu.memory_space<vmem>>, vector<1x1x48xf32>
    %3 = vector.shape_cast %2 : vector<1x1x48xf32> to vector<1x48xf32>
    %4 = vector.shape_cast %3 : vector<1x48xf32> to vector<1x1x48xf32>
    %5 = arith.mulf %1, %4 : vector<1x1x48xf32>
    %c1 = arith.constant 1 : index
    %c0_6 = arith.constant 0 : index
    %c0_7 = arith.constant 0 : index
    %c0_8 = arith.constant 0 : index
    %6 = vector.load %arg1[%c1, %c0_6, %c0_7, %c0_8] : memref<4x2x2x48xf32, #tpu.memory_space<vmem>>, vector<1x1x1x48xf32>
    %7 = vector.shape_cast %6 : vector<1x1x1x48xf32> to vector<1x1x48xf32>
    %c1_9 = arith.constant 1 : index
    %c0_10 = arith.constant 0 : index
    %c0_11 = arith.constant 0 : index
    %8 = vector.load %arg2[%c1_9, %c0_10, %c0_11] : memref<9x1x48xf32, #tpu.memory_space<vmem>>, vector<1x1x48xf32>
    %9 = vector.shape_cast %8 : vector<1x1x48xf32> to vector<1x48xf32>
    %10 = vector.shape_cast %9 : vector<1x48xf32> to vector<1x1x48xf32>
    %11 = arith.mulf %7, %10 : vector<1x1x48xf32>
    %12 = arith.addf %5, %11 : vector<1x1x48xf32>
    %c0_12 = arith.constant 0 : index
    %c0_13 = arith.constant 0 : index
    %c1_14 = arith.constant 1 : index
    %c0_15 = arith.constant 0 : index
    %13 = vector.load %arg1[%c0_12, %c0_13, %c1_14, %c0_15] : memref<4x2x2x48xf32, #tpu.memory_space<vmem>>, vector<1x1x1x48xf32>
    %14 = vector.shape_cast %13 : vector<1x1x1x48xf32> to vector<1x1x48xf32>
    %c2 = arith.constant 2 : index
    %c0_16 = arith.constant 0 : index
    %c0_17 = arith.constant 0 : index
    %15 = vector.load %arg2[%c2, %c0_16, %c0_17] : memref<9x1x48xf32, #tpu.memory_space<vmem>>, vector<1x1x48xf32>
    %16 = vector.shape_cast %15 : vector<1x1x48xf32> to vector<1x48xf32>
    %17 = vector.shape_cast %16 : vector<1x48xf32> to vector<1x1x48xf32>
    %18 = arith.mulf %14, %17 : vector<1x1x48xf32>
    %19 = arith.addf %12, %18 : vector<1x1x48xf32>
    %c2_18 = arith.constant 2 : index
    %c0_19 = arith.constant 0 : index
    %c0_20 = arith.constant 0 : index
    %c0_21 = arith.constant 0 : index
    %20 = vector.load %arg1[%c2_18, %c0_19, %c0_20, %c0_21] : memref<4x2x2x48xf32, #tpu.memory_space<vmem>>, vector<1x1x1x48xf32>
    %21 = vector.shape_cast %20 : vector<1x1x1x48xf32> to vector<1x1x48xf32>
    %c3 = arith.constant 3 : index
    %c0_22 = arith.constant 0 : index
    %c0_23 = arith.constant 0 : index
    %22 = vector.load %arg2[%c3, %c0_22, %c0_23] : memref<9x1x48xf32, #tpu.memory_space<vmem>>, vector<1x1x48xf32>
    %23 = vector.shape_cast %22 : vector<1x1x48xf32> to vector<1x48xf32>
    %24 = vector.shape_cast %23 : vector<1x48xf32> to vector<1x1x48xf32>
    %25 = arith.mulf %21, %24 : vector<1x1x48xf32>
    %26 = arith.addf %19, %25 : vector<1x1x48xf32>
    %c3_24 = arith.constant 3 : index
    %c0_25 = arith.constant 0 : index
    %c0_26 = arith.constant 0 : index
    %c0_27 = arith.constant 0 : index
    %27 = vector.load %arg1[%c3_24, %c0_25, %c0_26, %c0_27] : memref<4x2x2x48xf32, #tpu.memory_space<vmem>>, vector<1x1x1x48xf32>
    %28 = vector.shape_cast %27 : vector<1x1x1x48xf32> to vector<1x1x48xf32>
    %c4 = arith.constant 4 : index
    %c0_28 = arith.constant 0 : index
    %c0_29 = arith.constant 0 : index
    %29 = vector.load %arg2[%c4, %c0_28, %c0_29] : memref<9x1x48xf32, #tpu.memory_space<vmem>>, vector<1x1x48xf32>
    %30 = vector.shape_cast %29 : vector<1x1x48xf32> to vector<1x48xf32>
    %31 = vector.shape_cast %30 : vector<1x48xf32> to vector<1x1x48xf32>
    %32 = arith.mulf %28, %31 : vector<1x1x48xf32>
    %33 = arith.addf %26, %32 : vector<1x1x48xf32>
    %c2_30 = arith.constant 2 : index
    %c0_31 = arith.constant 0 : index
    %c1_32 = arith.constant 1 : index
    %c0_33 = arith.constant 0 : index
    %34 = vector.load %arg1[%c2_30, %c0_31, %c1_32, %c0_33] : memref<4x2x2x48xf32, #tpu.memory_space<vmem>>, vector<1x1x1x48xf32>
    %35 = vector.shape_cast %34 : vector<1x1x1x48xf32> to vector<1x1x48xf32>
    %c5 = arith.constant 5 : index
    %c0_34 = arith.constant 0 : index
    %c0_35 = arith.constant 0 : index
    %36 = vector.load %arg2[%c5, %c0_34, %c0_35] : memref<9x1x48xf32, #tpu.memory_space<vmem>>, vector<1x1x48xf32>
    %37 = vector.shape_cast %36 : vector<1x1x48xf32> to vector<1x48xf32>
    %38 = vector.shape_cast %37 : vector<1x48xf32> to vector<1x1x48xf32>
    %39 = arith.mulf %35, %38 : vector<1x1x48xf32>
    %40 = arith.addf %33, %39 : vector<1x1x48xf32>
    %c0_36 = arith.constant 0 : index
    %c1_37 = arith.constant 1 : index
    %c0_38 = arith.constant 0 : index
    %c0_39 = arith.constant 0 : index
    %41 = vector.load %arg1[%c0_36, %c1_37, %c0_38, %c0_39] : memref<4x2x2x48xf32, #tpu.memory_space<vmem>>, vector<1x1x1x48xf32>
    %42 = vector.shape_cast %41 : vector<1x1x1x48xf32> to vector<1x1x48xf32>
    %c6 = arith.constant 6 : index
    %c0_40 = arith.constant 0 : index
    %c0_41 = arith.constant 0 : index
    %43 = vector.load %arg2[%c6, %c0_40, %c0_41] : memref<9x1x48xf32, #tpu.memory_space<vmem>>, vector<1x1x48xf32>
    %44 = vector.shape_cast %43 : vector<1x1x48xf32> to vector<1x48xf32>
    %45 = vector.shape_cast %44 : vector<1x48xf32> to vector<1x1x48xf32>
    %46 = arith.mulf %42, %45 : vector<1x1x48xf32>
    %47 = arith.addf %40, %46 : vector<1x1x48xf32>
    %c1_42 = arith.constant 1 : index
    %c1_43 = arith.constant 1 : index
    %c0_44 = arith.constant 0 : index
    %c0_45 = arith.constant 0 : index
    %48 = vector.load %arg1[%c1_42, %c1_43, %c0_44, %c0_45] : memref<4x2x2x48xf32, #tpu.memory_space<vmem>>, vector<1x1x1x48xf32>
    %49 = vector.shape_cast %48 : vector<1x1x1x48xf32> to vector<1x1x48xf32>
    %c7 = arith.constant 7 : index
    %c0_46 = arith.constant 0 : index
    %c0_47 = arith.constant 0 : index
    %50 = vector.load %arg2[%c7, %c0_46, %c0_47] : memref<9x1x48xf32, #tpu.memory_space<vmem>>, vector<1x1x48xf32>
    %51 = vector.shape_cast %50 : vector<1x1x48xf32> to vector<1x48xf32>
    %52 = vector.shape_cast %51 : vector<1x48xf32> to vector<1x1x48xf32>
    %53 = arith.mulf %49, %52 : vector<1x1x48xf32>
    %54 = arith.addf %47, %53 : vector<1x1x48xf32>
    %c0_48 = arith.constant 0 : index
    %c1_49 = arith.constant 1 : index
    %c1_50 = arith.constant 1 : index
    %c0_51 = arith.constant 0 : index
    %55 = vector.load %arg1[%c0_48, %c1_49, %c1_50, %c0_51] : memref<4x2x2x48xf32, #tpu.memory_space<vmem>>, vector<1x1x1x48xf32>
    %56 = vector.shape_cast %55 : vector<1x1x1x48xf32> to vector<1x1x48xf32>
    %c8 = arith.constant 8 : index
    %c0_52 = arith.constant 0 : index
    %c0_53 = arith.constant 0 : index
    %57 = vector.load %arg2[%c8, %c0_52, %c0_53] : memref<9x1x48xf32, #tpu.memory_space<vmem>>, vector<1x1x48xf32>
    %58 = vector.shape_cast %57 : vector<1x1x48xf32> to vector<1x48xf32>
    %59 = vector.shape_cast %58 : vector<1x48xf32> to vector<1x1x48xf32>
    %60 = arith.mulf %56, %59 : vector<1x1x48xf32>
    %61 = arith.addf %54, %60 : vector<1x1x48xf32>
    %c0_54 = arith.constant 0 : index
    %c0_55 = arith.constant 0 : index
    %62 = vector.load %arg3[%c0_54, %c0_55] : memref<1x48xf32, #tpu.memory_space<vmem>>, vector<1x48xf32>
    %63 = vector.shape_cast %62 : vector<1x48xf32> to vector<1x1x48xf32>
    %64 = arith.addf %61, %63 : vector<1x1x48xf32>
    %c0_56 = arith.constant 0 : index
    %c0_57 = arith.constant 0 : index
    %c0_58 = arith.constant 0 : index
    %65 = vector.load %arg4[%c0_56, %c0_57, %c0_58] : memref<1x1x48xf32, #tpu.memory_space<vmem>>, vector<1x1x48xf32>
    tpu.vector_store %arg4[%c0_56, %c0_57, %c0_58], %64 {strides = array<i32>} : memref<1x1x48xf32, #tpu.memory_space<vmem>>, vector<1x1x48xf32>,
    return
  }
  func.func @transform_0(%arg0: i32) -> (i32, i32, i32, i32) {
    %c0_i32 = arith.constant 0 : i32
    %c0_i32_0 = arith.constant 0 : i32
    %c0_i32_1 = arith.constant 0 : i32
    %c0_i32_2 = arith.constant 0 : i32
    return %arg0, %c0_i32, %c0_i32_0, %c0_i32_1 : i32, i32, i32, i32
  }
  func.func @transform_1(%arg0: i32) -> (i32, i32, i32) {
    %c0_i32 = arith.constant 0 : i32
    %c0_i32_0 = arith.constant 0 : i32
    %c0_i32_1 = arith.constant 0 : i32
    %c0_i32_2 = arith.constant 0 : i32
    return %c0_i32, %c0_i32_0, %c0_i32_1 : i32, i32, i32
  }
  func.func @transform_2(%arg0: i32) -> (i32, i32) {
    %c0_i32 = arith.constant 0 : i32
    %c0_i32_0 = arith.constant 0 : i32
    %c0_i32_1 = arith.constant 0 : i32
    return %c0_i32, %c0_i32_0 : i32, i32
  }
  func.func @transform_3(%arg0: i32) -> (i32, i32, i32) {
    %c0_i32 = arith.constant 0 : i32
    %c0_i32_0 = arith.constant 0 : i32
    %c0_i32_1 = arith.constant 0 : i32
    return %arg0, %c0_i32, %c0_i32_0 : i32, i32, i32
  }
}

module attributes {stable_mosaic.version = 11 : i64} {
  func.func @_mm_bias_act_kernel(%arg0: i32, %arg1: memref<8x48xf32, #tpu.memory_space<vmem>>, %arg2: memref<48x48xbf16, #tpu.memory_space<vmem>>, %arg3: memref<1x48xf32, #tpu.memory_space<vmem>>, %arg4: memref<8x48xf32, #tpu.memory_space<vmem>>) attributes {dimension_semantics = [#tpu.dimension_semantics<parallel>], iteration_bounds = array<i64: 1>, scalar_prefetch = 0 : i64, scratch_operands = 0 : i64, tpu.core_type = #tpu.core_type<tc>, window_params = [{transform_indices = @transform_0, window_bounds = array<i64: 8, 48>}, {pipeline_mode = #tpu.pipeline_mode<synchronous>, transform_indices = @transform_1, window_bounds = array<i64: 48, 48>}, {pipeline_mode = #tpu.pipeline_mode<synchronous>, transform_indices = @transform_2, window_bounds = array<i64: 1, 48>}, {transform_indices = @transform_3, window_bounds = array<i64: 8, 48>}]} {
    %c0 = arith.constant 0 : index
    %c0_0 = arith.constant 0 : index
    %0 = vector.load %arg1[%c0, %c0_0] : memref<8x48xf32, #tpu.memory_space<vmem>>, vector<8x48xf32>
    %1 = arith.truncf %0 : vector<8x48xf32> to vector<8x48xbf16>
    %c0_1 = arith.constant 0 : index
    %c0_2 = arith.constant 0 : index
    %2 = vector.load %arg2[%c0_1, %c0_2] : memref<48x48xbf16, #tpu.memory_space<vmem>>, vector<48x48xbf16>
    %cst = arith.constant dense<0.000000e+00> : vector<8x48xf32>
    %3 = tpu.matmul %1, %2, %cst {dimension_numbers = #tpu.dot_dimension_numbers<[1], [0], [0], [1], [0, 0, 1, 1], [], []>} : vector<8x48xbf16>, vector<48x48xbf16>, vector<8x48xf32> -> vector<8x48xf32>
    %c0_3 = arith.constant 0 : index
    %c0_4 = arith.constant 0 : index
    %4 = vector.load %arg3[%c0_3, %c0_4] : memref<1x48xf32, #tpu.memory_space<vmem>>, vector<1x48xf32>
    %5 = vector.broadcast %4 : vector<1x48xf32> to vector<8x48xf32>
    %6 = arith.addf %3, %5 : vector<8x48xf32>
    %cst_5 = arith.constant 0.000000e+00 : f32
    %7 = vector.broadcast %cst_5 : f32 to vector<8x48xf32>
    %8 = arith.maximumf %6, %7 : vector<8x48xf32>
    %c0_6 = arith.constant 0 : index
    %c0_7 = arith.constant 0 : index
    %9 = vector.load %arg4[%c0_6, %c0_7] : memref<8x48xf32, #tpu.memory_space<vmem>>, vector<8x48xf32>
    tpu.vector_store %arg4[%c0_6, %c0_7], %8 {strides = array<i32>} : memref<8x48xf32, #tpu.memory_space<vmem>>, vector<8x48xf32>,
    return
  }
  func.func @transform_0(%arg0: i32) -> (i32, i32) {
    %c0_i32 = arith.constant 0 : i32
    %c0_i32_0 = arith.constant 0 : i32
    return %arg0, %c0_i32 : i32, i32
  }
  func.func @transform_1(%arg0: i32) -> (i32, i32) {
    %c0_i32 = arith.constant 0 : i32
    %c0_i32_0 = arith.constant 0 : i32
    %c0_i32_1 = arith.constant 0 : i32
    return %c0_i32, %c0_i32_0 : i32, i32
  }
  func.func @transform_2(%arg0: i32) -> (i32, i32) {
    %c0_i32 = arith.constant 0 : i32
    %c0_i32_0 = arith.constant 0 : i32
    %c0_i32_1 = arith.constant 0 : i32
    return %c0_i32, %c0_i32_0 : i32, i32
  }
  func.func @transform_3(%arg0: i32) -> (i32, i32) {
    %c0_i32 = arith.constant 0 : i32
    %c0_i32_0 = arith.constant 0 : i32
    return %arg0, %c0_i32 : i32, i32
  }
}

module attributes {stable_mosaic.version = 11 : i64} {
  func.func @_dw3x3_bn_kernel(%arg0: i32, %arg1: memref<1x3x3x48xf32, #tpu.memory_space<vmem>>, %arg2: memref<9x1x48xf32, #tpu.memory_space<vmem>>, %arg3: memref<1x48xf32, #tpu.memory_space<vmem>>, %arg4: memref<1x1x48xf32, #tpu.memory_space<vmem>>) attributes {dimension_semantics = [#tpu.dimension_semantics<parallel>], iteration_bounds = array<i64: 2>, scalar_prefetch = 0 : i64, scratch_operands = 0 : i64, tpu.core_type = #tpu.core_type<tc>, window_params = [{transform_indices = @transform_0, window_bounds = array<i64: 1, 3, 3, 48>}, {pipeline_mode = #tpu.pipeline_mode<synchronous>, transform_indices = @transform_1, window_bounds = array<i64: 9, 1, 48>}, {pipeline_mode = #tpu.pipeline_mode<synchronous>, transform_indices = @transform_2, window_bounds = array<i64: 1, 48>}, {transform_indices = @transform_3, window_bounds = array<i64: 1, 1, 48>}]} {
    %c0 = arith.constant 0 : index
    %c0_0 = arith.constant 0 : index
    %c0_1 = arith.constant 0 : index
    %c0_2 = arith.constant 0 : index
    %0 = vector.load %arg1[%c0, %c0_0, %c0_1, %c0_2] : memref<1x3x3x48xf32, #tpu.memory_space<vmem>>, vector<1x1x1x48xf32>
    %1 = vector.shape_cast %0 : vector<1x1x1x48xf32> to vector<1x1x48xf32>
    %c0_3 = arith.constant 0 : index
    %c0_4 = arith.constant 0 : index
    %c0_5 = arith.constant 0 : index
    %2 = vector.load %arg2[%c0_3, %c0_4, %c0_5] : memref<9x1x48xf32, #tpu.memory_space<vmem>>, vector<1x1x48xf32>
    %3 = vector.shape_cast %2 : vector<1x1x48xf32> to vector<1x48xf32>
    %4 = vector.shape_cast %3 : vector<1x48xf32> to vector<1x1x48xf32>
    %5 = arith.mulf %1, %4 : vector<1x1x48xf32>
    %c0_6 = arith.constant 0 : index
    %c0_7 = arith.constant 0 : index
    %c1 = arith.constant 1 : index
    %c0_8 = arith.constant 0 : index
    %6 = vector.load %arg1[%c0_6, %c0_7, %c1, %c0_8] : memref<1x3x3x48xf32, #tpu.memory_space<vmem>>, vector<1x1x1x48xf32>
    %7 = vector.shape_cast %6 : vector<1x1x1x48xf32> to vector<1x1x48xf32>
    %c1_9 = arith.constant 1 : index
    %c0_10 = arith.constant 0 : index
    %c0_11 = arith.constant 0 : index
    %8 = vector.load %arg2[%c1_9, %c0_10, %c0_11] : memref<9x1x48xf32, #tpu.memory_space<vmem>>, vector<1x1x48xf32>
    %9 = vector.shape_cast %8 : vector<1x1x48xf32> to vector<1x48xf32>
    %10 = vector.shape_cast %9 : vector<1x48xf32> to vector<1x1x48xf32>
    %11 = arith.mulf %7, %10 : vector<1x1x48xf32>
    %12 = arith.addf %5, %11 : vector<1x1x48xf32>
    %c0_12 = arith.constant 0 : index
    %c0_13 = arith.constant 0 : index
    %c2 = arith.constant 2 : index
    %c0_14 = arith.constant 0 : index
    %13 = vector.load %arg1[%c0_12, %c0_13, %c2, %c0_14] : memref<1x3x3x48xf32, #tpu.memory_space<vmem>>, vector<1x1x1x48xf32>
    %14 = vector.shape_cast %13 : vector<1x1x1x48xf32> to vector<1x1x48xf32>
    %c2_15 = arith.constant 2 : index
    %c0_16 = arith.constant 0 : index
    %c0_17 = arith.constant 0 : index
    %15 = vector.load %arg2[%c2_15, %c0_16, %c0_17] : memref<9x1x48xf32, #tpu.memory_space<vmem>>, vector<1x1x48xf32>
    %16 = vector.shape_cast %15 : vector<1x1x48xf32> to vector<1x48xf32>
    %17 = vector.shape_cast %16 : vector<1x48xf32> to vector<1x1x48xf32>
    %18 = arith.mulf %14, %17 : vector<1x1x48xf32>
    %19 = arith.addf %12, %18 : vector<1x1x48xf32>
    %c0_18 = arith.constant 0 : index
    %c1_19 = arith.constant 1 : index
    %c0_20 = arith.constant 0 : index
    %c0_21 = arith.constant 0 : index
    %20 = vector.load %arg1[%c0_18, %c1_19, %c0_20, %c0_21] : memref<1x3x3x48xf32, #tpu.memory_space<vmem>>, vector<1x1x1x48xf32>
    %21 = vector.shape_cast %20 : vector<1x1x1x48xf32> to vector<1x1x48xf32>
    %c3 = arith.constant 3 : index
    %c0_22 = arith.constant 0 : index
    %c0_23 = arith.constant 0 : index
    %22 = vector.load %arg2[%c3, %c0_22, %c0_23] : memref<9x1x48xf32, #tpu.memory_space<vmem>>, vector<1x1x48xf32>
    %23 = vector.shape_cast %22 : vector<1x1x48xf32> to vector<1x48xf32>
    %24 = vector.shape_cast %23 : vector<1x48xf32> to vector<1x1x48xf32>
    %25 = arith.mulf %21, %24 : vector<1x1x48xf32>
    %26 = arith.addf %19, %25 : vector<1x1x48xf32>
    %c0_24 = arith.constant 0 : index
    %c1_25 = arith.constant 1 : index
    %c1_26 = arith.constant 1 : index
    %c0_27 = arith.constant 0 : index
    %27 = vector.load %arg1[%c0_24, %c1_25, %c1_26, %c0_27] : memref<1x3x3x48xf32, #tpu.memory_space<vmem>>, vector<1x1x1x48xf32>
    %28 = vector.shape_cast %27 : vector<1x1x1x48xf32> to vector<1x1x48xf32>
    %c4 = arith.constant 4 : index
    %c0_28 = arith.constant 0 : index
    %c0_29 = arith.constant 0 : index
    %29 = vector.load %arg2[%c4, %c0_28, %c0_29] : memref<9x1x48xf32, #tpu.memory_space<vmem>>, vector<1x1x48xf32>
    %30 = vector.shape_cast %29 : vector<1x1x48xf32> to vector<1x48xf32>
    %31 = vector.shape_cast %30 : vector<1x48xf32> to vector<1x1x48xf32>
    %32 = arith.mulf %28, %31 : vector<1x1x48xf32>
    %33 = arith.addf %26, %32 : vector<1x1x48xf32>
    %c0_30 = arith.constant 0 : index
    %c1_31 = arith.constant 1 : index
    %c2_32 = arith.constant 2 : index
    %c0_33 = arith.constant 0 : index
    %34 = vector.load %arg1[%c0_30, %c1_31, %c2_32, %c0_33] : memref<1x3x3x48xf32, #tpu.memory_space<vmem>>, vector<1x1x1x48xf32>
    %35 = vector.shape_cast %34 : vector<1x1x1x48xf32> to vector<1x1x48xf32>
    %c5 = arith.constant 5 : index
    %c0_34 = arith.constant 0 : index
    %c0_35 = arith.constant 0 : index
    %36 = vector.load %arg2[%c5, %c0_34, %c0_35] : memref<9x1x48xf32, #tpu.memory_space<vmem>>, vector<1x1x48xf32>
    %37 = vector.shape_cast %36 : vector<1x1x48xf32> to vector<1x48xf32>
    %38 = vector.shape_cast %37 : vector<1x48xf32> to vector<1x1x48xf32>
    %39 = arith.mulf %35, %38 : vector<1x1x48xf32>
    %40 = arith.addf %33, %39 : vector<1x1x48xf32>
    %c0_36 = arith.constant 0 : index
    %c2_37 = arith.constant 2 : index
    %c0_38 = arith.constant 0 : index
    %c0_39 = arith.constant 0 : index
    %41 = vector.load %arg1[%c0_36, %c2_37, %c0_38, %c0_39] : memref<1x3x3x48xf32, #tpu.memory_space<vmem>>, vector<1x1x1x48xf32>
    %42 = vector.shape_cast %41 : vector<1x1x1x48xf32> to vector<1x1x48xf32>
    %c6 = arith.constant 6 : index
    %c0_40 = arith.constant 0 : index
    %c0_41 = arith.constant 0 : index
    %43 = vector.load %arg2[%c6, %c0_40, %c0_41] : memref<9x1x48xf32, #tpu.memory_space<vmem>>, vector<1x1x48xf32>
    %44 = vector.shape_cast %43 : vector<1x1x48xf32> to vector<1x48xf32>
    %45 = vector.shape_cast %44 : vector<1x48xf32> to vector<1x1x48xf32>
    %46 = arith.mulf %42, %45 : vector<1x1x48xf32>
    %47 = arith.addf %40, %46 : vector<1x1x48xf32>
    %c0_42 = arith.constant 0 : index
    %c2_43 = arith.constant 2 : index
    %c1_44 = arith.constant 1 : index
    %c0_45 = arith.constant 0 : index
    %48 = vector.load %arg1[%c0_42, %c2_43, %c1_44, %c0_45] : memref<1x3x3x48xf32, #tpu.memory_space<vmem>>, vector<1x1x1x48xf32>
    %49 = vector.shape_cast %48 : vector<1x1x1x48xf32> to vector<1x1x48xf32>
    %c7 = arith.constant 7 : index
    %c0_46 = arith.constant 0 : index
    %c0_47 = arith.constant 0 : index
    %50 = vector.load %arg2[%c7, %c0_46, %c0_47] : memref<9x1x48xf32, #tpu.memory_space<vmem>>, vector<1x1x48xf32>
    %51 = vector.shape_cast %50 : vector<1x1x48xf32> to vector<1x48xf32>
    %52 = vector.shape_cast %51 : vector<1x48xf32> to vector<1x1x48xf32>
    %53 = arith.mulf %49, %52 : vector<1x1x48xf32>
    %54 = arith.addf %47, %53 : vector<1x1x48xf32>
    %c0_48 = arith.constant 0 : index
    %c2_49 = arith.constant 2 : index
    %c2_50 = arith.constant 2 : index
    %c0_51 = arith.constant 0 : index
    %55 = vector.load %arg1[%c0_48, %c2_49, %c2_50, %c0_51] : memref<1x3x3x48xf32, #tpu.memory_space<vmem>>, vector<1x1x1x48xf32>
    %56 = vector.shape_cast %55 : vector<1x1x1x48xf32> to vector<1x1x48xf32>
    %c8 = arith.constant 8 : index
    %c0_52 = arith.constant 0 : index
    %c0_53 = arith.constant 0 : index
    %57 = vector.load %arg2[%c8, %c0_52, %c0_53] : memref<9x1x48xf32, #tpu.memory_space<vmem>>, vector<1x1x48xf32>
    %58 = vector.shape_cast %57 : vector<1x1x48xf32> to vector<1x48xf32>
    %59 = vector.shape_cast %58 : vector<1x48xf32> to vector<1x1x48xf32>
    %60 = arith.mulf %56, %59 : vector<1x1x48xf32>
    %61 = arith.addf %54, %60 : vector<1x1x48xf32>
    %c0_54 = arith.constant 0 : index
    %c0_55 = arith.constant 0 : index
    %62 = vector.load %arg3[%c0_54, %c0_55] : memref<1x48xf32, #tpu.memory_space<vmem>>, vector<1x48xf32>
    %63 = vector.shape_cast %62 : vector<1x48xf32> to vector<1x1x48xf32>
    %64 = arith.addf %61, %63 : vector<1x1x48xf32>
    %c0_56 = arith.constant 0 : index
    %c0_57 = arith.constant 0 : index
    %c0_58 = arith.constant 0 : index
    %65 = vector.load %arg4[%c0_56, %c0_57, %c0_58] : memref<1x1x48xf32, #tpu.memory_space<vmem>>, vector<1x1x48xf32>
    tpu.vector_store %arg4[%c0_56, %c0_57, %c0_58], %64 {strides = array<i32>} : memref<1x1x48xf32, #tpu.memory_space<vmem>>, vector<1x1x48xf32>,
    return
  }
  func.func @transform_0(%arg0: i32) -> (i32, i32, i32, i32) {
    %c0_i32 = arith.constant 0 : i32
    %c0_i32_0 = arith.constant 0 : i32
    %c0_i32_1 = arith.constant 0 : i32
    %c0_i32_2 = arith.constant 0 : i32
    return %arg0, %c0_i32, %c0_i32_0, %c0_i32_1 : i32, i32, i32, i32
  }
  func.func @transform_1(%arg0: i32) -> (i32, i32, i32) {
    %c0_i32 = arith.constant 0 : i32
    %c0_i32_0 = arith.constant 0 : i32
    %c0_i32_1 = arith.constant 0 : i32
    %c0_i32_2 = arith.constant 0 : i32
    return %c0_i32, %c0_i32_0, %c0_i32_1 : i32, i32, i32
  }
  func.func @transform_2(%arg0: i32) -> (i32, i32) {
    %c0_i32 = arith.constant 0 : i32
    %c0_i32_0 = arith.constant 0 : i32
    %c0_i32_1 = arith.constant 0 : i32
    return %c0_i32, %c0_i32_0 : i32, i32
  }
  func.func @transform_3(%arg0: i32) -> (i32, i32, i32) {
    %c0_i32 = arith.constant 0 : i32
    %c0_i32_0 = arith.constant 0 : i32
    %c0_i32_1 = arith.constant 0 : i32
    return %arg0, %c0_i32, %c0_i32_0 : i32, i32, i32
  }
}

module attributes {stable_mosaic.version = 11 : i64} {
  func.func @_mm_bias_act_kernel(%arg0: i32, %arg1: memref<8x96xf32, #tpu.memory_space<vmem>>, %arg2: memref<96x96xbf16, #tpu.memory_space<vmem>>, %arg3: memref<1x96xf32, #tpu.memory_space<vmem>>, %arg4: memref<8x96xf32, #tpu.memory_space<vmem>>) attributes {dimension_semantics = [#tpu.dimension_semantics<parallel>], iteration_bounds = array<i64: 1>, scalar_prefetch = 0 : i64, scratch_operands = 0 : i64, tpu.core_type = #tpu.core_type<tc>, window_params = [{transform_indices = @transform_0, window_bounds = array<i64: 8, 96>}, {pipeline_mode = #tpu.pipeline_mode<synchronous>, transform_indices = @transform_1, window_bounds = array<i64: 96, 96>}, {pipeline_mode = #tpu.pipeline_mode<synchronous>, transform_indices = @transform_2, window_bounds = array<i64: 1, 96>}, {transform_indices = @transform_3, window_bounds = array<i64: 8, 96>}]} {
    %c0 = arith.constant 0 : index
    %c0_0 = arith.constant 0 : index
    %0 = vector.load %arg1[%c0, %c0_0] : memref<8x96xf32, #tpu.memory_space<vmem>>, vector<8x96xf32>
    %1 = arith.truncf %0 : vector<8x96xf32> to vector<8x96xbf16>
    %c0_1 = arith.constant 0 : index
    %c0_2 = arith.constant 0 : index
    %2 = vector.load %arg2[%c0_1, %c0_2] : memref<96x96xbf16, #tpu.memory_space<vmem>>, vector<96x96xbf16>
    %cst = arith.constant dense<0.000000e+00> : vector<8x96xf32>
    %3 = tpu.matmul %1, %2, %cst {dimension_numbers = #tpu.dot_dimension_numbers<[1], [0], [0], [1], [0, 0, 1, 1], [], []>} : vector<8x96xbf16>, vector<96x96xbf16>, vector<8x96xf32> -> vector<8x96xf32>
    %c0_3 = arith.constant 0 : index
    %c0_4 = arith.constant 0 : index
    %4 = vector.load %arg3[%c0_3, %c0_4] : memref<1x96xf32, #tpu.memory_space<vmem>>, vector<1x96xf32>
    %5 = vector.broadcast %4 : vector<1x96xf32> to vector<8x96xf32>
    %6 = arith.addf %3, %5 : vector<8x96xf32>
    %cst_5 = arith.constant 0.000000e+00 : f32
    %7 = vector.broadcast %cst_5 : f32 to vector<8x96xf32>
    %8 = arith.maximumf %6, %7 : vector<8x96xf32>
    %c0_6 = arith.constant 0 : index
    %c0_7 = arith.constant 0 : index
    %9 = vector.load %arg4[%c0_6, %c0_7] : memref<8x96xf32, #tpu.memory_space<vmem>>, vector<8x96xf32>
    tpu.vector_store %arg4[%c0_6, %c0_7], %8 {strides = array<i32>} : memref<8x96xf32, #tpu.memory_space<vmem>>, vector<8x96xf32>,
    return
  }
  func.func @transform_0(%arg0: i32) -> (i32, i32) {
    %c0_i32 = arith.constant 0 : i32
    %c0_i32_0 = arith.constant 0 : i32
    return %arg0, %c0_i32 : i32, i32
  }
  func.func @transform_1(%arg0: i32) -> (i32, i32) {
    %c0_i32 = arith.constant 0 : i32
    %c0_i32_0 = arith.constant 0 : i32
    %c0_i32_1 = arith.constant 0 : i32
    return %c0_i32, %c0_i32_0 : i32, i32
  }
  func.func @transform_2(%arg0: i32) -> (i32, i32) {
    %c0_i32 = arith.constant 0 : i32
    %c0_i32_0 = arith.constant 0 : i32
    %c0_i32_1 = arith.constant 0 : i32
    return %c0_i32, %c0_i32_0 : i32, i32
  }
  func.func @transform_3(%arg0: i32) -> (i32, i32) {
    %c0_i32 = arith.constant 0 : i32
    %c0_i32_0 = arith.constant 0 : i32
    return %arg0, %c0_i32 : i32, i32
  }
}

module attributes {stable_mosaic.version = 11 : i64} {
  func.func @_dw3x3_bn_kernel(%arg0: i32, %arg1: memref<4x2x2x96xf32, #tpu.memory_space<vmem>>, %arg2: memref<9x1x96xf32, #tpu.memory_space<vmem>>, %arg3: memref<1x96xf32, #tpu.memory_space<vmem>>, %arg4: memref<1x1x96xf32, #tpu.memory_space<vmem>>) attributes {dimension_semantics = [#tpu.dimension_semantics<parallel>], iteration_bounds = array<i64: 2>, scalar_prefetch = 0 : i64, scratch_operands = 0 : i64, tpu.core_type = #tpu.core_type<tc>, window_params = [{transform_indices = @transform_0, window_bounds = array<i64: 4, 2, 2, 96>}, {pipeline_mode = #tpu.pipeline_mode<synchronous>, transform_indices = @transform_1, window_bounds = array<i64: 9, 1, 96>}, {pipeline_mode = #tpu.pipeline_mode<synchronous>, transform_indices = @transform_2, window_bounds = array<i64: 1, 96>}, {transform_indices = @transform_3, window_bounds = array<i64: 1, 1, 96>}]} {
    %c0 = arith.constant 0 : index
    %c0_0 = arith.constant 0 : index
    %c0_1 = arith.constant 0 : index
    %c0_2 = arith.constant 0 : index
    %0 = vector.load %arg1[%c0, %c0_0, %c0_1, %c0_2] : memref<4x2x2x96xf32, #tpu.memory_space<vmem>>, vector<1x1x1x96xf32>
    %1 = vector.shape_cast %0 : vector<1x1x1x96xf32> to vector<1x1x96xf32>
    %c0_3 = arith.constant 0 : index
    %c0_4 = arith.constant 0 : index
    %c0_5 = arith.constant 0 : index
    %2 = vector.load %arg2[%c0_3, %c0_4, %c0_5] : memref<9x1x96xf32, #tpu.memory_space<vmem>>, vector<1x1x96xf32>
    %3 = vector.shape_cast %2 : vector<1x1x96xf32> to vector<1x96xf32>
    %4 = vector.shape_cast %3 : vector<1x96xf32> to vector<1x1x96xf32>
    %5 = arith.mulf %1, %4 : vector<1x1x96xf32>
    %c1 = arith.constant 1 : index
    %c0_6 = arith.constant 0 : index
    %c0_7 = arith.constant 0 : index
    %c0_8 = arith.constant 0 : index
    %6 = vector.load %arg1[%c1, %c0_6, %c0_7, %c0_8] : memref<4x2x2x96xf32, #tpu.memory_space<vmem>>, vector<1x1x1x96xf32>
    %7 = vector.shape_cast %6 : vector<1x1x1x96xf32> to vector<1x1x96xf32>
    %c1_9 = arith.constant 1 : index
    %c0_10 = arith.constant 0 : index
    %c0_11 = arith.constant 0 : index
    %8 = vector.load %arg2[%c1_9, %c0_10, %c0_11] : memref<9x1x96xf32, #tpu.memory_space<vmem>>, vector<1x1x96xf32>
    %9 = vector.shape_cast %8 : vector<1x1x96xf32> to vector<1x96xf32>
    %10 = vector.shape_cast %9 : vector<1x96xf32> to vector<1x1x96xf32>
    %11 = arith.mulf %7, %10 : vector<1x1x96xf32>
    %12 = arith.addf %5, %11 : vector<1x1x96xf32>
    %c0_12 = arith.constant 0 : index
    %c0_13 = arith.constant 0 : index
    %c1_14 = arith.constant 1 : index
    %c0_15 = arith.constant 0 : index
    %13 = vector.load %arg1[%c0_12, %c0_13, %c1_14, %c0_15] : memref<4x2x2x96xf32, #tpu.memory_space<vmem>>, vector<1x1x1x96xf32>
    %14 = vector.shape_cast %13 : vector<1x1x1x96xf32> to vector<1x1x96xf32>
    %c2 = arith.constant 2 : index
    %c0_16 = arith.constant 0 : index
    %c0_17 = arith.constant 0 : index
    %15 = vector.load %arg2[%c2, %c0_16, %c0_17] : memref<9x1x96xf32, #tpu.memory_space<vmem>>, vector<1x1x96xf32>
    %16 = vector.shape_cast %15 : vector<1x1x96xf32> to vector<1x96xf32>
    %17 = vector.shape_cast %16 : vector<1x96xf32> to vector<1x1x96xf32>
    %18 = arith.mulf %14, %17 : vector<1x1x96xf32>
    %19 = arith.addf %12, %18 : vector<1x1x96xf32>
    %c2_18 = arith.constant 2 : index
    %c0_19 = arith.constant 0 : index
    %c0_20 = arith.constant 0 : index
    %c0_21 = arith.constant 0 : index
    %20 = vector.load %arg1[%c2_18, %c0_19, %c0_20, %c0_21] : memref<4x2x2x96xf32, #tpu.memory_space<vmem>>, vector<1x1x1x96xf32>
    %21 = vector.shape_cast %20 : vector<1x1x1x96xf32> to vector<1x1x96xf32>
    %c3 = arith.constant 3 : index
    %c0_22 = arith.constant 0 : index
    %c0_23 = arith.constant 0 : index
    %22 = vector.load %arg2[%c3, %c0_22, %c0_23] : memref<9x1x96xf32, #tpu.memory_space<vmem>>, vector<1x1x96xf32>
    %23 = vector.shape_cast %22 : vector<1x1x96xf32> to vector<1x96xf32>
    %24 = vector.shape_cast %23 : vector<1x96xf32> to vector<1x1x96xf32>
    %25 = arith.mulf %21, %24 : vector<1x1x96xf32>
    %26 = arith.addf %19, %25 : vector<1x1x96xf32>
    %c3_24 = arith.constant 3 : index
    %c0_25 = arith.constant 0 : index
    %c0_26 = arith.constant 0 : index
    %c0_27 = arith.constant 0 : index
    %27 = vector.load %arg1[%c3_24, %c0_25, %c0_26, %c0_27] : memref<4x2x2x96xf32, #tpu.memory_space<vmem>>, vector<1x1x1x96xf32>
    %28 = vector.shape_cast %27 : vector<1x1x1x96xf32> to vector<1x1x96xf32>
    %c4 = arith.constant 4 : index
    %c0_28 = arith.constant 0 : index
    %c0_29 = arith.constant 0 : index
    %29 = vector.load %arg2[%c4, %c0_28, %c0_29] : memref<9x1x96xf32, #tpu.memory_space<vmem>>, vector<1x1x96xf32>
    %30 = vector.shape_cast %29 : vector<1x1x96xf32> to vector<1x96xf32>
    %31 = vector.shape_cast %30 : vector<1x96xf32> to vector<1x1x96xf32>
    %32 = arith.mulf %28, %31 : vector<1x1x96xf32>
    %33 = arith.addf %26, %32 : vector<1x1x96xf32>
    %c2_30 = arith.constant 2 : index
    %c0_31 = arith.constant 0 : index
    %c1_32 = arith.constant 1 : index
    %c0_33 = arith.constant 0 : index
    %34 = vector.load %arg1[%c2_30, %c0_31, %c1_32, %c0_33] : memref<4x2x2x96xf32, #tpu.memory_space<vmem>>, vector<1x1x1x96xf32>
    %35 = vector.shape_cast %34 : vector<1x1x1x96xf32> to vector<1x1x96xf32>
    %c5 = arith.constant 5 : index
    %c0_34 = arith.constant 0 : index
    %c0_35 = arith.constant 0 : index
    %36 = vector.load %arg2[%c5, %c0_34, %c0_35] : memref<9x1x96xf32, #tpu.memory_space<vmem>>, vector<1x1x96xf32>
    %37 = vector.shape_cast %36 : vector<1x1x96xf32> to vector<1x96xf32>
    %38 = vector.shape_cast %37 : vector<1x96xf32> to vector<1x1x96xf32>
    %39 = arith.mulf %35, %38 : vector<1x1x96xf32>
    %40 = arith.addf %33, %39 : vector<1x1x96xf32>
    %c0_36 = arith.constant 0 : index
    %c1_37 = arith.constant 1 : index
    %c0_38 = arith.constant 0 : index
    %c0_39 = arith.constant 0 : index
    %41 = vector.load %arg1[%c0_36, %c1_37, %c0_38, %c0_39] : memref<4x2x2x96xf32, #tpu.memory_space<vmem>>, vector<1x1x1x96xf32>
    %42 = vector.shape_cast %41 : vector<1x1x1x96xf32> to vector<1x1x96xf32>
    %c6 = arith.constant 6 : index
    %c0_40 = arith.constant 0 : index
    %c0_41 = arith.constant 0 : index
    %43 = vector.load %arg2[%c6, %c0_40, %c0_41] : memref<9x1x96xf32, #tpu.memory_space<vmem>>, vector<1x1x96xf32>
    %44 = vector.shape_cast %43 : vector<1x1x96xf32> to vector<1x96xf32>
    %45 = vector.shape_cast %44 : vector<1x96xf32> to vector<1x1x96xf32>
    %46 = arith.mulf %42, %45 : vector<1x1x96xf32>
    %47 = arith.addf %40, %46 : vector<1x1x96xf32>
    %c1_42 = arith.constant 1 : index
    %c1_43 = arith.constant 1 : index
    %c0_44 = arith.constant 0 : index
    %c0_45 = arith.constant 0 : index
    %48 = vector.load %arg1[%c1_42, %c1_43, %c0_44, %c0_45] : memref<4x2x2x96xf32, #tpu.memory_space<vmem>>, vector<1x1x1x96xf32>
    %49 = vector.shape_cast %48 : vector<1x1x1x96xf32> to vector<1x1x96xf32>
    %c7 = arith.constant 7 : index
    %c0_46 = arith.constant 0 : index
    %c0_47 = arith.constant 0 : index
    %50 = vector.load %arg2[%c7, %c0_46, %c0_47] : memref<9x1x96xf32, #tpu.memory_space<vmem>>, vector<1x1x96xf32>
    %51 = vector.shape_cast %50 : vector<1x1x96xf32> to vector<1x96xf32>
    %52 = vector.shape_cast %51 : vector<1x96xf32> to vector<1x1x96xf32>
    %53 = arith.mulf %49, %52 : vector<1x1x96xf32>
    %54 = arith.addf %47, %53 : vector<1x1x96xf32>
    %c0_48 = arith.constant 0 : index
    %c1_49 = arith.constant 1 : index
    %c1_50 = arith.constant 1 : index
    %c0_51 = arith.constant 0 : index
    %55 = vector.load %arg1[%c0_48, %c1_49, %c1_50, %c0_51] : memref<4x2x2x96xf32, #tpu.memory_space<vmem>>, vector<1x1x1x96xf32>
    %56 = vector.shape_cast %55 : vector<1x1x1x96xf32> to vector<1x1x96xf32>
    %c8 = arith.constant 8 : index
    %c0_52 = arith.constant 0 : index
    %c0_53 = arith.constant 0 : index
    %57 = vector.load %arg2[%c8, %c0_52, %c0_53] : memref<9x1x96xf32, #tpu.memory_space<vmem>>, vector<1x1x96xf32>
    %58 = vector.shape_cast %57 : vector<1x1x96xf32> to vector<1x96xf32>
    %59 = vector.shape_cast %58 : vector<1x96xf32> to vector<1x1x96xf32>
    %60 = arith.mulf %56, %59 : vector<1x1x96xf32>
    %61 = arith.addf %54, %60 : vector<1x1x96xf32>
    %c0_54 = arith.constant 0 : index
    %c0_55 = arith.constant 0 : index
    %62 = vector.load %arg3[%c0_54, %c0_55] : memref<1x96xf32, #tpu.memory_space<vmem>>, vector<1x96xf32>
    %63 = vector.shape_cast %62 : vector<1x96xf32> to vector<1x1x96xf32>
    %64 = arith.addf %61, %63 : vector<1x1x96xf32>
    %c0_56 = arith.constant 0 : index
    %c0_57 = arith.constant 0 : index
    %c0_58 = arith.constant 0 : index
    %65 = vector.load %arg4[%c0_56, %c0_57, %c0_58] : memref<1x1x96xf32, #tpu.memory_space<vmem>>, vector<1x1x96xf32>
    tpu.vector_store %arg4[%c0_56, %c0_57, %c0_58], %64 {strides = array<i32>} : memref<1x1x96xf32, #tpu.memory_space<vmem>>, vector<1x1x96xf32>,
    return
  }
  func.func @transform_0(%arg0: i32) -> (i32, i32, i32, i32) {
    %c0_i32 = arith.constant 0 : i32
    %c0_i32_0 = arith.constant 0 : i32
    %c0_i32_1 = arith.constant 0 : i32
    %c0_i32_2 = arith.constant 0 : i32
    return %arg0, %c0_i32, %c0_i32_0, %c0_i32_1 : i32, i32, i32, i32
  }
  func.func @transform_1(%arg0: i32) -> (i32, i32, i32) {
    %c0_i32 = arith.constant 0 : i32
    %c0_i32_0 = arith.constant 0 : i32
    %c0_i32_1 = arith.constant 0 : i32
    %c0_i32_2 = arith.constant 0 : i32
    return %c0_i32, %c0_i32_0, %c0_i32_1 : i32, i32, i32
  }
  func.func @transform_2(%arg0: i32) -> (i32, i32) {
    %c0_i32 = arith.constant 0 : i32
    %c0_i32_0 = arith.constant 0 : i32
    %c0_i32_1 = arith.constant 0 : i32
    return %c0_i32, %c0_i32_0 : i32, i32
  }
  func.func @transform_3(%arg0: i32) -> (i32, i32, i32) {
    %c0_i32 = arith.constant 0 : i32
    %c0_i32_0 = arith.constant 0 : i32
    %c0_i32_1 = arith.constant 0 : i32
    return %arg0, %c0_i32, %c0_i32_0 : i32, i32, i32
  }
}

module attributes {stable_mosaic.version = 11 : i64} {
  func.func @_dw3x3_bn_kernel(%arg0: i32, %arg1: memref<1x3x3x96xf32, #tpu.memory_space<vmem>>, %arg2: memref<9x1x96xf32, #tpu.memory_space<vmem>>, %arg3: memref<1x96xf32, #tpu.memory_space<vmem>>, %arg4: memref<1x1x96xf32, #tpu.memory_space<vmem>>) attributes {dimension_semantics = [#tpu.dimension_semantics<parallel>], iteration_bounds = array<i64: 2>, scalar_prefetch = 0 : i64, scratch_operands = 0 : i64, tpu.core_type = #tpu.core_type<tc>, window_params = [{transform_indices = @transform_0, window_bounds = array<i64: 1, 3, 3, 96>}, {pipeline_mode = #tpu.pipeline_mode<synchronous>, transform_indices = @transform_1, window_bounds = array<i64: 9, 1, 96>}, {pipeline_mode = #tpu.pipeline_mode<synchronous>, transform_indices = @transform_2, window_bounds = array<i64: 1, 96>}, {transform_indices = @transform_3, window_bounds = array<i64: 1, 1, 96>}]} {
    %c0 = arith.constant 0 : index
    %c0_0 = arith.constant 0 : index
    %c0_1 = arith.constant 0 : index
    %c0_2 = arith.constant 0 : index
    %0 = vector.load %arg1[%c0, %c0_0, %c0_1, %c0_2] : memref<1x3x3x96xf32, #tpu.memory_space<vmem>>, vector<1x1x1x96xf32>
    %1 = vector.shape_cast %0 : vector<1x1x1x96xf32> to vector<1x1x96xf32>
    %c0_3 = arith.constant 0 : index
    %c0_4 = arith.constant 0 : index
    %c0_5 = arith.constant 0 : index
    %2 = vector.load %arg2[%c0_3, %c0_4, %c0_5] : memref<9x1x96xf32, #tpu.memory_space<vmem>>, vector<1x1x96xf32>
    %3 = vector.shape_cast %2 : vector<1x1x96xf32> to vector<1x96xf32>
    %4 = vector.shape_cast %3 : vector<1x96xf32> to vector<1x1x96xf32>
    %5 = arith.mulf %1, %4 : vector<1x1x96xf32>
    %c0_6 = arith.constant 0 : index
    %c0_7 = arith.constant 0 : index
    %c1 = arith.constant 1 : index
    %c0_8 = arith.constant 0 : index
    %6 = vector.load %arg1[%c0_6, %c0_7, %c1, %c0_8] : memref<1x3x3x96xf32, #tpu.memory_space<vmem>>, vector<1x1x1x96xf32>
    %7 = vector.shape_cast %6 : vector<1x1x1x96xf32> to vector<1x1x96xf32>
    %c1_9 = arith.constant 1 : index
    %c0_10 = arith.constant 0 : index
    %c0_11 = arith.constant 0 : index
    %8 = vector.load %arg2[%c1_9, %c0_10, %c0_11] : memref<9x1x96xf32, #tpu.memory_space<vmem>>, vector<1x1x96xf32>
    %9 = vector.shape_cast %8 : vector<1x1x96xf32> to vector<1x96xf32>
    %10 = vector.shape_cast %9 : vector<1x96xf32> to vector<1x1x96xf32>
    %11 = arith.mulf %7, %10 : vector<1x1x96xf32>
    %12 = arith.addf %5, %11 : vector<1x1x96xf32>
    %c0_12 = arith.constant 0 : index
    %c0_13 = arith.constant 0 : index
    %c2 = arith.constant 2 : index
    %c0_14 = arith.constant 0 : index
    %13 = vector.load %arg1[%c0_12, %c0_13, %c2, %c0_14] : memref<1x3x3x96xf32, #tpu.memory_space<vmem>>, vector<1x1x1x96xf32>
    %14 = vector.shape_cast %13 : vector<1x1x1x96xf32> to vector<1x1x96xf32>
    %c2_15 = arith.constant 2 : index
    %c0_16 = arith.constant 0 : index
    %c0_17 = arith.constant 0 : index
    %15 = vector.load %arg2[%c2_15, %c0_16, %c0_17] : memref<9x1x96xf32, #tpu.memory_space<vmem>>, vector<1x1x96xf32>
    %16 = vector.shape_cast %15 : vector<1x1x96xf32> to vector<1x96xf32>
    %17 = vector.shape_cast %16 : vector<1x96xf32> to vector<1x1x96xf32>
    %18 = arith.mulf %14, %17 : vector<1x1x96xf32>
    %19 = arith.addf %12, %18 : vector<1x1x96xf32>
    %c0_18 = arith.constant 0 : index
    %c1_19 = arith.constant 1 : index
    %c0_20 = arith.constant 0 : index
    %c0_21 = arith.constant 0 : index
    %20 = vector.load %arg1[%c0_18, %c1_19, %c0_20, %c0_21] : memref<1x3x3x96xf32, #tpu.memory_space<vmem>>, vector<1x1x1x96xf32>
    %21 = vector.shape_cast %20 : vector<1x1x1x96xf32> to vector<1x1x96xf32>
    %c3 = arith.constant 3 : index
    %c0_22 = arith.constant 0 : index
    %c0_23 = arith.constant 0 : index
    %22 = vector.load %arg2[%c3, %c0_22, %c0_23] : memref<9x1x96xf32, #tpu.memory_space<vmem>>, vector<1x1x96xf32>
    %23 = vector.shape_cast %22 : vector<1x1x96xf32> to vector<1x96xf32>
    %24 = vector.shape_cast %23 : vector<1x96xf32> to vector<1x1x96xf32>
    %25 = arith.mulf %21, %24 : vector<1x1x96xf32>
    %26 = arith.addf %19, %25 : vector<1x1x96xf32>
    %c0_24 = arith.constant 0 : index
    %c1_25 = arith.constant 1 : index
    %c1_26 = arith.constant 1 : index
    %c0_27 = arith.constant 0 : index
    %27 = vector.load %arg1[%c0_24, %c1_25, %c1_26, %c0_27] : memref<1x3x3x96xf32, #tpu.memory_space<vmem>>, vector<1x1x1x96xf32>
    %28 = vector.shape_cast %27 : vector<1x1x1x96xf32> to vector<1x1x96xf32>
    %c4 = arith.constant 4 : index
    %c0_28 = arith.constant 0 : index
    %c0_29 = arith.constant 0 : index
    %29 = vector.load %arg2[%c4, %c0_28, %c0_29] : memref<9x1x96xf32, #tpu.memory_space<vmem>>, vector<1x1x96xf32>
    %30 = vector.shape_cast %29 : vector<1x1x96xf32> to vector<1x96xf32>
    %31 = vector.shape_cast %30 : vector<1x96xf32> to vector<1x1x96xf32>
    %32 = arith.mulf %28, %31 : vector<1x1x96xf32>
    %33 = arith.addf %26, %32 : vector<1x1x96xf32>
    %c0_30 = arith.constant 0 : index
    %c1_31 = arith.constant 1 : index
    %c2_32 = arith.constant 2 : index
    %c0_33 = arith.constant 0 : index
    %34 = vector.load %arg1[%c0_30, %c1_31, %c2_32, %c0_33] : memref<1x3x3x96xf32, #tpu.memory_space<vmem>>, vector<1x1x1x96xf32>
    %35 = vector.shape_cast %34 : vector<1x1x1x96xf32> to vector<1x1x96xf32>
    %c5 = arith.constant 5 : index
    %c0_34 = arith.constant 0 : index
    %c0_35 = arith.constant 0 : index
    %36 = vector.load %arg2[%c5, %c0_34, %c0_35] : memref<9x1x96xf32, #tpu.memory_space<vmem>>, vector<1x1x96xf32>
    %37 = vector.shape_cast %36 : vector<1x1x96xf32> to vector<1x96xf32>
    %38 = vector.shape_cast %37 : vector<1x96xf32> to vector<1x1x96xf32>
    %39 = arith.mulf %35, %38 : vector<1x1x96xf32>
    %40 = arith.addf %33, %39 : vector<1x1x96xf32>
    %c0_36 = arith.constant 0 : index
    %c2_37 = arith.constant 2 : index
    %c0_38 = arith.constant 0 : index
    %c0_39 = arith.constant 0 : index
    %41 = vector.load %arg1[%c0_36, %c2_37, %c0_38, %c0_39] : memref<1x3x3x96xf32, #tpu.memory_space<vmem>>, vector<1x1x1x96xf32>
    %42 = vector.shape_cast %41 : vector<1x1x1x96xf32> to vector<1x1x96xf32>
    %c6 = arith.constant 6 : index
    %c0_40 = arith.constant 0 : index
    %c0_41 = arith.constant 0 : index
    %43 = vector.load %arg2[%c6, %c0_40, %c0_41] : memref<9x1x96xf32, #tpu.memory_space<vmem>>, vector<1x1x96xf32>
    %44 = vector.shape_cast %43 : vector<1x1x96xf32> to vector<1x96xf32>
    %45 = vector.shape_cast %44 : vector<1x96xf32> to vector<1x1x96xf32>
    %46 = arith.mulf %42, %45 : vector<1x1x96xf32>
    %47 = arith.addf %40, %46 : vector<1x1x96xf32>
    %c0_42 = arith.constant 0 : index
    %c2_43 = arith.constant 2 : index
    %c1_44 = arith.constant 1 : index
    %c0_45 = arith.constant 0 : index
    %48 = vector.load %arg1[%c0_42, %c2_43, %c1_44, %c0_45] : memref<1x3x3x96xf32, #tpu.memory_space<vmem>>, vector<1x1x1x96xf32>
    %49 = vector.shape_cast %48 : vector<1x1x1x96xf32> to vector<1x1x96xf32>
    %c7 = arith.constant 7 : index
    %c0_46 = arith.constant 0 : index
    %c0_47 = arith.constant 0 : index
    %50 = vector.load %arg2[%c7, %c0_46, %c0_47] : memref<9x1x96xf32, #tpu.memory_space<vmem>>, vector<1x1x96xf32>
    %51 = vector.shape_cast %50 : vector<1x1x96xf32> to vector<1x96xf32>
    %52 = vector.shape_cast %51 : vector<1x96xf32> to vector<1x1x96xf32>
    %53 = arith.mulf %49, %52 : vector<1x1x96xf32>
    %54 = arith.addf %47, %53 : vector<1x1x96xf32>
    %c0_48 = arith.constant 0 : index
    %c2_49 = arith.constant 2 : index
    %c2_50 = arith.constant 2 : index
    %c0_51 = arith.constant 0 : index
    %55 = vector.load %arg1[%c0_48, %c2_49, %c2_50, %c0_51] : memref<1x3x3x96xf32, #tpu.memory_space<vmem>>, vector<1x1x1x96xf32>
    %56 = vector.shape_cast %55 : vector<1x1x1x96xf32> to vector<1x1x96xf32>
    %c8 = arith.constant 8 : index
    %c0_52 = arith.constant 0 : index
    %c0_53 = arith.constant 0 : index
    %57 = vector.load %arg2[%c8, %c0_52, %c0_53] : memref<9x1x96xf32, #tpu.memory_space<vmem>>, vector<1x1x96xf32>
    %58 = vector.shape_cast %57 : vector<1x1x96xf32> to vector<1x96xf32>
    %59 = vector.shape_cast %58 : vector<1x96xf32> to vector<1x1x96xf32>
    %60 = arith.mulf %56, %59 : vector<1x1x96xf32>
    %61 = arith.addf %54, %60 : vector<1x1x96xf32>
    %c0_54 = arith.constant 0 : index
    %c0_55 = arith.constant 0 : index
    %62 = vector.load %arg3[%c0_54, %c0_55] : memref<1x96xf32, #tpu.memory_space<vmem>>, vector<1x96xf32>
    %63 = vector.shape_cast %62 : vector<1x96xf32> to vector<1x1x96xf32>
    %64 = arith.addf %61, %63 : vector<1x1x96xf32>
    %c0_56 = arith.constant 0 : index
    %c0_57 = arith.constant 0 : index
    %c0_58 = arith.constant 0 : index
    %65 = vector.load %arg4[%c0_56, %c0_57, %c0_58] : memref<1x1x96xf32, #tpu.memory_space<vmem>>, vector<1x1x96xf32>
    tpu.vector_store %arg4[%c0_56, %c0_57, %c0_58], %64 {strides = array<i32>} : memref<1x1x96xf32, #tpu.memory_space<vmem>>, vector<1x1x96xf32>,
    return
  }
  func.func @transform_0(%arg0: i32) -> (i32, i32, i32, i32) {
    %c0_i32 = arith.constant 0 : i32
    %c0_i32_0 = arith.constant 0 : i32
    %c0_i32_1 = arith.constant 0 : i32
    %c0_i32_2 = arith.constant 0 : i32
    return %arg0, %c0_i32, %c0_i32_0, %c0_i32_1 : i32, i32, i32, i32
  }
  func.func @transform_1(%arg0: i32) -> (i32, i32, i32) {
    %c0_i32 = arith.constant 0 : i32
    %c0_i32_0 = arith.constant 0 : i32
    %c0_i32_1 = arith.constant 0 : i32
    %c0_i32_2 = arith.constant 0 : i32
    return %c0_i32, %c0_i32_0, %c0_i32_1 : i32, i32, i32
  }
  func.func @transform_2(%arg0: i32) -> (i32, i32) {
    %c0_i32 = arith.constant 0 : i32
    %c0_i32_0 = arith.constant 0 : i32
    %c0_i32_1 = arith.constant 0 : i32
    return %c0_i32, %c0_i32_0 : i32, i32
  }
  func.func @transform_3(%arg0: i32) -> (i32, i32, i32) {
    %c0_i32 = arith.constant 0 : i32
    %c0_i32_0 = arith.constant 0 : i32
    %c0_i32_1 = arith.constant 0 : i32
    return %arg0, %c0_i32, %c0_i32_0 : i32, i32, i32
  }
}

module attributes {stable_mosaic.version = 11 : i64} {
  func.func @_conv5_gap_kernel(%arg0: i32, %arg1: memref<1x1x192xf32, #tpu.memory_space<vmem>>, %arg2: memref<192x1024xbf16, #tpu.memory_space<vmem>>, %arg3: memref<1x1024xf32, #tpu.memory_space<vmem>>, %arg4: memref<1x1x1024xf32, #tpu.memory_space<vmem>>, %arg5: memref<1x1x1024xf32, #tpu.memory_space<vmem>>) attributes {dimension_semantics = [#tpu.dimension_semantics<parallel>], iteration_bounds = array<i64: 2>, scalar_prefetch = 0 : i64, scratch_operands = 0 : i64, tpu.core_type = #tpu.core_type<tc>, window_params = [{transform_indices = @transform_0, window_bounds = array<i64: 1, 1, 192>}, {pipeline_mode = #tpu.pipeline_mode<synchronous>, transform_indices = @transform_1, window_bounds = array<i64: 192, 1024>}, {pipeline_mode = #tpu.pipeline_mode<synchronous>, transform_indices = @transform_2, window_bounds = array<i64: 1, 1024>}, {transform_indices = @transform_3, window_bounds = array<i64: 1, 1, 1024>}, {transform_indices = @transform_4, window_bounds = array<i64: 1, 1, 1024>}]} {
    %c0 = arith.constant 0 : index
    %c0_0 = arith.constant 0 : index
    %c0_1 = arith.constant 0 : index
    %0 = vector.load %arg1[%c0, %c0_0, %c0_1] : memref<1x1x192xf32, #tpu.memory_space<vmem>>, vector<1x1x192xf32>
    %1 = vector.shape_cast %0 : vector<1x1x192xf32> to vector<1x192xf32>
    %2 = arith.truncf %1 : vector<1x192xf32> to vector<1x192xbf16>
    %c0_2 = arith.constant 0 : index
    %c0_3 = arith.constant 0 : index
    %3 = vector.load %arg2[%c0_2, %c0_3] : memref<192x1024xbf16, #tpu.memory_space<vmem>>, vector<192x1024xbf16>
    %cst = arith.constant dense<0.000000e+00> : vector<1x1024xf32>
    %4 = tpu.matmul %2, %3, %cst {dimension_numbers = #tpu.dot_dimension_numbers<[1], [0], [0], [1], [0, 0, 1, 1], [], []>} : vector<1x192xbf16>, vector<192x1024xbf16>, vector<1x1024xf32> -> vector<1x1024xf32>
    %c0_4 = arith.constant 0 : index
    %c0_5 = arith.constant 0 : index
    %5 = vector.load %arg3[%c0_4, %c0_5] : memref<1x1024xf32, #tpu.memory_space<vmem>>, vector<1x1024xf32>
    %6 = arith.addf %4, %5 : vector<1x1024xf32>
    %cst_6 = arith.constant 0.000000e+00 : f32
    %7 = vector.broadcast %cst_6 : f32 to vector<1x1024xf32>
    %8 = arith.maximumf %6, %7 : vector<1x1024xf32>
    %c0_7 = arith.constant 0 : index
    %c0_8 = arith.constant 0 : index
    %c0_9 = arith.constant 0 : index
    %9 = vector.load %arg4[%c0_7, %c0_8, %c0_9] : memref<1x1x1024xf32, #tpu.memory_space<vmem>>, vector<1x1x1024xf32>
    %10 = vector.shape_cast %9 : vector<1x1x1024xf32> to vector<1x1024xf32>
    %11 = vector.shape_cast %8 : vector<1x1024xf32> to vector<1x1x1024xf32>
    tpu.vector_store %arg4[%c0_7, %c0_8, %c0_9], %11 {strides = array<i32>} : memref<1x1x1024xf32, #tpu.memory_space<vmem>>, vector<1x1x1024xf32>,
    %cst_10 = arith.constant dense<0.000000e+00> : vector<1024xf32>
    %12 = vector.multi_reduction <add>, %8, %cst_10 [0] : vector<1x1024xf32> to vector<1024xf32>
    %13 = vector.shape_cast %12 : vector<1024xf32> to vector<1x1024xf32>
    %cst_11 = arith.constant 1.000000e+00 : f32
    %14 = vector.broadcast %cst_11 : f32 to vector<1x1024xf32>
    %15 = arith.divf %13, %14 : vector<1x1024xf32>
    %c0_12 = arith.constant 0 : index
    %c0_13 = arith.constant 0 : index
    %c0_14 = arith.constant 0 : index
    %16 = vector.load %arg5[%c0_12, %c0_13, %c0_14] : memref<1x1x1024xf32, #tpu.memory_space<vmem>>, vector<1x1x1024xf32>
    %17 = vector.shape_cast %16 : vector<1x1x1024xf32> to vector<1x1024xf32>
    %18 = vector.shape_cast %15 : vector<1x1024xf32> to vector<1x1x1024xf32>
    tpu.vector_store %arg5[%c0_12, %c0_13, %c0_14], %18 {strides = array<i32>} : memref<1x1x1024xf32, #tpu.memory_space<vmem>>, vector<1x1x1024xf32>,
    return
  }
  func.func @transform_0(%arg0: i32) -> (i32, i32, i32) {
    %c0_i32 = arith.constant 0 : i32
    %c0_i32_0 = arith.constant 0 : i32
    %c0_i32_1 = arith.constant 0 : i32
    return %arg0, %c0_i32, %c0_i32_0 : i32, i32, i32
  }
  func.func @transform_1(%arg0: i32) -> (i32, i32) {
    %c0_i32 = arith.constant 0 : i32
    %c0_i32_0 = arith.constant 0 : i32
    %c0_i32_1 = arith.constant 0 : i32
    return %c0_i32, %c0_i32_0 : i32, i32
  }
  func.func @transform_2(%arg0: i32) -> (i32, i32) {
    %c0_i32 = arith.constant 0 : i32
    %c0_i32_0 = arith.constant 0 : i32
    %c0_i32_1 = arith.constant 0 : i32
    return %c0_i32, %c0_i32_0 : i32, i32
  }
  func.func @transform_3(%arg0: i32) -> (i32, i32, i32) {
    %c0_i32 = arith.constant 0 : i32
    %c0_i32_0 = arith.constant 0 : i32
    %c0_i32_1 = arith.constant 0 : i32
    return %arg0, %c0_i32, %c0_i32_0 : i32, i32, i32
  }
  func.func @transform_4(%arg0: i32) -> (i32, i32, i32) {
    %c0_i32 = arith.constant 0 : i32
    %c0_i32_0 = arith.constant 0 : i32
    %c0_i32_1 = arith.constant 0 : i32
    return %arg0, %c0_i32, %c0_i32_0 : i32, i32, i32
  }
}

</mosaic_0001>

<llo_original>
// kernel: _lambda_.58
$region0: #{_lambda_.58}
  #allocation0 [shape = 'u32[]', space=smem, size = 0x4, offset = 0x4, fixed_abs, tag = 'smem constant byte address 0x4 - core index']
  #allocation1 [shape = 'u32[144,128]{1,0:T(1,128)}', space=vmem, size = 0x12000, scoped, tag = 'internal scratch']
  %s0 = inlined_call_operand.vmem [shape: f32[8,5,5,24], index: 0, kind: input, shape index: {}]
  %s1 = inlined_call_operand.vmem [shape: f32[8,4,24], index: 1, kind: output, shape index: {}]
  %s2 = sld [smem:[#allocation0]]
  $region37: #{_lambda_.58} parent=0
    _
  %s4 = ssub.s32 1, %s2
  %s5 = scalar_select 0, %s4, %s2
  loop: start=0, step=1, limit=4
  $region2: #{_lambda_.58} parent=0 // loop_pre_header
    _
  $region3: #{_lambda_.58} parent=0 // loop_header
    %s7 = sphi 0, %s11
    %p8 = scmp.ge.s32.totalorder %s7, 4
    %s17 = sphi 0, %s19
    %s20 = sphi 0, %s17
    %s21 = sphi 0, %s20
    %s37 = sphi 0, %s21
    %s43 = sphi 0, %s45
    %s46 = sphi 0, %s43
    %s47 = sphi 0, %s46
    %s63 = sphi 0, %s47
  $region4: #{_lambda_.58} parent=0 // loop_header_branch
    %10 = sbr.rel (%p8) target = $region8
  $region5: #{_lambda_.58} parent=0 // loop_body
    %s12 = ssub.s32 %s7, 1
    %s13 = ssub.s32 %s7, 2
    %s14 = sadd.s32 %s7, 1
    %s15 = ssub.s32 %s7, %s14
    %p16 = scmp.eq.s32.totalorder %s15, 0
    %s18 = sadd.s32 %s17, 1
    %s19 = scalar_select %p16, %s17, %s18
    %p22 = pneg %p16
    %p23 = scmp.eq.s32.totalorder %s7, 1
    %p24 = por %p22, %p23
    %p25 = scmp.ne.s32.totalorder %s17, %s20
    %p26 = scmp.eq.s32.totalorder %s7, 0
    %p27 = por %p25, %p26
    %p28 = scmp.ne.s32.totalorder %s17, %s20
    %p29 = scmp.eq.s32.totalorder %s12, 1
    %p30 = por %p28, %p29
    %p31 = scmp.ne.s32.totalorder %s20, %s21
    %p32 = scmp.eq.s32.totalorder %s12, 0
    %p33 = por %p31, %p32
    %p34 = scmp.ne.s32.totalorder %s20, %s21
    %p35 = scmp.eq.s32.totalorder %s13, 1
    %p36 = por %p34, %p35
    %p38 = scmp.ne.s32.totalorder %s21, %s37
    %p39 = scmp.eq.s32.totalorder %s13, 0
    %p40 = por %p38, %p39
    %s41 = ssub.s32 %s7, %s14
    %p42 = scmp.eq.s32.totalorder %s41, 0
    %s44 = sadd.s32 %s43, 1
    %s45 = scalar_select %p42, %s43, %s44
    %p48 = pneg %p42
    %p49 = scmp.eq.s32.totalorder %s7, 1
    %p50 = por %p48, %p49
    %p51 = scmp.ne.s32.totalorder %s43, %s46
    %p52 = scmp.eq.s32.totalorder %s7, 0
    %p53 = por %p51, %p52
    %p54 = scmp.ne.s32.totalorder %s43, %s46
    %p55 = scmp.eq.s32.totalorder %s12, 1
    %p56 = por %p54, %p55
    %p57 = scmp.ne.s32.totalorder %s46, %s47
    %p58 = scmp.eq.s32.totalorder %s12, 0
    %p59 = por %p57, %p58
    %p60 = scmp.ne.s32.totalorder %s46, %s47
    %p61 = scmp.eq.s32.totalorder %s13, 1
    %p62 = por %p60, %p61
    %p64 = scmp.ne.s32.totalorder %s47, %s63
    %p65 = scmp.eq.s32.totalorder %s13, 0
    %p66 = por %p64, %p65
    %p67 = scmp.le.s32.totalorder 1, %s7
    %p68 = scmp.lt.s32.totalorder %s7, 3
    %p69 = pnand %p67, %p68
    %p70 = pneg %p69
    // Predicated region
    $region9: #{_lambda_.58} parent=5 // pred_check
      _
    $region10: #{_lambda_.58} parent=5 // pred_check_branch
      %72 = sbr.rel (%p69) target = $region12
    $region11: #{_lambda_.58} parent=5 // pred_region
      %s73 = ssub.s32 %s7, 1
    $region12: #{_lambda_.58} parent=5 // pred_fallthru
      _
    %p74 = scmp.lt.s32.totalorder %s7, 2
    // Predicated region
    $region13: #{_lambda_.58} parent=5 // pred_check
      %p75 = pneg %p74
    $region14: #{_lambda_.58} parent=5 // pred_check_branch
      %77 = sbr.rel (%p75) target = $region16
    $region15: #{_lambda_.58} parent=5 // pred_region
      // Predicated region
      $region17: #{_lambda_.58} parent=15 // pred_check
        %p78 = pneg %p27
      $region18: #{_lambda_.58} parent=15 // pred_check_branch
        %80 = sbr.rel (%p78) target = $region20
      $region19: #{_lambda_.58} parent=15 // pred_region
        %s81 = smul.u32 4, %s7
        %p82 = scmp.lt.s32.totalorder %s81, 7
        %s83 = scalar_select %p82, %s81, 7
        %s84 = smul.addr %s83, 5
        %s85 = smul.addr %s84, 8
        %s86 = scalar_lea.vmem %s0, %s85
        %s87 = smul.u32 4, %s7
      $region20: #{_lambda_.58} parent=15 // pred_fallthru
        _
    $region16: #{_lambda_.58} parent=5 // pred_fallthru
      _
    %p88 = scmp.le.s32.totalorder 1, %s7
    %p89 = scmp.lt.s32.totalorder %s7, 3
    %p90 = pnand %p88, %p89
    %p91 = pneg %p90
    // Predicated region
    $region21: #{_lambda_.58} parent=5 // pred_check
      _
    $region22: #{_lambda_.58} parent=5 // pred_check_branch
      %93 = sbr.rel (%p90) target = $region24
    $region23: #{_lambda_.58} parent=5 // pred_region
      %s94 = ssub.s32 %s7, 1
      %s95 = smul.u32 4, %s12
      %p96 = scmp.lt.s32.totalorder %s95, 7
      %s97 = scalar_select %p96, %s95, 7
      %s98 = smul.addr %s97, 5
      %s99 = smul.addr %s98, 8
      %s100 = scalar_lea.vmem %s0, %s99
      %p101 = pneg %p33
      %p102 = pneg %p30
      %p103 = pneg %p59
      %p104 = pneg %p56
      %s105 = smul.u32 4, %s12
      %p106 = scmp.lt.s32.totalorder %s105, 7
      %s107 = scalar_select %p106, %s105, 7
      %s108 = smul.addr %s107, 4
      %s109 = scalar_lea.vmem %s1, %s108
      %s110 = smul.u32 4, %s12
      %p111 = scmp.lt.s32.totalorder %s110, 7
      %s112 = scalar_select %p111, %s110, 7
      %s113 = smul.addr %s112, 5
      %s114 = smul.addr %s113, 8
      %s115 = scalar_lea.vmem %s0, %s114
      %s116 = smul.u32 4, %s12
      %s117 = smul.u32 4, %s12
      %p118 = scmp.lt.s32.totalorder %s117, 7
      %s119 = scalar_select %p118, %s117, 7
      %s120 = smul.addr %s119, 4
      %s121 = scalar_lea.vmem %s1, %s120
      %s122 = smul.u32 4, %s12
      %v123 = vld [vmem:[%s115] sm:$0xf]
      %v124 = vld [vmem:[%s115 + $0x8] sm:$0xf]
      %v125 = vld [vmem:[%s115 + $0x10] sm:$0xf]
      %v126 = vld [vmem:[%s115 + $0x18] sm:$0xf]
      %s127 = scalar_lea.vmem %s115, 40
      %v128 = vld [vmem:[%s127] sm:$0xf]
      %v129 = vld [vmem:[%s127 + $0x8] sm:$0xf]
      %v130 = vld [vmem:[%s127 + $0x10] sm:$0xf]
      %v131 = vld [vmem:[%s127 + $0x18] sm:$0xf]
      %v132 = vmax.f32 %v123, %v128
      %v133 = vmax.f32 %v124, %v129
      %v134 = vmax.f32 %v125, %v130
      %v135 = vmax.f32 %v126, %v131
      %v136 = vld [vmem:[%s115 + $0x1] sm:$0xf]
      %v137 = vld [vmem:[%s115 + $0x9] sm:$0xf]
      %v138 = vld [vmem:[%s115 + $0x11] sm:$0xf]
      %v139 = vld [vmem:[%s115 + $0x19] sm:$0xf]
      %v140 = vmax.f32 %v132, %v136
      %v141 = vmax.f32 %v133, %v137
      %v142 = vmax.f32 %v134, %v138
      %v143 = vmax.f32 %v135, %v139
      %s144 = scalar_lea.vmem %s115, 80
      %v145 = vld [vmem:[%s144] sm:$0xf]
      %v146 = vld [vmem:[%s144 + $0x8] sm:$0xf]
      %v147 = vld [vmem:[%s144 + $0x10] sm:$0xf]
      %v148 = vld [vmem:[%s144 + $0x18] sm:$0xf]
      %v149 = vmax.f32 %v140, %v145
      %v150 = vmax.f32 %v141, %v146
      %v151 = vmax.f32 %v142, %v147
      %v152 = vmax.f32 %v143, %v148
      %s153 = scalar_lea.vmem %s115, 120
      %v154 = vld [vmem:[%s153] sm:$0xf]
      %v155 = vld [vmem:[%s153 + $0x8] sm:$0xf]
      %v156 = vld [vmem:[%s153 + $0x10] sm:$0xf]
      %v157 = vld [vmem:[%s153 + $0x18] sm:$0xf]
      %v158 = vmax.f32 %v149, %v154
      %v159 = vmax.f32 %v150, %v155
      %v160 = vmax.f32 %v151, %v156
      %v161 = vmax.f32 %v152, %v157
      %v162 = vld [vmem:[%s144 + $0x1] sm:$0xf]
      %v163 = vld [vmem:[%s144 + $0x9] sm:$0xf]
      %v164 = vld [vmem:[%s144 + $0x11] sm:$0xf]
      %v165 = vld [vmem:[%s144 + $0x19] sm:$0xf]
      %v166 = vmax.f32 %v158, %v162
      %v167 = vmax.f32 %v159, %v163
      %v168 = vmax.f32 %v160, %v164
      %v169 = vmax.f32 %v161, %v165
      %s170 = scalar_lea.vmem %s115, 8
      %v171 = vld [vmem:[%s170] sm:$0xf]
      %v172 = vld [vmem:[%s170 + $0x8] sm:$0xf]
      %v173 = vld [vmem:[%s170 + $0x10] sm:$0xf]
      %v174 = vld [vmem:[%s170 + $0x18] sm:$0xf]
      %v175 = vmax.f32 %v166, %v171
      %v176 = vmax.f32 %v167, %v172
      %v177 = vmax.f32 %v168, %v173
      %v178 = vmax.f32 %v169, %v174
      %s179 = scalar_lea.vmem %s115, 48
      %v180 = vld [vmem:[%s179] sm:$0xf]
      %v181 = vld [vmem:[%s179 + $0x8] sm:$0xf]
      %v182 = vld [vmem:[%s179 + $0x10] sm:$0xf]
      %v183 = vld [vmem:[%s179 + $0x18] sm:$0xf]
      %v184 = vmax.f32 %v175, %v180
      %v185 = vmax.f32 %v176, %v181
      %v186 = vmax.f32 %v177, %v182
      %v187 = vmax.f32 %v178, %v183
      %v188 = vld [vmem:[%s170 + $0x1] sm:$0xf]
      %v189 = vld [vmem:[%s170 + $0x9] sm:$0xf]
      %v190 = vld [vmem:[%s170 + $0x11] sm:$0xf]
      %v191 = vld [vmem:[%s170 + $0x19] sm:$0xf]
      %v192 = vmax.f32 %v184, %v188
      %v193 = vmax.f32 %v185, %v189
      %v194 = vmax.f32 %v186, %v190
      %v195 = vmax.f32 %v187, %v191
      %vm196 = vcmask 191488
      %197 = vst.msk [vmem:[%s121] sm:$0xf] %vm196, %v192
      %198 = vst.msk [vmem:[%s121 + $0x4] sm:$0xf] %vm196, %v193
      %199 = vst.msk [vmem:[%s121 + $0x8] sm:$0xf] %vm196, %v194
      %200 = vst.msk [vmem:[%s121 + $0xc] sm:$0xf] %vm196, %v195
      %s201 = smul.u32 4, %s12
      %p202 = scmp.lt.s32.totalorder %s201, 7
      %s203 = scalar_select %p202, %s201, 7
      %s204 = smul.addr %s203, 4
      %s205 = scalar_lea.vmem %s1, %s204
      // Predicated region
      $region25: #{_lambda_.58} parent=23 // pred_check
        %p206 = pneg %p56
      $region26: #{_lambda_.58} parent=23 // pred_check_branch
        %208 = sbr.rel (%p206) target = $region28
      $region27: #{_lambda_.58} parent=23 // pred_region
        %s209 = smul.u32 4, %s12
      $region28: #{_lambda_.58} parent=23 // pred_fallthru
        _
    $region24: #{_lambda_.58} parent=5 // pred_fallthru
      _
    %p210 = scmp.le.s32.totalorder 2, %s7
    // Predicated region
    $region29: #{_lambda_.58} parent=5 // pred_check
      %p211 = pneg %p210
    $region30: #{_lambda_.58} parent=5 // pred_check_branch
      %213 = sbr.rel (%p211) target = $region32
    $region31: #{_lambda_.58} parent=5 // pred_region
      %s214 = ssub.s32 %s7, 2
      // Predicated region
      $region33: #{_lambda_.58} parent=31 // pred_check
        %p215 = pneg %p62
      $region34: #{_lambda_.58} parent=31 // pred_check_branch
        %217 = sbr.rel (%p215) target = $region36
      $region35: #{_lambda_.58} parent=31 // pred_region
        %s218 = smul.u32 4, %s13
        %p219 = scmp.lt.s32.totalorder %s218, 7
        %s220 = scalar_select %p219, %s218, 7
        %s221 = smul.addr %s220, 4
        %s222 = scalar_lea.vmem %s1, %s221
      $region36: #{_lambda_.58} parent=31 // pred_fallthru
        _
    $region32: #{_lambda_.58} parent=5 // pred_fallthru
      _
  $region6: #{_lambda_.58} parent=0 // loop_footer
    %s11 = sadd.s32 1, %s7
  $region7: #{_lambda_.58} parent=0 // loop_footer_branch
    %6 = sbr.rel target = $region3
  $region8: #{_lambda_.58} parent=0 // loop_exit
    _

// kernel: _lambda_.61
$region0: #{_lambda_.61}
  #allocation0 [shape = 'u32[]', space=smem, size = 0x4, offset = 0x4, fixed_abs, tag = 'smem constant byte address 0x4 - core index']
  #allocation1 [shape = 'u32[144,128]{1,0:T(1,128)}', space=vmem, size = 0x12000, scoped, tag = 'internal scratch']
  %s0 = inlined_call_operand.vmem [shape: f32[32,24], index: 0, kind: input, shape index: {}]
  %s1 = inlined_call_operand.vmem [shape: bf16[24,24], index: 1, kind: input, shape index: {}]
  %s2 = inlined_call_operand.vmem [shape: f32[1,24], index: 2, kind: input, shape index: {}]
  %s3 = inlined_call_operand.vmem [shape: f32[32,24], index: 3, kind: output, shape index: {}]
  %s4 = sld [smem:[#allocation0]]
  $region22: #{_lambda_.61} parent=0
    _
  %s6 = ssub.s32 1, %s4
  %s7 = scalar_select 0, %s6, %s4
  // Predicated region
  $region2: #{_lambda_.61} parent=0 // pred_check
    _
  $region3: #{_lambda_.61} parent=0 // pred_check_branch
    %9 = sbr.rel (0) target = $region5
  $region4: #{_lambda_.61} parent=0 // pred_region
    _
  $region5: #{_lambda_.61} parent=0 // pred_fallthru
    _
  // Predicated region
  $region6: #{_lambda_.61} parent=0 // pred_check
    _
  $region7: #{_lambda_.61} parent=0 // pred_check_branch
    %11 = sbr.rel (0) target = $region9
  $region8: #{_lambda_.61} parent=0 // pred_region
    _
  $region9: #{_lambda_.61} parent=0 // pred_fallthru
    _
  // Predicated region
  $region10: #{_lambda_.61} parent=0 // pred_check
    _
  $region11: #{_lambda_.61} parent=0 // pred_check_branch
    %13 = sbr.rel (0) target = $region13
  $region12: #{_lambda_.61} parent=0 // pred_region
    _
  $region13: #{_lambda_.61} parent=0 // pred_fallthru
    _
  %v15 = vld [vmem:[%s0] sm:$0xff]
  %v16 = vld [vmem:[%s0 + $0x8] sm:$0xff]
  %v17 = vld [vmem:[%s0 + $0x10] sm:$0xff]
  %v18 = vld [vmem:[%s0 + $0x18] sm:$0xff]
  %v19 = vpack.c.bf16 %v16, %v15
  %v20 = vpack.c.bf16 %v18, %v17
  %v21 = vld [vmem:[%s1] sm:$0xf]
  %v22 = vld [vmem:[%s1 + $0x4] sm:$0xf]
  %v23 = vld [vmem:[%s1 + $0x8] sm:$0xf]
  %v24 = vld [vmem:[%s2] sm:$0x1]
  %v26 = vlaneseq
  %v27 = vshrl.u32 %v26, 7
  %v28 = vsub.s32 0, %v27
  %v29 = vrot.slane %v24, %v28
  %v34 = vunpack.c.l.b16 %v21
  %v35 = vunpack.c.l.b16 %v22
  %v36 = vunpack.c.l.b16 %v23
  %v37 = vpack.c.b16 %v35, %v34
  %v38 = vpack.c.b16 %v36, %v36
  %vm40 = vcmask 195584
  %v42 = vsel %vm40, %v19, 0
  %v45 = vsel %vm40, %v20, 0
  %vm47 = vcmask 1043456
  %v49 = vsel %vm47, %v38, 0
  %51 = vmatprep.subr.bf16.mxu0 0
  %52 = vmatpush1.bf16.msra.mxu0 %v37
  %53 = vmatprep.subr.bf16.mxu0 0
  %54 = vmatpush1.bf16.msra.mxu0 %v49
  %55 = vmatprep.subr.bf16.mxu0 0
  %56 = vmatpush1.bf16.msra.mxu0 0
  %57 = vmatprep.subr.bf16.mxu0 0
  %58 = vmatpush1.bf16.msra.mxu0 0
  %59 = vmatprep.subr.bf16.mxu0 0
  %60 = vmatpush1.bf16.msra.mxu0 0
  %61 = vmatprep.subr.bf16.mxu0 0
  %62 = vmatpush1.bf16.msra.mxu0 0
  %63 = vmatprep.subr.bf16.mxu0 0
  %64 = vmatpush1.bf16.msra.mxu0 0
  %65 = vmatprep.subr.bf16.mxu0 0
  %66 = vmatpush1.bf16.msra.mxu0 0
  %67 = vmatprep.subr.bf16.mxu0 0
  %68 = vmatpush1.bf16.msra.mxu0 0
  %69 = vmatprep.subr.bf16.mxu0 0
  %70 = vmatpush1.bf16.msra.mxu0 0
  %71 = vmatprep.subr.bf16.mxu0 0
  %72 = vmatpush1.bf16.msra.mxu0 0
  %73 = vmatprep.subr.bf16.mxu0 0
  %74 = vmatpush1.bf16.msra.mxu0 0
  %75 = vmatprep.subr.bf16.mxu0 0
  %76 = vmatpush1.bf16.msra.mxu0 0
  %77 = vmatprep.subr.bf16.mxu0 0
  %78 = vmatpush1.bf16.msra.mxu0 0
  %79 = vmatprep.subr.bf16.mxu0 0
  %80 = vmatpush1.bf16.msra.mxu0 0
  %81 = vmatprep.subr.bf16.mxu0 0
  %82 = vmatpush1.bf16.msra.mxu0 0
  %83 = vmatprep.mubr.bf16.mxu0 0
  %84 = vmatmul.mubr.bf16.gmra.mrb[0].mxu0 %v42
  %v85 = vpop.f32.mrb[0].mxu0
  %v86 = vadd.f32 %v29, %v85
  %v87 = vpop.f32.mrb[0].mxu0
  %v88 = vpop.f32.mrb[0].mxu0
  %v89 = vadd.f32 %v29, %v88
  %v90 = vpop.f32.mrb[0].mxu0
  %91 = vmatprep.mubr.bf16.mxu0 0
  %92 = vmatmul.mubr.bf16.gmra.mrb[0].mxu0 %v45
  %v93 = vpop.f32.mrb[0].mxu0
  %v94 = vadd.f32 %v29, %v93
  %v95 = vpop.f32.mrb[0].mxu0
  %v96 = vpop.f32.mrb[0].mxu0
  %v97 = vadd.f32 %v29, %v96
  %v98 = vpop.f32.mrb[0].mxu0
  %99 = vdwg.mxu0
  %v100 = vmax.f32 %v86, 0.0
  %v101 = vmax.f32 %v89, 0.0
  %v102 = vmax.f32 %v94, 0.0
  %v103 = vmax.f32 %v97, 0.0
  %104 = vst.msk [vmem:[%s3] sm:$0xff] %vm40, %v100
  %105 = vst.msk [vmem:[%s3 + $0x8] sm:$0xff] %vm40, %v101
  %106 = vst.msk [vmem:[%s3 + $0x10] sm:$0xff] %vm40, %v102
  %107 = vst.msk [vmem:[%s3 + $0x18] sm:$0xff] %vm40, %v103
  // Predicated region
  $region14: #{_lambda_.61} parent=0 // pred_check
    _
  $region15: #{_lambda_.61} parent=0 // pred_check_branch
    %109 = sbr.rel (0) target = $region17
  $region16: #{_lambda_.61} parent=0 // pred_region
    _
  $region17: #{_lambda_.61} parent=0 // pred_fallthru
    _
  // Predicated region
  $region18: #{_lambda_.61} parent=0 // pred_check
    _
  $region19: #{_lambda_.61} parent=0 // pred_check_branch
    %111 = sbr.rel (0) target = $region21
  $region20: #{_lambda_.61} parent=0 // pred_region
    _
  $region21: #{_lambda_.61} parent=0 // pred_fallthru
    _

// kernel: _lambda_.62
$region0: #{_lambda_.62}
  #allocation0 [shape = 'u32[]', space=smem, size = 0x4, offset = 0x4, fixed_abs, tag = 'smem constant byte address 0x4 - core index']
  #allocation1 [shape = 'u32[144,128]{1,0:T(1,128)}', space=vmem, size = 0x12000, scoped, tag = 'internal scratch']
  %s0 = inlined_call_operand.vmem [shape: f32[8,3,3,24], index: 0, kind: input, shape index: {}]
  %s1 = inlined_call_operand.vmem [shape: f32[9,1,24], index: 1, kind: input, shape index: {}]
  %s2 = inlined_call_operand.vmem [shape: f32[1,24], index: 2, kind: input, shape index: {}]
  %s3 = inlined_call_operand.vmem [shape: f32[4,2,24], index: 3, kind: output, shape index: {}]
  %s4 = sld [smem:[#allocation0]]
  $region45: #{_lambda_.62} parent=0
    _
  %s6 = ssub.s32 1, %s4
  %s7 = scalar_select 0, %s6, %s4
  loop: start=0, step=1, limit=4
  $region2: #{_lambda_.62} parent=0 // loop_pre_header
    _
  $region3: #{_lambda_.62} parent=0 // loop_header
    %s9 = sphi 0, %s13
    %p10 = scmp.ge.s32.totalorder %s9, 4
    %s19 = sphi 0, %s21
    %s22 = sphi 0, %s19
    %s23 = sphi 0, %s22
    %s39 = sphi 0, %s23
    %s43 = sphi 0, %s43
    %s45 = sphi 0, %s43
    %s46 = sphi 0, %s45
    %s60 = sphi 0, %s46
    %s64 = sphi 0, %s64
    %s66 = sphi 0, %s64
    %s67 = sphi 0, %s66
    %s81 = sphi 0, %s67
    %s87 = sphi 0, %s89
    %s90 = sphi 0, %s87
    %s91 = sphi 0, %s90
    %s107 = sphi 0, %s91
  $region4: #{_lambda_.62} parent=0 // loop_header_branch
    %12 = sbr.rel (%p10) target = $region8
  $region5: #{_lambda_.62} parent=0 // loop_body
    %s14 = ssub.s32 %s9, 1
    %s15 = ssub.s32 %s9, 2
    %s16 = sadd.s32 %s9, 1
    %s17 = ssub.s32 %s9, %s16
    %p18 = scmp.eq.s32.totalorder %s17, 0
    %s20 = sadd.s32 %s19, 1
    %s21 = scalar_select %p18, %s19, %s20
    %p24 = pneg %p18
    %p25 = scmp.eq.s32.totalorder %s9, 1
    %p26 = por %p24, %p25
    %p27 = scmp.ne.s32.totalorder %s19, %s22
    %p28 = scmp.eq.s32.totalorder %s9, 0
    %p29 = por %p27, %p28
    %p30 = scmp.ne.s32.totalorder %s19, %s22
    %p31 = scmp.eq.s32.totalorder %s14, 1
    %p32 = por %p30, %p31
    %p33 = scmp.ne.s32.totalorder %s22, %s23
    %p34 = scmp.eq.s32.totalorder %s14, 0
    %p35 = por %p33, %p34
    %p36 = scmp.ne.s32.totalorder %s22, %s23
    %p37 = scmp.eq.s32.totalorder %s15, 1
    %p38 = por %p36, %p37
    %p40 = scmp.ne.s32.totalorder %s23, %s39
    %p41 = scmp.eq.s32.totalorder %s15, 0
    %p42 = por %p40, %p41
    %s44 = sadd.s32 %s43, 1
    %p47 = scmp.eq.s32.totalorder %s9, 1
    %p48 = scmp.ne.s32.totalorder %s43, %s45
    %p49 = scmp.eq.s32.totalorder %s9, 0
    %p50 = por %p48, %p49
    %p51 = scmp.ne.s32.totalorder %s43, %s45
    %p52 = scmp.eq.s32.totalorder %s14, 1
    %p53 = por %p51, %p52
    %p54 = scmp.ne.s32.totalorder %s45, %s46
    %p55 = scmp.eq.s32.totalorder %s14, 0
    %p56 = por %p54, %p55
    %p57 = scmp.ne.s32.totalorder %s45, %s46
    %p58 = scmp.eq.s32.totalorder %s15, 1
    %p59 = por %p57, %p58
    %p61 = scmp.ne.s32.totalorder %s46, %s60
    %p62 = scmp.eq.s32.totalorder %s15, 0
    %p63 = por %p61, %p62
    %s65 = sadd.s32 %s64, 1
    %p68 = scmp.eq.s32.totalorder %s9, 1
    %p69 = scmp.ne.s32.totalorder %s64, %s66
    %p70 = scmp.eq.s32.totalorder %s9, 0
    %p71 = por %p69, %p70
    %p72 = scmp.ne.s32.totalorder %s64, %s66
    %p73 = scmp.eq.s32.totalorder %s14, 1
    %p74 = por %p72, %p73
    %p75 = scmp.ne.s32.totalorder %s66, %s67
    %p76 = scmp.eq.s32.totalorder %s14, 0
    %p77 = por %p75, %p76
    %p78 = scmp.ne.s32.totalorder %s66, %s67
    %p79 = scmp.eq.s32.totalorder %s15, 1
    %p80 = por %p78, %p79
    %p82 = scmp.ne.s32.totalorder %s67, %s81
    %p83 = scmp.eq.s32.totalorder %s15, 0
    %p84 = por %p82, %p83
    %s85 = ssub.s32 %s9, %s16
    %p86 = scmp.eq.s32.totalorder %s85, 0
    %s88 = sadd.s32 %s87, 1
    %s89 = scalar_select %p86, %s87, %s88
    %p92 = pneg %p86
    %p93 = scmp.eq.s32.totalorder %s9, 1
    %p94 = por %p92, %p93
    %p95 = scmp.ne.s32.totalorder %s87, %s90
    %p96 = scmp.eq.s32.totalorder %s9, 0
    %p97 = por %p95, %p96
    %p98 = scmp.ne.s32.totalorder %s87, %s90
    %p99 = scmp.eq.s32.totalorder %s14, 1
    %p100 = por %p98, %p99
    %p101 = scmp.ne.s32.totalorder %s90, %s91
    %p102 = scmp.eq.s32.totalorder %s14, 0
    %p103 = por %p101, %p102
    %p104 = scmp.ne.s32.totalorder %s90, %s91
    %p105 = scmp.eq.s32.totalorder %s15, 1
    %p106 = por %p104, %p105
    %p108 = scmp.ne.s32.totalorder %s91, %s107
    %p109 = scmp.eq.s32.totalorder %s15, 0
    %p110 = por %p108, %p109
    %p111 = scmp.le.s32.totalorder 1, %s9
    %p112 = scmp.lt.s32.totalorder %s9, 3
    %p113 = pnand %p111, %p112
    %p114 = pneg %p113
    // Predicated region
    $region9: #{_lambda_.62} parent=5 // pred_check
      _
    $region10: #{_lambda_.62} parent=5 // pred_check_branch
      %116 = sbr.rel (%p113) target = $region12
    $region11: #{_lambda_.62} parent=5 // pred_region
      %s117 = ssub.s32 %s9, 1
      // Predicated region
      $region13: #{_lambda_.62} parent=11 // pred_check
        %p118 = pneg %p56
      $region14: #{_lambda_.62} parent=11 // pred_check_branch
        %120 = sbr.rel (%p118) target = $region16
      $region15: #{_lambda_.62} parent=11 // pred_region
        _
      $region16: #{_lambda_.62} parent=11 // pred_fallthru
        _
      // Predicated region
      $region17: #{_lambda_.62} parent=11 // pred_check
        %p121 = pneg %p77
      $region18: #{_lambda_.62} parent=11 // pred_check_branch
        %123 = sbr.rel (%p121) target = $region20
      $region19: #{_lambda_.62} parent=11 // pred_region
        _
      $region20: #{_lambda_.62} parent=11 // pred_fallthru
        _
    $region12: #{_lambda_.62} parent=5 // pred_fallthru
      _
    %p124 = scmp.lt.s32.totalorder %s9, 2
    // Predicated region
    $region21: #{_lambda_.62} parent=5 // pred_check
      %p125 = pneg %p124
    $region22: #{_lambda_.62} parent=5 // pred_check_branch
      %127 = sbr.rel (%p125) target = $region24
    $region23: #{_lambda_.62} parent=5 // pred_region
      // Predicated region
      $region25: #{_lambda_.62} parent=23 // pred_check
        %p128 = pneg %p29
      $region26: #{_lambda_.62} parent=23 // pred_check_branch
        %130 = sbr.rel (%p128) target = $region28
      $region27: #{_lambda_.62} parent=23 // pred_region
        %s131 = smul.u32 4, %s9
        %p132 = scmp.lt.s32.totalorder %s131, 7
        %s133 = scalar_select %p132, %s131, 7
        %s134 = smul.addr %s133, 3
        %s135 = smul.addr %s134, 4
        %s136 = scalar_lea.vmem %s0, %s135
        %s137 = smul.u32 4, %s9
      $region28: #{_lambda_.62} parent=23 // pred_fallthru
        _
    $region24: #{_lambda_.62} parent=5 // pred_fallthru
      _
    %p138 = scmp.le.s32.totalorder 1, %s9
    %p139 = scmp.lt.s32.totalorder %s9, 3
    %p140 = pnand %p138, %p139
    %p141 = pneg %p140
    // Predicated region
    $region29: #{_lambda_.62} parent=5 // pred_check
      _
    $region30: #{_lambda_.62} parent=5 // pred_check_branch
      %143 = sbr.rel (%p140) target = $region32
    $region31: #{_lambda_.62} parent=5 // pred_region
      %s144 = ssub.s32 %s9, 1
      %s145 = smul.u32 4, %s14
      %p146 = scmp.lt.s32.totalorder %s145, 7
      %s147 = scalar_select %p146, %s145, 7
      %s148 = smul.addr %s147, 3
      %s149 = smul.addr %s148, 4
      %s150 = scalar_lea.vmem %s0, %s149
      %p151 = pneg %p35
      %p152 = pneg %p32
      %p153 = pneg %p56
      %p154 = pneg %p53
      %p155 = pneg %p77
      %p156 = pneg %p74
      %p157 = pneg %p103
      %p158 = pneg %p100
      %s159 = smul.u32 2, %s14
      %p160 = scmp.lt.s32.totalorder %s159, 3
      %s161 = scalar_select %p160, %s159, 3
      %s162 = smul.addr %s161, 2
      %s163 = scalar_lea.vmem %s3, %s162
      %s164 = smul.u32 4, %s14
      %p165 = scmp.lt.s32.totalorder %s164, 7
      %s166 = scalar_select %p165, %s164, 7
      %s167 = smul.addr %s166, 3
      %s168 = smul.addr %s167, 4
      %s169 = scalar_lea.vmem %s0, %s168
      %s170 = smul.u32 4, %s14
      %s171 = smul.u32 2, %s14
      %p172 = scmp.lt.s32.totalorder %s171, 3
      %s173 = scalar_select %p172, %s171, 3
      %s174 = smul.addr %s173, 2
      %s175 = scalar_lea.vmem %s3, %s174
      %s176 = smul.u32 2, %s14
      %v177 = vld [vmem:[%s169] sm:$0x3]
      %v178 = vld [vmem:[%s169 + $0x4] sm:$0x3]
      %v179 = vld [vmem:[%s1] sm:$0x1]
      %v181 = vlaneseq
      %v182 = vshrl.u32 %v181, 7
      %v183 = vsub.s32 0, %v182
      %v184 = vrot.slane %v179, %v183
      %v186 = vmul.f32 %v177, %v184
      %v187 = vmul.f32 %v178, %v184
      %s188 = scalar_lea.vmem %s169, 12
      %v189 = vld [vmem:[%s188] sm:$0x3]
      %v190 = vld [vmem:[%s188 + $0x4] sm:$0x3]
      %s191 = scalar_lea.vmem %s1, 1
      %v192 = vld [vmem:[%s191] sm:$0x1]
      %v194 = vlaneseq
      %v195 = vshrl.u32 %v194, 7
      %v196 = vsub.s32 0, %v195
      %v197 = vrot.slane %v192, %v196
      %v199 = vmul.f32 %v189, %v197
      %v200 = vmul.f32 %v190, %v197
      %v201 = vadd.f32 %v186, %v199
      %v202 = vadd.f32 %v187, %v200
      %v203 = vld [vmem:[%s169 + $0x1] sm:$0x3]
      %v204 = vld [vmem:[%s169 + $0x5] sm:$0x3]
      %s205 = scalar_lea.vmem %s1, 2
      %v206 = vld [vmem:[%s205] sm:$0x1]
      %v208 = vlaneseq
      %v209 = vshrl.u32 %v208, 7
      %v210 = vsub.s32 0, %v209
      %v211 = vrot.slane %v206, %v210
      %v213 = vmul.f32 %v203, %v211
      %v214 = vmul.f32 %v204, %v211
      %v215 = vadd.f32 %v201, %v213
      %v216 = vadd.f32 %v202, %v214
      %s217 = scalar_lea.vmem %s169, 24
      %v218 = vld [vmem:[%s217] sm:$0x3]
      %v219 = vld [vmem:[%s217 + $0x4] sm:$0x3]
      %s220 = scalar_lea.vmem %s1, 3
      %v221 = vld [vmem:[%s220] sm:$0x1]
      %v223 = vlaneseq
      %v224 = vshrl.u32 %v223, 7
      %v225 = vsub.s32 0, %v224
      %v226 = vrot.slane %v221, %v225
      %v228 = vmul.f32 %v218, %v226
      %v229 = vmul.f32 %v219, %v226
      %v230 = vadd.f32 %v215, %v228
      %v231 = vadd.f32 %v216, %v229
      %s232 = scalar_lea.vmem %s169, 36
      %v233 = vld [vmem:[%s232] sm:$0x3]
      %v234 = vld [vmem:[%s232 + $0x4] sm:$0x3]
      %s235 = scalar_lea.vmem %s1, 4
      %v236 = vld [vmem:[%s235] sm:$0x1]
      %v238 = vlaneseq
      %v239 = vshrl.u32 %v238, 7
      %v240 = vsub.s32 0, %v239
      %v241 = vrot.slane %v236, %v240
      %v243 = vmul.f32 %v233, %v241
      %v244 = vmul.f32 %v234, %v241
      %v245 = vadd.f32 %v230, %v243
      %v246 = vadd.f32 %v231, %v244
      %v247 = vld [vmem:[%s217 + $0x1] sm:$0x3]
      %v248 = vld [vmem:[%s217 + $0x5] sm:$0x3]
      %s249 = scalar_lea.vmem %s1, 5
      %v250 = vld [vmem:[%s249] sm:$0x1]
      %v252 = vlaneseq
      %v253 = vshrl.u32 %v252, 7
      %v254 = vsub.s32 0, %v253
      %v255 = vrot.slane %v250, %v254
      %v257 = vmul.f32 %v247, %v255
      %v258 = vmul.f32 %v248, %v255
      %v259 = vadd.f32 %v245, %v257
      %v260 = vadd.f32 %v246, %v258
      %s261 = scalar_lea.vmem %s169, 4
      %v262 = vld [vmem:[%s261] sm:$0x3]
      %v263 = vld [vmem:[%s261 + $0x4] sm:$0x3]
      %s264 = scalar_lea.vmem %s1, 6
      %v265 = vld [vmem:[%s264] sm:$0x1]
      %v267 = vlaneseq
      %v268 = vshrl.u32 %v267, 7
      %v269 = vsub.s32 0, %v268
      %v270 = vrot.slane %v265, %v269
      %v272 = vmul.f32 %v262, %v270
      %v273 = vmul.f32 %v263, %v270
      %v274 = vadd.f32 %v259, %v272
      %v275 = vadd.f32 %v260, %v273
      %s276 = scalar_lea.vmem %s169, 16
      %v277 = vld [vmem:[%s276] sm:$0x3]
      %v278 = vld [vmem:[%s276 + $0x4] sm:$0x3]
      %s279 = scalar_lea.vmem %s1, 7
      %v280 = vld [vmem:[%s279] sm:$0x1]
      %v282 = vlaneseq
      %v283 = vshrl.u32 %v282, 7
      %v284 = vsub.s32 0, %v283
      %v285 = vrot.slane %v280, %v284
      %v287 = vmul.f32 %v277, %v285
      %v288 = vmul.f32 %v278, %v285
      %v289 = vadd.f32 %v274, %v287
      %v290 = vadd.f32 %v275, %v288
      %v291 = vld [vmem:[%s261 + $0x1] sm:$0x3]
      %v292 = vld [vmem:[%s261 + $0x5] sm:$0x3]
      %s293 = scalar_lea.vmem %s1, 8
      %v294 = vld [vmem:[%s293] sm:$0x1]
      %v296 = vlaneseq
      %v297 = vshrl.u32 %v296, 7
      %v298 = vsub.s32 0, %v297
      %v299 = vrot.slane %v294, %v298
      %v301 = vmul.f32 %v291, %v299
      %v302 = vmul.f32 %v292, %v299
      %v303 = vadd.f32 %v289, %v301
      %v304 = vadd.f32 %v290, %v302
      %v305 = vld [vmem:[%s2] sm:$0x1]
      %v307 = vlaneseq
      %v308 = vshrl.u32 %v307, 7
      %v309 = vsub.s32 0, %v308
      %v310 = vrot.slane %v305, %v309
      %v312 = vadd.f32 %v303, %v310
      %v313 = vadd.f32 %v304, %v310
      %vm314 = vcmask 189440
      %315 = vst.msk [vmem:[%s175] sm:$0x3] %vm314, %v312
      %316 = vst.msk [vmem:[%s175 + $0x2] sm:$0x3] %vm314, %v313
      %s317 = smul.u32 2, %s14
      %p318 = scmp.lt.s32.totalorder %s317, 3
      %s319 = scalar_select %p318, %s317, 3
      %s320 = smul.addr %s319, 2
      %s321 = scalar_lea.vmem %s3, %s320
      // Predicated region
      $region33: #{_lambda_.62} parent=31 // pred_check
        %p322 = pneg %p100
      $region34: #{_lambda_.62} parent=31 // pred_check_branch
        %324 = sbr.rel (%p322) target = $region36
      $region35: #{_lambda_.62} parent=31 // pred_region
        %s325 = smul.u32 2, %s14
      $region36: #{_lambda_.62} parent=31 // pred_fallthru
        _
    $region32: #{_lambda_.62} parent=5 // pred_fallthru
      _
    %p326 = scmp.le.s32.totalorder 2, %s9
    // Predicated region
    $region37: #{_lambda_.62} parent=5 // pred_check
      %p327 = pneg %p326
    $region38: #{_lambda_.62} parent=5 // pred_check_branch
      %329 = sbr.rel (%p327) target = $region40
    $region39: #{_lambda_.62} parent=5 // pred_region
      %s330 = ssub.s32 %s9, 2
      // Predicated region
      $region41: #{_lambda_.62} parent=39 // pred_check
        %p331 = pneg %p106
      $region42: #{_lambda_.62} parent=39 // pred_check_branch
        %333 = sbr.rel (%p331) target = $region44
      $region43: #{_lambda_.62} parent=39 // pred_region
        %s334 = smul.u32 2, %s15
        %p335 = scmp.lt.s32.totalorder %s334, 3
        %s336 = scalar_select %p335, %s334, 3
        %s337 = smul.addr %s336, 2
        %s338 = scalar_lea.vmem %s3, %s337
      $region44: #{_lambda_.62} parent=39 // pred_fallthru
        _
    $region40: #{_lambda_.62} parent=5 // pred_fallthru
      _
  $region6: #{_lambda_.62} parent=0 // loop_footer
    %s13 = sadd.s32 1, %s9
  $region7: #{_lambda_.62} parent=0 // loop_footer_branch
    %8 = sbr.rel target = $region3
  $region8: #{_lambda_.62} parent=0 // loop_exit
    _

// kernel: _lambda_.57
$region0: #{_lambda_.57}
  #allocation0 [shape = 'u32[]', space=smem, size = 0x4, offset = 0x4, fixed_abs, tag = 'smem constant byte address 0x4 - core index']
  #allocation1 [shape = 'u32[144,128]{1,0:T(1,128)}', space=vmem, size = 0x12000, scoped, tag = 'internal scratch']
  %s0 = inlined_call_operand.vmem [shape: f32[9,128,4], index: 0, kind: input, shape index: {}]
  %s1 = inlined_call_operand.vmem [shape: bf16[9,4,24], index: 1, kind: input, shape index: {}]
  %s2 = inlined_call_operand.vmem [shape: f32[1,24], index: 2, kind: input, shape index: {}]
  %s3 = inlined_call_operand.vmem [shape: f32[128,24], index: 3, kind: output, shape index: {}]
  %s4 = sld [smem:[#allocation0]]
  $region22: #{_lambda_.57} parent=0
    _
  %s6 = ssub.s32 1, %s4
  %s7 = scalar_select 0, %s6, %s4
  // Predicated region
  $region2: #{_lambda_.57} parent=0 // pred_check
    _
  $region3: #{_lambda_.57} parent=0 // pred_check_branch
    %9 = sbr.rel (0) target = $region5
  $region4: #{_lambda_.57} parent=0 // pred_region
    _
  $region5: #{_lambda_.57} parent=0 // pred_fallthru
    _
  // Predicated region
  $region6: #{_lambda_.57} parent=0 // pred_check
    _
  $region7: #{_lambda_.57} parent=0 // pred_check_branch
    %11 = sbr.rel (0) target = $region9
  $region8: #{_lambda_.57} parent=0 // pred_region
    _
  $region9: #{_lambda_.57} parent=0 // pred_fallthru
    _
  // Predicated region
  $region10: #{_lambda_.57} parent=0 // pred_check
    _
  $region11: #{_lambda_.57} parent=0 // pred_check_branch
    %13 = sbr.rel (0) target = $region13
  $region12: #{_lambda_.57} parent=0 // pred_region
    _
  $region13: #{_lambda_.57} parent=0 // pred_fallthru
    _
  %v15 = vld [vmem:[%s0] sm:$0xff]
  %v16 = vld [vmem:[%s0 + $0x8] sm:$0xff]
  %v17 = vld [vmem:[%s0 + $0x10] sm:$0xff]
  %v18 = vld [vmem:[%s0 + $0x18] sm:$0xff]
  %v19 = vld [vmem:[%s0 + $0x20] sm:$0xff]
  %v20 = vld [vmem:[%s0 + $0x28] sm:$0xff]
  %v21 = vld [vmem:[%s0 + $0x30] sm:$0xff]
  %v22 = vld [vmem:[%s0 + $0x38] sm:$0xff]
  %v23 = vld [vmem:[%s0 + $0x40] sm:$0xff]
  %v24 = vld [vmem:[%s0 + $0x48] sm:$0xff]
  %v25 = vld [vmem:[%s0 + $0x50] sm:$0xff]
  %v26 = vld [vmem:[%s0 + $0x58] sm:$0xff]
  %v27 = vld [vmem:[%s0 + $0x60] sm:$0xff]
  %v28 = vld [vmem:[%s0 + $0x68] sm:$0xff]
  %v29 = vld [vmem:[%s0 + $0x70] sm:$0xff]
  %v30 = vld [vmem:[%s0 + $0x78] sm:$0xff]
  %v31 = vpack.c.bf16 %v16, %v15
  %v32 = vpack.c.bf16 %v18, %v17
  %v33 = vpack.c.bf16 %v20, %v19
  %v34 = vpack.c.bf16 %v22, %v21
  %v35 = vpack.c.bf16 %v24, %v23
  %v36 = vpack.c.bf16 %v26, %v25
  %v37 = vpack.c.bf16 %v28, %v27
  %v38 = vpack.c.bf16 %v30, %v29
  %v39 = vld [vmem:[%s1] sm:$0x3]
  %s40 = scalar_lea.vmem %s0, 128
  %v41 = vld [vmem:[%s40] sm:$0xff]
  %v42 = vld [vmem:[%s40 + $0x8] sm:$0xff]
  %v43 = vld [vmem:[%s40 + $0x10] sm:$0xff]
  %v44 = vld [vmem:[%s40 + $0x18] sm:$0xff]
  %v45 = vld [vmem:[%s40 + $0x20] sm:$0xff]
  %v46 = vld [vmem:[%s40 + $0x28] sm:$0xff]
  %v47 = vld [vmem:[%s40 + $0x30] sm:$0xff]
  %v48 = vld [vmem:[%s40 + $0x38] sm:$0xff]
  %v49 = vld [vmem:[%s40 + $0x40] sm:$0xff]
  %v50 = vld [vmem:[%s40 + $0x48] sm:$0xff]
  %v51 = vld [vmem:[%s40 + $0x50] sm:$0xff]
  %v52 = vld [vmem:[%s40 + $0x58] sm:$0xff]
  %v53 = vld [vmem:[%s40 + $0x60] sm:$0xff]
  %v54 = vld [vmem:[%s40 + $0x68] sm:$0xff]
  %v55 = vld [vmem:[%s40 + $0x70] sm:$0xff]
  %v56 = vld [vmem:[%s40 + $0x78] sm:$0xff]
  %v57 = vpack.c.bf16 %v42, %v41
  %v58 = vpack.c.bf16 %v44, %v43
  %v59 = vpack.c.bf16 %v46, %v45
  %v60 = vpack.c.bf16 %v48, %v47
  %v61 = vpack.c.bf16 %v50, %v49
  %v62 = vpack.c.bf16 %v52, %v51
  %v63 = vpack.c.bf16 %v54, %v53
  %v64 = vpack.c.bf16 %v56, %v55
  %s65 = scalar_lea.vmem %s1, 2
  %v66 = vld [vmem:[%s65] sm:$0x3]
  %vm67 = vcmask 31744
  %v69 = vsel %vm67, %v57, 0
  %v72 = vsel %vm67, %v58, 0
  %v75 = vsel %vm67, %v59, 0
  %v78 = vsel %vm67, %v60, 0
  %v81 = vsel %vm67, %v61, 0
  %v84 = vsel %vm67, %v62, 0
  %v87 = vsel %vm67, %v63, 0
  %v90 = vsel %vm67, %v64, 0
  %vm92 = vcmask 1041408
  %v94 = vsel %vm92, %v66, 0
  %96 = vmatprep.subr.bf16.mxu0 0
  %97 = vmatpush1.bf16.msra.mxu0 %v94
  %98 = vmatprep.subr.bf16.mxu0 0
  %99 = vmatpush1.bf16.msra.mxu0 0
  %100 = vmatprep.subr.bf16.mxu0 0
  %101 = vmatpush1.bf16.msra.mxu0 0
  %102 = vmatprep.subr.bf16.mxu0 0
  %103 = vmatpush1.bf16.msra.mxu0 0
  %104 = vmatprep.subr.bf16.mxu0 0
  %105 = vmatpush1.bf16.msra.mxu0 0
  %106 = vmatprep.subr.bf16.mxu0 0
  %107 = vmatpush1.bf16.msra.mxu0 0
  %108 = vmatprep.subr.bf16.mxu0 0
  %109 = vmatpush1.bf16.msra.mxu0 0
  %110 = vmatprep.subr.bf16.mxu0 0
  %111 = vmatpush1.bf16.msra.mxu0 0
  %112 = vmatprep.subr.bf16.mxu0 0
  %113 = vmatpush1.bf16.msra.mxu0 0
  %114 = vmatprep.subr.bf16.mxu0 0
  %115 = vmatpush1.bf16.msra.mxu0 0
  %116 = vmatprep.subr.bf16.mxu0 0
  %117 = vmatpush1.bf16.msra.mxu0 0
  %118 = vmatprep.subr.bf16.mxu0 0
  %119 = vmatpush1.bf16.msra.mxu0 0
  %120 = vmatprep.subr.bf16.mxu0 0
  %121 = vmatpush1.bf16.msra.mxu0 0
  %122 = vmatprep.subr.bf16.mxu0 0
  %123 = vmatpush1.bf16.msra.mxu0 0
  %124 = vmatprep.subr.bf16.mxu0 0
  %125 = vmatpush1.bf16.msra.mxu0 0
  %126 = vmatprep.subr.bf16.mxu0 0
  %127 = vmatpush1.bf16.msra.mxu0 0
  %128 = vmatprep.mubr.bf16.mxu0 0
  %129 = vmatmul.mubr.bf16.gmra.mrb[0].mxu0 %v69
  %v130 = vpop.f32.mrb[0].mxu0
  %v131 = vadd.f32 0.0, %v130
  %v132 = vpop.f32.mrb[0].mxu0
  %v133 = vpop.f32.mrb[0].mxu0
  %v134 = vadd.f32 0.0, %v133
  %v135 = vpop.f32.mrb[0].mxu0
  %136 = vmatprep.mubr.bf16.mxu0 0
  %137 = vmatmul.mubr.bf16.gmra.mrb[0].mxu0 %v72
  %v138 = vpop.f32.mrb[0].mxu0
  %v139 = vadd.f32 0.0, %v138
  %v140 = vpop.f32.mrb[0].mxu0
  %v141 = vpop.f32.mrb[0].mxu0
  %v142 = vadd.f32 0.0, %v141
  %v143 = vpop.f32.mrb[0].mxu0
  %144 = vmatprep.mubr.bf16.mxu0 0
  %145 = vmatmul.mubr.bf16.gmra.mrb[0].mxu0 %v75
  %v146 = vpop.f32.mrb[0].mxu0
  %v147 = vadd.f32 0.0, %v146
  %v148 = vpop.f32.mrb[0].mxu0
  %v149 = vpop.f32.mrb[0].mxu0
  %v150 = vadd.f32 0.0, %v149
  %v151 = vpop.f32.mrb[0].mxu0
  %152 = vmatprep.mubr.bf16.mxu0 0
  %153 = vmatmul.mubr.bf16.gmra.mrb[0].mxu0 %v78
  %v154 = vpop.f32.mrb[0].mxu0
  %v155 = vadd.f32 0.0, %v154
  %v156 = vpop.f32.mrb[0].mxu0
  %v157 = vpop.f32.mrb[0].mxu0
  %v158 = vadd.f32 0.0, %v157
  %v159 = vpop.f32.mrb[0].mxu0
  %160 = vmatprep.mubr.bf16.mxu0 0
  %161 = vmatmul.mubr.bf16.gmra.mrb[0].mxu0 %v81
  %v162 = vpop.f32.mrb[0].mxu0
  %v163 = vadd.f32 0.0, %v162
  %v164 = vpop.f32.mrb[0].mxu0
  %v165 = vpop.f32.mrb[0].mxu0
  %v166 = vadd.f32 0.0, %v165
  %v167 = vpop.f32.mrb[0].mxu0
  %168 = vmatprep.mubr.bf16.mxu0 0
  %169 = vmatmul.mubr.bf16.gmra.mrb[0].mxu0 %v84
  %v170 = vpop.f32.mrb[0].mxu0
  %v171 = vadd.f32 0.0, %v170
  %v172 = vpop.f32.mrb[0].mxu0
  %v173 = vpop.f32.mrb[0].mxu0
  %v174 = vadd.f32 0.0, %v173
  %v175 = vpop.f32.mrb[0].mxu0
  %176 = vmatprep.mubr.bf16.mxu0 0
  %177 = vmatmul.mubr.bf16.gmra.mrb[0].mxu0 %v87
  %v178 = vpop.f32.mrb[0].mxu0
  %v179 = vadd.f32 0.0, %v178
  %v180 = vpop.f32.mrb[0].mxu0
  %v181 = vpop.f32.mrb[0].mxu0
  %v182 = vadd.f32 0.0, %v181
  %v183 = vpop.f32.mrb[0].mxu0
  %184 = vmatprep.mubr.bf16.mxu0 0
  %185 = vmatmul.mubr.bf16.gmra.mrb[0].mxu0 %v90
  %v186 = vpop.f32.mrb[0].mxu0
  %v187 = vadd.f32 0.0, %v186
  %v188 = vpop.f32.mrb[0].mxu0
  %v189 = vpop.f32.mrb[0].mxu0
  %v190 = vadd.f32 0.0, %v189
  %v191 = vpop.f32.mrb[0].mxu0
  %192 = vdwg.mxu0
  %v194 = vsel %vm67, %v31, 0
  %v197 = vsel %vm67, %v32, 0
  %v200 = vsel %vm67, %v33, 0
  %v203 = vsel %vm67, %v34, 0
  %v206 = vsel %vm67, %v35, 0
  %v209 = vsel %vm67, %v36, 0
  %v212 = vsel %vm67, %v37, 0
  %v215 = vsel %vm67, %v38, 0
  %v218 = vsel %vm92, %v39, 0
  %220 = vmatprep.subr.bf16.mxu0 0
  %221 = vmatpush1.bf16.msra.mxu0 %v218
  %222 = vmatprep.subr.bf16.mxu0 0
  %223 = vmatpush1.bf16.msra.mxu0 0
  %224 = vmatprep.subr.bf16.mxu0 0
  %225 = vmatpush1.bf16.msra.mxu0 0
  %226 = vmatprep.subr.bf16.mxu0 0
  %227 = vmatpush1.bf16.msra.mxu0 0
  %228 = vmatprep.subr.bf16.mxu0 0
  %229 = vmatpush1.bf16.msra.mxu0 0
  %230 = vmatprep.subr.bf16.mxu0 0
  %231 = vmatpush1.bf16.msra.mxu0 0
  %232 = vmatprep.subr.bf16.mxu0 0
  %233 = vmatpush1.bf16.msra.mxu0 0
  %234 = vmatprep.subr.bf16.mxu0 0
  %235 = vmatpush1.bf16.msra.mxu0 0
  %236 = vmatprep.subr.bf16.mxu0 0
  %237 = vmatpush1.bf16.msra.mxu0 0
  %238 = vmatprep.subr.bf16.mxu0 0
  %239 = vmatpush1.bf16.msra.mxu0 0
  %240 = vmatprep.subr.bf16.mxu0 0
  %241 = vmatpush1.bf16.msra.mxu0 0
  %242 = vmatprep.subr.bf16.mxu0 0
  %243 = vmatpush1.bf16.msra.mxu0 0
  %244 = vmatprep.subr.bf16.mxu0 0
  %245 = vmatpush1.bf16.msra.mxu0 0
  %246 = vmatprep.subr.bf16.mxu0 0
  %247 = vmatpush1.bf16.msra.mxu0 0
  %248 = vmatprep.subr.bf16.mxu0 0
  %249 = vmatpush1.bf16.msra.mxu0 0
  %250 = vmatprep.subr.bf16.mxu0 0
  %251 = vmatpush1.bf16.msra.mxu0 0
  %252 = vmatprep.mubr.bf16.mxu0 0
  %253 = vmatmul.mubr.bf16.gmra.mrb[0].mxu0 %v194
  %v254 = vpop.f32.mrb[0].mxu0
  %v255 = vadd.f32 %v131, %v254
  %v256 = vpop.f32.mrb[0].mxu0
  %v257 = vpop.f32.mrb[0].mxu0
  %v258 = vadd.f32 %v134, %v257
  %v259 = vpop.f32.mrb[0].mxu0
  %260 = vmatprep.mubr.bf16.mxu0 0
  %261 = vmatmul.mubr.bf16.gmra.mrb[0].mxu0 %v197
  %v262 = vpop.f32.mrb[0].mxu0
  %v263 = vadd.f32 %v139, %v262
  %v264 = vpop.f32.mrb[0].mxu0
  %v265 = vpop.f32.mrb[0].mxu0
  %v266 = vadd.f32 %v142, %v265
  %v267 = vpop.f32.mrb[0].mxu0
  %268 = vmatprep.mubr.bf16.mxu0 0
  %269 = vmatmul.mubr.bf16.gmra.mrb[0].mxu0 %v200
  %v270 = vpop.f32.mrb[0].mxu0
  %v271 = vadd.f32 %v147, %v270
  %v272 = vpop.f32.mrb[0].mxu0
  %v273 = vpop.f32.mrb[0].mxu0
  %v274 = vadd.f32 %v150, %v273
  %v275 = vpop.f32.mrb[0].mxu0
  %276 = vmatprep.mubr.bf16.mxu0 0
  %277 = vmatmul.mubr.bf16.gmra.mrb[0].mxu0 %v203
  %v278 = vpop.f32.mrb[0].mxu0
  %v279 = vadd.f32 %v155, %v278
  %v280 = vpop.f32.mrb[0].mxu0
  %v281 = vpop.f32.mrb[0].mxu0
  %v282 = vadd.f32 %v158, %v281
  %v283 = vpop.f32.mrb[0].mxu0
  %284 = vmatprep.mubr.bf16.mxu0 0
  %285 = vmatmul.mubr.bf16.gmra.mrb[0].mxu0 %v206
  %v286 = vpop.f32.mrb[0].mxu0
  %v287 = vadd.f32 %v163, %v286
  %v288 = vpop.f32.mrb[0].mxu0
  %v289 = vpop.f32.mrb[0].mxu0
  %v290 = vadd.f32 %v166, %v289
  %v291 = vpop.f32.mrb[0].mxu0
  %292 = vmatprep.mubr.bf16.mxu0 0
  %293 = vmatmul.mubr.bf16.gmra.mrb[0].mxu0 %v209
  %v294 = vpop.f32.mrb[0].mxu0
  %v295 = vadd.f32 %v171, %v294
  %v296 = vpop.f32.mrb[0].mxu0
  %v297 = vpop.f32.mrb[0].mxu0
  %v298 = vadd.f32 %v174, %v297
  %v299 = vpop.f32.mrb[0].mxu0
  %300 = vmatprep.mubr.bf16.mxu0 0
  %301 = vmatmul.mubr.bf16.gmra.mrb[0].mxu0 %v212
  %v302 = vpop.f32.mrb[0].mxu0
  %v303 = vadd.f32 %v179, %v302
  %v304 = vpop.f32.mrb[0].mxu0
  %v305 = vpop.f32.mrb[0].mxu0
  %v306 = vadd.f32 %v182, %v305
  %v307 = vpop.f32.mrb[0].mxu0
  %308 = vmatprep.mubr.bf16.mxu0 0
  %309 = vmatmul.mubr.bf16.gmra.mrb[0].mxu0 %v215
  %v310 = vpop.f32.mrb[0].mxu0
  %v311 = vadd.f32 %v187, %v310
  %v312 = vpop.f32.mrb[0].mxu0
  %v313 = vpop.f32.mrb[0].mxu0
  %v314 = vadd.f32 %v190, %v313
  %v315 = vpop.f32.mrb[0].mxu0
  %316 = vdwg.mxu0
  %s317 = scalar_lea.vmem %s0, 256
  %v318 = vld [vmem:[%s317] sm:$0xff]
  %v319 = vld [vmem:[%s317 + $0x8] sm:$0xff]
  %v320 = vld [vmem:[%s317 + $0x10] sm:$0xff]
  %v321 = vld [vmem:[%s317 + $0x18] sm:$0xff]
  %v322 = vld [vmem:[%s317 + $0x20] sm:$0xff]
  %v323 = vld [vmem:[%s317 + $0x28] sm:$0xff]
  %v324 = vld [vmem:[%s317 + $0x30] sm:$0xff]
  %v325 = vld [vmem:[%s317 + $0x38] sm:$0xff]
  %v326 = vld [vmem:[%s317 + $0x40] sm:$0xff]
  %v327 = vld [vmem:[%s317 + $0x48] sm:$0xff]
  %v328 = vld [vmem:[%s317 + $0x50] sm:$0xff]
  %v329 = vld [vmem:[%s317 + $0x58] sm:$0xff]
  %v330 = vld [vmem:[%s317 + $0x60] sm:$0xff]
  %v331 = vld [vmem:[%s317 + $0x68] sm:$0xff]
  %v332 = vld [vmem:[%s317 + $0x70] sm:$0xff]
  %v333 = vld [vmem:[%s317 + $0x78] sm:$0xff]
  %v334 = vpack.c.bf16 %v319, %v318
  %v335 = vpack.c.bf16 %v321, %v320
  %v336 = vpack.c.bf16 %v323, %v322
  %v337 = vpack.c.bf16 %v325, %v324
  %v338 = vpack.c.bf16 %v327, %v326
  %v339 = vpack.c.bf16 %v329, %v328
  %v340 = vpack.c.bf16 %v331, %v330
  %v341 = vpack.c.bf16 %v333, %v332
  %s342 = scalar_lea.vmem %s1, 4
  %v343 = vld [vmem:[%s342] sm:$0x3]
  %v345 = vsel %vm67, %v334, 0
  %v348 = vsel %vm67, %v335, 0
  %v351 = vsel %vm67, %v336, 0
  %v354 = vsel %vm67, %v337, 0
  %v357 = vsel %vm67, %v338, 0
  %v360 = vsel %vm67, %v339, 0
  %v363 = vsel %vm67, %v340, 0
  %v366 = vsel %vm67, %v341, 0
  %v369 = vsel %vm92, %v343, 0
  %371 = vmatprep.subr.bf16.mxu0 0
  %372 = vmatpush1.bf16.msra.mxu0 %v369
  %373 = vmatprep.subr.bf16.mxu0 0
  %374 = vmatpush1.bf16.msra.mxu0 0
  %375 = vmatprep.subr.bf16.mxu0 0
  %376 = vmatpush1.bf16.msra.mxu0 0
  %377 = vmatprep.subr.bf16.mxu0 0
  %378 = vmatpush1.bf16.msra.mxu0 0
  %379 = vmatprep.subr.bf16.mxu0 0
  %380 = vmatpush1.bf16.msra.mxu0 0
  %381 = vmatprep.subr.bf16.mxu0 0
  %382 = vmatpush1.bf16.msra.mxu0 0
  %383 = vmatprep.subr.bf16.mxu0 0
  %384 = vmatpush1.bf16.msra.mxu0 0
  %385 = vmatprep.subr.bf16.mxu0 0
  %386 = vmatpush1.bf16.msra.mxu0 0
  %387 = vmatprep.subr.bf16.mxu0 0
  %388 = vmatpush1.bf16.msra.mxu0 0
  %389 = vmatprep.subr.bf16.mxu0 0
  %390 = vmatpush1.bf16.msra.mxu0 0
  %391 = vmatprep.subr.bf16.mxu0 0
  %392 = vmatpush1.bf16.msra.mxu0 0
  %393 = vmatprep.subr.bf16.mxu0 0
  %394 = vmatpush1.bf16.msra.mxu0 0
  %395 = vmatprep.subr.bf16.mxu0 0
  %396 = vmatpush1.bf16.msra.mxu0 0
  %397 = vmatprep.subr.bf16.mxu0 0
  %398 = vmatpush1.bf16.msra.mxu0 0
  %399 = vmatprep.subr.bf16.mxu0 0
  %400 = vmatpush1.bf16.msra.mxu0 0
  %401 = vmatprep.subr.bf16.mxu0 0
  %402 = vmatpush1.bf16.msra.mxu0 0
  %403 = vmatprep.mubr.bf16.mxu0 0
  %404 = vmatmul.mubr.bf16.gmra.mrb[0].mxu0 %v345
  %v405 = vpop.f32.mrb[0].mxu0
  %v406 = vadd.f32 0.0, %v405
  %v407 = vpop.f32.mrb[0].mxu0
  %v408 = vpop.f32.mrb[0].mxu0
  %v409 = vadd.f32 0.0, %v408
  %v410 = vpop.f32.mrb[0].mxu0
  %411 = vmatprep.mubr.bf16.mxu0 0
  %412 = vmatmul.mubr.bf16.gmra.mrb[0].mxu0 %v348
  %v413 = vpop.f32.mrb[0].mxu0
  %v414 = vadd.f32 0.0, %v413
  %v415 = vpop.f32.mrb[0].mxu0
  %v416 = vpop.f32.mrb[0].mxu0
  %v417 = vadd.f32 0.0, %v416
  %v418 = vpop.f32.mrb[0].mxu0
  %419 = vmatprep.mubr.bf16.mxu0 0
  %420 = vmatmul.mubr.bf16.gmra.mrb[0].mxu0 %v351
  %v421 = vpop.f32.mrb[0].mxu0
  %v422 = vadd.f32 0.0, %v421
  %v423 = vpop.f32.mrb[0].mxu0
  %v424 = vpop.f32.mrb[0].mxu0
  %v425 = vadd.f32 0.0, %v424
  %v426 = vpop.f32.mrb[0].mxu0
  %427 = vmatprep.mubr.bf16.mxu0 0
  %428 = vmatmul.mubr.bf16.gmra.mrb[0].mxu0 %v354
  %v429 = vpop.f32.mrb[0].mxu0
  %v430 = vadd.f32 0.0, %v429
  %v431 = vpop.f32.mrb[0].mxu0
  %v432 = vpop.f32.mrb[0].mxu0
  %v433 = vadd.f32 0.0, %v432
  %v434 = vpop.f32.mrb[0].mxu0
  %435 = vmatprep.mubr.bf16.mxu0 0
  %436 = vmatmul.mubr.bf16.gmra.mrb[0].mxu0 %v357
  %v437 = vpop.f32.mrb[0].mxu0
  %v438 = vadd.f32 0.0, %v437
  %v439 = vpop.f32.mrb[0].mxu0
  %v440 = vpop.f32.mrb[0].mxu0
  %v441 = vadd.f32 0.0, %v440
  %v442 = vpop.f32.mrb[0].mxu0
  %443 = vmatprep.mubr.bf16.mxu0 0
  %444 = vmatmul.mubr.bf16.gmra.mrb[0].mxu0 %v360
  %v445 = vpop.f32.mrb[0].mxu0
  %v446 = vadd.f32 0.0, %v445
  %v447 = vpop.f32.mrb[0].mxu0
  %v448 = vpop.f32.mrb[0].mxu0
  %v449 = vadd.f32 0.0, %v448
  %v450 = vpop.f32.mrb[0].mxu0
  %451 = vmatprep.mubr.bf16.mxu0 0
  %452 = vmatmul.mubr.bf16.gmra.mrb[0].mxu0 %v363
  %v453 = vpop.f32.mrb[0].mxu0
  %v454 = vadd.f32 0.0, %v453
  %v455 = vpop.f32.mrb[0].mxu0
  %v456 = vpop.f32.mrb[0].mxu0
  %v457 = vadd.f32 0.0, %v456
  %v458 = vpop.f32.mrb[0].mxu0
  %459 = vmatprep.mubr.bf16.mxu0 0
  %460 = vmatmul.mubr.bf16.gmra.mrb[0].mxu0 %v366
  %v461 = vpop.f32.mrb[0].mxu0
  %v462 = vadd.f32 0.0, %v461
  %v463 = vpop.f32.mrb[0].mxu0
  %v464 = vpop.f32.mrb[0].mxu0
  %v465 = vadd.f32 0.0, %v464
  %v466 = vpop.f32.mrb[0].mxu0
  %467 = vdwg.mxu0
  %v468 = vadd.f32 %v255, %v406
  %v469 = vadd.f32 %v258, %v409
  %v470 = vadd.f32 %v263, %v414
  %v471 = vadd.f32 %v266, %v417
  %v472 = vadd.f32 %v271, %v422
  %v473 = vadd.f32 %v274, %v425
  %v474 = vadd.f32 %v279, %v430
  %v475 = vadd.f32 %v282, %v433
  %v476 = vadd.f32 %v287, %v438
  %v477 = vadd.f32 %v290, %v441
  %v478 = vadd.f32 %v295, %v446
  %v479 = vadd.f32 %v298, %v449
  %v480 = vadd.f32 %v303, %v454
  %v481 = vadd.f32 %v306, %v457
  %v482 = vadd.f32 %v311, %v462
  %v483 = vadd.f32 %v314, %v465
  %s484 = scalar_lea.vmem %s0, 384
  %v485 = vld [vmem:[%s484] sm:$0xff]
  %v486 = vld [vmem:[%s484 + $0x8] sm:$0xff]
  %v487 = vld [vmem:[%s484 + $0x10] sm:$0xff]
  %v488 = vld [vmem:[%s484 + $0x18] sm:$0xff]
  %v489 = vld [vmem:[%s484 + $0x20] sm:$0xff]
  %v490 = vld [vmem:[%s484 + $0x28] sm:$0xff]
  %v491 = vld [vmem:[%s484 + $0x30] sm:$0xff]
  %v492 = vld [vmem:[%s484 + $0x38] sm:$0xff]
  %v493 = vld [vmem:[%s484 + $0x40] sm:$0xff]
  %v494 = vld [vmem:[%s484 + $0x48] sm:$0xff]
  %v495 = vld [vmem:[%s484 + $0x50] sm:$0xff]
  %v496 = vld [vmem:[%s484 + $0x58] sm:$0xff]
  %v497 = vld [vmem:[%s484 + $0x60] sm:$0xff]
  %v498 = vld [vmem:[%s484 + $0x68] sm:$0xff]
  %v499 = vld [vmem:[%s484 + $0x70] sm:$0xff]
  %v500 = vld [vmem:[%s484 + $0x78] sm:$0xff]
  %v501 = vpack.c.bf16 %v486, %v485
  %v502 = vpack.c.bf16 %v488, %v487
  %v503 = vpack.c.bf16 %v490, %v489
  %v504 = vpack.c.bf16 %v492, %v491
  %v505 = vpack.c.bf16 %v494, %v493
  %v506 = vpack.c.bf16 %v496, %v495
  %v507 = vpack.c.bf16 %v498, %v497
  %v508 = vpack.c.bf16 %v500, %v499
  %s509 = scalar_lea.vmem %s1, 6
  %v510 = vld [vmem:[%s509] sm:$0x3]
  %v512 = vsel %vm67, %v501, 0
  %v515 = vsel %vm67, %v502, 0
  %v518 = vsel %vm67, %v503, 0
  %v521 = vsel %vm67, %v504, 0
  %v524 = vsel %vm67, %v505, 0
  %v527 = vsel %vm67, %v506, 0
  %v530 = vsel %vm67, %v507, 0
  %v533 = vsel %vm67, %v508, 0
  %v536 = vsel %vm92, %v510, 0
  %538 = vmatprep.subr.bf16.mxu0 0
  %539 = vmatpush1.bf16.msra.mxu0 %v536
  %540 = vmatprep.subr.bf16.mxu0 0
  %541 = vmatpush1.bf16.msra.mxu0 0
  %542 = vmatprep.subr.bf16.mxu0 0
  %543 = vmatpush1.bf16.msra.mxu0 0
  %544 = vmatprep.subr.bf16.mxu0 0
  %545 = vmatpush1.bf16.msra.mxu0 0
  %546 = vmatprep.subr.bf16.mxu0 0
  %547 = vmatpush1.bf16.msra.mxu0 0
  %548 = vmatprep.subr.bf16.mxu0 0
  %549 = vmatpush1.bf16.msra.mxu0 0
  %550 = vmatprep.subr.bf16.mxu0 0
  %551 = vmatpush1.bf16.msra.mxu0 0
  %552 = vmatprep.subr.bf16.mxu0 0
  %553 = vmatpush1.bf16.msra.mxu0 0
  %554 = vmatprep.subr.bf16.mxu0 0
  %555 = vmatpush1.bf16.msra.mxu0 0
  %556 = vmatprep.subr.bf16.mxu0 0
  %557 = vmatpush1.bf16.msra.mxu0 0
  %558 = vmatprep.subr.bf16.mxu0 0
  %559 = vmatpush1.bf16.msra.mxu0 0
  %560 = vmatprep.subr.bf16.mxu0 0
  %561 = vmatpush1.bf16.msra.mxu0 0
  %562 = vmatprep.subr.bf16.mxu0 0
  %563 = vmatpush1.bf16.msra.mxu0 0
  %564 = vmatprep.subr.bf16.mxu0 0
  %565 = vmatpush1.bf16.msra.mxu0 0
  %566 = vmatprep.subr.bf16.mxu0 0
  %567 = vmatpush1.bf16.msra.mxu0 0
  %568 = vmatprep.subr.bf16.mxu0 0
  %569 = vmatpush1.bf16.msra.mxu0 0
  %570 = vmatprep.mubr.bf16.mxu0 0
  %571 = vmatmul.mubr.bf16.gmra.mrb[0].mxu0 %v512
  %v572 = vpop.f32.mrb[0].mxu0
  %v573 = vadd.f32 0.0, %v572
  %v574 = vpop.f32.mrb[0].mxu0
  %v575 = vpop.f32.mrb[0].mxu0
  %v576 = vadd.f32 0.0, %v575
  %v577 = vpop.f32.mrb[0].mxu0
  %578 = vmatprep.mubr.bf16.mxu0 0
  %579 = vmatmul.mubr.bf16.gmra.mrb[0].mxu0 %v515
  %v580 = vpop.f32.mrb[0].mxu0
  %v581 = vadd.f32 0.0, %v580
  %v582 = vpop.f32.mrb[0].mxu0
  %v583 = vpop.f32.mrb[0].mxu0
  %v584 = vadd.f32 0.0, %v583
  %v585 = vpop.f32.mrb[0].mxu0
  %586 = vmatprep.mubr.bf16.mxu0 0
  %587 = vmatmul.mubr.bf16.gmra.mrb[0].mxu0 %v518
  %v588 = vpop.f32.mrb[0].mxu0
  %v589 = vadd.f32 0.0, %v588
  %v590 = vpop.f32.mrb[0].mxu0
  %v591 = vpop.f32.mrb[0].mxu0
  %v592 = vadd.f32 0.0, %v591
  %v593 = vpop.f32.mrb[0].mxu0
  %594 = vmatprep.mubr.bf16.mxu0 0
  %595 = vmatmul.mubr.bf16.gmra.mrb[0].mxu0 %v521
  %v596 = vpop.f32.mrb[0].mxu0
  %v597 = vadd.f32 0.0, %v596
  %v598 = vpop.f32.mrb[0].mxu0
  %v599 = vpop.f32.mrb[0].mxu0
  %v600 = vadd.f32 0.0, %v599
  %v601 = vpop.f32.mrb[0].mxu0
  %602 = vmatprep.mubr.bf16.mxu0 0
  %603 = vmatmul.mubr.bf16.gmra.mrb[0].mxu0 %v524
  %v604 = vpop.f32.mrb[0].mxu0
  %v605 = vadd.f32 0.0, %v604
  %v606 = vpop.f32.mrb[0].mxu0
  %v607 = vpop.f32.mrb[0].mxu0
  %v608 = vadd.f32 0.0, %v607
  %v609 = vpop.f32.mrb[0].mxu0
  %610 = vmatprep.mubr.bf16.mxu0 0
  %611 = vmatmul.mubr.bf16.gmra.mrb[0].mxu0 %v527
  %v612 = vpop.f32.mrb[0].mxu0
  %v613 = vadd.f32 0.0, %v612
  %v614 = vpop.f32.mrb[0].mxu0
  %v615 = vpop.f32.mrb[0].mxu0
  %v616 = vadd.f32 0.0, %v615
  %v617 = vpop.f32.mrb[0].mxu0
  %618 = vmatprep.mubr.bf16.mxu0 0
  %619 = vmatmul.mubr.bf16.gmra.mrb[0].mxu0 %v530
  %v620 = vpop.f32.mrb[0].mxu0
  %v621 = vadd.f32 0.0, %v620
  %v622 = vpop.f32.mrb[0].mxu0
  %v623 = vpop.f32.mrb[0].mxu0
  %v624 = vadd.f32 0.0, %v623
  %v625 = vpop.f32.mrb[0].mxu0
  %626 = vmatprep.mubr.bf16.mxu0 0
  %627 = vmatmul.mubr.bf16.gmra.mrb[0].mxu0 %v533
  %v628 = vpop.f32.mrb[0].mxu0
  %v629 = vadd.f32 0.0, %v628
  %v630 = vpop.f32.mrb[0].mxu0
  %v631 = vpop.f32.mrb[0].mxu0
  %v632 = vadd.f32 0.0, %v631
  %v633 = vpop.f32.mrb[0].mxu0
  %634 = vdwg.mxu0
  %v635 = vadd.f32 %v468, %v573
  %v636 = vadd.f32 %v469, %v576
  %v637 = vadd.f32 %v470, %v581
  %v638 = vadd.f32 %v471, %v584
  %v639 = vadd.f32 %v472, %v589
  %v640 = vadd.f32 %v473, %v592
  %v641 = vadd.f32 %v474, %v597
  %v642 = vadd.f32 %v475, %v600
  %v643 = vadd.f32 %v476, %v605
  %v644 = vadd.f32 %v477, %v608
  %v645 = vadd.f32 %v478, %v613
  %v646 = vadd.f32 %v479, %v616
  %v647 = vadd.f32 %v480, %v621
  %v648 = vadd.f32 %v481, %v624
  %v649 = vadd.f32 %v482, %v629
  %v650 = vadd.f32 %v483, %v632
  %s651 = scalar_lea.vmem %s0, 512
  %v652 = vld [vmem:[%s651] sm:$0xff]
  %v653 = vld [vmem:[%s651 + $0x8] sm:$0xff]
  %v654 = vld [vmem:[%s651 + $0x10] sm:$0xff]
  %v655 = vld [vmem:[%s651 + $0x18] sm:$0xff]
  %v656 = vld [vmem:[%s651 + $0x20] sm:$0xff]
  %v657 = vld [vmem:[%s651 + $0x28] sm:$0xff]
  %v658 = vld [vmem:[%s651 + $0x30] sm:$0xff]
  %v659 = vld [vmem:[%s651 + $0x38] sm:$0xff]
  %v660 = vld [vmem:[%s651 + $0x40] sm:$0xff]
  %v661 = vld [vmem:[%s651 + $0x48] sm:$0xff]
  %v662 = vld [vmem:[%s651 + $0x50] sm:$0xff]
  %v663 = vld [vmem:[%s651 + $0x58] sm:$0xff]
  %v664 = vld [vmem:[%s651 + $0x60] sm:$0xff]
  %v665 = vld [vmem:[%s651 + $0x68] sm:$0xff]
  %v666 = vld [vmem:[%s651 + $0x70] sm:$0xff]
  %v667 = vld [vmem:[%s651 + $0x78] sm:$0xff]
  %v668 = vpack.c.bf16 %v653, %v652
  %v669 = vpack.c.bf16 %v655, %v654
  %v670 = vpack.c.bf16 %v657, %v656
  %v671 = vpack.c.bf16 %v659, %v658
  %v672 = vpack.c.bf16 %v661, %v660
  %v673 = vpack.c.bf16 %v663, %v662
  %v674 = vpack.c.bf16 %v665, %v664
  %v675 = vpack.c.bf16 %v667, %v666
  %s676 = scalar_lea.vmem %s1, 8
  %v677 = vld [vmem:[%s676] sm:$0x3]
  %v679 = vsel %vm67, %v668, 0
  %v682 = vsel %vm67, %v669, 0
  %v685 = vsel %vm67, %v670, 0
  %v688 = vsel %vm67, %v671, 0
  %v691 = vsel %vm67, %v672, 0
  %v694 = vsel %vm67, %v673, 0
  %v697 = vsel %vm67, %v674, 0
  %v700 = vsel %vm67, %v675, 0
  %v703 = vsel %vm92, %v677, 0
  %705 = vmatprep.subr.bf16.mxu0 0
  %706 = vmatpush1.bf16.msra.mxu0 %v703
  %707 = vmatprep.subr.bf16.mxu0 0
  %708 = vmatpush1.bf16.msra.mxu0 0
  %709 = vmatprep.subr.bf16.mxu0 0
  %710 = vmatpush1.bf16.msra.mxu0 0
  %711 = vmatprep.subr.bf16.mxu0 0
  %712 = vmatpush1.bf16.msra.mxu0 0
  %713 = vmatprep.subr.bf16.mxu0 0
  %714 = vmatpush1.bf16.msra.mxu0 0
  %715 = vmatprep.subr.bf16.mxu0 0
  %716 = vmatpush1.bf16.msra.mxu0 0
  %717 = vmatprep.subr.bf16.mxu0 0
  %718 = vmatpush1.bf16.msra.mxu0 0
  %719 = vmatprep.subr.bf16.mxu0 0
  %720 = vmatpush1.bf16.msra.mxu0 0
  %721 = vmatprep.subr.bf16.mxu0 0
  %722 = vmatpush1.bf16.msra.mxu0 0
  %723 = vmatprep.subr.bf16.mxu0 0
  %724 = vmatpush1.bf16.msra.mxu0 0
  %725 = vmatprep.subr.bf16.mxu0 0
  %726 = vmatpush1.bf16.msra.mxu0 0
  %727 = vmatprep.subr.bf16.mxu0 0
  %728 = vmatpush1.bf16.msra.mxu0 0
  %729 = vmatprep.subr.bf16.mxu0 0
  %730 = vmatpush1.bf16.msra.mxu0 0
  %731 = vmatprep.subr.bf16.mxu0 0
  %732 = vmatpush1.bf16.msra.mxu0 0
  %733 = vmatprep.subr.bf16.mxu0 0
  %734 = vmatpush1.bf16.msra.mxu0 0
  %735 = vmatprep.subr.bf16.mxu0 0
  %736 = vmatpush1.bf16.msra.mxu0 0
  %737 = vmatprep.mubr.bf16.mxu0 0
  %738 = vmatmul.mubr.bf16.gmra.mrb[0].mxu0 %v679
  %v739 = vpop.f32.mrb[0].mxu0
  %v740 = vadd.f32 0.0, %v739
  %v741 = vpop.f32.mrb[0].mxu0
  %v742 = vpop.f32.mrb[0].mxu0
  %v743 = vadd.f32 0.0, %v742
  %v744 = vpop.f32.mrb[0].mxu0
  %745 = vmatprep.mubr.bf16.mxu0 0
  %746 = vmatmul.mubr.bf16.gmra.mrb[0].mxu0 %v682
  %v747 = vpop.f32.mrb[0].mxu0
  %v748 = vadd.f32 0.0, %v747
  %v749 = vpop.f32.mrb[0].mxu0
  %v750 = vpop.f32.mrb[0].mxu0
  %v751 = vadd.f32 0.0, %v750
  %v752 = vpop.f32.mrb[0].mxu0
  %753 = vmatprep.mubr.bf16.mxu0 0
  %754 = vmatmul.mubr.bf16.gmra.mrb[0].mxu0 %v685
  %v755 = vpop.f32.mrb[0].mxu0
  %v756 = vadd.f32 0.0, %v755
  %v757 = vpop.f32.mrb[0].mxu0
  %v758 = vpop.f32.mrb[0].mxu0
  %v759 = vadd.f32 0.0, %v758
  %v760 = vpop.f32.mrb[0].mxu0
  %761 = vmatprep.mubr.bf16.mxu0 0
  %762 = vmatmul.mubr.bf16.gmra.mrb[0].mxu0 %v688
  %v763 = vpop.f32.mrb[0].mxu0
  %v764 = vadd.f32 0.0, %v763
  %v765 = vpop.f32.mrb[0].mxu0
  %v766 = vpop.f32.mrb[0].mxu0
  %v767 = vadd.f32 0.0, %v766
  %v768 = vpop.f32.mrb[0].mxu0
  %769 = vmatprep.mubr.bf16.mxu0 0
  %770 = vmatmul.mubr.bf16.gmra.mrb[0].mxu0 %v691
  %v771 = vpop.f32.mrb[0].mxu0
  %v772 = vadd.f32 0.0, %v771
  %v773 = vpop.f32.mrb[0].mxu0
  %v774 = vpop.f32.mrb[0].mxu0
  %v775 = vadd.f32 0.0, %v774
  %v776 = vpop.f32.mrb[0].mxu0
  %777 = vmatprep.mubr.bf16.mxu0 0
  %778 = vmatmul.mubr.bf16.gmra.mrb[0].mxu0 %v694
  %v779 = vpop.f32.mrb[0].mxu0
  %v780 = vadd.f32 0.0, %v779
  %v781 = vpop.f32.mrb[0].mxu0
  %v782 = vpop.f32.mrb[0].mxu0
  %v783 = vadd.f32 0.0, %v782
  %v784 = vpop.f32.mrb[0].mxu0
  %785 = vmatprep.mubr.bf16.mxu0 0
  %786 = vmatmul.mubr.bf16.gmra.mrb[0].mxu0 %v697
  %v787 = vpop.f32.mrb[0].mxu0
  %v788 = vadd.f32 0.0, %v787
  %v789 = vpop.f32.mrb[0].mxu0
  %v790 = vpop.f32.mrb[0].mxu0
  %v791 = vadd.f32 0.0, %v790
  %v792 = vpop.f32.mrb[0].mxu0
  %793 = vmatprep.mubr.bf16.mxu0 0
  %794 = vmatmul.mubr.bf16.gmra.mrb[0].mxu0 %v700
  %v795 = vpop.f32.mrb[0].mxu0
  %v796 = vadd.f32 0.0, %v795
  %v797 = vpop.f32.mrb[0].mxu0
  %v798 = vpop.f32.mrb[0].mxu0
  %v799 = vadd.f32 0.0, %v798
  %v800 = vpop.f32.mrb[0].mxu0
  %801 = vdwg.mxu0
  %v802 = vadd.f32 %v635, %v740
  %v803 = vadd.f32 %v636, %v743
  %v804 = vadd.f32 %v637, %v748
  %v805 = vadd.f32 %v638, %v751
  %v806 = vadd.f32 %v639, %v756
  %v807 = vadd.f32 %v640, %v759
  %v808 = vadd.f32 %v641, %v764
  %v809 = vadd.f32 %v642, %v767
  %v810 = vadd.f32 %v643, %v772
  %v811 = vadd.f32 %v644, %v775
  %v812 = vadd.f32 %v645, %v780
  %v813 = vadd.f32 %v646, %v783
  %v814 = vadd.f32 %v647, %v788
  %v815 = vadd.f32 %v648, %v791
  %v816 = vadd.f32 %v649, %v796
  %v817 = vadd.f32 %v650, %v799
  %s818 = scalar_lea.vmem %s0, 640
  %v819 = vld [vmem:[%s818] sm:$0xff]
  %v820 = vld [vmem:[%s818 + $0x8] sm:$0xff]
  %v821 = vld [vmem:[%s818 + $0x10] sm:$0xff]
  %v822 = vld [vmem:[%s818 + $0x18] sm:$0xff]
  %v823 = vld [vmem:[%s818 + $0x20] sm:$0xff]
  %v824 = vld [vmem:[%s818 + $0x28] sm:$0xff]
  %v825 = vld [vmem:[%s818 + $0x30] sm:$0xff]
  %v826 = vld [vmem:[%s818 + $0x38] sm:$0xff]
  %v827 = vld [vmem:[%s818 + $0x40] sm:$0xff]
  %v828 = vld [vmem:[%s818 + $0x48] sm:$0xff]
  %v829 = vld [vmem:[%s818 + $0x50] sm:$0xff]
  %v830 = vld [vmem:[%s818 + $0x58] sm:$0xff]
  %v831 = vld [vmem:[%s818 + $0x60] sm:$0xff]
  %v832 = vld [vmem:[%s818 + $0x68] sm:$0xff]
  %v833 = vld [vmem:[%s818 + $0x70] sm:$0xff]
  %v834 = vld [vmem:[%s818 + $0x78] sm:$0xff]
  %v835 = vpack.c.bf16 %v820, %v819
  %v836 = vpack.c.bf16 %v822, %v821
  %v837 = vpack.c.bf16 %v824, %v823
  %v838 = vpack.c.bf16 %v826, %v825
  %v839 = vpack.c.bf16 %v828, %v827
  %v840 = vpack.c.bf16 %v830, %v829
  %v841 = vpack.c.bf16 %v832, %v831
  %v842 = vpack.c.bf16 %v834, %v833
  %s843 = scalar_lea.vmem %s1, 10
  %v844 = vld [vmem:[%s843] sm:$0x3]
  %v846 = vsel %vm67, %v835, 0
  %v849 = vsel %vm67, %v836, 0
  %v852 = vsel %vm67, %v837, 0
  %v855 = vsel %vm67, %v838, 0
  %v858 = vsel %vm67, %v839, 0
  %v861 = vsel %vm67, %v840, 0
  %v864 = vsel %vm67, %v841, 0
  %v867 = vsel %vm67, %v842, 0
  %v870 = vsel %vm92, %v844, 0
  %872 = vmatprep.subr.bf16.mxu0 0
  %873 = vmatpush1.bf16.msra.mxu0 %v870
  %874 = vmatprep.subr.bf16.mxu0 0
  %875 = vmatpush1.bf16.msra.mxu0 0
  %876 = vmatprep.subr.bf16.mxu0 0
  %877 = vmatpush1.bf16.msra.mxu0 0
  %878 = vmatprep.subr.bf16.mxu0 0
  %879 = vmatpush1.bf16.msra.mxu0 0
  %880 = vmatprep.subr.bf16.mxu0 0
  %881 = vmatpush1.bf16.msra.mxu0 0
  %882 = vmatprep.subr.bf16.mxu0 0
  %883 = vmatpush1.bf16.msra.mxu0 0
  %884 = vmatprep.subr.bf16.mxu0 0
  %885 = vmatpush1.bf16.msra.mxu0 0
  %886 = vmatprep.subr.bf16.mxu0 0
  %887 = vmatpush1.bf16.msra.mxu0 0
  %888 = vmatprep.subr.bf16.mxu0 0
  %889 = vmatpush1.bf16.msra.mxu0 0
  %890 = vmatprep.subr.bf16.mxu0 0
  %891 = vmatpush1.bf16.msra.mxu0 0
  %892 = vmatprep.subr.bf16.mxu0 0
  %893 = vmatpush1.bf16.msra.mxu0 0
  %894 = vmatprep.subr.bf16.mxu0 0
  %895 = vmatpush1.bf16.msra.mxu0 0
  %896 = vmatprep.subr.bf16.mxu0 0
  %897 = vmatpush1.bf16.msra.mxu0 0
  %898 = vmatprep.subr.bf16.mxu0 0
  %899 = vmatpush1.bf16.msra.mxu0 0
  %900 = vmatprep.subr.bf16.mxu0 0
  %901 = vmatpush1.bf16.msra.mxu0 0
  %902 = vmatprep.subr.bf16.mxu0 0
  %903 = vmatpush1.bf16.msra.mxu0 0
  %904 = vmatprep.mubr.bf16.mxu0 0
  %905 = vmatmul.mubr.bf16.gmra.mrb[0].mxu0 %v846
  %v906 = vpop.f32.mrb[0].mxu0
  %v907 = vadd.f32 0.0, %v906
  %v908 = vpop.f32.mrb[0].mxu0
  %v909 = vpop.f32.mrb[0].mxu0
  %v910 = vadd.f32 0.0, %v909
  %v911 = vpop.f32.mrb[0].mxu0
  %912 = vmatprep.mubr.bf16.mxu0 0
  %913 = vmatmul.mubr.bf16.gmra.mrb[0].mxu0 %v849
  %v914 = vpop.f32.mrb[0].mxu0
  %v915 = vadd.f32 0.0, %v914
  %v916 = vpop.f32.mrb[0].mxu0
  %v917 = vpop.f32.mrb[0].mxu0
  %v918 = vadd.f32 0.0, %v917
  %v919 = vpop.f32.mrb[0].mxu0
  %920 = vmatprep.mubr.bf16.mxu0 0
  %921 = vmatmul.mubr.bf16.gmra.mrb[0].mxu0 %v852
  %v922 = vpop.f32.mrb[0].mxu0
  %v923 = vadd.f32 0.0, %v922
  %v924 = vpop.f32.mrb[0].mxu0
  %v925 = vpop.f32.mrb[0].mxu0
  %v926 = vadd.f32 0.0, %v925
  %v927 = vpop.f32.mrb[0].mxu0
  %928 = vmatprep.mubr.bf16.mxu0 0
  %929 = vmatmul.mubr.bf16.gmra.mrb[0].mxu0 %v855
  %v930 = vpop.f32.mrb[0].mxu0
  %v931 = vadd.f32 0.0, %v930
  %v932 = vpop.f32.mrb[0].mxu0
  %v933 = vpop.f32.mrb[0].mxu0
  %v934 = vadd.f32 0.0, %v933
  %v935 = vpop.f32.mrb[0].mxu0
  %936 = vmatprep.mubr.bf16.mxu0 0
  %937 = vmatmul.mubr.bf16.gmra.mrb[0].mxu0 %v858
  %v938 = vpop.f32.mrb[0].mxu0
  %v939 = vadd.f32 0.0, %v938
  %v940 = vpop.f32.mrb[0].mxu0
  %v941 = vpop.f32.mrb[0].mxu0
  %v942 = vadd.f32 0.0, %v941
  %v943 = vpop.f32.mrb[0].mxu0
  %944 = vmatprep.mubr.bf16.mxu0 0
  %945 = vmatmul.mubr.bf16.gmra.mrb[0].mxu0 %v861
  %v946 = vpop.f32.mrb[0].mxu0
  %v947 = vadd.f32 0.0, %v946
  %v948 = vpop.f32.mrb[0].mxu0
  %v949 = vpop.f32.mrb[0].mxu0
  %v950 = vadd.f32 0.0, %v949
  %v951 = vpop.f32.mrb[0].mxu0
  %952 = vmatprep.mubr.bf16.mxu0 0
  %953 = vmatmul.mubr.bf16.gmra.mrb[0].mxu0 %v864
  %v954 = vpop.f32.mrb[0].mxu0
  %v955 = vadd.f32 0.0, %v954
  %v956 = vpop.f32.mrb[0].mxu0
  %v957 = vpop.f32.mrb[0].mxu0
  %v958 = vadd.f32 0.0, %v957
  %v959 = vpop.f32.mrb[0].mxu0
  %960 = vmatprep.mubr.bf16.mxu0 0
  %961 = vmatmul.mubr.bf16.gmra.mrb[0].mxu0 %v867
  %v962 = vpop.f32.mrb[0].mxu0
  %v963 = vadd.f32 0.0, %v962
  %v964 = vpop.f32.mrb[0].mxu0
  %v965 = vpop.f32.mrb[0].mxu0
  %v966 = vadd.f32 0.0, %v965
  %v967 = vpop.f32.mrb[0].mxu0
  %968 = vdwg.mxu0
  %v969 = vadd.f32 %v802, %v907
  %v970 = vadd.f32 %v803, %v910
  %v971 = vadd.f32 %v804, %v915
  %v972 = vadd.f32 %v805, %v918
  %v973 = vadd.f32 %v806, %v923
  %v974 = vadd.f32 %v807, %v926
  %v975 = vadd.f32 %v808, %v931
  %v976 = vadd.f32 %v809, %v934
  %v977 = vadd.f32 %v810, %v939
  %v978 = vadd.f32 %v811, %v942
  %v979 = vadd.f32 %v812, %v947
  %v980 = vadd.f32 %v813, %v950
  %v981 = vadd.f32 %v814, %v955
  %v982 = vadd.f32 %v815, %v958
  %v983 = vadd.f32 %v816, %v963
  %v984 = vadd.f32 %v817, %v966
  %s985 = scalar_lea.vmem %s0, 768
  %v986 = vld [vmem:[%s985] sm:$0xff]
  %v987 = vld [vmem:[%s985 + $0x8] sm:$0xff]
  %v988 = vld [vmem:[%s985 + $0x10] sm:$0xff]
  %v989 = vld [vmem:[%s985 + $0x18] sm:$0xff]
  %v990 = vld [vmem:[%s985 + $0x20] sm:$0xff]
  %v991 = vld [vmem:[%s985 + $0x28] sm:$0xff]
  %v992 = vld [vmem:[%s985 + $0x30] sm:$0xff]
  %v993 = vld [vmem:[%s985 + $0x38] sm:$0xff]
  %v994 = vld [vmem:[%s985 + $0x40] sm:$0xff]
  %v995 = vld [vmem:[%s985 + $0x48] sm:$0xff]
  %v996 = vld [vmem:[%s985 + $0x50] sm:$0xff]
  %v997 = vld [vmem:[%s985 + $0x58] sm:$0xff]
  %v998 = vld [vmem:[%s985 + $0x60] sm:$0xff]
  %v999 = vld [vmem:[%s985 + $0x68] sm:$0xff]
  %v1000 = vld [vmem:[%s985 + $0x70] sm:$0xff]
  %v1001 = vld [vmem:[%s985 + $0x78] sm:$0xff]
  %v1002 = vpack.c.bf16 %v987, %v986
  %v1003 = vpack.c.bf16 %v989, %v988
  %v1004 = vpack.c.bf16 %v991, %v990
  %v1005 = vpack.c.bf16 %v993, %v992
  %v1006 = vpack.c.bf16 %v995, %v994
  %v1007 = vpack.c.bf16 %v997, %v996
  %v1008 = vpack.c.bf16 %v999, %v998
  %v1009 = vpack.c.bf16 %v1001, %v1000
  %s1010 = scalar_lea.vmem %s1, 12
  %v1011 = vld [vmem:[%s1010] sm:$0x3]
  %v1013 = vsel %vm67, %v1002, 0
  %v1016 = vsel %vm67, %v1003, 0
  %v1019 = vsel %vm67, %v1004, 0
  %v1022 = vsel %vm67, %v1005, 0
  %v1025 = vsel %vm67, %v1006, 0
  %v1028 = vsel %vm67, %v1007, 0
  %v1031 = vsel %vm67, %v1008, 0
  %v1034 = vsel %vm67, %v1009, 0
  %v1037 = vsel %vm92, %v1011, 0
  %1039 = vmatprep.subr.bf16.mxu0 0
  %1040 = vmatpush1.bf16.msra.mxu0 %v1037
  %1041 = vmatprep.subr.bf16.mxu0 0
  %1042 = vmatpush1.bf16.msra.mxu0 0
  %1043 = vmatprep.subr.bf16.mxu0 0
  %1044 = vmatpush1.bf16.msra.mxu0 0
  %1045 = vmatprep.subr.bf16.mxu0 0
  %1046 = vmatpush1.bf16.msra.mxu0 0
  %1047 = vmatprep.subr.bf16.mxu0 0
  %1048 = vmatpush1.bf16.msra.mxu0 0
  %1049 = vmatprep.subr.bf16.mxu0 0
  %1050 = vmatpush1.bf16.msra.mxu0 0
  %1051 = vmatprep.subr.bf16.mxu0 0
  %1052 = vmatpush1.bf16.msra.mxu0 0
  %1053 = vmatprep.subr.bf16.mxu0 0
  %1054 = vmatpush1.bf16.msra.mxu0 0
  %1055 = vmatprep.subr.bf16.mxu0 0
  %1056 = vmatpush1.bf16.msra.mxu0 0
  %1057 = vmatprep.subr.bf16.mxu0 0
  %1058 = vmatpush1.bf16.msra.mxu0 0
  %1059 = vmatprep.subr.bf16.mxu0 0
  %1060 = vmatpush1.bf16.msra.mxu0 0
  %1061 = vmatprep.subr.bf16.mxu0 0
  %1062 = vmatpush1.bf16.msra.mxu0 0
  %1063 = vmatprep.subr.bf16.mxu0 0
  %1064 = vmatpush1.bf16.msra.mxu0 0
  %1065 = vmatprep.subr.bf16.mxu0 0
  %1066 = vmatpush1.bf16.msra.mxu0 0
  %1067 = vmatprep.subr.bf16.mxu0 0
  %1068 = vmatpush1.bf16.msra.mxu0 0
  %1069 = vmatprep.subr.bf16.mxu0 0
  %1070 = vmatpush1.bf16.msra.mxu0 0
  %1071 = vmatprep.mubr.bf16.mxu0 0
  %1072 = vmatmul.mubr.bf16.gmra.mrb[0].mxu0 %v1013
  %v1073 = vpop.f32.mrb[0].mxu0
  %v1074 = vadd.f32 0.0, %v1073
  %v1075 = vpop.f32.mrb[0].mxu0
  %v1076 = vpop.f32.mrb[0].mxu0
  %v1077 = vadd.f32 0.0, %v1076
  %v1078 = vpop.f32.mrb[0].mxu0
  %1079 = vmatprep.mubr.bf16.mxu0 0
  %1080 = vmatmul.mubr.bf16.gmra.mrb[0].mxu0 %v1016
  %v1081 = vpop.f32.mrb[0].mxu0
  %v1082 = vadd.f32 0.0, %v1081
  %v1083 = vpop.f32.mrb[0].mxu0
  %v1084 = vpop.f32.mrb[0].mxu0
  %v1085 = vadd.f32 0.0, %v1084
  %v1086 = vpop.f32.mrb[0].mxu0
  %1087 = vmatprep.mubr.bf16.mxu0 0
  %1088 = vmatmul.mubr.bf16.gmra.mrb[0].mxu0 %v1019
  %v1089 = vpop.f32.mrb[0].mxu0
  %v1090 = vadd.f32 0.0, %v1089
  %v1091 = vpop.f32.mrb[0].mxu0
  %v1092 = vpop.f32.mrb[0].mxu0
  %v1093 = vadd.f32 0.0, %v1092
  %v1094 = vpop.f32.mrb[0].mxu0
  %1095 = vmatprep.mubr.bf16.mxu0 0
  %1096 = vmatmul.mubr.bf16.gmra.mrb[0].mxu0 %v1022
  %v1097 = vpop.f32.mrb[0].mxu0
  %v1098 = vadd.f32 0.0, %v1097
  %v1099 = vpop.f32.mrb[0].mxu0
  %v1100 = vpop.f32.mrb[0].mxu0
  %v1101 = vadd.f32 0.0, %v1100
  %v1102 = vpop.f32.mrb[0].mxu0
  %1103 = vmatprep.mubr.bf16.mxu0 0
  %1104 = vmatmul.mubr.bf16.gmra.mrb[0].mxu0 %v1025
  %v1105 = vpop.f32.mrb[0].mxu0
  %v1106 = vadd.f32 0.0, %v1105
  %v1107 = vpop.f32.mrb[0].mxu0
  %v1108 = vpop.f32.mrb[0].mxu0
  %v1109 = vadd.f32 0.0, %v1108
  %v1110 = vpop.f32.mrb[0].mxu0
  %1111 = vmatprep.mubr.bf16.mxu0 0
  %1112 = vmatmul.mubr.bf16.gmra.mrb[0].mxu0 %v1028
  %v1113 = vpop.f32.mrb[0].mxu0
  %v1114 = vadd.f32 0.0, %v1113
  %v1115 = vpop.f32.mrb[0].mxu0
  %v1116 = vpop.f32.mrb[0].mxu0
  %v1117 = vadd.f32 0.0, %v1116
  %v1118 = vpop.f32.mrb[0].mxu0
  %1119 = vmatprep.mubr.bf16.mxu0 0
  %1120 = vmatmul.mubr.bf16.gmra.mrb[0].mxu0 %v1031
  %v1121 = vpop.f32.mrb[0].mxu0
  %v1122 = vadd.f32 0.0, %v1121
  %v1123 = vpop.f32.mrb[0].mxu0
  %v1124 = vpop.f32.mrb[0].mxu0
  %v1125 = vadd.f32 0.0, %v1124
  %v1126 = vpop.f32.mrb[0].mxu0
  %1127 = vmatprep.mubr.bf16.mxu0 0
  %1128 = vmatmul.mubr.bf16.gmra.mrb[0].mxu0 %v1034
  %v1129 = vpop.f32.mrb[0].mxu0
  %v1130 = vadd.f32 0.0, %v1129
  %v1131 = vpop.f32.mrb[0].mxu0
  %v1132 = vpop.f32.mrb[0].mxu0
  %v1133 = vadd.f32 0.0, %v1132
  %v1134 = vpop.f32.mrb[0].mxu0
  %1135 = vdwg.mxu0
  %v1136 = vadd.f32 %v969, %v1074
  %v1137 = vadd.f32 %v970, %v1077
  %v1138 = vadd.f32 %v971, %v1082
  %v1139 = vadd.f32 %v972, %v1085
  %v1140 = vadd.f32 %v973, %v1090
  %v1141 = vadd.f32 %v974, %v1093
  %v1142 = vadd.f32 %v975, %v1098
  %v1143 = vadd.f32 %v976, %v1101
  %v1144 = vadd.f32 %v977, %v1106
  %v1145 = vadd.f32 %v978, %v1109
  %v1146 = vadd.f32 %v979, %v1114
  %v1147 = vadd.f32 %v980, %v1117
  %v1148 = vadd.f32 %v981, %v1122
  %v1149 = vadd.f32 %v982, %v1125
  %v1150 = vadd.f32 %v983, %v1130
  %v1151 = vadd.f32 %v984, %v1133
  %s1152 = scalar_lea.vmem %s0, 896
  %v1153 = vld [vmem:[%s1152] sm:$0xff]
  %v1154 = vld [vmem:[%s1152 + $0x8] sm:$0xff]
  %v1155 = vld [vmem:[%s1152 + $0x10] sm:$0xff]
  %v1156 = vld [vmem:[%s1152 + $0x18] sm:$0xff]
  %v1157 = vld [vmem:[%s1152 + $0x20] sm:$0xff]
  %v1158 = vld [vmem:[%s1152 + $0x28] sm:$0xff]
  %v1159 = vld [vmem:[%s1152 + $0x30] sm:$0xff]
  %v1160 = vld [vmem:[%s1152 + $0x38] sm:$0xff]
  %v1161 = vld [vmem:[%s1152 + $0x40] sm:$0xff]
  %v1162 = vld [vmem:[%s1152 + $0x48] sm:$0xff]
  %v1163 = vld [vmem:[%s1152 + $0x50] sm:$0xff]
  %v1164 = vld [vmem:[%s1152 + $0x58] sm:$0xff]
  %v1165 = vld [vmem:[%s1152 + $0x60] sm:$0xff]
  %v1166 = vld [vmem:[%s1152 + $0x68] sm:$0xff]
  %v1167 = vld [vmem:[%s1152 + $0x70] sm:$0xff]
  %v1168 = vld [vmem:[%s1152 + $0x78] sm:$0xff]
  %v1169 = vpack.c.bf16 %v1154, %v1153
  %v1170 = vpack.c.bf16 %v1156, %v1155
  %v1171 = vpack.c.bf16 %v1158, %v1157
  %v1172 = vpack.c.bf16 %v1160, %v1159
  %v1173 = vpack.c.bf16 %v1162, %v1161
  %v1174 = vpack.c.bf16 %v1164, %v1163
  %v1175 = vpack.c.bf16 %v1166, %v1165
  %v1176 = vpack.c.bf16 %v1168, %v1167
  %s1177 = scalar_lea.vmem %s1, 14
  %v1178 = vld [vmem:[%s1177] sm:$0x3]
  %v1180 = vsel %vm67, %v1169, 0
  %v1183 = vsel %vm67, %v1170, 0
  %v1186 = vsel %vm67, %v1171, 0
  %v1189 = vsel %vm67, %v1172, 0
  %v1192 = vsel %vm67, %v1173, 0
  %v1195 = vsel %vm67, %v1174, 0
  %v1198 = vsel %vm67, %v1175, 0
  %v1201 = vsel %vm67, %v1176, 0
  %v1204 = vsel %vm92, %v1178, 0
  %1206 = vmatprep.subr.bf16.mxu0 0
  %1207 = vmatpush1.bf16.msra.mxu0 %v1204
  %1208 = vmatprep.subr.bf16.mxu0 0
  %1209 = vmatpush1.bf16.msra.mxu0 0
  %1210 = vmatprep.subr.bf16.mxu0 0
  %1211 = vmatpush1.bf16.msra.mxu0 0
  %1212 = vmatprep.subr.bf16.mxu0 0
  %1213 = vmatpush1.bf16.msra.mxu0 0
  %1214 = vmatprep.subr.bf16.mxu0 0
  %1215 = vmatpush1.bf16.msra.mxu0 0
  %1216 = vmatprep.subr.bf16.mxu0 0
  %1217 = vmatpush1.bf16.msra.mxu0 0
  %1218 = vmatprep.subr.bf16.mxu0 0
  %1219 = vmatpush1.bf16.msra.mxu0 0
  %1220 = vmatprep.subr.bf16.mxu0 0
  %1221 = vmatpush1.bf16.msra.mxu0 0
  %1222 = vmatprep.subr.bf16.mxu0 0
  %1223 = vmatpush1.bf16.msra.mxu0 0
  %1224 = vmatprep.subr.bf16.mxu0 0
  %1225 = vmatpush1.bf16.msra.mxu0 0
  %1226 = vmatprep.subr.bf16.mxu0 0
  %1227 = vmatpush1.bf16.msra.mxu0 0
  %1228 = vmatprep.subr.bf16.mxu0 0
  %1229 = vmatpush1.bf16.msra.mxu0 0
  %1230 = vmatprep.subr.bf16.mxu0 0
  %1231 = vmatpush1.bf16.msra.mxu0 0
  %1232 = vmatprep.subr.bf16.mxu0 0
  %1233 = vmatpush1.bf16.msra.mxu0 0
  %1234 = vmatprep.subr.bf16.mxu0 0
  %1235 = vmatpush1.bf16.msra.mxu0 0
  %1236 = vmatprep.subr.bf16.mxu0 0
  %1237 = vmatpush1.bf16.msra.mxu0 0
  %1238 = vmatprep.mubr.bf16.mxu0 0
  %1239 = vmatmul.mubr.bf16.gmra.mrb[0].mxu0 %v1180
  %v1240 = vpop.f32.mrb[0].mxu0
  %v1241 = vadd.f32 0.0, %v1240
  %v1242 = vpop.f32.mrb[0].mxu0
  %v1243 = vpop.f32.mrb[0].mxu0
  %v1244 = vadd.f32 0.0, %v1243
  %v1245 = vpop.f32.mrb[0].mxu0
  %1246 = vmatprep.mubr.bf16.mxu0 0
  %1247 = vmatmul.mubr.bf16.gmra.mrb[0].mxu0 %v1183
  %v1248 = vpop.f32.mrb[0].mxu0
  %v1249 = vadd.f32 0.0, %v1248
  %v1250 = vpop.f32.mrb[0].mxu0
  %v1251 = vpop.f32.mrb[0].mxu0
  %v1252 = vadd.f32 0.0, %v1251
  %v1253 = vpop.f32.mrb[0].mxu0
  %1254 = vmatprep.mubr.bf16.mxu0 0
  %1255 = vmatmul.mubr.bf16.gmra.mrb[0].mxu0 %v1186
  %v1256 = vpop.f32.mrb[0].mxu0
  %v1257 = vadd.f32 0.0, %v1256
  %v1258 = vpop.f32.mrb[0].mxu0
  %v1259 = vpop.f32.mrb[0].mxu0
  %v1260 = vadd.f32 0.0, %v1259
  %v1261 = vpop.f32.mrb[0].mxu0
  %1262 = vmatprep.mubr.bf16.mxu0 0
  %1263 = vmatmul.mubr.bf16.gmra.mrb[0].mxu0 %v1189
  %v1264 = vpop.f32.mrb[0].mxu0
  %v1265 = vadd.f32 0.0, %v1264
  %v1266 = vpop.f32.mrb[0].mxu0
  %v1267 = vpop.f32.mrb[0].mxu0
  %v1268 = vadd.f32 0.0, %v1267
  %v1269 = vpop.f32.mrb[0].mxu0
  %1270 = vmatprep.mubr.bf16.mxu0 0
  %1271 = vmatmul.mubr.bf16.gmra.mrb[0].mxu0 %v1192
  %v1272 = vpop.f32.mrb[0].mxu0
  %v1273 = vadd.f32 0.0, %v1272
  %v1274 = vpop.f32.mrb[0].mxu0
  %v1275 = vpop.f32.mrb[0].mxu0
  %v1276 = vadd.f32 0.0, %v1275
  %v1277 = vpop.f32.mrb[0].mxu0
  %1278 = vmatprep.mubr.bf16.mxu0 0
  %1279 = vmatmul.mubr.bf16.gmra.mrb[0].mxu0 %v1195
  %v1280 = vpop.f32.mrb[0].mxu0
  %v1281 = vadd.f32 0.0, %v1280
  %v1282 = vpop.f32.mrb[0].mxu0
  %v1283 = vpop.f32.mrb[0].mxu0
  %v1284 = vadd.f32 0.0, %v1283
  %v1285 = vpop.f32.mrb[0].mxu0
  %1286 = vmatprep.mubr.bf16.mxu0 0
  %1287 = vmatmul.mubr.bf16.gmra.mrb[0].mxu0 %v1198
  %v1288 = vpop.f32.mrb[0].mxu0
  %v1289 = vadd.f32 0.0, %v1288
  %v1290 = vpop.f32.mrb[0].mxu0
  %v1291 = vpop.f32.mrb[0].mxu0
  %v1292 = vadd.f32 0.0, %v1291
  %v1293 = vpop.f32.mrb[0].mxu0
  %1294 = vmatprep.mubr.bf16.mxu0 0
  %1295 = vmatmul.mubr.bf16.gmra.mrb[0].mxu0 %v1201
  %v1296 = vpop.f32.mrb[0].mxu0
  %v1297 = vadd.f32 0.0, %v1296
  %v1298 = vpop.f32.mrb[0].mxu0
  %v1299 = vpop.f32.mrb[0].mxu0
  %v1300 = vadd.f32 0.0, %v1299
  %v1301 = vpop.f32.mrb[0].mxu0
  %1302 = vdwg.mxu0
  %v1303 = vadd.f32 %v1136, %v1241
  %v1304 = vadd.f32 %v1137, %v1244
  %v1305 = vadd.f32 %v1138, %v1249
  %v1306 = vadd.f32 %v1139, %v1252
  %v1307 = vadd.f32 %v1140, %v1257
  %v1308 = vadd.f32 %v1141, %v1260
  %v1309 = vadd.f32 %v1142, %v1265
  %v1310 = vadd.f32 %v1143, %v1268
  %v1311 = vadd.f32 %v1144, %v1273
  %v1312 = vadd.f32 %v1145, %v1276
  %v1313 = vadd.f32 %v1146, %v1281
  %v1314 = vadd.f32 %v1147, %v1284
  %v1315 = vadd.f32 %v1148, %v1289
  %v1316 = vadd.f32 %v1149, %v1292
  %v1317 = vadd.f32 %v1150, %v1297
  %v1318 = vadd.f32 %v1151, %v1300
  %s1319 = scalar_lea.vmem %s0, 1024
  %v1320 = vld [vmem:[%s1319] sm:$0xff]
  %v1321 = vld [vmem:[%s1319 + $0x8] sm:$0xff]
  %v1322 = vld [vmem:[%s1319 + $0x10] sm:$0xff]
  %v1323 = vld [vmem:[%s1319 + $0x18] sm:$0xff]
  %v1324 = vld [vmem:[%s1319 + $0x20] sm:$0xff]
  %v1325 = vld [vmem:[%s1319 + $0x28] sm:$0xff]
  %v1326 = vld [vmem:[%s1319 + $0x30] sm:$0xff]
  %v1327 = vld [vmem:[%s1319 + $0x38] sm:$0xff]
  %v1328 = vld [vmem:[%s1319 + $0x40] sm:$0xff]
  %v1329 = vld [vmem:[%s1319 + $0x48] sm:$0xff]
  %v1330 = vld [vmem:[%s1319 + $0x50] sm:$0xff]
  %v1331 = vld [vmem:[%s1319 + $0x58] sm:$0xff]
  %v1332 = vld [vmem:[%s1319 + $0x60] sm:$0xff]
  %v1333 = vld [vmem:[%s1319 + $0x68] sm:$0xff]
  %v1334 = vld [vmem:[%s1319 + $0x70] sm:$0xff]
  %v1335 = vld [vmem:[%s1319 + $0x78] sm:$0xff]
  %v1336 = vpack.c.bf16 %v1321, %v1320
  %v1337 = vpack.c.bf16 %v1323, %v1322
  %v1338 = vpack.c.bf16 %v1325, %v1324
  %v1339 = vpack.c.bf16 %v1327, %v1326
  %v1340 = vpack.c.bf16 %v1329, %v1328
  %v1341 = vpack.c.bf16 %v1331, %v1330
  %v1342 = vpack.c.bf16 %v1333, %v1332
  %v1343 = vpack.c.bf16 %v1335, %v1334
  %s1344 = scalar_lea.vmem %s1, 16
  %v1345 = vld [vmem:[%s1344] sm:$0x3]
  %v1347 = vsel %vm67, %v1336, 0
  %v1350 = vsel %vm67, %v1337, 0
  %v1353 = vsel %vm67, %v1338, 0
  %v1356 = vsel %vm67, %v1339, 0
  %v1359 = vsel %vm67, %v1340, 0
  %v1362 = vsel %vm67, %v1341, 0
  %v1365 = vsel %vm67, %v1342, 0
  %v1368 = vsel %vm67, %v1343, 0
  %v1371 = vsel %vm92, %v1345, 0
  %1373 = vmatprep.subr.bf16.mxu0 0
  %1374 = vmatpush1.bf16.msra.mxu0 %v1371
  %1375 = vmatprep.subr.bf16.mxu0 0
  %1376 = vmatpush1.bf16.msra.mxu0 0
  %1377 = vmatprep.subr.bf16.mxu0 0
  %1378 = vmatpush1.bf16.msra.mxu0 0
  %1379 = vmatprep.subr.bf16.mxu0 0
  %1380 = vmatpush1.bf16.msra.mxu0 0
  %1381 = vmatprep.subr.bf16.mxu0 0
  %1382 = vmatpush1.bf16.msra.mxu0 0
  %1383 = vmatprep.subr.bf16.mxu0 0
  %1384 = vmatpush1.bf16.msra.mxu0 0
  %1385 = vmatprep.subr.bf16.mxu0 0
  %1386 = vmatpush1.bf16.msra.mxu0 0
  %1387 = vmatprep.subr.bf16.mxu0 0
  %1388 = vmatpush1.bf16.msra.mxu0 0
  %1389 = vmatprep.subr.bf16.mxu0 0
  %1390 = vmatpush1.bf16.msra.mxu0 0
  %1391 = vmatprep.subr.bf16.mxu0 0
  %1392 = vmatpush1.bf16.msra.mxu0 0
  %1393 = vmatprep.subr.bf16.mxu0 0
  %1394 = vmatpush1.bf16.msra.mxu0 0
  %1395 = vmatprep.subr.bf16.mxu0 0
  %1396 = vmatpush1.bf16.msra.mxu0 0
  %1397 = vmatprep.subr.bf16.mxu0 0
  %1398 = vmatpush1.bf16.msra.mxu0 0
  %1399 = vmatprep.subr.bf16.mxu0 0
  %1400 = vmatpush1.bf16.msra.mxu0 0
  %1401 = vmatprep.subr.bf16.mxu0 0
  %1402 = vmatpush1.bf16.msra.mxu0 0
  %1403 = vmatprep.subr.bf16.mxu0 0
  %1404 = vmatpush1.bf16.msra.mxu0 0
  %1405 = vmatprep.mubr.bf16.mxu0 0
  %1406 = vmatmul.mubr.bf16.gmra.mrb[0].mxu0 %v1347
  %v1407 = vpop.f32.mrb[0].mxu0
  %v1408 = vadd.f32 0.0, %v1407
  %v1409 = vpop.f32.mrb[0].mxu0
  %v1410 = vpop.f32.mrb[0].mxu0
  %v1411 = vadd.f32 0.0, %v1410
  %v1412 = vpop.f32.mrb[0].mxu0
  %1413 = vmatprep.mubr.bf16.mxu0 0
  %1414 = vmatmul.mubr.bf16.gmra.mrb[0].mxu0 %v1350
  %v1415 = vpop.f32.mrb[0].mxu0
  %v1416 = vadd.f32 0.0, %v1415
  %v1417 = vpop.f32.mrb[0].mxu0
  %v1418 = vpop.f32.mrb[0].mxu0
  %v1419 = vadd.f32 0.0, %v1418
  %v1420 = vpop.f32.mrb[0].mxu0
  %1421 = vmatprep.mubr.bf16.mxu0 0
  %1422 = vmatmul.mubr.bf16.gmra.mrb[0].mxu0 %v1353
  %v1423 = vpop.f32.mrb[0].mxu0
  %v1424 = vadd.f32 0.0, %v1423
  %v1425 = vpop.f32.mrb[0].mxu0
  %v1426 = vpop.f32.mrb[0].mxu0
  %v1427 = vadd.f32 0.0, %v1426
  %v1428 = vpop.f32.mrb[0].mxu0
  %1429 = vmatprep.mubr.bf16.mxu0 0
  %1430 = vmatmul.mubr.bf16.gmra.mrb[0].mxu0 %v1356
  %v1431 = vpop.f32.mrb[0].mxu0
  %v1432 = vadd.f32 0.0, %v1431
  %v1433 = vpop.f32.mrb[0].mxu0
  %v1434 = vpop.f32.mrb[0].mxu0
  %v1435 = vadd.f32 0.0, %v1434
  %v1436 = vpop.f32.mrb[0].mxu0
  %1437 = vmatprep.mubr.bf16.mxu0 0
  %1438 = vmatmul.mubr.bf16.gmra.mrb[0].mxu0 %v1359
  %v1439 = vpop.f32.mrb[0].mxu0
  %v1440 = vadd.f32 0.0, %v1439
  %v1441 = vpop.f32.mrb[0].mxu0
  %v1442 = vpop.f32.mrb[0].mxu0
  %v1443 = vadd.f32 0.0, %v1442
  %v1444 = vpop.f32.mrb[0].mxu0
  %1445 = vmatprep.mubr.bf16.mxu0 0
  %1446 = vmatmul.mubr.bf16.gmra.mrb[0].mxu0 %v1362
  %v1447 = vpop.f32.mrb[0].mxu0
  %v1448 = vadd.f32 0.0, %v1447
  %v1449 = vpop.f32.mrb[0].mxu0
  %v1450 = vpop.f32.mrb[0].mxu0
  %v1451 = vadd.f32 0.0, %v1450
  %v1452 = vpop.f32.mrb[0].mxu0
  %1453 = vmatprep.mubr.bf16.mxu0 0
  %1454 = vmatmul.mubr.bf16.gmra.mrb[0].mxu0 %v1365
  %v1455 = vpop.f32.mrb[0].mxu0
  %v1456 = vadd.f32 0.0, %v1455
  %v1457 = vpop.f32.mrb[0].mxu0
  %v1458 = vpop.f32.mrb[0].mxu0
  %v1459 = vadd.f32 0.0, %v1458
  %v1460 = vpop.f32.mrb[0].mxu0
  %1461 = vmatprep.mubr.bf16.mxu0 0
  %1462 = vmatmul.mubr.bf16.gmra.mrb[0].mxu0 %v1368
  %v1463 = vpop.f32.mrb[0].mxu0
  %v1464 = vadd.f32 0.0, %v1463
  %v1465 = vpop.f32.mrb[0].mxu0
  %v1466 = vpop.f32.mrb[0].mxu0
  %v1467 = vadd.f32 0.0, %v1466
  %v1468 = vpop.f32.mrb[0].mxu0
  %1469 = vdwg.mxu0
  %v1470 = vadd.f32 %v1303, %v1408
  %v1471 = vadd.f32 %v1304, %v1411
  %v1472 = vadd.f32 %v1305, %v1416
  %v1473 = vadd.f32 %v1306, %v1419
  %v1474 = vadd.f32 %v1307, %v1424
  %v1475 = vadd.f32 %v1308, %v1427
  %v1476 = vadd.f32 %v1309, %v1432
  %v1477 = vadd.f32 %v1310, %v1435
  %v1478 = vadd.f32 %v1311, %v1440
  %v1479 = vadd.f32 %v1312, %v1443
  %v1480 = vadd.f32 %v1313, %v1448
  %v1481 = vadd.f32 %v1314, %v1451
  %v1482 = vadd.f32 %v1315, %v1456
  %v1483 = vadd.f32 %v1316, %v1459
  %v1484 = vadd.f32 %v1317, %v1464
  %v1485 = vadd.f32 %v1318, %v1467
  %v1486 = vld [vmem:[%s2] sm:$0x1]
  %v1488 = vlaneseq
  %v1489 = vshrl.u32 %v1488, 7
  %v1490 = vsub.s32 0, %v1489
  %v1491 = vrot.slane %v1486, %v1490
  %v1493 = vadd.f32 %v1470, %v1491
  %v1494 = vadd.f32 %v1471, %v1491
  %v1495 = vadd.f32 %v1472, %v1491
  %v1496 = vadd.f32 %v1473, %v1491
  %v1497 = vadd.f32 %v1474, %v1491
  %v1498 = vadd.f32 %v1475, %v1491
  %v1499 = vadd.f32 %v1476, %v1491
  %v1500 = vadd.f32 %v1477, %v1491
  %v1501 = vadd.f32 %v1478, %v1491
  %v1502 = vadd.f32 %v1479, %v1491
  %v1503 = vadd.f32 %v1480, %v1491
  %v1504 = vadd.f32 %v1481, %v1491
  %v1505 = vadd.f32 %v1482, %v1491
  %v1506 = vadd.f32 %v1483, %v1491
  %v1507 = vadd.f32 %v1484, %v1491
  %v1508 = vadd.f32 %v1485, %v1491
  %v1509 = vmax.f32 %v1493, 0.0
  %v1510 = vmax.f32 %v1494, 0.0
  %v1511 = vmax.f32 %v1495, 0.0
  %v1512 = vmax.f32 %v1496, 0.0
  %v1513 = vmax.f32 %v1497, 0.0
  %v1514 = vmax.f32 %v1498, 0.0
  %v1515 = vmax.f32 %v1499, 0.0
  %v1516 = vmax.f32 %v1500, 0.0
  %v1517 = vmax.f32 %v1501, 0.0
  %v1518 = vmax.f32 %v1502, 0.0
  %v1519 = vmax.f32 %v1503, 0.0
  %v1520 = vmax.f32 %v1504, 0.0
  %v1521 = vmax.f32 %v1505, 0.0
  %v1522 = vmax.f32 %v1506, 0.0
  %v1523 = vmax.f32 %v1507, 0.0
  %v1524 = vmax.f32 %v1508, 0.0
  %vm1525 = vcmask 195584
  %1526 = vst.msk [vmem:[%s3] sm:$0xff] %vm1525, %v1509
  %1527 = vst.msk [vmem:[%s3 + $0x8] sm:$0xff] %vm1525, %v1510
  %1528 = vst.msk [vmem:[%s3 + $0x10] sm:$0xff] %vm1525, %v1511
  %1529 = vst.msk [vmem:[%s3 + $0x18] sm:$0xff] %vm1525, %v1512
  %1530 = vst.msk [vmem:[%s3 + $0x20] sm:$0xff] %vm1525, %v1513
  %1531 = vst.msk [vmem:[%s3 + $0x28] sm:$0xff] %vm1525, %v1514
  %1532 = vst.msk [vmem:[%s3 + $0x30] sm:$0xff] %vm1525, %v1515
  %1533 = vst.msk [vmem:[%s3 + $0x38] sm:$0xff] %vm1525, %v1516
  %1534 = vst.msk [vmem:[%s3 + $0x40] sm:$0xff] %vm1525, %v1517
  %1535 = vst.msk [vmem:[%s3 + $0x48] sm:$0xff] %vm1525, %v1518
  %1536 = vst.msk [vmem:[%s3 + $0x50] sm:$0xff] %vm1525, %v1519
  %1537 = vst.msk [vmem:[%s3 + $0x58] sm:$0xff] %vm1525, %v1520
  %1538 = vst.msk [vmem:[%s3 + $0x60] sm:$0xff] %vm1525, %v1521
  %1539 = vst.msk [vmem:[%s3 + $0x68] sm:$0xff] %vm1525, %v1522
  %1540 = vst.msk [vmem:[%s3 + $0x70] sm:$0xff] %vm1525, %v1523
  %1541 = vst.msk [vmem:[%s3 + $0x78] sm:$0xff] %vm1525, %v1524
  // Predicated region
  $region14: #{_lambda_.57} parent=0 // pred_check
    _
  $region15: #{_lambda_.57} parent=0 // pred_check_branch
    %1543 = sbr.rel (0) target = $region17
  $region16: #{_lambda_.57} parent=0 // pred_region
    _
  $region17: #{_lambda_.57} parent=0 // pred_fallthru
    _
  // Predicated region
  $region18: #{_lambda_.57} parent=0 // pred_check
    _
  $region19: #{_lambda_.57} parent=0 // pred_check_branch
    %1545 = sbr.rel (0) target = $region21
  $region20: #{_lambda_.57} parent=0 // pred_region
    _
  $region21: #{_lambda_.57} parent=0 // pred_fallthru
    _

// kernel: _lambda_.63
$region0: #{_lambda_.63}
  #allocation0 [shape = 'u32[]', space=smem, size = 0x4, offset = 0x4, fixed_abs, tag = 'smem constant byte address 0x4 - core index']
  #allocation1 [shape = 'u32[144,128]{1,0:T(1,128)}', space=vmem, size = 0x12000, scoped, tag = 'internal scratch']
  %s0 = inlined_call_operand.vmem [shape: f32[8,24], index: 0, kind: input, shape index: {}]
  %s1 = inlined_call_operand.vmem [shape: bf16[24,24], index: 1, kind: input, shape index: {}]
  %s2 = inlined_call_operand.vmem [shape: f32[1,24], index: 2, kind: input, shape index: {}]
  %s3 = inlined_call_operand.vmem [shape: f32[8,24], index: 3, kind: output, shape index: {}]
  %s4 = sld [smem:[#allocation0]]
  $region22: #{_lambda_.63} parent=0
    _
  %s6 = ssub.s32 1, %s4
  %s7 = scalar_select 0, %s6, %s4
  // Predicated region
  $region2: #{_lambda_.63} parent=0 // pred_check
    _
  $region3: #{_lambda_.63} parent=0 // pred_check_branch
    %9 = sbr.rel (0) target = $region5
  $region4: #{_lambda_.63} parent=0 // pred_region
    _
  $region5: #{_lambda_.63} parent=0 // pred_fallthru
    _
  // Predicated region
  $region6: #{_lambda_.63} parent=0 // pred_check
    _
  $region7: #{_lambda_.63} parent=0 // pred_check_branch
    %11 = sbr.rel (0) target = $region9
  $region8: #{_lambda_.63} parent=0 // pred_region
    _
  $region9: #{_lambda_.63} parent=0 // pred_fallthru
    _
  // Predicated region
  $region10: #{_lambda_.63} parent=0 // pred_check
    _
  $region11: #{_lambda_.63} parent=0 // pred_check_branch
    %13 = sbr.rel (0) target = $region13
  $region12: #{_lambda_.63} parent=0 // pred_region
    _
  $region13: #{_lambda_.63} parent=0 // pred_fallthru
    _
  %v15 = vld [vmem:[%s0] sm:$0xff]
  %v16 = vpack.c.bf16 %v15, %v15
  %v17 = vld [vmem:[%s1] sm:$0xf]
  %v18 = vld [vmem:[%s1 + $0x4] sm:$0xf]
  %v19 = vld [vmem:[%s1 + $0x8] sm:$0xf]
  %v20 = vld [vmem:[%s2] sm:$0x1]
  %v22 = vlaneseq
  %v23 = vshrl.u32 %v22, 7
  %v24 = vsub.s32 0, %v23
  %v25 = vrot.slane %v20, %v24
  %v30 = vunpack.c.l.b16 %v17
  %v31 = vunpack.c.l.b16 %v18
  %v32 = vunpack.c.l.b16 %v19
  %v33 = vpack.c.b16 %v31, %v30
  %v34 = vpack.c.b16 %v32, %v32
  %vm36 = vcmask 195584
  %v38 = vsel %vm36, %v16, 0
  %vm40 = vcmask 1043456
  %v42 = vsel %vm40, %v34, 0
  %44 = vmatprep.subr.bf16.mxu0 0
  %45 = vmatpush1.bf16.msra.mxu0 %v33
  %46 = vmatprep.subr.bf16.mxu0 0
  %47 = vmatpush1.bf16.msra.mxu0 %v42
  %48 = vmatprep.subr.bf16.mxu0 0
  %49 = vmatpush1.bf16.msra.mxu0 0
  %50 = vmatprep.subr.bf16.mxu0 0
  %51 = vmatpush1.bf16.msra.mxu0 0
  %52 = vmatprep.subr.bf16.mxu0 0
  %53 = vmatpush1.bf16.msra.mxu0 0
  %54 = vmatprep.subr.bf16.mxu0 0
  %55 = vmatpush1.bf16.msra.mxu0 0
  %56 = vmatprep.subr.bf16.mxu0 0
  %57 = vmatpush1.bf16.msra.mxu0 0
  %58 = vmatprep.subr.bf16.mxu0 0
  %59 = vmatpush1.bf16.msra.mxu0 0
  %60 = vmatprep.subr.bf16.mxu0 0
  %61 = vmatpush1.bf16.msra.mxu0 0
  %62 = vmatprep.subr.bf16.mxu0 0
  %63 = vmatpush1.bf16.msra.mxu0 0
  %64 = vmatprep.subr.bf16.mxu0 0
  %65 = vmatpush1.bf16.msra.mxu0 0
  %66 = vmatprep.subr.bf16.mxu0 0
  %67 = vmatpush1.bf16.msra.mxu0 0
  %68 = vmatprep.subr.bf16.mxu0 0
  %69 = vmatpush1.bf16.msra.mxu0 0
  %70 = vmatprep.subr.bf16.mxu0 0
  %71 = vmatpush1.bf16.msra.mxu0 0
  %72 = vmatprep.subr.bf16.mxu0 0
  %73 = vmatpush1.bf16.msra.mxu0 0
  %74 = vmatprep.subr.bf16.mxu0 0
  %75 = vmatpush1.bf16.msra.mxu0 0
  %76 = vmatprep.mubr.bf16.mxu0 0
  %77 = vmatmul.mubr.bf16.gmra.mrb[0].mxu0 %v38
  %v78 = vpop.f32.mrb[0].mxu0
  %v79 = vadd.f32 %v25, %v78
  %v80 = vpop.f32.mrb[0].mxu0
  %v81 = vpop.f32.mrb[0].mxu0
  %v82 = vpop.f32.mrb[0].mxu0
  %83 = vdwg.mxu0
  %v84 = vmax.f32 %v79, 0.0
  %85 = vst.msk [vmem:[%s3] sm:$0xff] %vm36, %v84
  // Predicated region
  $region14: #{_lambda_.63} parent=0 // pred_check
    _
  $region15: #{_lambda_.63} parent=0 // pred_check_branch
    %87 = sbr.rel (0) target = $region17
  $region16: #{_lambda_.63} parent=0 // pred_region
    _
  $region17: #{_lambda_.63} parent=0 // pred_fallthru
    _
  // Predicated region
  $region18: #{_lambda_.63} parent=0 // pred_check
    _
  $region19: #{_lambda_.63} parent=0 // pred_check_branch
    %89 = sbr.rel (0) target = $region21
  $region20: #{_lambda_.63} parent=0 // pred_region
    _
  $region21: #{_lambda_.63} parent=0 // pred_fallthru
    _

// kernel: _lambda_.65
$region0: #{_lambda_.65}
  #allocation0 [shape = 'u32[]', space=smem, size = 0x4, offset = 0x4, fixed_abs, tag = 'smem constant byte address 0x4 - core index']
  #allocation1 [shape = 'u32[144,128]{1,0:T(1,128)}', space=vmem, size = 0x12000, scoped, tag = 'internal scratch']
  %s0 = inlined_call_operand.vmem [shape: f32[2,4,4,24], index: 0, kind: input, shape index: {}]
  %s1 = inlined_call_operand.vmem [shape: f32[9,1,24], index: 1, kind: input, shape index: {}]
  %s2 = inlined_call_operand.vmem [shape: f32[1,24], index: 2, kind: input, shape index: {}]
  %s3 = inlined_call_operand.vmem [shape: f32[4,2,24], index: 3, kind: output, shape index: {}]
  %s4 = sld [smem:[#allocation0]]
  $region45: #{_lambda_.65} parent=0
    _
  %s6 = ssub.s32 1, %s4
  %s7 = scalar_select 0, %s6, %s4
  loop: start=0, step=1, limit=4
  $region2: #{_lambda_.65} parent=0 // loop_pre_header
    _
  $region3: #{_lambda_.65} parent=0 // loop_header
    %s9 = sphi 0, %s13
    %p10 = scmp.ge.s32.totalorder %s9, 4
    %s19 = sphi 0, %s21
    %s22 = sphi 0, %s19
    %s23 = sphi 0, %s22
    %s39 = sphi 0, %s23
    %s43 = sphi 0, %s43
    %s45 = sphi 0, %s43
    %s46 = sphi 0, %s45
    %s60 = sphi 0, %s46
    %s64 = sphi 0, %s64
    %s66 = sphi 0, %s64
    %s67 = sphi 0, %s66
    %s81 = sphi 0, %s67
    %s87 = sphi 0, %s89
    %s90 = sphi 0, %s87
    %s91 = sphi 0, %s90
    %s107 = sphi 0, %s91
  $region4: #{_lambda_.65} parent=0 // loop_header_branch
    %12 = sbr.rel (%p10) target = $region8
  $region5: #{_lambda_.65} parent=0 // loop_body
    %s14 = ssub.s32 %s9, 1
    %s15 = ssub.s32 %s9, 2
    %s16 = sadd.s32 %s9, 1
    %s17 = ssub.s32 %s9, %s16
    %p18 = scmp.eq.s32.totalorder %s17, 0
    %s20 = sadd.s32 %s19, 1
    %s21 = scalar_select %p18, %s19, %s20
    %p24 = pneg %p18
    %p25 = scmp.eq.s32.totalorder %s9, 1
    %p26 = por %p24, %p25
    %p27 = scmp.ne.s32.totalorder %s19, %s22
    %p28 = scmp.eq.s32.totalorder %s9, 0
    %p29 = por %p27, %p28
    %p30 = scmp.ne.s32.totalorder %s19, %s22
    %p31 = scmp.eq.s32.totalorder %s14, 1
    %p32 = por %p30, %p31
    %p33 = scmp.ne.s32.totalorder %s22, %s23
    %p34 = scmp.eq.s32.totalorder %s14, 0
    %p35 = por %p33, %p34
    %p36 = scmp.ne.s32.totalorder %s22, %s23
    %p37 = scmp.eq.s32.totalorder %s15, 1
    %p38 = por %p36, %p37
    %p40 = scmp.ne.s32.totalorder %s23, %s39
    %p41 = scmp.eq.s32.totalorder %s15, 0
    %p42 = por %p40, %p41
    %s44 = sadd.s32 %s43, 1
    %p47 = scmp.eq.s32.totalorder %s9, 1
    %p48 = scmp.ne.s32.totalorder %s43, %s45
    %p49 = scmp.eq.s32.totalorder %s9, 0
    %p50 = por %p48, %p49
    %p51 = scmp.ne.s32.totalorder %s43, %s45
    %p52 = scmp.eq.s32.totalorder %s14, 1
    %p53 = por %p51, %p52
    %p54 = scmp.ne.s32.totalorder %s45, %s46
    %p55 = scmp.eq.s32.totalorder %s14, 0
    %p56 = por %p54, %p55
    %p57 = scmp.ne.s32.totalorder %s45, %s46
    %p58 = scmp.eq.s32.totalorder %s15, 1
    %p59 = por %p57, %p58
    %p61 = scmp.ne.s32.totalorder %s46, %s60
    %p62 = scmp.eq.s32.totalorder %s15, 0
    %p63 = por %p61, %p62
    %s65 = sadd.s32 %s64, 1
    %p68 = scmp.eq.s32.totalorder %s9, 1
    %p69 = scmp.ne.s32.totalorder %s64, %s66
    %p70 = scmp.eq.s32.totalorder %s9, 0
    %p71 = por %p69, %p70
    %p72 = scmp.ne.s32.totalorder %s64, %s66
    %p73 = scmp.eq.s32.totalorder %s14, 1
    %p74 = por %p72, %p73
    %p75 = scmp.ne.s32.totalorder %s66, %s67
    %p76 = scmp.eq.s32.totalorder %s14, 0
    %p77 = por %p75, %p76
    %p78 = scmp.ne.s32.totalorder %s66, %s67
    %p79 = scmp.eq.s32.totalorder %s15, 1
    %p80 = por %p78, %p79
    %p82 = scmp.ne.s32.totalorder %s67, %s81
    %p83 = scmp.eq.s32.totalorder %s15, 0
    %p84 = por %p82, %p83
    %s85 = ssub.s32 %s9, %s16
    %p86 = scmp.eq.s32.totalorder %s85, 0
    %s88 = sadd.s32 %s87, 1
    %s89 = scalar_select %p86, %s87, %s88
    %p92 = pneg %p86
    %p93 = scmp.eq.s32.totalorder %s9, 1
    %p94 = por %p92, %p93
    %p95 = scmp.ne.s32.totalorder %s87, %s90
    %p96 = scmp.eq.s32.totalorder %s9, 0
    %p97 = por %p95, %p96
    %p98 = scmp.ne.s32.totalorder %s87, %s90
    %p99 = scmp.eq.s32.totalorder %s14, 1
    %p100 = por %p98, %p99
    %p101 = scmp.ne.s32.totalorder %s90, %s91
    %p102 = scmp.eq.s32.totalorder %s14, 0
    %p103 = por %p101, %p102
    %p104 = scmp.ne.s32.totalorder %s90, %s91
    %p105 = scmp.eq.s32.totalorder %s15, 1
    %p106 = por %p104, %p105
    %p108 = scmp.ne.s32.totalorder %s91, %s107
    %p109 = scmp.eq.s32.totalorder %s15, 0
    %p110 = por %p108, %p109
    %p111 = scmp.le.s32.totalorder 1, %s9
    %p112 = scmp.lt.s32.totalorder %s9, 3
    %p113 = pnand %p111, %p112
    %p114 = pneg %p113
    // Predicated region
    $region9: #{_lambda_.65} parent=5 // pred_check
      _
    $region10: #{_lambda_.65} parent=5 // pred_check_branch
      %116 = sbr.rel (%p113) target = $region12
    $region11: #{_lambda_.65} parent=5 // pred_region
      %s117 = ssub.s32 %s9, 1
      // Predicated region
      $region13: #{_lambda_.65} parent=11 // pred_check
        %p118 = pneg %p56
      $region14: #{_lambda_.65} parent=11 // pred_check_branch
        %120 = sbr.rel (%p118) target = $region16
      $region15: #{_lambda_.65} parent=11 // pred_region
        _
      $region16: #{_lambda_.65} parent=11 // pred_fallthru
        _
      // Predicated region
      $region17: #{_lambda_.65} parent=11 // pred_check
        %p121 = pneg %p77
      $region18: #{_lambda_.65} parent=11 // pred_check_branch
        %123 = sbr.rel (%p121) target = $region20
      $region19: #{_lambda_.65} parent=11 // pred_region
        _
      $region20: #{_lambda_.65} parent=11 // pred_fallthru
        _
    $region12: #{_lambda_.65} parent=5 // pred_fallthru
      _
    %p124 = scmp.lt.s32.totalorder %s9, 2
    // Predicated region
    $region21: #{_lambda_.65} parent=5 // pred_check
      %p125 = pneg %p124
    $region22: #{_lambda_.65} parent=5 // pred_check_branch
      %127 = sbr.rel (%p125) target = $region24
    $region23: #{_lambda_.65} parent=5 // pred_region
      // Predicated region
      $region25: #{_lambda_.65} parent=23 // pred_check
        %p128 = pneg %p29
      $region26: #{_lambda_.65} parent=23 // pred_check_branch
        %130 = sbr.rel (%p128) target = $region28
      $region27: #{_lambda_.65} parent=23 // pred_region
        %p131 = scmp.lt.s32.totalorder %s9, 1
        %s132 = scalar_select %p131, %s9, 1
        %s133 = smul.addr %s132, 4
        %s134 = smul.addr %s133, 4
        %s135 = scalar_lea.vmem %s0, %s134
      $region28: #{_lambda_.65} parent=23 // pred_fallthru
        _
    $region24: #{_lambda_.65} parent=5 // pred_fallthru
      _
    %p136 = scmp.le.s32.totalorder 1, %s9
    %p137 = scmp.lt.s32.totalorder %s9, 3
    %p138 = pnand %p136, %p137
    %p139 = pneg %p138
    // Predicated region
    $region29: #{_lambda_.65} parent=5 // pred_check
      _
    $region30: #{_lambda_.65} parent=5 // pred_check_branch
      %141 = sbr.rel (%p138) target = $region32
    $region31: #{_lambda_.65} parent=5 // pred_region
      %s142 = ssub.s32 %s9, 1
      %p143 = scmp.lt.s32.totalorder %s14, 1
      %s144 = scalar_select %p143, %s14, 1
      %s145 = smul.addr %s144, 4
      %s146 = smul.addr %s145, 4
      %s147 = scalar_lea.vmem %s0, %s146
      %p148 = pneg %p35
      %p149 = pneg %p32
      %p150 = pneg %p56
      %p151 = pneg %p53
      %p152 = pneg %p77
      %p153 = pneg %p74
      %p154 = pneg %p103
      %p155 = pneg %p100
      %s156 = smul.u32 2, %s14
      %p157 = scmp.lt.s32.totalorder %s156, 3
      %s158 = scalar_select %p157, %s156, 3
      %s159 = smul.addr %s158, 2
      %s160 = scalar_lea.vmem %s3, %s159
      %p161 = scmp.lt.s32.totalorder %s14, 1
      %s162 = scalar_select %p161, %s14, 1
      %s163 = smul.addr %s162, 4
      %s164 = smul.addr %s163, 4
      %s165 = scalar_lea.vmem %s0, %s164
      %s166 = smul.u32 2, %s14
      %p167 = scmp.lt.s32.totalorder %s166, 3
      %s168 = scalar_select %p167, %s166, 3
      %s169 = smul.addr %s168, 2
      %s170 = scalar_lea.vmem %s3, %s169
      %s171 = smul.u32 2, %s14
      %v172 = vld [vmem:[%s165] sm:$0x3]
      %v173 = vld [vmem:[%s165 + $0x4] sm:$0x3]
      %v174 = vld [vmem:[%s1] sm:$0x1]
      %v176 = vlaneseq
      %v177 = vshrl.u32 %v176, 7
      %v178 = vsub.s32 0, %v177
      %v179 = vrot.slane %v174, %v178
      %v181 = vmul.f32 %v172, %v179
      %v182 = vmul.f32 %v173, %v179
      %v183 = vld [vmem:[%s165 + $0x1] sm:$0x3]
      %v184 = vld [vmem:[%s165 + $0x5] sm:$0x3]
      %s185 = scalar_lea.vmem %s1, 1
      %v186 = vld [vmem:[%s185] sm:$0x1]
      %v188 = vlaneseq
      %v189 = vshrl.u32 %v188, 7
      %v190 = vsub.s32 0, %v189
      %v191 = vrot.slane %v186, %v190
      %v193 = vmul.f32 %v183, %v191
      %v194 = vmul.f32 %v184, %v191
      %v195 = vadd.f32 %v181, %v193
      %v196 = vadd.f32 %v182, %v194
      %v197 = vld [vmem:[%s165 + $0x2] sm:$0x3]
      %v198 = vld [vmem:[%s165 + $0x6] sm:$0x3]
      %s199 = scalar_lea.vmem %s1, 2
      %v200 = vld [vmem:[%s199] sm:$0x1]
      %v202 = vlaneseq
      %v203 = vshrl.u32 %v202, 7
      %v204 = vsub.s32 0, %v203
      %v205 = vrot.slane %v200, %v204
      %v207 = vmul.f32 %v197, %v205
      %v208 = vmul.f32 %v198, %v205
      %v209 = vadd.f32 %v195, %v207
      %v210 = vadd.f32 %v196, %v208
      %s211 = scalar_lea.vmem %s165, 4
      %v212 = vld [vmem:[%s211] sm:$0x3]
      %v213 = vld [vmem:[%s211 + $0x4] sm:$0x3]
      %s214 = scalar_lea.vmem %s1, 3
      %v215 = vld [vmem:[%s214] sm:$0x1]
      %v217 = vlaneseq
      %v218 = vshrl.u32 %v217, 7
      %v219 = vsub.s32 0, %v218
      %v220 = vrot.slane %v215, %v219
      %v222 = vmul.f32 %v212, %v220
      %v223 = vmul.f32 %v213, %v220
      %v224 = vadd.f32 %v209, %v222
      %v225 = vadd.f32 %v210, %v223
      %v226 = vld [vmem:[%s211 + $0x1] sm:$0x3]
      %v227 = vld [vmem:[%s211 + $0x5] sm:$0x3]
      %s228 = scalar_lea.vmem %s1, 4
      %v229 = vld [vmem:[%s228] sm:$0x1]
      %v231 = vlaneseq
      %v232 = vshrl.u32 %v231, 7
      %v233 = vsub.s32 0, %v232
      %v234 = vrot.slane %v229, %v233
      %v236 = vmul.f32 %v226, %v234
      %v237 = vmul.f32 %v227, %v234
      %v238 = vadd.f32 %v224, %v236
      %v239 = vadd.f32 %v225, %v237
      %v240 = vld [vmem:[%s211 + $0x2] sm:$0x3]
      %v241 = vld [vmem:[%s211 + $0x6] sm:$0x3]
      %s242 = scalar_lea.vmem %s1, 5
      %v243 = vld [vmem:[%s242] sm:$0x1]
      %v245 = vlaneseq
      %v246 = vshrl.u32 %v245, 7
      %v247 = vsub.s32 0, %v246
      %v248 = vrot.slane %v243, %v247
      %v250 = vmul.f32 %v240, %v248
      %v251 = vmul.f32 %v241, %v248
      %v252 = vadd.f32 %v238, %v250
      %v253 = vadd.f32 %v239, %v251
      %s254 = scalar_lea.vmem %s165, 8
      %v255 = vld [vmem:[%s254] sm:$0x3]
      %v256 = vld [vmem:[%s254 + $0x4] sm:$0x3]
      %s257 = scalar_lea.vmem %s1, 6
      %v258 = vld [vmem:[%s257] sm:$0x1]
      %v260 = vlaneseq
      %v261 = vshrl.u32 %v260, 7
      %v262 = vsub.s32 0, %v261
      %v263 = vrot.slane %v258, %v262
      %v265 = vmul.f32 %v255, %v263
      %v266 = vmul.f32 %v256, %v263
      %v267 = vadd.f32 %v252, %v265
      %v268 = vadd.f32 %v253, %v266
      %v269 = vld [vmem:[%s254 + $0x1] sm:$0x3]
      %v270 = vld [vmem:[%s254 + $0x5] sm:$0x3]
      %s271 = scalar_lea.vmem %s1, 7
      %v272 = vld [vmem:[%s271] sm:$0x1]
      %v274 = vlaneseq
      %v275 = vshrl.u32 %v274, 7
      %v276 = vsub.s32 0, %v275
      %v277 = vrot.slane %v272, %v276
      %v279 = vmul.f32 %v269, %v277
      %v280 = vmul.f32 %v270, %v277
      %v281 = vadd.f32 %v267, %v279
      %v282 = vadd.f32 %v268, %v280
      %v283 = vld [vmem:[%s254 + $0x2] sm:$0x3]
      %v284 = vld [vmem:[%s254 + $0x6] sm:$0x3]
      %s285 = scalar_lea.vmem %s1, 8
      %v286 = vld [vmem:[%s285] sm:$0x1]
      %v288 = vlaneseq
      %v289 = vshrl.u32 %v288, 7
      %v290 = vsub.s32 0, %v289
      %v291 = vrot.slane %v286, %v290
      %v293 = vmul.f32 %v283, %v291
      %v294 = vmul.f32 %v284, %v291
      %v295 = vadd.f32 %v281, %v293
      %v296 = vadd.f32 %v282, %v294
      %v297 = vld [vmem:[%s2] sm:$0x1]
      %v299 = vlaneseq
      %v300 = vshrl.u32 %v299, 7
      %v301 = vsub.s32 0, %v300
      %v302 = vrot.slane %v297, %v301
      %v304 = vadd.f32 %v295, %v302
      %v305 = vadd.f32 %v296, %v302
      %vm306 = vcmask 189440
      %307 = vst.msk [vmem:[%s170] sm:$0x3] %vm306, %v304
      %308 = vst.msk [vmem:[%s170 + $0x2] sm:$0x3] %vm306, %v305
      %s309 = smul.u32 2, %s14
      %p310 = scmp.lt.s32.totalorder %s309, 3
      %s311 = scalar_select %p310, %s309, 3
      %s312 = smul.addr %s311, 2
      %s313 = scalar_lea.vmem %s3, %s312
      // Predicated region
      $region33: #{_lambda_.65} parent=31 // pred_check
        %p314 = pneg %p100
      $region34: #{_lambda_.65} parent=31 // pred_check_branch
        %316 = sbr.rel (%p314) target = $region36
      $region35: #{_lambda_.65} parent=31 // pred_region
        %s317 = smul.u32 2, %s14
      $region36: #{_lambda_.65} parent=31 // pred_fallthru
        _
    $region32: #{_lambda_.65} parent=5 // pred_fallthru
      _
    %p318 = scmp.le.s32.totalorder 2, %s9
    // Predicated region
    $region37: #{_lambda_.65} parent=5 // pred_check
      %p319 = pneg %p318
    $region38: #{_lambda_.65} parent=5 // pred_check_branch
      %321 = sbr.rel (%p319) target = $region40
    $region39: #{_lambda_.65} parent=5 // pred_region
      %s322 = ssub.s32 %s9, 2
      // Predicated region
      $region41: #{_lambda_.65} parent=39 // pred_check
        %p323 = pneg %p106
      $region42: #{_lambda_.65} parent=39 // pred_check_branch
        %325 = sbr.rel (%p323) target = $region44
      $region43: #{_lambda_.65} parent=39 // pred_region
        %s326 = smul.u32 2, %s15
        %p327 = scmp.lt.s32.totalorder %s326, 3
        %s328 = scalar_select %p327, %s326, 3
        %s329 = smul.addr %s328, 2
        %s330 = scalar_lea.vmem %s3, %s329
      $region44: #{_lambda_.65} parent=39 // pred_fallthru
        _
    $region40: #{_lambda_.65} parent=5 // pred_fallthru
      _
  $region6: #{_lambda_.65} parent=0 // loop_footer
    %s13 = sadd.s32 1, %s9
  $region7: #{_lambda_.65} parent=0 // loop_footer_branch
    %8 = sbr.rel target = $region3
  $region8: #{_lambda_.65} parent=0 // loop_exit
    _

// kernel: _lambda_.76
$region0: #{_lambda_.76}
  #allocation0 [shape = 'u32[]', space=smem, size = 0x4, offset = 0x4, fixed_abs, tag = 'smem constant byte address 0x4 - core index']
  #allocation1 [shape = 'u32[144,128]{1,0:T(1,128)}', space=vmem, size = 0x12000, scoped, tag = 'internal scratch']
  %s0 = inlined_call_operand.vmem [shape: f32[8,2,2,48], index: 0, kind: input, shape index: {}]
  %s1 = inlined_call_operand.vmem [shape: f32[9,1,48], index: 1, kind: input, shape index: {}]
  %s2 = inlined_call_operand.vmem [shape: f32[1,48], index: 2, kind: input, shape index: {}]
  %s3 = inlined_call_operand.vmem [shape: f32[2,1,48], index: 3, kind: output, shape index: {}]
  %s4 = sld [smem:[#allocation0]]
  $region45: #{_lambda_.76} parent=0
    _
  %s6 = ssub.s32 1, %s4
  %s7 = scalar_select 0, %s6, %s4
  loop: start=0, step=1, limit=4
  $region2: #{_lambda_.76} parent=0 // loop_pre_header
    _
  $region3: #{_lambda_.76} parent=0 // loop_header
    %s9 = sphi 0, %s13
    %p10 = scmp.ge.s32.totalorder %s9, 4
    %s19 = sphi 0, %s21
    %s22 = sphi 0, %s19
    %s23 = sphi 0, %s22
    %s39 = sphi 0, %s23
    %s43 = sphi 0, %s43
    %s45 = sphi 0, %s43
    %s46 = sphi 0, %s45
    %s60 = sphi 0, %s46
    %s64 = sphi 0, %s64
    %s66 = sphi 0, %s64
    %s67 = sphi 0, %s66
    %s81 = sphi 0, %s67
    %s87 = sphi 0, %s89
    %s90 = sphi 0, %s87
    %s91 = sphi 0, %s90
    %s107 = sphi 0, %s91
  $region4: #{_lambda_.76} parent=0 // loop_header_branch
    %12 = sbr.rel (%p10) target = $region8
  $region5: #{_lambda_.76} parent=0 // loop_body
    %s14 = ssub.s32 %s9, 1
    %s15 = ssub.s32 %s9, 2
    %s16 = sadd.s32 %s9, 1
    %s17 = ssub.s32 %s9, %s16
    %p18 = scmp.eq.s32.totalorder %s17, 0
    %s20 = sadd.s32 %s19, 1
    %s21 = scalar_select %p18, %s19, %s20
    %p24 = pneg %p18
    %p25 = scmp.eq.s32.totalorder %s9, 1
    %p26 = por %p24, %p25
    %p27 = scmp.ne.s32.totalorder %s19, %s22
    %p28 = scmp.eq.s32.totalorder %s9, 0
    %p29 = por %p27, %p28
    %p30 = scmp.ne.s32.totalorder %s19, %s22
    %p31 = scmp.eq.s32.totalorder %s14, 1
    %p32 = por %p30, %p31
    %p33 = scmp.ne.s32.totalorder %s22, %s23
    %p34 = scmp.eq.s32.totalorder %s14, 0
    %p35 = por %p33, %p34
    %p36 = scmp.ne.s32.totalorder %s22, %s23
    %p37 = scmp.eq.s32.totalorder %s15, 1
    %p38 = por %p36, %p37
    %p40 = scmp.ne.s32.totalorder %s23, %s39
    %p41 = scmp.eq.s32.totalorder %s15, 0
    %p42 = por %p40, %p41
    %s44 = sadd.s32 %s43, 1
    %p47 = scmp.eq.s32.totalorder %s9, 1
    %p48 = scmp.ne.s32.totalorder %s43, %s45
    %p49 = scmp.eq.s32.totalorder %s9, 0
    %p50 = por %p48, %p49
    %p51 = scmp.ne.s32.totalorder %s43, %s45
    %p52 = scmp.eq.s32.totalorder %s14, 1
    %p53 = por %p51, %p52
    %p54 = scmp.ne.s32.totalorder %s45, %s46
    %p55 = scmp.eq.s32.totalorder %s14, 0
    %p56 = por %p54, %p55
    %p57 = scmp.ne.s32.totalorder %s45, %s46
    %p58 = scmp.eq.s32.totalorder %s15, 1
    %p59 = por %p57, %p58
    %p61 = scmp.ne.s32.totalorder %s46, %s60
    %p62 = scmp.eq.s32.totalorder %s15, 0
    %p63 = por %p61, %p62
    %s65 = sadd.s32 %s64, 1
    %p68 = scmp.eq.s32.totalorder %s9, 1
    %p69 = scmp.ne.s32.totalorder %s64, %s66
    %p70 = scmp.eq.s32.totalorder %s9, 0
    %p71 = por %p69, %p70
    %p72 = scmp.ne.s32.totalorder %s64, %s66
    %p73 = scmp.eq.s32.totalorder %s14, 1
    %p74 = por %p72, %p73
    %p75 = scmp.ne.s32.totalorder %s66, %s67
    %p76 = scmp.eq.s32.totalorder %s14, 0
    %p77 = por %p75, %p76
    %p78 = scmp.ne.s32.totalorder %s66, %s67
    %p79 = scmp.eq.s32.totalorder %s15, 1
    %p80 = por %p78, %p79
    %p82 = scmp.ne.s32.totalorder %s67, %s81
    %p83 = scmp.eq.s32.totalorder %s15, 0
    %p84 = por %p82, %p83
    %s85 = ssub.s32 %s9, %s16
    %p86 = scmp.eq.s32.totalorder %s85, 0
    %s88 = sadd.s32 %s87, 1
    %s89 = scalar_select %p86, %s87, %s88
    %p92 = pneg %p86
    %p93 = scmp.eq.s32.totalorder %s9, 1
    %p94 = por %p92, %p93
    %p95 = scmp.ne.s32.totalorder %s87, %s90
    %p96 = scmp.eq.s32.totalorder %s9, 0
    %p97 = por %p95, %p96
    %p98 = scmp.ne.s32.totalorder %s87, %s90
    %p99 = scmp.eq.s32.totalorder %s14, 1
    %p100 = por %p98, %p99
    %p101 = scmp.ne.s32.totalorder %s90, %s91
    %p102 = scmp.eq.s32.totalorder %s14, 0
    %p103 = por %p101, %p102
    %p104 = scmp.ne.s32.totalorder %s90, %s91
    %p105 = scmp.eq.s32.totalorder %s15, 1
    %p106 = por %p104, %p105
    %p108 = scmp.ne.s32.totalorder %s91, %s107
    %p109 = scmp.eq.s32.totalorder %s15, 0
    %p110 = por %p108, %p109
    %p111 = scmp.le.s32.totalorder 1, %s9
    %p112 = scmp.lt.s32.totalorder %s9, 3
    %p113 = pnand %p111, %p112
    %p114 = pneg %p113
    // Predicated region
    $region9: #{_lambda_.76} parent=5 // pred_check
      _
    $region10: #{_lambda_.76} parent=5 // pred_check_branch
      %116 = sbr.rel (%p113) target = $region12
    $region11: #{_lambda_.76} parent=5 // pred_region
      %s117 = ssub.s32 %s9, 1
      // Predicated region
      $region13: #{_lambda_.76} parent=11 // pred_check
        %p118 = pneg %p56
      $region14: #{_lambda_.76} parent=11 // pred_check_branch
        %120 = sbr.rel (%p118) target = $region16
      $region15: #{_lambda_.76} parent=11 // pred_region
        _
      $region16: #{_lambda_.76} parent=11 // pred_fallthru
        _
      // Predicated region
      $region17: #{_lambda_.76} parent=11 // pred_check
        %p121 = pneg %p77
      $region18: #{_lambda_.76} parent=11 // pred_check_branch
        %123 = sbr.rel (%p121) target = $region20
      $region19: #{_lambda_.76} parent=11 // pred_region
        _
      $region20: #{_lambda_.76} parent=11 // pred_fallthru
        _
    $region12: #{_lambda_.76} parent=5 // pred_fallthru
      _
    %p124 = scmp.lt.s32.totalorder %s9, 2
    // Predicated region
    $region21: #{_lambda_.76} parent=5 // pred_check
      %p125 = pneg %p124
    $region22: #{_lambda_.76} parent=5 // pred_check_branch
      %127 = sbr.rel (%p125) target = $region24
    $region23: #{_lambda_.76} parent=5 // pred_region
      // Predicated region
      $region25: #{_lambda_.76} parent=23 // pred_check
        %p128 = pneg %p29
      $region26: #{_lambda_.76} parent=23 // pred_check_branch
        %130 = sbr.rel (%p128) target = $region28
      $region27: #{_lambda_.76} parent=23 // pred_region
        %s131 = smul.u32 4, %s9
        %p132 = scmp.lt.s32.totalorder %s131, 7
        %s133 = scalar_select %p132, %s131, 7
        %s134 = smul.addr %s133, 2
        %s135 = smul.addr %s134, 2
        %s136 = scalar_lea.vmem %s0, %s135
        %s137 = smul.u32 4, %s9
      $region28: #{_lambda_.76} parent=23 // pred_fallthru
        _
    $region24: #{_lambda_.76} parent=5 // pred_fallthru
      _
    %p138 = scmp.le.s32.totalorder 1, %s9
    %p139 = scmp.lt.s32.totalorder %s9, 3
    %p140 = pnand %p138, %p139
    %p141 = pneg %p140
    // Predicated region
    $region29: #{_lambda_.76} parent=5 // pred_check
      _
    $region30: #{_lambda_.76} parent=5 // pred_check_branch
      %143 = sbr.rel (%p140) target = $region32
    $region31: #{_lambda_.76} parent=5 // pred_region
      %s144 = ssub.s32 %s9, 1
      %s145 = smul.u32 4, %s14
      %p146 = scmp.lt.s32.totalorder %s145, 7
      %s147 = scalar_select %p146, %s145, 7
      %s148 = smul.addr %s147, 2
      %s149 = smul.addr %s148, 2
      %s150 = scalar_lea.vmem %s0, %s149
      %p151 = pneg %p35
      %p152 = pneg %p32
      %p153 = pneg %p56
      %p154 = pneg %p53
      %p155 = pneg %p77
      %p156 = pneg %p74
      %p157 = pneg %p103
      %p158 = pneg %p100
      %p159 = scmp.lt.s32.totalorder %s14, 1
      %s160 = scalar_select %p159, %s14, 1
      %s161 = scalar_lea.vmem %s3, %s160
      %s162 = smul.u32 4, %s14
      %p163 = scmp.lt.s32.totalorder %s162, 7
      %s164 = scalar_select %p163, %s162, 7
      %s165 = smul.addr %s164, 2
      %s166 = smul.addr %s165, 2
      %s167 = scalar_lea.vmem %s0, %s166
      %s168 = smul.u32 4, %s14
      %p169 = scmp.lt.s32.totalorder %s14, 1
      %s170 = scalar_select %p169, %s14, 1
      %s171 = scalar_lea.vmem %s3, %s170
      %v172 = vld [vmem:[%s167] sm:$0x1]
      %v173 = vld [vmem:[%s1] sm:$0x1]
      %v174 = vmul.f32 %v172, %v173
      %s175 = scalar_lea.vmem %s167, 4
      %v176 = vld [vmem:[%s175] sm:$0x1]
      %s177 = scalar_lea.vmem %s1, 1
      %v178 = vld [vmem:[%s177] sm:$0x1]
      %v179 = vmul.f32 %v176, %v178
      %v180 = vadd.f32 %v174, %v179
      %v181 = vld [vmem:[%s167 + $0x1] sm:$0x1]
      %s182 = scalar_lea.vmem %s1, 2
      %v183 = vld [vmem:[%s182] sm:$0x1]
      %v184 = vmul.f32 %v181, %v183
      %v185 = vadd.f32 %v180, %v184
      %s186 = scalar_lea.vmem %s167, 8
      %v187 = vld [vmem:[%s186] sm:$0x1]
      %s188 = scalar_lea.vmem %s1, 3
      %v189 = vld [vmem:[%s188] sm:$0x1]
      %v190 = vmul.f32 %v187, %v189
      %v191 = vadd.f32 %v185, %v190
      %s192 = scalar_lea.vmem %s167, 12
      %v193 = vld [vmem:[%s192] sm:$0x1]
      %s194 = scalar_lea.vmem %s1, 4
      %v195 = vld [vmem:[%s194] sm:$0x1]
      %v196 = vmul.f32 %v193, %v195
      %v197 = vadd.f32 %v191, %v196
      %v198 = vld [vmem:[%s186 + $0x1] sm:$0x1]
      %s199 = scalar_lea.vmem %s1, 5
      %v200 = vld [vmem:[%s199] sm:$0x1]
      %v201 = vmul.f32 %v198, %v200
      %v202 = vadd.f32 %v197, %v201
      %s203 = scalar_lea.vmem %s167, 2
      %v204 = vld [vmem:[%s203] sm:$0x1]
      %s205 = scalar_lea.vmem %s1, 6
      %v206 = vld [vmem:[%s205] sm:$0x1]
      %v207 = vmul.f32 %v204, %v206
      %v208 = vadd.f32 %v202, %v207
      %s209 = scalar_lea.vmem %s167, 6
      %v210 = vld [vmem:[%s209] sm:$0x1]
      %s211 = scalar_lea.vmem %s1, 7
      %v212 = vld [vmem:[%s211] sm:$0x1]
      %v213 = vmul.f32 %v210, %v212
      %v214 = vadd.f32 %v208, %v213
      %v215 = vld [vmem:[%s203 + $0x1] sm:$0x1]
      %s216 = scalar_lea.vmem %s1, 8
      %v217 = vld [vmem:[%s216] sm:$0x1]
      %v218 = vmul.f32 %v215, %v217
      %v219 = vadd.f32 %v214, %v218
      %v220 = vld [vmem:[%s2] sm:$0x1]
      %v221 = vadd.f32 %v219, %v220
      %vm222 = vcmask 385024
      %223 = vst.msk [vmem:[%s171] sm:$0x1] %vm222, %v221
      %p224 = scmp.lt.s32.totalorder %s14, 1
      %s225 = scalar_select %p224, %s14, 1
      %s226 = scalar_lea.vmem %s3, %s225
      // Predicated region
      $region33: #{_lambda_.76} parent=31 // pred_check
        %p227 = pneg %p100
      $region34: #{_lambda_.76} parent=31 // pred_check_branch
        %229 = sbr.rel (%p227) target = $region36
      $region35: #{_lambda_.76} parent=31 // pred_region
        _
      $region36: #{_lambda_.76} parent=31 // pred_fallthru
        _
    $region32: #{_lambda_.76} parent=5 // pred_fallthru
      _
    %p230 = scmp.le.s32.totalorder 2, %s9
    // Predicated region
    $region37: #{_lambda_.76} parent=5 // pred_check
      %p231 = pneg %p230
    $region38: #{_lambda_.76} parent=5 // pred_check_branch
      %233 = sbr.rel (%p231) target = $region40
    $region39: #{_lambda_.76} parent=5 // pred_region
      %s234 = ssub.s32 %s9, 2
      // Predicated region
      $region41: #{_lambda_.76} parent=39 // pred_check
        %p235 = pneg %p106
      $region42: #{_lambda_.76} parent=39 // pred_check_branch
        %237 = sbr.rel (%p235) target = $region44
      $region43: #{_lambda_.76} parent=39 // pred_region
        %p238 = scmp.lt.s32.totalorder %s15, 1
        %s239 = scalar_select %p238, %s15, 1
        %s240 = scalar_lea.vmem %s3, %s239
      $region44: #{_lambda_.76} parent=39 // pred_fallthru
        _
    $region40: #{_lambda_.76} parent=5 // pred_fallthru
      _
  $region6: #{_lambda_.76} parent=0 // loop_footer
    %s13 = sadd.s32 1, %s9
  $region7: #{_lambda_.76} parent=0 // loop_footer_branch
    %8 = sbr.rel target = $region3
  $region8: #{_lambda_.76} parent=0 // loop_exit
    _

// kernel: _lambda_.75
$region0: #{_lambda_.75}
  #allocation0 [shape = 'u32[]', space=smem, size = 0x4, offset = 0x4, fixed_abs, tag = 'smem constant byte address 0x4 - core index']
  #allocation1 [shape = 'u32[144,128]{1,0:T(1,128)}', space=vmem, size = 0x12000, scoped, tag = 'internal scratch']
  %s0 = inlined_call_operand.vmem [shape: f32[8,48], index: 0, kind: input, shape index: {}]
  %s1 = inlined_call_operand.vmem [shape: bf16[48,48], index: 1, kind: input, shape index: {}]
  %s2 = inlined_call_operand.vmem [shape: f32[1,48], index: 2, kind: input, shape index: {}]
  %s3 = inlined_call_operand.vmem [shape: f32[8,48], index: 3, kind: output, shape index: {}]
  %s4 = sld [smem:[#allocation0]]
  $region22: #{_lambda_.75} parent=0
    _
  %s6 = ssub.s32 1, %s4
  %s7 = scalar_select 0, %s6, %s4
  // Predicated region
  $region2: #{_lambda_.75} parent=0 // pred_check
    _
  $region3: #{_lambda_.75} parent=0 // pred_check_branch
    %9 = sbr.rel (0) target = $region5
  $region4: #{_lambda_.75} parent=0 // pred_region
    _
  $region5: #{_lambda_.75} parent=0 // pred_fallthru
    _
  // Predicated region
  $region6: #{_lambda_.75} parent=0 // pred_check
    _
  $region7: #{_lambda_.75} parent=0 // pred_check_branch
    %11 = sbr.rel (0) target = $region9
  $region8: #{_lambda_.75} parent=0 // pred_region
    _
  $region9: #{_lambda_.75} parent=0 // pred_fallthru
    _
  // Predicated region
  $region10: #{_lambda_.75} parent=0 // pred_check
    _
  $region11: #{_lambda_.75} parent=0 // pred_check_branch
    %13 = sbr.rel (0) target = $region13
  $region12: #{_lambda_.75} parent=0 // pred_region
    _
  $region13: #{_lambda_.75} parent=0 // pred_fallthru
    _
  %v15 = vld [vmem:[%s0] sm:$0xff]
  %v16 = vpack.c.bf16 %v15, %v15
  %v17 = vld [vmem:[%s1] sm:$0xf]
  %v18 = vld [vmem:[%s1 + $0x4] sm:$0xf]
  %v19 = vld [vmem:[%s1 + $0x8] sm:$0xf]
  %v20 = vld [vmem:[%s1 + $0xc] sm:$0xf]
  %v21 = vld [vmem:[%s1 + $0x10] sm:$0xf]
  %v22 = vld [vmem:[%s1 + $0x14] sm:$0xf]
  %v23 = vld [vmem:[%s2] sm:$0x1]
  %v25 = vlaneseq
  %v26 = vshrl.u32 %v25, 7
  %v27 = vsub.s32 0, %v26
  %v28 = vrot.slane %v23, %v27
  %v36 = vunpack.c.l.b16 %v17
  %v37 = vunpack.c.l.b16 %v18
  %v38 = vunpack.c.l.b16 %v19
  %v39 = vunpack.c.l.b16 %v20
  %v40 = vunpack.c.l.b16 %v21
  %v41 = vunpack.c.l.b16 %v22
  %v42 = vpack.c.b16 %v37, %v36
  %v43 = vpack.c.b16 %v39, %v38
  %v44 = vpack.c.b16 %v41, %v40
  %vm48 = vcmask 392192
  %v50 = vsel %vm48, %v16, 0
  %52 = vmatprep.subr.bf16.mxu0 0
  %53 = vmatpush1.bf16.msra.mxu0 %v42
  %54 = vmatprep.subr.bf16.mxu0 0
  %55 = vmatpush1.bf16.msra.mxu0 %v43
  %56 = vmatprep.subr.bf16.mxu0 0
  %57 = vmatpush1.bf16.msra.mxu0 %v44
  %58 = vmatprep.subr.bf16.mxu0 0
  %59 = vmatpush1.bf16.msra.mxu0 0
  %60 = vmatprep.subr.bf16.mxu0 0
  %61 = vmatpush1.bf16.msra.mxu0 0
  %62 = vmatprep.subr.bf16.mxu0 0
  %63 = vmatpush1.bf16.msra.mxu0 0
  %64 = vmatprep.subr.bf16.mxu0 0
  %65 = vmatpush1.bf16.msra.mxu0 0
  %66 = vmatprep.subr.bf16.mxu0 0
  %67 = vmatpush1.bf16.msra.mxu0 0
  %68 = vmatprep.subr.bf16.mxu0 0
  %69 = vmatpush1.bf16.msra.mxu0 0
  %70 = vmatprep.subr.bf16.mxu0 0
  %71 = vmatpush1.bf16.msra.mxu0 0
  %72 = vmatprep.subr.bf16.mxu0 0
  %73 = vmatpush1.bf16.msra.mxu0 0
  %74 = vmatprep.subr.bf16.mxu0 0
  %75 = vmatpush1.bf16.msra.mxu0 0
  %76 = vmatprep.subr.bf16.mxu0 0
  %77 = vmatpush1.bf16.msra.mxu0 0
  %78 = vmatprep.subr.bf16.mxu0 0
  %79 = vmatpush1.bf16.msra.mxu0 0
  %80 = vmatprep.subr.bf16.mxu0 0
  %81 = vmatpush1.bf16.msra.mxu0 0
  %82 = vmatprep.subr.bf16.mxu0 0
  %83 = vmatpush1.bf16.msra.mxu0 0
  %84 = vmatprep.mubr.bf16.mxu0 0
  %85 = vmatmul.mubr.bf16.gmra.mrb[0].mxu0 %v50
  %v86 = vpop.f32.mrb[0].mxu0
  %v87 = vadd.f32 %v28, %v86
  %v88 = vpop.f32.mrb[0].mxu0
  %v89 = vpop.f32.mrb[0].mxu0
  %v90 = vpop.f32.mrb[0].mxu0
  %91 = vdwg.mxu0
  %v92 = vmax.f32 %v87, 0.0
  %93 = vst.msk [vmem:[%s3] sm:$0xff] %vm48, %v92
  // Predicated region
  $region14: #{_lambda_.75} parent=0 // pred_check
    _
  $region15: #{_lambda_.75} parent=0 // pred_check_branch
    %95 = sbr.rel (0) target = $region17
  $region16: #{_lambda_.75} parent=0 // pred_region
    _
  $region17: #{_lambda_.75} parent=0 // pred_fallthru
    _
  // Predicated region
  $region18: #{_lambda_.75} parent=0 // pred_check
    _
  $region19: #{_lambda_.75} parent=0 // pred_check_branch
    %97 = sbr.rel (0) target = $region21
  $region20: #{_lambda_.75} parent=0 // pred_region
    _
  $region21: #{_lambda_.75} parent=0 // pred_fallthru
    _

// kernel: _lambda_.79
$region0: #{_lambda_.79}
  #allocation0 [shape = 'u32[]', space=smem, size = 0x4, offset = 0x4, fixed_abs, tag = 'smem constant byte address 0x4 - core index']
  #allocation1 [shape = 'u32[144,128]{1,0:T(1,128)}', space=vmem, size = 0x12000, scoped, tag = 'internal scratch']
  %s0 = inlined_call_operand.vmem [shape: f32[2,3,3,48], index: 0, kind: input, shape index: {}]
  %s1 = inlined_call_operand.vmem [shape: f32[9,1,48], index: 1, kind: input, shape index: {}]
  %s2 = inlined_call_operand.vmem [shape: f32[1,48], index: 2, kind: input, shape index: {}]
  %s3 = inlined_call_operand.vmem [shape: f32[2,1,48], index: 3, kind: output, shape index: {}]
  %s4 = sld [smem:[#allocation0]]
  $region45: #{_lambda_.79} parent=0
    _
  %s6 = ssub.s32 1, %s4
  %s7 = scalar_select 0, %s6, %s4
  loop: start=0, step=1, limit=4
  $region2: #{_lambda_.79} parent=0 // loop_pre_header
    _
  $region3: #{_lambda_.79} parent=0 // loop_header
    %s9 = sphi 0, %s13
    %p10 = scmp.ge.s32.totalorder %s9, 4
    %s19 = sphi 0, %s21
    %s22 = sphi 0, %s19
    %s23 = sphi 0, %s22
    %s39 = sphi 0, %s23
    %s43 = sphi 0, %s43
    %s45 = sphi 0, %s43
    %s46 = sphi 0, %s45
    %s60 = sphi 0, %s46
    %s64 = sphi 0, %s64
    %s66 = sphi 0, %s64
    %s67 = sphi 0, %s66
    %s81 = sphi 0, %s67
    %s87 = sphi 0, %s89
    %s90 = sphi 0, %s87
    %s91 = sphi 0, %s90
    %s107 = sphi 0, %s91
  $region4: #{_lambda_.79} parent=0 // loop_header_branch
    %12 = sbr.rel (%p10) target = $region8
  $region5: #{_lambda_.79} parent=0 // loop_body
    %s14 = ssub.s32 %s9, 1
    %s15 = ssub.s32 %s9, 2
    %s16 = sadd.s32 %s9, 1
    %s17 = ssub.s32 %s9, %s16
    %p18 = scmp.eq.s32.totalorder %s17, 0
    %s20 = sadd.s32 %s19, 1
    %s21 = scalar_select %p18, %s19, %s20
    %p24 = pneg %p18
    %p25 = scmp.eq.s32.totalorder %s9, 1
    %p26 = por %p24, %p25
    %p27 = scmp.ne.s32.totalorder %s19, %s22
    %p28 = scmp.eq.s32.totalorder %s9, 0
    %p29 = por %p27, %p28
    %p30 = scmp.ne.s32.totalorder %s19, %s22
    %p31 = scmp.eq.s32.totalorder %s14, 1
    %p32 = por %p30, %p31
    %p33 = scmp.ne.s32.totalorder %s22, %s23
    %p34 = scmp.eq.s32.totalorder %s14, 0
    %p35 = por %p33, %p34
    %p36 = scmp.ne.s32.totalorder %s22, %s23
    %p37 = scmp.eq.s32.totalorder %s15, 1
    %p38 = por %p36, %p37
    %p40 = scmp.ne.s32.totalorder %s23, %s39
    %p41 = scmp.eq.s32.totalorder %s15, 0
    %p42 = por %p40, %p41
    %s44 = sadd.s32 %s43, 1
    %p47 = scmp.eq.s32.totalorder %s9, 1
    %p48 = scmp.ne.s32.totalorder %s43, %s45
    %p49 = scmp.eq.s32.totalorder %s9, 0
    %p50 = por %p48, %p49
    %p51 = scmp.ne.s32.totalorder %s43, %s45
    %p52 = scmp.eq.s32.totalorder %s14, 1
    %p53 = por %p51, %p52
    %p54 = scmp.ne.s32.totalorder %s45, %s46
    %p55 = scmp.eq.s32.totalorder %s14, 0
    %p56 = por %p54, %p55
    %p57 = scmp.ne.s32.totalorder %s45, %s46
    %p58 = scmp.eq.s32.totalorder %s15, 1
    %p59 = por %p57, %p58
    %p61 = scmp.ne.s32.totalorder %s46, %s60
    %p62 = scmp.eq.s32.totalorder %s15, 0
    %p63 = por %p61, %p62
    %s65 = sadd.s32 %s64, 1
    %p68 = scmp.eq.s32.totalorder %s9, 1
    %p69 = scmp.ne.s32.totalorder %s64, %s66
    %p70 = scmp.eq.s32.totalorder %s9, 0
    %p71 = por %p69, %p70
    %p72 = scmp.ne.s32.totalorder %s64, %s66
    %p73 = scmp.eq.s32.totalorder %s14, 1
    %p74 = por %p72, %p73
    %p75 = scmp.ne.s32.totalorder %s66, %s67
    %p76 = scmp.eq.s32.totalorder %s14, 0
    %p77 = por %p75, %p76
    %p78 = scmp.ne.s32.totalorder %s66, %s67
    %p79 = scmp.eq.s32.totalorder %s15, 1
    %p80 = por %p78, %p79
    %p82 = scmp.ne.s32.totalorder %s67, %s81
    %p83 = scmp.eq.s32.totalorder %s15, 0
    %p84 = por %p82, %p83
    %s85 = ssub.s32 %s9, %s16
    %p86 = scmp.eq.s32.totalorder %s85, 0
    %s88 = sadd.s32 %s87, 1
    %s89 = scalar_select %p86, %s87, %s88
    %p92 = pneg %p86
    %p93 = scmp.eq.s32.totalorder %s9, 1
    %p94 = por %p92, %p93
    %p95 = scmp.ne.s32.totalorder %s87, %s90
    %p96 = scmp.eq.s32.totalorder %s9, 0
    %p97 = por %p95, %p96
    %p98 = scmp.ne.s32.totalorder %s87, %s90
    %p99 = scmp.eq.s32.totalorder %s14, 1
    %p100 = por %p98, %p99
    %p101 = scmp.ne.s32.totalorder %s90, %s91
    %p102 = scmp.eq.s32.totalorder %s14, 0
    %p103 = por %p101, %p102
    %p104 = scmp.ne.s32.totalorder %s90, %s91
    %p105 = scmp.eq.s32.totalorder %s15, 1
    %p106 = por %p104, %p105
    %p108 = scmp.ne.s32.totalorder %s91, %s107
    %p109 = scmp.eq.s32.totalorder %s15, 0
    %p110 = por %p108, %p109
    %p111 = scmp.le.s32.totalorder 1, %s9
    %p112 = scmp.lt.s32.totalorder %s9, 3
    %p113 = pnand %p111, %p112
    %p114 = pneg %p113
    // Predicated region
    $region9: #{_lambda_.79} parent=5 // pred_check
      _
    $region10: #{_lambda_.79} parent=5 // pred_check_branch
      %116 = sbr.rel (%p113) target = $region12
    $region11: #{_lambda_.79} parent=5 // pred_region
      %s117 = ssub.s32 %s9, 1
      // Predicated region
      $region13: #{_lambda_.79} parent=11 // pred_check
        %p118 = pneg %p56
      $region14: #{_lambda_.79} parent=11 // pred_check_branch
        %120 = sbr.rel (%p118) target = $region16
      $region15: #{_lambda_.79} parent=11 // pred_region
        _
      $region16: #{_lambda_.79} parent=11 // pred_fallthru
        _
      // Predicated region
      $region17: #{_lambda_.79} parent=11 // pred_check
        %p121 = pneg %p77
      $region18: #{_lambda_.79} parent=11 // pred_check_branch
        %123 = sbr.rel (%p121) target = $region20
      $region19: #{_lambda_.79} parent=11 // pred_region
        _
      $region20: #{_lambda_.79} parent=11 // pred_fallthru
        _
    $region12: #{_lambda_.79} parent=5 // pred_fallthru
      _
    %p124 = scmp.lt.s32.totalorder %s9, 2
    // Predicated region
    $region21: #{_lambda_.79} parent=5 // pred_check
      %p125 = pneg %p124
    $region22: #{_lambda_.79} parent=5 // pred_check_branch
      %127 = sbr.rel (%p125) target = $region24
    $region23: #{_lambda_.79} parent=5 // pred_region
      // Predicated region
      $region25: #{_lambda_.79} parent=23 // pred_check
        %p128 = pneg %p29
      $region26: #{_lambda_.79} parent=23 // pred_check_branch
        %130 = sbr.rel (%p128) target = $region28
      $region27: #{_lambda_.79} parent=23 // pred_region
        %p131 = scmp.lt.s32.totalorder %s9, 1
        %s132 = scalar_select %p131, %s9, 1
        %s133 = smul.addr %s132, 3
        %s134 = smul.addr %s133, 4
        %s135 = scalar_lea.vmem %s0, %s134
      $region28: #{_lambda_.79} parent=23 // pred_fallthru
        _
    $region24: #{_lambda_.79} parent=5 // pred_fallthru
      _
    %p136 = scmp.le.s32.totalorder 1, %s9
    %p137 = scmp.lt.s32.totalorder %s9, 3
    %p138 = pnand %p136, %p137
    %p139 = pneg %p138
    // Predicated region
    $region29: #{_lambda_.79} parent=5 // pred_check
      _
    $region30: #{_lambda_.79} parent=5 // pred_check_branch
      %141 = sbr.rel (%p138) target = $region32
    $region31: #{_lambda_.79} parent=5 // pred_region
      %s142 = ssub.s32 %s9, 1
      %p143 = scmp.lt.s32.totalorder %s14, 1
      %s144 = scalar_select %p143, %s14, 1
      %s145 = smul.addr %s144, 3
      %s146 = smul.addr %s145, 4
      %s147 = scalar_lea.vmem %s0, %s146
      %p148 = pneg %p35
      %p149 = pneg %p32
      %p150 = pneg %p56
      %p151 = pneg %p53
      %p152 = pneg %p77
      %p153 = pneg %p74
      %p154 = pneg %p103
      %p155 = pneg %p100
      %p156 = scmp.lt.s32.totalorder %s14, 1
      %s157 = scalar_select %p156, %s14, 1
      %s158 = scalar_lea.vmem %s3, %s157
      %p159 = scmp.lt.s32.totalorder %s14, 1
      %s160 = scalar_select %p159, %s14, 1
      %s161 = smul.addr %s160, 3
      %s162 = smul.addr %s161, 4
      %s163 = scalar_lea.vmem %s0, %s162
      %p164 = scmp.lt.s32.totalorder %s14, 1
      %s165 = scalar_select %p164, %s14, 1
      %s166 = scalar_lea.vmem %s3, %s165
      %v167 = vld [vmem:[%s163] sm:$0x1]
      %v168 = vld [vmem:[%s1] sm:$0x1]
      %v169 = vmul.f32 %v167, %v168
      %v170 = vld [vmem:[%s163 + $0x1] sm:$0x1]
      %s171 = scalar_lea.vmem %s1, 1
      %v172 = vld [vmem:[%s171] sm:$0x1]
      %v173 = vmul.f32 %v170, %v172
      %v174 = vadd.f32 %v169, %v173
      %v175 = vld [vmem:[%s163 + $0x2] sm:$0x1]
      %s176 = scalar_lea.vmem %s1, 2
      %v177 = vld [vmem:[%s176] sm:$0x1]
      %v178 = vmul.f32 %v175, %v177
      %v179 = vadd.f32 %v174, %v178
      %s180 = scalar_lea.vmem %s163, 4
      %v181 = vld [vmem:[%s180] sm:$0x1]
      %s182 = scalar_lea.vmem %s1, 3
      %v183 = vld [vmem:[%s182] sm:$0x1]
      %v184 = vmul.f32 %v181, %v183
      %v185 = vadd.f32 %v179, %v184
      %v186 = vld [vmem:[%s180 + $0x1] sm:$0x1]
      %s187 = scalar_lea.vmem %s1, 4
      %v188 = vld [vmem:[%s187] sm:$0x1]
      %v189 = vmul.f32 %v186, %v188
      %v190 = vadd.f32 %v185, %v189
      %v191 = vld [vmem:[%s180 + $0x2] sm:$0x1]
      %s192 = scalar_lea.vmem %s1, 5
      %v193 = vld [vmem:[%s192] sm:$0x1]
      %v194 = vmul.f32 %v191, %v193
      %v195 = vadd.f32 %v190, %v194
      %s196 = scalar_lea.vmem %s163, 8
      %v197 = vld [vmem:[%s196] sm:$0x1]
      %s198 = scalar_lea.vmem %s1, 6
      %v199 = vld [vmem:[%s198] sm:$0x1]
      %v200 = vmul.f32 %v197, %v199
      %v201 = vadd.f32 %v195, %v200
      %v202 = vld [vmem:[%s196 + $0x1] sm:$0x1]
      %s203 = scalar_lea.vmem %s1, 7
      %v204 = vld [vmem:[%s203] sm:$0x1]
      %v205 = vmul.f32 %v202, %v204
      %v206 = vadd.f32 %v201, %v205
      %v207 = vld [vmem:[%s196 + $0x2] sm:$0x1]
      %s208 = scalar_lea.vmem %s1, 8
      %v209 = vld [vmem:[%s208] sm:$0x1]
      %v210 = vmul.f32 %v207, %v209
      %v211 = vadd.f32 %v206, %v210
      %v212 = vld [vmem:[%s2] sm:$0x1]
      %v213 = vadd.f32 %v211, %v212
      %vm214 = vcmask 385024
      %215 = vst.msk [vmem:[%s166] sm:$0x1] %vm214, %v213
      %p216 = scmp.lt.s32.totalorder %s14, 1
      %s217 = scalar_select %p216, %s14, 1
      %s218 = scalar_lea.vmem %s3, %s217
      // Predicated region
      $region33: #{_lambda_.79} parent=31 // pred_check
        %p219 = pneg %p100
      $region34: #{_lambda_.79} parent=31 // pred_check_branch
        %221 = sbr.rel (%p219) target = $region36
      $region35: #{_lambda_.79} parent=31 // pred_region
        _
      $region36: #{_lambda_.79} parent=31 // pred_fallthru
        _
    $region32: #{_lambda_.79} parent=5 // pred_fallthru
      _
    %p222 = scmp.le.s32.totalorder 2, %s9
    // Predicated region
    $region37: #{_lambda_.79} parent=5 // pred_check
      %p223 = pneg %p222
    $region38: #{_lambda_.79} parent=5 // pred_check_branch
      %225 = sbr.rel (%p223) target = $region40
    $region39: #{_lambda_.79} parent=5 // pred_region
      %s226 = ssub.s32 %s9, 2
      // Predicated region
      $region41: #{_lambda_.79} parent=39 // pred_check
        %p227 = pneg %p106
      $region42: #{_lambda_.79} parent=39 // pred_check_branch
        %229 = sbr.rel (%p227) target = $region44
      $region43: #{_lambda_.79} parent=39 // pred_region
        %p230 = scmp.lt.s32.totalorder %s15, 1
        %s231 = scalar_select %p230, %s15, 1
        %s232 = scalar_lea.vmem %s3, %s231
      $region44: #{_lambda_.79} parent=39 // pred_fallthru
        _
    $region40: #{_lambda_.79} parent=5 // pred_fallthru
      _
  $region6: #{_lambda_.79} parent=0 // loop_footer
    %s13 = sadd.s32 1, %s9
  $region7: #{_lambda_.79} parent=0 // loop_footer_branch
    %8 = sbr.rel target = $region3
  $region8: #{_lambda_.79} parent=0 // loop_exit
    _

// kernel: _lambda_.101
$region0: #{_lambda_.101}
  #allocation0 [shape = 'u32[]', space=smem, size = 0x4, offset = 0x4, fixed_abs, tag = 'smem constant byte address 0x4 - core index']
  #allocation1 [shape = 'u32[144,128]{1,0:T(1,128)}', space=vmem, size = 0x12000, scoped, tag = 'internal scratch']
  %s0 = inlined_call_operand.vmem [shape: f32[8,96], index: 0, kind: input, shape index: {}]
  %s1 = inlined_call_operand.vmem [shape: bf16[96,96], index: 1, kind: input, shape index: {}]
  %s2 = inlined_call_operand.vmem [shape: f32[1,96], index: 2, kind: input, shape index: {}]
  %s3 = inlined_call_operand.vmem [shape: f32[8,96], index: 3, kind: output, shape index: {}]
  %s4 = sld [smem:[#allocation0]]
  $region22: #{_lambda_.101} parent=0
    _
  %s6 = ssub.s32 1, %s4
  %s7 = scalar_select 0, %s6, %s4
  // Predicated region
  $region2: #{_lambda_.101} parent=0 // pred_check
    _
  $region3: #{_lambda_.101} parent=0 // pred_check_branch
    %9 = sbr.rel (0) target = $region5
  $region4: #{_lambda_.101} parent=0 // pred_region
    _
  $region5: #{_lambda_.101} parent=0 // pred_fallthru
    _
  // Predicated region
  $region6: #{_lambda_.101} parent=0 // pred_check
    _
  $region7: #{_lambda_.101} parent=0 // pred_check_branch
    %11 = sbr.rel (0) target = $region9
  $region8: #{_lambda_.101} parent=0 // pred_region
    _
  $region9: #{_lambda_.101} parent=0 // pred_fallthru
    _
  // Predicated region
  $region10: #{_lambda_.101} parent=0 // pred_check
    _
  $region11: #{_lambda_.101} parent=0 // pred_check_branch
    %13 = sbr.rel (0) target = $region13
  $region12: #{_lambda_.101} parent=0 // pred_region
    _
  $region13: #{_lambda_.101} parent=0 // pred_fallthru
    _
  %v15 = vld [vmem:[%s0] sm:$0xff]
  %v16 = vpack.c.bf16 %v15, %v15
  %v17 = vld [vmem:[%s1] sm:$0xf]
  %v18 = vld [vmem:[%s1 + $0x4] sm:$0xf]
  %v19 = vld [vmem:[%s1 + $0x8] sm:$0xf]
  %v20 = vld [vmem:[%s1 + $0xc] sm:$0xf]
  %v21 = vld [vmem:[%s1 + $0x10] sm:$0xf]
  %v22 = vld [vmem:[%s1 + $0x14] sm:$0xf]
  %v23 = vld [vmem:[%s1 + $0x18] sm:$0xf]
  %v24 = vld [vmem:[%s1 + $0x1c] sm:$0xf]
  %v25 = vld [vmem:[%s1 + $0x20] sm:$0xf]
  %v26 = vld [vmem:[%s1 + $0x24] sm:$0xf]
  %v27 = vld [vmem:[%s1 + $0x28] sm:$0xf]
  %v28 = vld [vmem:[%s1 + $0x2c] sm:$0xf]
  %v29 = vld [vmem:[%s2] sm:$0x1]
  %v31 = vlaneseq
  %v32 = vshrl.u32 %v31, 7
  %v33 = vsub.s32 0, %v32
  %v34 = vrot.slane %v29, %v33
  %v48 = vunpack.c.l.b16 %v17
  %v49 = vunpack.c.l.b16 %v18
  %v50 = vunpack.c.l.b16 %v19
  %v51 = vunpack.c.l.b16 %v20
  %v52 = vunpack.c.l.b16 %v21
  %v53 = vunpack.c.l.b16 %v22
  %v54 = vunpack.c.l.b16 %v23
  %v55 = vunpack.c.l.b16 %v24
  %v56 = vunpack.c.l.b16 %v25
  %v57 = vunpack.c.l.b16 %v26
  %v58 = vunpack.c.l.b16 %v27
  %v59 = vunpack.c.l.b16 %v28
  %v60 = vpack.c.b16 %v49, %v48
  %v61 = vpack.c.b16 %v51, %v50
  %v62 = vpack.c.b16 %v53, %v52
  %v63 = vpack.c.b16 %v55, %v54
  %v64 = vpack.c.b16 %v57, %v56
  %v65 = vpack.c.b16 %v59, %v58
  %vm72 = vcmask 785408
  %v74 = vsel %vm72, %v16, 0
  %76 = vmatprep.subr.bf16.mxu0 0
  %77 = vmatpush1.bf16.msra.mxu0 %v60
  %78 = vmatprep.subr.bf16.mxu0 0
  %79 = vmatpush1.bf16.msra.mxu0 %v61
  %80 = vmatprep.subr.bf16.mxu0 0
  %81 = vmatpush1.bf16.msra.mxu0 %v62
  %82 = vmatprep.subr.bf16.mxu0 0
  %83 = vmatpush1.bf16.msra.mxu0 %v63
  %84 = vmatprep.subr.bf16.mxu0 0
  %85 = vmatpush1.bf16.msra.mxu0 %v64
  %86 = vmatprep.subr.bf16.mxu0 0
  %87 = vmatpush1.bf16.msra.mxu0 %v65
  %88 = vmatprep.subr.bf16.mxu0 0
  %89 = vmatpush1.bf16.msra.mxu0 0
  %90 = vmatprep.subr.bf16.mxu0 0
  %91 = vmatpush1.bf16.msra.mxu0 0
  %92 = vmatprep.subr.bf16.mxu0 0
  %93 = vmatpush1.bf16.msra.mxu0 0
  %94 = vmatprep.subr.bf16.mxu0 0
  %95 = vmatpush1.bf16.msra.mxu0 0
  %96 = vmatprep.subr.bf16.mxu0 0
  %97 = vmatpush1.bf16.msra.mxu0 0
  %98 = vmatprep.subr.bf16.mxu0 0
  %99 = vmatpush1.bf16.msra.mxu0 0
  %100 = vmatprep.subr.bf16.mxu0 0
  %101 = vmatpush1.bf16.msra.mxu0 0
  %102 = vmatprep.subr.bf16.mxu0 0
  %103 = vmatpush1.bf16.msra.mxu0 0
  %104 = vmatprep.subr.bf16.mxu0 0
  %105 = vmatpush1.bf16.msra.mxu0 0
  %106 = vmatprep.subr.bf16.mxu0 0
  %107 = vmatpush1.bf16.msra.mxu0 0
  %108 = vmatprep.mubr.bf16.mxu0 0
  %109 = vmatmul.mubr.bf16.gmra.mrb[0].mxu0 %v74
  %v110 = vpop.f32.mrb[0].mxu0
  %v111 = vadd.f32 %v34, %v110
  %v112 = vpop.f32.mrb[0].mxu0
  %v113 = vpop.f32.mrb[0].mxu0
  %v114 = vpop.f32.mrb[0].mxu0
  %115 = vdwg.mxu0
  %v116 = vmax.f32 %v111, 0.0
  %117 = vst.msk [vmem:[%s3] sm:$0xff] %vm72, %v116
  // Predicated region
  $region14: #{_lambda_.101} parent=0 // pred_check
    _
  $region15: #{_lambda_.101} parent=0 // pred_check_branch
    %119 = sbr.rel (0) target = $region17
  $region16: #{_lambda_.101} parent=0 // pred_region
    _
  $region17: #{_lambda_.101} parent=0 // pred_fallthru
    _
  // Predicated region
  $region18: #{_lambda_.101} parent=0 // pred_check
    _
  $region19: #{_lambda_.101} parent=0 // pred_check_branch
    %121 = sbr.rel (0) target = $region21
  $region20: #{_lambda_.101} parent=0 // pred_region
    _
  $region21: #{_lambda_.101} parent=0 // pred_fallthru
    _

// kernel: _lambda_.102
$region0: #{_lambda_.102}
  #allocation0 [shape = 'u32[]', space=smem, size = 0x4, offset = 0x4, fixed_abs, tag = 'smem constant byte address 0x4 - core index']
  #allocation1 [shape = 'u32[144,128]{1,0:T(1,128)}', space=vmem, size = 0x12000, scoped, tag = 'internal scratch']
  %s0 = inlined_call_operand.vmem [shape: f32[8,2,2,96], index: 0, kind: input, shape index: {}]
  %s1 = inlined_call_operand.vmem [shape: f32[9,1,96], index: 1, kind: input, shape index: {}]
  %s2 = inlined_call_operand.vmem [shape: f32[1,96], index: 2, kind: input, shape index: {}]
  %s3 = inlined_call_operand.vmem [shape: f32[2,1,96], index: 3, kind: output, shape index: {}]
  %s4 = sld [smem:[#allocation0]]
  $region45: #{_lambda_.102} parent=0
    _
  %s6 = ssub.s32 1, %s4
  %s7 = scalar_select 0, %s6, %s4
  loop: start=0, step=1, limit=4
  $region2: #{_lambda_.102} parent=0 // loop_pre_header
    _
  $region3: #{_lambda_.102} parent=0 // loop_header
    %s9 = sphi 0, %s13
    %p10 = scmp.ge.s32.totalorder %s9, 4
    %s19 = sphi 0, %s21
    %s22 = sphi 0, %s19
    %s23 = sphi 0, %s22
    %s39 = sphi 0, %s23
    %s43 = sphi 0, %s43
    %s45 = sphi 0, %s43
    %s46 = sphi 0, %s45
    %s60 = sphi 0, %s46
    %s64 = sphi 0, %s64
    %s66 = sphi 0, %s64
    %s67 = sphi 0, %s66
    %s81 = sphi 0, %s67
    %s87 = sphi 0, %s89
    %s90 = sphi 0, %s87
    %s91 = sphi 0, %s90
    %s107 = sphi 0, %s91
  $region4: #{_lambda_.102} parent=0 // loop_header_branch
    %12 = sbr.rel (%p10) target = $region8
  $region5: #{_lambda_.102} parent=0 // loop_body
    %s14 = ssub.s32 %s9, 1
    %s15 = ssub.s32 %s9, 2
    %s16 = sadd.s32 %s9, 1
    %s17 = ssub.s32 %s9, %s16
    %p18 = scmp.eq.s32.totalorder %s17, 0
    %s20 = sadd.s32 %s19, 1
    %s21 = scalar_select %p18, %s19, %s20
    %p24 = pneg %p18
    %p25 = scmp.eq.s32.totalorder %s9, 1
    %p26 = por %p24, %p25
    %p27 = scmp.ne.s32.totalorder %s19, %s22
    %p28 = scmp.eq.s32.totalorder %s9, 0
    %p29 = por %p27, %p28
    %p30 = scmp.ne.s32.totalorder %s19, %s22
    %p31 = scmp.eq.s32.totalorder %s14, 1
    %p32 = por %p30, %p31
    %p33 = scmp.ne.s32.totalorder %s22, %s23
    %p34 = scmp.eq.s32.totalorder %s14, 0
    %p35 = por %p33, %p34
    %p36 = scmp.ne.s32.totalorder %s22, %s23
    %p37 = scmp.eq.s32.totalorder %s15, 1
    %p38 = por %p36, %p37
    %p40 = scmp.ne.s32.totalorder %s23, %s39
    %p41 = scmp.eq.s32.totalorder %s15, 0
    %p42 = por %p40, %p41
    %s44 = sadd.s32 %s43, 1
    %p47 = scmp.eq.s32.totalorder %s9, 1
    %p48 = scmp.ne.s32.totalorder %s43, %s45
    %p49 = scmp.eq.s32.totalorder %s9, 0
    %p50 = por %p48, %p49
    %p51 = scmp.ne.s32.totalorder %s43, %s45
    %p52 = scmp.eq.s32.totalorder %s14, 1
    %p53 = por %p51, %p52
    %p54 = scmp.ne.s32.totalorder %s45, %s46
    %p55 = scmp.eq.s32.totalorder %s14, 0
    %p56 = por %p54, %p55
    %p57 = scmp.ne.s32.totalorder %s45, %s46
    %p58 = scmp.eq.s32.totalorder %s15, 1
    %p59 = por %p57, %p58
    %p61 = scmp.ne.s32.totalorder %s46, %s60
    %p62 = scmp.eq.s32.totalorder %s15, 0
    %p63 = por %p61, %p62
    %s65 = sadd.s32 %s64, 1
    %p68 = scmp.eq.s32.totalorder %s9, 1
    %p69 = scmp.ne.s32.totalorder %s64, %s66
    %p70 = scmp.eq.s32.totalorder %s9, 0
    %p71 = por %p69, %p70
    %p72 = scmp.ne.s32.totalorder %s64, %s66
    %p73 = scmp.eq.s32.totalorder %s14, 1
    %p74 = por %p72, %p73
    %p75 = scmp.ne.s32.totalorder %s66, %s67
    %p76 = scmp.eq.s32.totalorder %s14, 0
    %p77 = por %p75, %p76
    %p78 = scmp.ne.s32.totalorder %s66, %s67
    %p79 = scmp.eq.s32.totalorder %s15, 1
    %p80 = por %p78, %p79
    %p82 = scmp.ne.s32.totalorder %s67, %s81
    %p83 = scmp.eq.s32.totalorder %s15, 0
    %p84 = por %p82, %p83
    %s85 = ssub.s32 %s9, %s16
    %p86 = scmp.eq.s32.totalorder %s85, 0
    %s88 = sadd.s32 %s87, 1
    %s89 = scalar_select %p86, %s87, %s88
    %p92 = pneg %p86
    %p93 = scmp.eq.s32.totalorder %s9, 1
    %p94 = por %p92, %p93
    %p95 = scmp.ne.s32.totalorder %s87, %s90
    %p96 = scmp.eq.s32.totalorder %s9, 0
    %p97 = por %p95, %p96
    %p98 = scmp.ne.s32.totalorder %s87, %s90
    %p99 = scmp.eq.s32.totalorder %s14, 1
    %p100 = por %p98, %p99
    %p101 = scmp.ne.s32.totalorder %s90, %s91
    %p102 = scmp.eq.s32.totalorder %s14, 0
    %p103 = por %p101, %p102
    %p104 = scmp.ne.s32.totalorder %s90, %s91
    %p105 = scmp.eq.s32.totalorder %s15, 1
    %p106 = por %p104, %p105
    %p108 = scmp.ne.s32.totalorder %s91, %s107
    %p109 = scmp.eq.s32.totalorder %s15, 0
    %p110 = por %p108, %p109
    %p111 = scmp.le.s32.totalorder 1, %s9
    %p112 = scmp.lt.s32.totalorder %s9, 3
    %p113 = pnand %p111, %p112
    %p114 = pneg %p113
    // Predicated region
    $region9: #{_lambda_.102} parent=5 // pred_check
      _
    $region10: #{_lambda_.102} parent=5 // pred_check_branch
      %116 = sbr.rel (%p113) target = $region12
    $region11: #{_lambda_.102} parent=5 // pred_region
      %s117 = ssub.s32 %s9, 1
      // Predicated region
      $region13: #{_lambda_.102} parent=11 // pred_check
        %p118 = pneg %p56
      $region14: #{_lambda_.102} parent=11 // pred_check_branch
        %120 = sbr.rel (%p118) target = $region16
      $region15: #{_lambda_.102} parent=11 // pred_region
        _
      $region16: #{_lambda_.102} parent=11 // pred_fallthru
        _
      // Predicated region
      $region17: #{_lambda_.102} parent=11 // pred_check
        %p121 = pneg %p77
      $region18: #{_lambda_.102} parent=11 // pred_check_branch
        %123 = sbr.rel (%p121) target = $region20
      $region19: #{_lambda_.102} parent=11 // pred_region
        _
      $region20: #{_lambda_.102} parent=11 // pred_fallthru
        _
    $region12: #{_lambda_.102} parent=5 // pred_fallthru
      _
    %p124 = scmp.lt.s32.totalorder %s9, 2
    // Predicated region
    $region21: #{_lambda_.102} parent=5 // pred_check
      %p125 = pneg %p124
    $region22: #{_lambda_.102} parent=5 // pred_check_branch
      %127 = sbr.rel (%p125) target = $region24
    $region23: #{_lambda_.102} parent=5 // pred_region
      // Predicated region
      $region25: #{_lambda_.102} parent=23 // pred_check
        %p128 = pneg %p29
      $region26: #{_lambda_.102} parent=23 // pred_check_branch
        %130 = sbr.rel (%p128) target = $region28
      $region27: #{_lambda_.102} parent=23 // pred_region
        %s131 = smul.u32 4, %s9
        %p132 = scmp.lt.s32.totalorder %s131, 7
        %s133 = scalar_select %p132, %s131, 7
        %s134 = smul.addr %s133, 2
        %s135 = smul.addr %s134, 2
        %s136 = scalar_lea.vmem %s0, %s135
        %s137 = smul.u32 4, %s9
      $region28: #{_lambda_.102} parent=23 // pred_fallthru
        _
    $region24: #{_lambda_.102} parent=5 // pred_fallthru
      _
    %p138 = scmp.le.s32.totalorder 1, %s9
    %p139 = scmp.lt.s32.totalorder %s9, 3
    %p140 = pnand %p138, %p139
    %p141 = pneg %p140
    // Predicated region
    $region29: #{_lambda_.102} parent=5 // pred_check
      _
    $region30: #{_lambda_.102} parent=5 // pred_check_branch
      %143 = sbr.rel (%p140) target = $region32
    $region31: #{_lambda_.102} parent=5 // pred_region
      %s144 = ssub.s32 %s9, 1
      %s145 = smul.u32 4, %s14
      %p146 = scmp.lt.s32.totalorder %s145, 7
      %s147 = scalar_select %p146, %s145, 7
      %s148 = smul.addr %s147, 2
      %s149 = smul.addr %s148, 2
      %s150 = scalar_lea.vmem %s0, %s149
      %p151 = pneg %p35
      %p152 = pneg %p32
      %p153 = pneg %p56
      %p154 = pneg %p53
      %p155 = pneg %p77
      %p156 = pneg %p74
      %p157 = pneg %p103
      %p158 = pneg %p100
      %p159 = scmp.lt.s32.totalorder %s14, 1
      %s160 = scalar_select %p159, %s14, 1
      %s161 = scalar_lea.vmem %s3, %s160
      %s162 = smul.u32 4, %s14
      %p163 = scmp.lt.s32.totalorder %s162, 7
      %s164 = scalar_select %p163, %s162, 7
      %s165 = smul.addr %s164, 2
      %s166 = smul.addr %s165, 2
      %s167 = scalar_lea.vmem %s0, %s166
      %s168 = smul.u32 4, %s14
      %p169 = scmp.lt.s32.totalorder %s14, 1
      %s170 = scalar_select %p169, %s14, 1
      %s171 = scalar_lea.vmem %s3, %s170
      %v172 = vld [vmem:[%s167] sm:$0x1]
      %v173 = vld [vmem:[%s1] sm:$0x1]
      %v174 = vmul.f32 %v172, %v173
      %s175 = scalar_lea.vmem %s167, 4
      %v176 = vld [vmem:[%s175] sm:$0x1]
      %s177 = scalar_lea.vmem %s1, 1
      %v178 = vld [vmem:[%s177] sm:$0x1]
      %v179 = vmul.f32 %v176, %v178
      %v180 = vadd.f32 %v174, %v179
      %v181 = vld [vmem:[%s167 + $0x1] sm:$0x1]
      %s182 = scalar_lea.vmem %s1, 2
      %v183 = vld [vmem:[%s182] sm:$0x1]
      %v184 = vmul.f32 %v181, %v183
      %v185 = vadd.f32 %v180, %v184
      %s186 = scalar_lea.vmem %s167, 8
      %v187 = vld [vmem:[%s186] sm:$0x1]
      %s188 = scalar_lea.vmem %s1, 3
      %v189 = vld [vmem:[%s188] sm:$0x1]
      %v190 = vmul.f32 %v187, %v189
      %v191 = vadd.f32 %v185, %v190
      %s192 = scalar_lea.vmem %s167, 12
      %v193 = vld [vmem:[%s192] sm:$0x1]
      %s194 = scalar_lea.vmem %s1, 4
      %v195 = vld [vmem:[%s194] sm:$0x1]
      %v196 = vmul.f32 %v193, %v195
      %v197 = vadd.f32 %v191, %v196
      %v198 = vld [vmem:[%s186 + $0x1] sm:$0x1]
      %s199 = scalar_lea.vmem %s1, 5
      %v200 = vld [vmem:[%s199] sm:$0x1]
      %v201 = vmul.f32 %v198, %v200
      %v202 = vadd.f32 %v197, %v201
      %s203 = scalar_lea.vmem %s167, 2
      %v204 = vld [vmem:[%s203] sm:$0x1]
      %s205 = scalar_lea.vmem %s1, 6
      %v206 = vld [vmem:[%s205] sm:$0x1]
      %v207 = vmul.f32 %v204, %v206
      %v208 = vadd.f32 %v202, %v207
      %s209 = scalar_lea.vmem %s167, 6
      %v210 = vld [vmem:[%s209] sm:$0x1]
      %s211 = scalar_lea.vmem %s1, 7
      %v212 = vld [vmem:[%s211] sm:$0x1]
      %v213 = vmul.f32 %v210, %v212
      %v214 = vadd.f32 %v208, %v213
      %v215 = vld [vmem:[%s203 + $0x1] sm:$0x1]
      %s216 = scalar_lea.vmem %s1, 8
      %v217 = vld [vmem:[%s216] sm:$0x1]
      %v218 = vmul.f32 %v215, %v217
      %v219 = vadd.f32 %v214, %v218
      %v220 = vld [vmem:[%s2] sm:$0x1]
      %v221 = vadd.f32 %v219, %v220
      %vm222 = vcmask 778240
      %223 = vst.msk [vmem:[%s171] sm:$0x1] %vm222, %v221
      %p224 = scmp.lt.s32.totalorder %s14, 1
      %s225 = scalar_select %p224, %s14, 1
      %s226 = scalar_lea.vmem %s3, %s225
      // Predicated region
      $region33: #{_lambda_.102} parent=31 // pred_check
        %p227 = pneg %p100
      $region34: #{_lambda_.102} parent=31 // pred_check_branch
        %229 = sbr.rel (%p227) target = $region36
      $region35: #{_lambda_.102} parent=31 // pred_region
        _
      $region36: #{_lambda_.102} parent=31 // pred_fallthru
        _
    $region32: #{_lambda_.102} parent=5 // pred_fallthru
      _
    %p230 = scmp.le.s32.totalorder 2, %s9
    // Predicated region
    $region37: #{_lambda_.102} parent=5 // pred_check
      %p231 = pneg %p230
    $region38: #{_lambda_.102} parent=5 // pred_check_branch
      %233 = sbr.rel (%p231) target = $region40
    $region39: #{_lambda_.102} parent=5 // pred_region
      %s234 = ssub.s32 %s9, 2
      // Predicated region
      $region41: #{_lambda_.102} parent=39 // pred_check
        %p235 = pneg %p106
      $region42: #{_lambda_.102} parent=39 // pred_check_branch
        %237 = sbr.rel (%p235) target = $region44
      $region43: #{_lambda_.102} parent=39 // pred_region
        %p238 = scmp.lt.s32.totalorder %s15, 1
        %s239 = scalar_select %p238, %s15, 1
        %s240 = scalar_lea.vmem %s3, %s239
      $region44: #{_lambda_.102} parent=39 // pred_fallthru
        _
    $region40: #{_lambda_.102} parent=5 // pred_fallthru
      _
  $region6: #{_lambda_.102} parent=0 // loop_footer
    %s13 = sadd.s32 1, %s9
  $region7: #{_lambda_.102} parent=0 // loop_footer_branch
    %8 = sbr.rel target = $region3
  $region8: #{_lambda_.102} parent=0 // loop_exit
    _

// kernel: _lambda_.105
$region0: #{_lambda_.105}
  #allocation0 [shape = 'u32[]', space=smem, size = 0x4, offset = 0x4, fixed_abs, tag = 'smem constant byte address 0x4 - core index']
  #allocation1 [shape = 'u32[144,128]{1,0:T(1,128)}', space=vmem, size = 0x12000, scoped, tag = 'internal scratch']
  %s0 = inlined_call_operand.vmem [shape: f32[2,3,3,96], index: 0, kind: input, shape index: {}]
  %s1 = inlined_call_operand.vmem [shape: f32[9,1,96], index: 1, kind: input, shape index: {}]
  %s2 = inlined_call_operand.vmem [shape: f32[1,96], index: 2, kind: input, shape index: {}]
  %s3 = inlined_call_operand.vmem [shape: f32[2,1,96], index: 3, kind: output, shape index: {}]
  %s4 = sld [smem:[#allocation0]]
  $region45: #{_lambda_.105} parent=0
    _
  %s6 = ssub.s32 1, %s4
  %s7 = scalar_select 0, %s6, %s4
  loop: start=0, step=1, limit=4
  $region2: #{_lambda_.105} parent=0 // loop_pre_header
    _
  $region3: #{_lambda_.105} parent=0 // loop_header
    %s9 = sphi 0, %s13
    %p10 = scmp.ge.s32.totalorder %s9, 4
    %s19 = sphi 0, %s21
    %s22 = sphi 0, %s19
    %s23 = sphi 0, %s22
    %s39 = sphi 0, %s23
    %s43 = sphi 0, %s43
    %s45 = sphi 0, %s43
    %s46 = sphi 0, %s45
    %s60 = sphi 0, %s46
    %s64 = sphi 0, %s64
    %s66 = sphi 0, %s64
    %s67 = sphi 0, %s66
    %s81 = sphi 0, %s67
    %s87 = sphi 0, %s89
    %s90 = sphi 0, %s87
    %s91 = sphi 0, %s90
    %s107 = sphi 0, %s91
  $region4: #{_lambda_.105} parent=0 // loop_header_branch
    %12 = sbr.rel (%p10) target = $region8
  $region5: #{_lambda_.105} parent=0 // loop_body
    %s14 = ssub.s32 %s9, 1
    %s15 = ssub.s32 %s9, 2
    %s16 = sadd.s32 %s9, 1
    %s17 = ssub.s32 %s9, %s16
    %p18 = scmp.eq.s32.totalorder %s17, 0
    %s20 = sadd.s32 %s19, 1
    %s21 = scalar_select %p18, %s19, %s20
    %p24 = pneg %p18
    %p25 = scmp.eq.s32.totalorder %s9, 1
    %p26 = por %p24, %p25
    %p27 = scmp.ne.s32.totalorder %s19, %s22
    %p28 = scmp.eq.s32.totalorder %s9, 0
    %p29 = por %p27, %p28
    %p30 = scmp.ne.s32.totalorder %s19, %s22
    %p31 = scmp.eq.s32.totalorder %s14, 1
    %p32 = por %p30, %p31
    %p33 = scmp.ne.s32.totalorder %s22, %s23
    %p34 = scmp.eq.s32.totalorder %s14, 0
    %p35 = por %p33, %p34
    %p36 = scmp.ne.s32.totalorder %s22, %s23
    %p37 = scmp.eq.s32.totalorder %s15, 1
    %p38 = por %p36, %p37
    %p40 = scmp.ne.s32.totalorder %s23, %s39
    %p41 = scmp.eq.s32.totalorder %s15, 0
    %p42 = por %p40, %p41
    %s44 = sadd.s32 %s43, 1
    %p47 = scmp.eq.s32.totalorder %s9, 1
    %p48 = scmp.ne.s32.totalorder %s43, %s45
    %p49 = scmp.eq.s32.totalorder %s9, 0
    %p50 = por %p48, %p49
    %p51 = scmp.ne.s32.totalorder %s43, %s45
    %p52 = scmp.eq.s32.totalorder %s14, 1
    %p53 = por %p51, %p52
    %p54 = scmp.ne.s32.totalorder %s45, %s46
    %p55 = scmp.eq.s32.totalorder %s14, 0
    %p56 = por %p54, %p55
    %p57 = scmp.ne.s32.totalorder %s45, %s46
    %p58 = scmp.eq.s32.totalorder %s15, 1
    %p59 = por %p57, %p58
    %p61 = scmp.ne.s32.totalorder %s46, %s60
    %p62 = scmp.eq.s32.totalorder %s15, 0
    %p63 = por %p61, %p62
    %s65 = sadd.s32 %s64, 1
    %p68 = scmp.eq.s32.totalorder %s9, 1
    %p69 = scmp.ne.s32.totalorder %s64, %s66
    %p70 = scmp.eq.s32.totalorder %s9, 0
    %p71 = por %p69, %p70
    %p72 = scmp.ne.s32.totalorder %s64, %s66
    %p73 = scmp.eq.s32.totalorder %s14, 1
    %p74 = por %p72, %p73
    %p75 = scmp.ne.s32.totalorder %s66, %s67
    %p76 = scmp.eq.s32.totalorder %s14, 0
    %p77 = por %p75, %p76
    %p78 = scmp.ne.s32.totalorder %s66, %s67
    %p79 = scmp.eq.s32.totalorder %s15, 1
    %p80 = por %p78, %p79
    %p82 = scmp.ne.s32.totalorder %s67, %s81
    %p83 = scmp.eq.s32.totalorder %s15, 0
    %p84 = por %p82, %p83
    %s85 = ssub.s32 %s9, %s16
    %p86 = scmp.eq.s32.totalorder %s85, 0
    %s88 = sadd.s32 %s87, 1
    %s89 = scalar_select %p86, %s87, %s88
    %p92 = pneg %p86
    %p93 = scmp.eq.s32.totalorder %s9, 1
    %p94 = por %p92, %p93
    %p95 = scmp.ne.s32.totalorder %s87, %s90
    %p96 = scmp.eq.s32.totalorder %s9, 0
    %p97 = por %p95, %p96
    %p98 = scmp.ne.s32.totalorder %s87, %s90
    %p99 = scmp.eq.s32.totalorder %s14, 1
    %p100 = por %p98, %p99
    %p101 = scmp.ne.s32.totalorder %s90, %s91
    %p102 = scmp.eq.s32.totalorder %s14, 0
    %p103 = por %p101, %p102
    %p104 = scmp.ne.s32.totalorder %s90, %s91
    %p105 = scmp.eq.s32.totalorder %s15, 1
    %p106 = por %p104, %p105
    %p108 = scmp.ne.s32.totalorder %s91, %s107
    %p109 = scmp.eq.s32.totalorder %s15, 0
    %p110 = por %p108, %p109
    %p111 = scmp.le.s32.totalorder 1, %s9
    %p112 = scmp.lt.s32.totalorder %s9, 3
    %p113 = pnand %p111, %p112
    %p114 = pneg %p113
    // Predicated region
    $region9: #{_lambda_.105} parent=5 // pred_check
      _
    $region10: #{_lambda_.105} parent=5 // pred_check_branch
      %116 = sbr.rel (%p113) target = $region12
    $region11: #{_lambda_.105} parent=5 // pred_region
      %s117 = ssub.s32 %s9, 1
      // Predicated region
      $region13: #{_lambda_.105} parent=11 // pred_check
        %p118 = pneg %p56
      $region14: #{_lambda_.105} parent=11 // pred_check_branch
        %120 = sbr.rel (%p118) target = $region16
      $region15: #{_lambda_.105} parent=11 // pred_region
        _
      $region16: #{_lambda_.105} parent=11 // pred_fallthru
        _
      // Predicated region
      $region17: #{_lambda_.105} parent=11 // pred_check
        %p121 = pneg %p77
      $region18: #{_lambda_.105} parent=11 // pred_check_branch
        %123 = sbr.rel (%p121) target = $region20
      $region19: #{_lambda_.105} parent=11 // pred_region
        _
      $region20: #{_lambda_.105} parent=11 // pred_fallthru
        _
    $region12: #{_lambda_.105} parent=5 // pred_fallthru
      _
    %p124 = scmp.lt.s32.totalorder %s9, 2
    // Predicated region
    $region21: #{_lambda_.105} parent=5 // pred_check
      %p125 = pneg %p124
    $region22: #{_lambda_.105} parent=5 // pred_check_branch
      %127 = sbr.rel (%p125) target = $region24
    $region23: #{_lambda_.105} parent=5 // pred_region
      // Predicated region
      $region25: #{_lambda_.105} parent=23 // pred_check
        %p128 = pneg %p29
      $region26: #{_lambda_.105} parent=23 // pred_check_branch
        %130 = sbr.rel (%p128) target = $region28
      $region27: #{_lambda_.105} parent=23 // pred_region
        %p131 = scmp.lt.s32.totalorder %s9, 1
        %s132 = scalar_select %p131, %s9, 1
        %s133 = smul.addr %s132, 3
        %s134 = smul.addr %s133, 4
        %s135 = scalar_lea.vmem %s0, %s134
      $region28: #{_lambda_.105} parent=23 // pred_fallthru
        _
    $region24: #{_lambda_.105} parent=5 // pred_fallthru
      _
    %p136 = scmp.le.s32.totalorder 1, %s9
    %p137 = scmp.lt.s32.totalorder %s9, 3
    %p138 = pnand %p136, %p137
    %p139 = pneg %p138
    // Predicated region
    $region29: #{_lambda_.105} parent=5 // pred_check
      _
    $region30: #{_lambda_.105} parent=5 // pred_check_branch
      %141 = sbr.rel (%p138) target = $region32
    $region31: #{_lambda_.105} parent=5 // pred_region
      %s142 = ssub.s32 %s9, 1
      %p143 = scmp.lt.s32.totalorder %s14, 1
      %s144 = scalar_select %p143, %s14, 1
      %s145 = smul.addr %s144, 3
      %s146 = smul.addr %s145, 4
      %s147 = scalar_lea.vmem %s0, %s146
      %p148 = pneg %p35
      %p149 = pneg %p32
      %p150 = pneg %p56
      %p151 = pneg %p53
      %p152 = pneg %p77
      %p153 = pneg %p74
      %p154 = pneg %p103
      %p155 = pneg %p100
      %p156 = scmp.lt.s32.totalorder %s14, 1
      %s157 = scalar_select %p156, %s14, 1
      %s158 = scalar_lea.vmem %s3, %s157
      %p159 = scmp.lt.s32.totalorder %s14, 1
      %s160 = scalar_select %p159, %s14, 1
      %s161 = smul.addr %s160, 3
      %s162 = smul.addr %s161, 4
      %s163 = scalar_lea.vmem %s0, %s162
      %p164 = scmp.lt.s32.totalorder %s14, 1
      %s165 = scalar_select %p164, %s14, 1
      %s166 = scalar_lea.vmem %s3, %s165
      %v167 = vld [vmem:[%s163] sm:$0x1]
      %v168 = vld [vmem:[%s1] sm:$0x1]
      %v169 = vmul.f32 %v167, %v168
      %v170 = vld [vmem:[%s163 + $0x1] sm:$0x1]
      %s171 = scalar_lea.vmem %s1, 1
      %v172 = vld [vmem:[%s171] sm:$0x1]
      %v173 = vmul.f32 %v170, %v172
      %v174 = vadd.f32 %v169, %v173
      %v175 = vld [vmem:[%s163 + $0x2] sm:$0x1]
      %s176 = scalar_lea.vmem %s1, 2
      %v177 = vld [vmem:[%s176] sm:$0x1]
      %v178 = vmul.f32 %v175, %v177
      %v179 = vadd.f32 %v174, %v178
      %s180 = scalar_lea.vmem %s163, 4
      %v181 = vld [vmem:[%s180] sm:$0x1]
      %s182 = scalar_lea.vmem %s1, 3
      %v183 = vld [vmem:[%s182] sm:$0x1]
      %v184 = vmul.f32 %v181, %v183
      %v185 = vadd.f32 %v179, %v184
      %v186 = vld [vmem:[%s180 + $0x1] sm:$0x1]
      %s187 = scalar_lea.vmem %s1, 4
      %v188 = vld [vmem:[%s187] sm:$0x1]
      %v189 = vmul.f32 %v186, %v188
      %v190 = vadd.f32 %v185, %v189
      %v191 = vld [vmem:[%s180 + $0x2] sm:$0x1]
      %s192 = scalar_lea.vmem %s1, 5
      %v193 = vld [vmem:[%s192] sm:$0x1]
      %v194 = vmul.f32 %v191, %v193
      %v195 = vadd.f32 %v190, %v194
      %s196 = scalar_lea.vmem %s163, 8
      %v197 = vld [vmem:[%s196] sm:$0x1]
      %s198 = scalar_lea.vmem %s1, 6
      %v199 = vld [vmem:[%s198] sm:$0x1]
      %v200 = vmul.f32 %v197, %v199
      %v201 = vadd.f32 %v195, %v200
      %v202 = vld [vmem:[%s196 + $0x1] sm:$0x1]
      %s203 = scalar_lea.vmem %s1, 7
      %v204 = vld [vmem:[%s203] sm:$0x1]
      %v205 = vmul.f32 %v202, %v204
      %v206 = vadd.f32 %v201, %v205
      %v207 = vld [vmem:[%s196 + $0x2] sm:$0x1]
      %s208 = scalar_lea.vmem %s1, 8
      %v209 = vld [vmem:[%s208] sm:$0x1]
      %v210 = vmul.f32 %v207, %v209
      %v211 = vadd.f32 %v206, %v210
      %v212 = vld [vmem:[%s2] sm:$0x1]
      %v213 = vadd.f32 %v211, %v212
      %vm214 = vcmask 778240
      %215 = vst.msk [vmem:[%s166] sm:$0x1] %vm214, %v213
      %p216 = scmp.lt.s32.totalorder %s14, 1
      %s217 = scalar_select %p216, %s14, 1
      %s218 = scalar_lea.vmem %s3, %s217
      // Predicated region
      $region33: #{_lambda_.105} parent=31 // pred_check
        %p219 = pneg %p100
      $region34: #{_lambda_.105} parent=31 // pred_check_branch
        %221 = sbr.rel (%p219) target = $region36
      $region35: #{_lambda_.105} parent=31 // pred_region
        _
      $region36: #{_lambda_.105} parent=31 // pred_fallthru
        _
    $region32: #{_lambda_.105} parent=5 // pred_fallthru
      _
    %p222 = scmp.le.s32.totalorder 2, %s9
    // Predicated region
    $region37: #{_lambda_.105} parent=5 // pred_check
      %p223 = pneg %p222
    $region38: #{_lambda_.105} parent=5 // pred_check_branch
      %225 = sbr.rel (%p223) target = $region40
    $region39: #{_lambda_.105} parent=5 // pred_region
      %s226 = ssub.s32 %s9, 2
      // Predicated region
      $region41: #{_lambda_.105} parent=39 // pred_check
        %p227 = pneg %p106
      $region42: #{_lambda_.105} parent=39 // pred_check_branch
        %229 = sbr.rel (%p227) target = $region44
      $region43: #{_lambda_.105} parent=39 // pred_region
        %p230 = scmp.lt.s32.totalorder %s15, 1
        %s231 = scalar_select %p230, %s15, 1
        %s232 = scalar_lea.vmem %s3, %s231
      $region44: #{_lambda_.105} parent=39 // pred_fallthru
        _
    $region40: #{_lambda_.105} parent=5 // pred_fallthru
      _
  $region6: #{_lambda_.105} parent=0 // loop_footer
    %s13 = sadd.s32 1, %s9
  $region7: #{_lambda_.105} parent=0 // loop_footer_branch
    %8 = sbr.rel target = $region3
  $region8: #{_lambda_.105} parent=0 // loop_exit
    _

// kernel: _lambda_.113
$region0: #{_lambda_.113}
  #allocation0 [shape = 'u32[]', space=smem, size = 0x4, offset = 0x4, fixed_abs, tag = 'smem constant byte address 0x4 - core index']
  #allocation1 [shape = 'u32[144,128]{1,0:T(1,128)}', space=vmem, size = 0x12000, scoped, tag = 'internal scratch']
  %s0 = inlined_call_operand.vmem [shape: f32[2,1,192], index: 0, kind: input, shape index: {}]
  %s1 = inlined_call_operand.vmem [shape: bf16[192,1024], index: 1, kind: input, shape index: {}]
  %s2 = inlined_call_operand.vmem [shape: f32[1,1024], index: 2, kind: input, shape index: {}]
  %s3 = inlined_call_operand.hbm [shape: f32[2,1,1024], index: 3, kind: output, shape index: {0}]
  %s4 = inlined_call_operand.vmem [shape: f32[2,1,1024], index: 4, kind: output, shape index: {1}]
  %5 = xla_tuple %s3, %s4
  %s6 = sld [smem:[#allocation0]]
  $region53: #{_lambda_.113} parent=0
    _
  %s8 = ssub.s32 1, %s6
  %s9 = scalar_select 0, %s8, %s6
  $region1: #{_lambda_.113} parent=0
    #allocation2 [shape = 'u8[8192]{0}', space=vmem, size = 0x2000, scoped, tag = 'output window, operand 0']
    #allocation3 [shape = 's32[2]{0}', space=sflag, size = 0x8, scoped, tag = 'scoped memory for _lambda_.113']
    %10 = vsyncpa [#allocation3], 0
    %s11 = scalar_lea.sflag [#allocation3], 1
    %12 = vsyncpa %s11, 0
    loop: start=0, step=1, limit=4
    $region2: #{_lambda_.113} parent=1 // loop_pre_header
      _
    $region3: #{_lambda_.113} parent=1 // loop_header
      %s14 = sphi 0, %s18
      %p15 = scmp.ge.s32.totalorder %s14, 4
      %s24 = sphi 0, %s26
      %s27 = sphi 0, %s24
      %s28 = sphi 0, %s27
      %s44 = sphi 0, %s28
      %s48 = sphi 0, %s48
      %s50 = sphi 0, %s48
      %s51 = sphi 0, %s50
      %s65 = sphi 0, %s51
      %s69 = sphi 0, %s69
      %s71 = sphi 0, %s69
      %s72 = sphi 0, %s71
      %s86 = sphi 0, %s72
      %s92 = sphi 0, %s94
      %s95 = sphi 0, %s92
      %s96 = sphi 0, %s95
      %s112 = sphi 0, %s96
      %s118 = sphi 0, %s120
      %s121 = sphi 0, %s118
      %s122 = sphi 0, %s121
      %s138 = sphi 0, %s122
    $region4: #{_lambda_.113} parent=1 // loop_header_branch
      %17 = sbr.rel (%p15) target = $region8
    $region5: #{_lambda_.113} parent=1 // loop_body
      %s19 = ssub.s32 %s14, 1
      %s20 = ssub.s32 %s14, 2
      %s21 = sadd.s32 %s14, 1
      %s22 = ssub.s32 %s14, %s21
      %p23 = scmp.eq.s32.totalorder %s22, 0
      %s25 = sadd.s32 %s24, 1
      %s26 = scalar_select %p23, %s24, %s25
      %p29 = pneg %p23
      %p30 = scmp.eq.s32.totalorder %s14, 1
      %p31 = por %p29, %p30
      %p32 = scmp.ne.s32.totalorder %s24, %s27
      %p33 = scmp.eq.s32.totalorder %s14, 0
      %p34 = por %p32, %p33
      %p35 = scmp.ne.s32.totalorder %s24, %s27
      %p36 = scmp.eq.s32.totalorder %s19, 1
      %p37 = por %p35, %p36
      %p38 = scmp.ne.s32.totalorder %s27, %s28
      %p39 = scmp.eq.s32.totalorder %s19, 0
      %p40 = por %p38, %p39
      %p41 = scmp.ne.s32.totalorder %s27, %s28
      %p42 = scmp.eq.s32.totalorder %s20, 1
      %p43 = por %p41, %p42
      %p45 = scmp.ne.s32.totalorder %s28, %s44
      %p46 = scmp.eq.s32.totalorder %s20, 0
      %p47 = por %p45, %p46
      %s49 = sadd.s32 %s48, 1
      %p52 = scmp.eq.s32.totalorder %s14, 1
      %p53 = scmp.ne.s32.totalorder %s48, %s50
      %p54 = scmp.eq.s32.totalorder %s14, 0
      %p55 = por %p53, %p54
      %p56 = scmp.ne.s32.totalorder %s48, %s50
      %p57 = scmp.eq.s32.totalorder %s19, 1
      %p58 = por %p56, %p57
      %p59 = scmp.ne.s32.totalorder %s50, %s51
      %p60 = scmp.eq.s32.totalorder %s19, 0
      %p61 = por %p59, %p60
      %p62 = scmp.ne.s32.totalorder %s50, %s51
      %p63 = scmp.eq.s32.totalorder %s20, 1
      %p64 = por %p62, %p63
      %p66 = scmp.ne.s32.totalorder %s51, %s65
      %p67 = scmp.eq.s32.totalorder %s20, 0
      %p68 = por %p66, %p67
      %s70 = sadd.s32 %s69, 1
      %p73 = scmp.eq.s32.totalorder %s14, 1
      %p74 = scmp.ne.s32.totalorder %s69, %s71
      %p75 = scmp.eq.s32.totalorder %s14, 0
      %p76 = por %p74, %p75
      %p77 = scmp.ne.s32.totalorder %s69, %s71
      %p78 = scmp.eq.s32.totalorder %s19, 1
      %p79 = por %p77, %p78
      %p80 = scmp.ne.s32.totalorder %s71, %s72
      %p81 = scmp.eq.s32.totalorder %s19, 0
      %p82 = por %p80, %p81
      %p83 = scmp.ne.s32.totalorder %s71, %s72
      %p84 = scmp.eq.s32.totalorder %s20, 1
      %p85 = por %p83, %p84
      %p87 = scmp.ne.s32.totalorder %s72, %s86
      %p88 = scmp.eq.s32.totalorder %s20, 0
      %p89 = por %p87, %p88
      %s90 = ssub.s32 %s14, %s21
      %p91 = scmp.eq.s32.totalorder %s90, 0
      %s93 = sadd.s32 %s92, 1
      %s94 = scalar_select %p91, %s92, %s93
      %p97 = pneg %p91
      %p98 = scmp.eq.s32.totalorder %s14, 1
      %p99 = por %p97, %p98
      %p100 = scmp.ne.s32.totalorder %s92, %s95
      %p101 = scmp.eq.s32.totalorder %s14, 0
      %p102 = por %p100, %p101
      %p103 = scmp.ne.s32.totalorder %s92, %s95
      %p104 = scmp.eq.s32.totalorder %s19, 1
      %p105 = por %p103, %p104
      %p106 = scmp.ne.s32.totalorder %s95, %s96
      %p107 = scmp.eq.s32.totalorder %s19, 0
      %p108 = por %p106, %p107
      %p109 = scmp.ne.s32.totalorder %s95, %s96
      %p110 = scmp.eq.s32.totalorder %s20, 1
      %p111 = por %p109, %p110
      %p113 = scmp.ne.s32.totalorder %s96, %s112
      %p114 = scmp.eq.s32.totalorder %s20, 0
      %p115 = por %p113, %p114
      %s116 = ssub.s32 %s14, %s21
      %p117 = scmp.eq.s32.totalorder %s116, 0
      %s119 = sadd.s32 %s118, 1
      %s120 = scalar_select %p117, %s118, %s119
      %p123 = pneg %p117
      %p124 = scmp.eq.s32.totalorder %s14, 1
      %p125 = por %p123, %p124
      %p126 = scmp.ne.s32.totalorder %s118, %s121
      %p127 = scmp.eq.s32.totalorder %s14, 0
      %p128 = por %p126, %p127
      %p129 = scmp.ne.s32.totalorder %s118, %s121
      %p130 = scmp.eq.s32.totalorder %s19, 1
      %p131 = por %p129, %p130
      %p132 = scmp.ne.s32.totalorder %s121, %s122
      %p133 = scmp.eq.s32.totalorder %s19, 0
      %p134 = por %p132, %p133
      %p135 = scmp.ne.s32.totalorder %s121, %s122
      %p136 = scmp.eq.s32.totalorder %s20, 1
      %p137 = por %p135, %p136
      %p139 = scmp.ne.s32.totalorder %s122, %s138
      %p140 = scmp.eq.s32.totalorder %s20, 0
      %p141 = por %p139, %p140
      %p142 = scmp.le.s32.totalorder 1, %s14
      %p143 = scmp.lt.s32.totalorder %s14, 3
      %p144 = pnand %p142, %p143
      %p145 = pneg %p144
      // Predicated region
      $region9: #{_lambda_.113} parent=5 // pred_check
        _
      $region10: #{_lambda_.113} parent=5 // pred_check_branch
        %147 = sbr.rel (%p144) target = $region12
      $region11: #{_lambda_.113} parent=5 // pred_region
        %s148 = ssub.s32 %s14, 1
        // Predicated region
        $region13: #{_lambda_.113} parent=11 // pred_check
          %p149 = pneg %p61
        $region14: #{_lambda_.113} parent=11 // pred_check_branch
          %151 = sbr.rel (%p149) target = $region16
        $region15: #{_lambda_.113} parent=11 // pred_region
          _
        $region16: #{_lambda_.113} parent=11 // pred_fallthru
          _
        // Predicated region
        $region17: #{_lambda_.113} parent=11 // pred_check
          %p152 = pneg %p82
        $region18: #{_lambda_.113} parent=11 // pred_check_branch
          %154 = sbr.rel (%p152) target = $region20
        $region19: #{_lambda_.113} parent=11 // pred_region
          _
        $region20: #{_lambda_.113} parent=11 // pred_fallthru
          _
      $region12: #{_lambda_.113} parent=5 // pred_fallthru
        _
      %p155 = scmp.lt.s32.totalorder %s14, 2
      // Predicated region
      $region21: #{_lambda_.113} parent=5 // pred_check
        %p156 = pneg %p155
      $region22: #{_lambda_.113} parent=5 // pred_check_branch
        %158 = sbr.rel (%p156) target = $region24
      $region23: #{_lambda_.113} parent=5 // pred_region
        // Predicated region
        $region25: #{_lambda_.113} parent=23 // pred_check
          %p159 = pneg %p34
        $region26: #{_lambda_.113} parent=23 // pred_check_branch
          %161 = sbr.rel (%p159) target = $region28
        $region27: #{_lambda_.113} parent=23 // pred_region
          %p162 = scmp.lt.s32.totalorder %s14, 1
          %s163 = scalar_select %p162, %s14, 1
          %s164 = smul.addr %s163, 2
          %s165 = scalar_lea.vmem %s0, %s164
        $region28: #{_lambda_.113} parent=23 // pred_fallthru
          _
      $region24: #{_lambda_.113} parent=5 // pred_fallthru
        _
      %p166 = scmp.le.s32.totalorder 1, %s14
      %p167 = scmp.lt.s32.totalorder %s14, 3
      %p168 = pnand %p166, %p167
      %p169 = pneg %p168
      // Predicated region
      $region29: #{_lambda_.113} parent=5 // pred_check
        _
      $region30: #{_lambda_.113} parent=5 // pred_check_branch
        %171 = sbr.rel (%p168) target = $region32
      $region31: #{_lambda_.113} parent=5 // pred_region
        %s172 = ssub.s32 %s14, 1
        %p173 = scmp.lt.s32.totalorder %s19, 1
        %s174 = scalar_select %p173, %s19, 1
        %s175 = smul.addr %s174, 2
        %s176 = scalar_lea.vmem %s0, %s175
        %p177 = pneg %p40
        %p178 = pneg %p37
        %p179 = pneg %p61
        %p180 = pneg %p58
        %p181 = pneg %p82
        %p182 = pneg %p79
        %p183 = pneg %p108
        %p184 = pneg %p105
        %s185 = sand.u32 %s95, 1
        %s186 = scalar_lea.sflag [#allocation3], %s185
        %s187 = sand.u32 %s95, 1
        %s188 = smul.addr %s187, 8
        %s189 = scalar_lea.vmem [#allocation2], %s188
        %p190 = pneg %p134
        %p191 = pneg %p131
        %p192 = scmp.lt.s32.totalorder %s19, 1
        %s193 = scalar_select %p192, %s19, 1
        %s194 = smul.addr %s193, 8
        %s195 = scalar_lea.vmem %s4, %s194
        %p196 = scmp.lt.s32.totalorder %s19, 1
        %s197 = scalar_select %p196, %s19, 1
        %s198 = smul.addr %s197, 2
        %s199 = scalar_lea.vmem %s0, %s198
        %p200 = scmp.lt.s32.totalorder %s19, 1
        %s201 = scalar_select %p200, %s19, 1
        %s202 = smul.addr %s201, 8
        %s203 = scalar_lea.vmem %s4, %s202
        %v205 = vld [vmem:[%s199] sm:$0x3]
        %v207 = vlaneseq
        %v208 = vshrl.u32 %v207, 7
        %v209 = vsub.s32 0, %v208
        %v210 = vrot.slane %v205, %v209
        %v211 = vlaneseq
        %v212 = vshrl.u32 %v211, 7
        %v213 = vsub.s32 1, %v212
        %v214 = vrot.slane %v205, %v213
        %v217 = vpack.c.bf16 %v210, %v210
        %v218 = vpack.c.bf16 %v214, %v214
        %v219 = vld [vmem:[%s1] sm:$0xff]
        %v220 = vld [vmem:[%s1 + $0x8] sm:$0xff]
        %v221 = vld [vmem:[%s1 + $0x10] sm:$0xff]
        %v222 = vld [vmem:[%s1 + $0x18] sm:$0xff]
        %v223 = vld [vmem:[%s1 + $0x20] sm:$0xff]
        %v224 = vld [vmem:[%s1 + $0x28] sm:$0xff]
        %v225 = vld [vmem:[%s1 + $0x30] sm:$0xff]
        %v226 = vld [vmem:[%s1 + $0x38] sm:$0xff]
        %v227 = vld [vmem:[%s1 + $0x40] sm:$0xff]
        %v228 = vld [vmem:[%s1 + $0x48] sm:$0xff]
        %v229 = vld [vmem:[%s1 + $0x50] sm:$0xff]
        %v230 = vld [vmem:[%s1 + $0x58] sm:$0xff]
        %v231 = vld [vmem:[%s1 + $0x60] sm:$0xff]
        %v232 = vld [vmem:[%s1 + $0x68] sm:$0xff]
        %v233 = vld [vmem:[%s1 + $0x70] sm:$0xff]
        %v234 = vld [vmem:[%s1 + $0x78] sm:$0xff]
        %v235 = vld [vmem:[%s1 + $0x80] sm:$0xff]
        %v236 = vld [vmem:[%s1 + $0x88] sm:$0xff]
        %v237 = vld [vmem:[%s1 + $0x90] sm:$0xff]
        %v238 = vld [vmem:[%s1 + $0x98] sm:$0xff]
        %v239 = vld [vmem:[%s1 + $0xa0] sm:$0xff]
        %v240 = vld [vmem:[%s1 + $0xa8] sm:$0xff]
        %v241 = vld [vmem:[%s1 + $0xb0] sm:$0xff]
        %v242 = vld [vmem:[%s1 + $0xb8] sm:$0xff]
        %v243 = vld [vmem:[%s1 + $0xc0] sm:$0xff]
        %v244 = vld [vmem:[%s1 + $0xc8] sm:$0xff]
        %v245 = vld [vmem:[%s1 + $0xd0] sm:$0xff]
        %v246 = vld [vmem:[%s1 + $0xd8] sm:$0xff]
        %v247 = vld [vmem:[%s1 + $0xe0] sm:$0xff]
        %v248 = vld [vmem:[%s1 + $0xe8] sm:$0xff]
        %v249 = vld [vmem:[%s1 + $0xf0] sm:$0xff]
        %v250 = vld [vmem:[%s1 + $0xf8] sm:$0xff]
        %v251 = vld [vmem:[%s1 + $0x100] sm:$0xff]
        %v252 = vld [vmem:[%s1 + $0x108] sm:$0xff]
        %v253 = vld [vmem:[%s1 + $0x110] sm:$0xff]
        %v254 = vld [vmem:[%s1 + $0x118] sm:$0xff]
        %v255 = vld [vmem:[%s1 + $0x120] sm:$0xff]
        %v256 = vld [vmem:[%s1 + $0x128] sm:$0xff]
        %v257 = vld [vmem:[%s1 + $0x130] sm:$0xff]
        %v258 = vld [vmem:[%s1 + $0x138] sm:$0xff]
        %v259 = vld [vmem:[%s1 + $0x140] sm:$0xff]
        %v260 = vld [vmem:[%s1 + $0x148] sm:$0xff]
        %v261 = vld [vmem:[%s1 + $0x150] sm:$0xff]
        %v262 = vld [vmem:[%s1 + $0x158] sm:$0xff]
        %v263 = vld [vmem:[%s1 + $0x160] sm:$0xff]
        %v264 = vld [vmem:[%s1 + $0x168] sm:$0xff]
        %v265 = vld [vmem:[%s1 + $0x170] sm:$0xff]
        %v266 = vld [vmem:[%s1 + $0x178] sm:$0xff]
        %v267 = vld [vmem:[%s1 + $0x180] sm:$0xff]
        %v268 = vld [vmem:[%s1 + $0x188] sm:$0xff]
        %v269 = vld [vmem:[%s1 + $0x190] sm:$0xff]
        %v270 = vld [vmem:[%s1 + $0x198] sm:$0xff]
        %v271 = vld [vmem:[%s1 + $0x1a0] sm:$0xff]
        %v272 = vld [vmem:[%s1 + $0x1a8] sm:$0xff]
        %v273 = vld [vmem:[%s1 + $0x1b0] sm:$0xff]
        %v274 = vld [vmem:[%s1 + $0x1b8] sm:$0xff]
        %v275 = vld [vmem:[%s1 + $0x1c0] sm:$0xff]
        %v276 = vld [vmem:[%s1 + $0x1c8] sm:$0xff]
        %v277 = vld [vmem:[%s1 + $0x1d0] sm:$0xff]
        %v278 = vld [vmem:[%s1 + $0x1d8] sm:$0xff]
        %v279 = vld [vmem:[%s1 + $0x1e0] sm:$0xff]
        %v280 = vld [vmem:[%s1 + $0x1e8] sm:$0xff]
        %v281 = vld [vmem:[%s1 + $0x1f0] sm:$0xff]
        %v282 = vld [vmem:[%s1 + $0x1f8] sm:$0xff]
        %v283 = vld [vmem:[%s1 + $0x200] sm:$0xff]
        %v284 = vld [vmem:[%s1 + $0x208] sm:$0xff]
        %v285 = vld [vmem:[%s1 + $0x210] sm:$0xff]
        %v286 = vld [vmem:[%s1 + $0x218] sm:$0xff]
        %v287 = vld [vmem:[%s1 + $0x220] sm:$0xff]
        %v288 = vld [vmem:[%s1 + $0x228] sm:$0xff]
        %v289 = vld [vmem:[%s1 + $0x230] sm:$0xff]
        %v290 = vld [vmem:[%s1 + $0x238] sm:$0xff]
        %v291 = vld [vmem:[%s1 + $0x240] sm:$0xff]
        %v292 = vld [vmem:[%s1 + $0x248] sm:$0xff]
        %v293 = vld [vmem:[%s1 + $0x250] sm:$0xff]
        %v294 = vld [vmem:[%s1 + $0x258] sm:$0xff]
        %v295 = vld [vmem:[%s1 + $0x260] sm:$0xff]
        %v296 = vld [vmem:[%s1 + $0x268] sm:$0xff]
        %v297 = vld [vmem:[%s1 + $0x270] sm:$0xff]
        %v298 = vld [vmem:[%s1 + $0x278] sm:$0xff]
        %v299 = vld [vmem:[%s1 + $0x280] sm:$0xff]
        %v300 = vld [vmem:[%s1 + $0x288] sm:$0xff]
        %v301 = vld [vmem:[%s1 + $0x290] sm:$0xff]
        %v302 = vld [vmem:[%s1 + $0x298] sm:$0xff]
        %v303 = vld [vmem:[%s1 + $0x2a0] sm:$0xff]
        %v304 = vld [vmem:[%s1 + $0x2a8] sm:$0xff]
        %v305 = vld [vmem:[%s1 + $0x2b0] sm:$0xff]
        %v306 = vld [vmem:[%s1 + $0x2b8] sm:$0xff]
        %v307 = vld [vmem:[%s1 + $0x2c0] sm:$0xff]
        %v308 = vld [vmem:[%s1 + $0x2c8] sm:$0xff]
        %v309 = vld [vmem:[%s1 + $0x2d0] sm:$0xff]
        %v310 = vld [vmem:[%s1 + $0x2d8] sm:$0xff]
        %v311 = vld [vmem:[%s1 + $0x2e0] sm:$0xff]
        %v312 = vld [vmem:[%s1 + $0x2e8] sm:$0xff]
        %v313 = vld [vmem:[%s1 + $0x2f0] sm:$0xff]
        %v314 = vld [vmem:[%s1 + $0x2f8] sm:$0xff]
        %v315 = vld [vmem:[%s2] sm:$0xff]
        %v412 = vunpack.c.l.b16 %v219
        %v413 = vunpack.c.h.b16 %v219
        %v414 = vunpack.c.l.b16 %v220
        %v415 = vunpack.c.h.b16 %v220
        %v416 = vunpack.c.l.b16 %v221
        %v417 = vunpack.c.h.b16 %v221
        %v418 = vunpack.c.l.b16 %v222
        %v419 = vunpack.c.h.b16 %v222
        %v420 = vunpack.c.l.b16 %v223
        %v421 = vunpack.c.h.b16 %v223
        %v422 = vunpack.c.l.b16 %v224
        %v423 = vunpack.c.h.b16 %v224
        %v424 = vunpack.c.l.b16 %v225
        %v425 = vunpack.c.h.b16 %v225
        %v426 = vunpack.c.l.b16 %v226
        %v427 = vunpack.c.h.b16 %v226
        %v428 = vunpack.c.l.b16 %v227
        %v429 = vunpack.c.h.b16 %v227
        %v430 = vunpack.c.l.b16 %v228
        %v431 = vunpack.c.h.b16 %v228
        %v432 = vunpack.c.l.b16 %v229
        %v433 = vunpack.c.h.b16 %v229
        %v434 = vunpack.c.l.b16 %v230
        %v435 = vunpack.c.h.b16 %v230
        %v436 = vunpack.c.l.b16 %v231
        %v437 = vunpack.c.h.b16 %v231
        %v438 = vunpack.c.l.b16 %v232
        %v439 = vunpack.c.h.b16 %v232
        %v440 = vunpack.c.l.b16 %v233
        %v441 = vunpack.c.h.b16 %v233
        %v442 = vunpack.c.l.b16 %v234
        %v443 = vunpack.c.h.b16 %v234
        %v444 = vunpack.c.l.b16 %v235
        %v445 = vunpack.c.h.b16 %v235
        %v446 = vunpack.c.l.b16 %v236
        %v447 = vunpack.c.h.b16 %v236
        %v448 = vunpack.c.l.b16 %v237
        %v449 = vunpack.c.h.b16 %v237
        %v450 = vunpack.c.l.b16 %v238
        %v451 = vunpack.c.h.b16 %v238
        %v452 = vunpack.c.l.b16 %v239
        %v453 = vunpack.c.h.b16 %v239
        %v454 = vunpack.c.l.b16 %v240
        %v455 = vunpack.c.h.b16 %v240
        %v456 = vunpack.c.l.b16 %v241
        %v457 = vunpack.c.h.b16 %v241
        %v458 = vunpack.c.l.b16 %v242
        %v459 = vunpack.c.h.b16 %v242
        %v460 = vunpack.c.l.b16 %v243
        %v461 = vunpack.c.h.b16 %v243
        %v462 = vunpack.c.l.b16 %v244
        %v463 = vunpack.c.h.b16 %v244
        %v464 = vunpack.c.l.b16 %v245
        %v465 = vunpack.c.h.b16 %v245
        %v466 = vunpack.c.l.b16 %v246
        %v467 = vunpack.c.h.b16 %v246
        %v468 = vunpack.c.l.b16 %v247
        %v469 = vunpack.c.h.b16 %v247
        %v470 = vunpack.c.l.b16 %v248
        %v471 = vunpack.c.h.b16 %v248
        %v472 = vunpack.c.l.b16 %v249
        %v473 = vunpack.c.h.b16 %v249
        %v474 = vunpack.c.l.b16 %v250
        %v475 = vunpack.c.h.b16 %v250
        %v476 = vunpack.c.l.b16 %v251
        %v477 = vunpack.c.h.b16 %v251
        %v478 = vunpack.c.l.b16 %v252
        %v479 = vunpack.c.h.b16 %v252
        %v480 = vunpack.c.l.b16 %v253
        %v481 = vunpack.c.h.b16 %v253
        %v482 = vunpack.c.l.b16 %v254
        %v483 = vunpack.c.h.b16 %v254
        %v484 = vunpack.c.l.b16 %v255
        %v485 = vunpack.c.h.b16 %v255
        %v486 = vunpack.c.l.b16 %v256
        %v487 = vunpack.c.h.b16 %v256
        %v488 = vunpack.c.l.b16 %v257
        %v489 = vunpack.c.h.b16 %v257
        %v490 = vunpack.c.l.b16 %v258
        %v491 = vunpack.c.h.b16 %v258
        %v492 = vunpack.c.l.b16 %v259
        %v493 = vunpack.c.h.b16 %v259
        %v494 = vunpack.c.l.b16 %v260
        %v495 = vunpack.c.h.b16 %v260
        %v496 = vunpack.c.l.b16 %v261
        %v497 = vunpack.c.h.b16 %v261
        %v498 = vunpack.c.l.b16 %v262
        %v499 = vunpack.c.h.b16 %v262
        %v500 = vunpack.c.l.b16 %v263
        %v501 = vunpack.c.h.b16 %v263
        %v502 = vunpack.c.l.b16 %v264
        %v503 = vunpack.c.h.b16 %v264
        %v504 = vunpack.c.l.b16 %v265
        %v505 = vunpack.c.h.b16 %v265
        %v506 = vunpack.c.l.b16 %v266
        %v507 = vunpack.c.h.b16 %v266
        %v508 = vunpack.c.l.b16 %v267
        %v509 = vunpack.c.h.b16 %v267
        %v510 = vunpack.c.l.b16 %v268
        %v511 = vunpack.c.h.b16 %v268
        %v512 = vunpack.c.l.b16 %v269
        %v513 = vunpack.c.h.b16 %v269
        %v514 = vunpack.c.l.b16 %v270
        %v515 = vunpack.c.h.b16 %v270
        %v516 = vunpack.c.l.b16 %v271
        %v517 = vunpack.c.h.b16 %v271
        %v518 = vunpack.c.l.b16 %v272
        %v519 = vunpack.c.h.b16 %v272
        %v520 = vunpack.c.l.b16 %v273
        %v521 = vunpack.c.h.b16 %v273
        %v522 = vunpack.c.l.b16 %v274
        %v523 = vunpack.c.h.b16 %v274
        %v524 = vunpack.c.l.b16 %v275
        %v525 = vunpack.c.h.b16 %v275
        %v526 = vunpack.c.l.b16 %v276
        %v527 = vunpack.c.h.b16 %v276
        %v528 = vunpack.c.l.b16 %v277
        %v529 = vunpack.c.h.b16 %v277
        %v530 = vunpack.c.l.b16 %v278
        %v531 = vunpack.c.h.b16 %v278
        %v532 = vunpack.c.l.b16 %v279
        %v533 = vunpack.c.h.b16 %v279
        %v534 = vunpack.c.l.b16 %v280
        %v535 = vunpack.c.h.b16 %v280
        %v536 = vunpack.c.l.b16 %v281
        %v537 = vunpack.c.h.b16 %v281
        %v538 = vunpack.c.l.b16 %v282
        %v539 = vunpack.c.h.b16 %v282
        %v540 = vunpack.c.l.b16 %v283
        %v541 = vunpack.c.h.b16 %v283
        %v542 = vunpack.c.l.b16 %v284
        %v543 = vunpack.c.h.b16 %v284
        %v544 = vunpack.c.l.b16 %v285
        %v545 = vunpack.c.h.b16 %v285
        %v546 = vunpack.c.l.b16 %v286
        %v547 = vunpack.c.h.b16 %v286
        %v548 = vunpack.c.l.b16 %v287
        %v549 = vunpack.c.h.b16 %v287
        %v550 = vunpack.c.l.b16 %v288
        %v551 = vunpack.c.h.b16 %v288
        %v552 = vunpack.c.l.b16 %v289
        %v553 = vunpack.c.h.b16 %v289
        %v554 = vunpack.c.l.b16 %v290
        %v555 = vunpack.c.h.b16 %v290
        %v556 = vunpack.c.l.b16 %v291
        %v557 = vunpack.c.h.b16 %v291
        %v558 = vunpack.c.l.b16 %v292
        %v559 = vunpack.c.h.b16 %v292
        %v560 = vunpack.c.l.b16 %v293
        %v561 = vunpack.c.h.b16 %v293
        %v562 = vunpack.c.l.b16 %v294
        %v563 = vunpack.c.h.b16 %v294
        %v564 = vunpack.c.l.b16 %v295
        %v565 = vunpack.c.h.b16 %v295
        %v566 = vunpack.c.l.b16 %v296
        %v567 = vunpack.c.h.b16 %v296
        %v568 = vunpack.c.l.b16 %v297
        %v569 = vunpack.c.h.b16 %v297
        %v570 = vunpack.c.l.b16 %v298
        %v571 = vunpack.c.h.b16 %v298
        %v572 = vunpack.c.l.b16 %v299
        %v573 = vunpack.c.h.b16 %v299
        %v574 = vunpack.c.l.b16 %v300
        %v575 = vunpack.c.h.b16 %v300
        %v576 = vunpack.c.l.b16 %v301
        %v577 = vunpack.c.h.b16 %v301
        %v578 = vunpack.c.l.b16 %v302
        %v579 = vunpack.c.h.b16 %v302
        %v580 = vunpack.c.l.b16 %v303
        %v581 = vunpack.c.h.b16 %v303
        %v582 = vunpack.c.l.b16 %v304
        %v583 = vunpack.c.h.b16 %v304
        %v584 = vunpack.c.l.b16 %v305
        %v585 = vunpack.c.h.b16 %v305
        %v586 = vunpack.c.l.b16 %v306
        %v587 = vunpack.c.h.b16 %v306
        %v588 = vunpack.c.l.b16 %v307
        %v589 = vunpack.c.h.b16 %v307
        %v590 = vunpack.c.l.b16 %v308
        %v591 = vunpack.c.h.b16 %v308
        %v592 = vunpack.c.l.b16 %v309
        %v593 = vunpack.c.h.b16 %v309
        %v594 = vunpack.c.l.b16 %v310
        %v595 = vunpack.c.h.b16 %v310
        %v596 = vunpack.c.l.b16 %v311
        %v597 = vunpack.c.h.b16 %v311
        %v598 = vunpack.c.l.b16 %v312
        %v599 = vunpack.c.h.b16 %v312
        %v600 = vunpack.c.l.b16 %v313
        %v601 = vunpack.c.h.b16 %v313
        %v602 = vunpack.c.l.b16 %v314
        %v603 = vunpack.c.h.b16 %v314
        %v604 = vpack.c.b16 %v420, %v412
        %v605 = vpack.c.b16 %v421, %v413
        %v606 = vpack.c.b16 %v422, %v414
        %v607 = vpack.c.b16 %v423, %v415
        %v608 = vpack.c.b16 %v424, %v416
        %v609 = vpack.c.b16 %v425, %v417
        %v610 = vpack.c.b16 %v426, %v418
        %v611 = vpack.c.b16 %v427, %v419
        %v612 = vpack.c.b16 %v436, %v428
        %v613 = vpack.c.b16 %v437, %v429
        %v614 = vpack.c.b16 %v438, %v430
        %v615 = vpack.c.b16 %v439, %v431
        %v616 = vpack.c.b16 %v440, %v432
        %v617 = vpack.c.b16 %v441, %v433
        %v618 = vpack.c.b16 %v442, %v434
        %v619 = vpack.c.b16 %v443, %v435
        %v620 = vpack.c.b16 %v452, %v444
        %v621 = vpack.c.b16 %v453, %v445
        %v622 = vpack.c.b16 %v454, %v446
        %v623 = vpack.c.b16 %v455, %v447
        %v624 = vpack.c.b16 %v456, %v448
        %v625 = vpack.c.b16 %v457, %v449
        %v626 = vpack.c.b16 %v458, %v450
        %v627 = vpack.c.b16 %v459, %v451
        %v628 = vpack.c.b16 %v468, %v460
        %v629 = vpack.c.b16 %v469, %v461
        %v630 = vpack.c.b16 %v470, %v462
        %v631 = vpack.c.b16 %v471, %v463
        %v632 = vpack.c.b16 %v472, %v464
        %v633 = vpack.c.b16 %v473, %v465
        %v634 = vpack.c.b16 %v474, %v466
        %v635 = vpack.c.b16 %v475, %v467
        %v636 = vpack.c.b16 %v484, %v476
        %v637 = vpack.c.b16 %v485, %v477
        %v638 = vpack.c.b16 %v486, %v478
        %v639 = vpack.c.b16 %v487, %v479
        %v640 = vpack.c.b16 %v488, %v480
        %v641 = vpack.c.b16 %v489, %v481
        %v642 = vpack.c.b16 %v490, %v482
        %v643 = vpack.c.b16 %v491, %v483
        %v644 = vpack.c.b16 %v500, %v492
        %v645 = vpack.c.b16 %v501, %v493
        %v646 = vpack.c.b16 %v502, %v494
        %v647 = vpack.c.b16 %v503, %v495
        %v648 = vpack.c.b16 %v504, %v496
        %v649 = vpack.c.b16 %v505, %v497
        %v650 = vpack.c.b16 %v506, %v498
        %v651 = vpack.c.b16 %v507, %v499
        %v652 = vpack.c.b16 %v516, %v508
        %v653 = vpack.c.b16 %v517, %v509
        %v654 = vpack.c.b16 %v518, %v510
        %v655 = vpack.c.b16 %v519, %v511
        %v656 = vpack.c.b16 %v520, %v512
        %v657 = vpack.c.b16 %v521, %v513
        %v658 = vpack.c.b16 %v522, %v514
        %v659 = vpack.c.b16 %v523, %v515
        %v660 = vpack.c.b16 %v532, %v524
        %v661 = vpack.c.b16 %v533, %v525
        %v662 = vpack.c.b16 %v534, %v526
        %v663 = vpack.c.b16 %v535, %v527
        %v664 = vpack.c.b16 %v536, %v528
        %v665 = vpack.c.b16 %v537, %v529
        %v666 = vpack.c.b16 %v538, %v530
        %v667 = vpack.c.b16 %v539, %v531
        %v668 = vpack.c.b16 %v548, %v540
        %v669 = vpack.c.b16 %v549, %v541
        %v670 = vpack.c.b16 %v550, %v542
        %v671 = vpack.c.b16 %v551, %v543
        %v672 = vpack.c.b16 %v552, %v544
        %v673 = vpack.c.b16 %v553, %v545
        %v674 = vpack.c.b16 %v554, %v546
        %v675 = vpack.c.b16 %v555, %v547
        %v676 = vpack.c.b16 %v564, %v556
        %v677 = vpack.c.b16 %v565, %v557
        %v678 = vpack.c.b16 %v566, %v558
        %v679 = vpack.c.b16 %v567, %v559
        %v680 = vpack.c.b16 %v568, %v560
        %v681 = vpack.c.b16 %v569, %v561
        %v682 = vpack.c.b16 %v570, %v562
        %v683 = vpack.c.b16 %v571, %v563
        %v684 = vpack.c.b16 %v580, %v572
        %v685 = vpack.c.b16 %v581, %v573
        %v686 = vpack.c.b16 %v582, %v574
        %v687 = vpack.c.b16 %v583, %v575
        %v688 = vpack.c.b16 %v584, %v576
        %v689 = vpack.c.b16 %v585, %v577
        %v690 = vpack.c.b16 %v586, %v578
        %v691 = vpack.c.b16 %v587, %v579
        %v692 = vpack.c.b16 %v596, %v588
        %v693 = vpack.c.b16 %v597, %v589
        %v694 = vpack.c.b16 %v598, %v590
        %v695 = vpack.c.b16 %v599, %v591
        %v696 = vpack.c.b16 %v600, %v592
        %v697 = vpack.c.b16 %v601, %v593
        %v698 = vpack.c.b16 %v602, %v594
        %v699 = vpack.c.b16 %v603, %v595
        %v797 = vlaneseq
        %v798 = vshrl.u32 %v797, 7
        %v799 = vsub.s32 0, %v798
        %v800 = vrot.slane %v315, %v799
        %v801 = vlaneseq
        %v802 = vshrl.u32 %v801, 7
        %v803 = vsub.s32 1, %v802
        %v804 = vrot.slane %v315, %v803
        %v805 = vlaneseq
        %v806 = vshrl.u32 %v805, 7
        %v807 = vsub.s32 2, %v806
        %v808 = vrot.slane %v315, %v807
        %v809 = vlaneseq
        %v810 = vshrl.u32 %v809, 7
        %v811 = vsub.s32 3, %v810
        %v812 = vrot.slane %v315, %v811
        %v813 = vlaneseq
        %v814 = vshrl.u32 %v813, 7
        %v815 = vsub.s32 4, %v814
        %v816 = vrot.slane %v315, %v815
        %v817 = vlaneseq
        %v818 = vshrl.u32 %v817, 7
        %v819 = vsub.s32 5, %v818
        %v820 = vrot.slane %v315, %v819
        %v821 = vlaneseq
        %v822 = vshrl.u32 %v821, 7
        %v823 = vsub.s32 6, %v822
        %v824 = vrot.slane %v315, %v823
        %v825 = vlaneseq
        %v826 = vshrl.u32 %v825, 7
        %v827 = vsub.s32 7, %v826
        %v828 = vrot.slane %v315, %v827
        %vm837 = vcmask 523264
        %v839 = vsel %vm837, %v218, 0
        %841 = vmatprep.subr.bf16.mxu0 %v605
        %842 = vmatpush1.bf16.msra.mxu0 %v604
        %843 = vmatprep.subr.bf16.mxu0 %v613
        %844 = vmatpush1.bf16.msra.mxu0 %v612
        %845 = vmatprep.subr.bf16.mxu0 %v621
        %846 = vmatpush1.bf16.msra.mxu0 %v620
        %847 = vmatprep.subr.bf16.mxu0 %v629
        %848 = vmatpush1.bf16.msra.mxu0 %v628
        %849 = vmatprep.subr.bf16.mxu0 %v637
        %850 = vmatpush1.bf16.msra.mxu0 %v636
        %851 = vmatprep.subr.bf16.mxu0 %v645
        %852 = vmatpush1.bf16.msra.mxu0 %v644
        %853 = vmatprep.subr.bf16.mxu0 %v653
        %854 = vmatpush1.bf16.msra.mxu0 %v652
        %855 = vmatprep.subr.bf16.mxu0 %v661
        %856 = vmatpush1.bf16.msra.mxu0 %v660
        %857 = vmatprep.subr.bf16.mxu0 %v669
        %858 = vmatpush1.bf16.msra.mxu0 %v668
        %859 = vmatprep.subr.bf16.mxu0 %v677
        %860 = vmatpush1.bf16.msra.mxu0 %v676
        %861 = vmatprep.subr.bf16.mxu0 %v685
        %862 = vmatpush1.bf16.msra.mxu0 %v684
        %863 = vmatprep.subr.bf16.mxu0 %v693
        %864 = vmatpush1.bf16.msra.mxu0 %v692
        %865 = vmatprep.subr.bf16.mxu0 0
        %866 = vmatpush1.bf16.msra.mxu0 0
        %867 = vmatprep.subr.bf16.mxu0 0
        %868 = vmatpush1.bf16.msra.mxu0 0
        %869 = vmatprep.subr.bf16.mxu0 0
        %870 = vmatpush1.bf16.msra.mxu0 0
        %871 = vmatprep.subr.bf16.mxu0 0
        %872 = vmatpush1.bf16.msra.mxu0 0
        %873 = vmatprep.mubr.bf16.mxu0 %v839
        %874 = vmatmul.mubr.bf16.gmra.mrb[0].mxu0 %v217
        %v875 = vpop.f32.mrb[0].mxu0
        %v876 = vadd.f32 %v800, %v875
        %v877 = vpop.f32.mrb[0].mxu0
        %v878 = vadd.f32 %v804, %v877
        %v879 = vpop.f32.mrb[0].mxu0
        %v880 = vpop.f32.mrb[0].mxu0
        %881 = vdwg.mxu0
        %882 = vmatprep.subr.bf16.mxu0 %v607
        %883 = vmatpush1.bf16.msra.mxu0 %v606
        %884 = vmatprep.subr.bf16.mxu0 %v615
        %885 = vmatpush1.bf16.msra.mxu0 %v614
        %886 = vmatprep.subr.bf16.mxu0 %v623
        %887 = vmatpush1.bf16.msra.mxu0 %v622
        %888 = vmatprep.subr.bf16.mxu0 %v631
        %889 = vmatpush1.bf16.msra.mxu0 %v630
        %890 = vmatprep.subr.bf16.mxu0 %v639
        %891 = vmatpush1.bf16.msra.mxu0 %v638
        %892 = vmatprep.subr.bf16.mxu0 %v647
        %893 = vmatpush1.bf16.msra.mxu0 %v646
        %894 = vmatprep.subr.bf16.mxu0 %v655
        %895 = vmatpush1.bf16.msra.mxu0 %v654
        %896 = vmatprep.subr.bf16.mxu0 %v663
        %897 = vmatpush1.bf16.msra.mxu0 %v662
        %898 = vmatprep.subr.bf16.mxu0 %v671
        %899 = vmatpush1.bf16.msra.mxu0 %v670
        %900 = vmatprep.subr.bf16.mxu0 %v679
        %901 = vmatpush1.bf16.msra.mxu0 %v678
        %902 = vmatprep.subr.bf16.mxu0 %v687
        %903 = vmatpush1.bf16.msra.mxu0 %v686
        %904 = vmatprep.subr.bf16.mxu0 %v695
        %905 = vmatpush1.bf16.msra.mxu0 %v694
        %906 = vmatprep.subr.bf16.mxu0 0
        %907 = vmatpush1.bf16.msra.mxu0 0
        %908 = vmatprep.subr.bf16.mxu0 0
        %909 = vmatpush1.bf16.msra.mxu0 0
        %910 = vmatprep.subr.bf16.mxu0 0
        %911 = vmatpush1.bf16.msra.mxu0 0
        %912 = vmatprep.subr.bf16.mxu0 0
        %913 = vmatpush1.bf16.msra.mxu0 0
        %914 = vmatprep.mubr.bf16.mxu0 %v839
        %915 = vmatmul.mubr.bf16.gmra.mrb[0].mxu0 %v217
        %v916 = vpop.f32.mrb[0].mxu0
        %v917 = vadd.f32 %v808, %v916
        %v918 = vpop.f32.mrb[0].mxu0
        %v919 = vadd.f32 %v812, %v918
        %v920 = vpop.f32.mrb[0].mxu0
        %v921 = vpop.f32.mrb[0].mxu0
        %922 = vdwg.mxu0
        %923 = vmatprep.subr.bf16.mxu0 %v609
        %924 = vmatpush1.bf16.msra.mxu0 %v608
        %925 = vmatprep.subr.bf16.mxu0 %v617
        %926 = vmatpush1.bf16.msra.mxu0 %v616
        %927 = vmatprep.subr.bf16.mxu0 %v625
        %928 = vmatpush1.bf16.msra.mxu0 %v624
        %929 = vmatprep.subr.bf16.mxu0 %v633
        %930 = vmatpush1.bf16.msra.mxu0 %v632
        %931 = vmatprep.subr.bf16.mxu0 %v641
        %932 = vmatpush1.bf16.msra.mxu0 %v640
        %933 = vmatprep.subr.bf16.mxu0 %v649
        %934 = vmatpush1.bf16.msra.mxu0 %v648
        %935 = vmatprep.subr.bf16.mxu0 %v657
        %936 = vmatpush1.bf16.msra.mxu0 %v656
        %937 = vmatprep.subr.bf16.mxu0 %v665
        %938 = vmatpush1.bf16.msra.mxu0 %v664
        %939 = vmatprep.subr.bf16.mxu0 %v673
        %940 = vmatpush1.bf16.msra.mxu0 %v672
        %941 = vmatprep.subr.bf16.mxu0 %v681
        %942 = vmatpush1.bf16.msra.mxu0 %v680
        %943 = vmatprep.subr.bf16.mxu0 %v689
        %944 = vmatpush1.bf16.msra.mxu0 %v688
        %945 = vmatprep.subr.bf16.mxu0 %v697
        %946 = vmatpush1.bf16.msra.mxu0 %v696
        %947 = vmatprep.subr.bf16.mxu0 0
        %948 = vmatpush1.bf16.msra.mxu0 0
        %949 = vmatprep.subr.bf16.mxu0 0
        %950 = vmatpush1.bf16.msra.mxu0 0
        %951 = vmatprep.subr.bf16.mxu0 0
        %952 = vmatpush1.bf16.msra.mxu0 0
        %953 = vmatprep.subr.bf16.mxu0 0
        %954 = vmatpush1.bf16.msra.mxu0 0
        %955 = vmatprep.mubr.bf16.mxu0 %v839
        %956 = vmatmul.mubr.bf16.gmra.mrb[0].mxu0 %v217
        %v957 = vpop.f32.mrb[0].mxu0
        %v958 = vadd.f32 %v816, %v957
        %v959 = vpop.f32.mrb[0].mxu0
        %v960 = vadd.f32 %v820, %v959
        %v961 = vpop.f32.mrb[0].mxu0
        %v962 = vpop.f32.mrb[0].mxu0
        %963 = vdwg.mxu0
        %964 = vmatprep.subr.bf16.mxu0 %v611
        %965 = vmatpush1.bf16.msra.mxu0 %v610
        %966 = vmatprep.subr.bf16.mxu0 %v619
        %967 = vmatpush1.bf16.msra.mxu0 %v618
        %968 = vmatprep.subr.bf16.mxu0 %v627
        %969 = vmatpush1.bf16.msra.mxu0 %v626
        %970 = vmatprep.subr.bf16.mxu0 %v635
        %971 = vmatpush1.bf16.msra.mxu0 %v634
        %972 = vmatprep.subr.bf16.mxu0 %v643
        %973 = vmatpush1.bf16.msra.mxu0 %v642
        %974 = vmatprep.subr.bf16.mxu0 %v651
        %975 = vmatpush1.bf16.msra.mxu0 %v650
        %976 = vmatprep.subr.bf16.mxu0 %v659
        %977 = vmatpush1.bf16.msra.mxu0 %v658
        %978 = vmatprep.subr.bf16.mxu0 %v667
        %979 = vmatpush1.bf16.msra.mxu0 %v666
        %980 = vmatprep.subr.bf16.mxu0 %v675
        %981 = vmatpush1.bf16.msra.mxu0 %v674
        %982 = vmatprep.subr.bf16.mxu0 %v683
        %983 = vmatpush1.bf16.msra.mxu0 %v682
        %984 = vmatprep.subr.bf16.mxu0 %v691
        %985 = vmatpush1.bf16.msra.mxu0 %v690
        %986 = vmatprep.subr.bf16.mxu0 %v699
        %987 = vmatpush1.bf16.msra.mxu0 %v698
        %988 = vmatprep.subr.bf16.mxu0 0
        %989 = vmatpush1.bf16.msra.mxu0 0
        %990 = vmatprep.subr.bf16.mxu0 0
        %991 = vmatpush1.bf16.msra.mxu0 0
        %992 = vmatprep.subr.bf16.mxu0 0
        %993 = vmatpush1.bf16.msra.mxu0 0
        %994 = vmatprep.subr.bf16.mxu0 0
        %995 = vmatpush1.bf16.msra.mxu0 0
        %996 = vmatprep.mubr.bf16.mxu0 %v839
        %997 = vmatmul.mubr.bf16.gmra.mrb[0].mxu0 %v217
        %v998 = vpop.f32.mrb[0].mxu0
        %v999 = vadd.f32 %v824, %v998
        %v1000 = vpop.f32.mrb[0].mxu0
        %v1001 = vadd.f32 %v828, %v1000
        %v1002 = vpop.f32.mrb[0].mxu0
        %v1003 = vpop.f32.mrb[0].mxu0
        %1004 = vdwg.mxu0
        %v1005 = vmax.f32 %v876, 0.0
        %v1006 = vmax.f32 %v878, 0.0
        %v1007 = vmax.f32 %v917, 0.0
        %v1008 = vmax.f32 %v919, 0.0
        %v1009 = vmax.f32 %v958, 0.0
        %v1010 = vmax.f32 %v960, 0.0
        %v1011 = vmax.f32 %v999, 0.0
        %v1012 = vmax.f32 %v1001, 0.0
        %v1021 = vcombine.low %v1005, %v1006
        %v1022 = vcombine.low %v1007, %v1008
        %v1023 = vcombine.low %v1009, %v1010
        %v1024 = vcombine.low %v1011, %v1012
        %v1026 = vunpack.c.l.s4 1966171168
        %v1027 = vunpack.c.0.s8 %v1026
        %v1028 = vlaneseq
        %v1029 = vshrl.u32 %v1028, 7
        %v1030 = vsub.s32 %v1027, %v1029
        %v1031 = vrot.slane %v1021, %v1030
        %v1033 = vunpack.c.l.s4 1966171168
        %v1034 = vunpack.c.0.s8 %v1033
        %v1035 = vlaneseq
        %v1036 = vshrl.u32 %v1035, 7
        %v1037 = vsub.s32 %v1034, %v1036
        %v1038 = vrot.slane %v1022, %v1037
        %v1040 = vunpack.c.l.s4 1966171168
        %v1041 = vunpack.c.0.s8 %v1040
        %v1042 = vlaneseq
        %v1043 = vshrl.u32 %v1042, 7
        %v1044 = vsub.s32 %v1041, %v1043
        %v1045 = vrot.slane %v1023, %v1044
        %v1047 = vunpack.c.l.s4 1966171168
        %v1048 = vunpack.c.0.s8 %v1047
        %v1049 = vlaneseq
        %v1050 = vshrl.u32 %v1049, 7
        %v1051 = vsub.s32 %v1048, %v1050
        %v1052 = vrot.slane %v1024, %v1051
        %v1053 = vcombine.low %v1031, %v1038
        %v1054 = vcombine.low %v1045, %v1052
        %v1056 = vunpack.c.l.s4 1966171168
        %v1057 = vunpack.c.0.s8 %v1056
        %v1058 = vlaneseq
        %v1059 = vshrl.u32 %v1058, 7
        %v1060 = vsub.s32 %v1057, %v1059
        %v1061 = vrot.slane %v1053, %v1060
        %v1063 = vunpack.c.l.s4 1966171168
        %v1064 = vunpack.c.0.s8 %v1063
        %v1065 = vlaneseq
        %v1066 = vshrl.u32 %v1065, 7
        %v1067 = vsub.s32 %v1064, %v1066
        %v1068 = vrot.slane %v1054, %v1067
        %v1069 = vcombine.low %v1061, %v1068
        %1071 = vst [vmem:[%s189] sm:$0xff] %v1069
        %v1072 = vadd.f32 %v1005, 0.0
        %v1073 = vadd.f32 %v1006, 0.0
        %v1074 = vadd.f32 %v1007, 0.0
        %v1075 = vadd.f32 %v1008, 0.0
        %v1076 = vadd.f32 %v1009, 0.0
        %v1077 = vadd.f32 %v1010, 0.0
        %v1078 = vadd.f32 %v1011, 0.0
        %v1079 = vadd.f32 %v1012, 0.0
        %v1088 = vcombine.low %v1072, %v1073
        %v1089 = vcombine.low %v1074, %v1075
        %v1090 = vcombine.low %v1076, %v1077
        %v1091 = vcombine.low %v1078, %v1079
        %v1093 = vunpack.c.l.s4 1966171168
        %v1094 = vunpack.c.0.s8 %v1093
        %v1095 = vlaneseq
        %v1096 = vshrl.u32 %v1095, 7
        %v1097 = vsub.s32 %v1094, %v1096
        %v1098 = vrot.slane %v1088, %v1097
        %v1100 = vunpack.c.l.s4 1966171168
        %v1101 = vunpack.c.0.s8 %v1100
        %v1102 = vlaneseq
        %v1103 = vshrl.u32 %v1102, 7
        %v1104 = vsub.s32 %v1101, %v1103
        %v1105 = vrot.slane %v1089, %v1104
        %v1107 = vunpack.c.l.s4 1966171168
        %v1108 = vunpack.c.0.s8 %v1107
        %v1109 = vlaneseq
        %v1110 = vshrl.u32 %v1109, 7
        %v1111 = vsub.s32 %v1108, %v1110
        %v1112 = vrot.slane %v1090, %v1111
        %v1114 = vunpack.c.l.s4 1966171168
        %v1115 = vunpack.c.0.s8 %v1114
        %v1116 = vlaneseq
        %v1117 = vshrl.u32 %v1116, 7
        %v1118 = vsub.s32 %v1115, %v1117
        %v1119 = vrot.slane %v1091, %v1118
        %v1120 = vcombine.low %v1098, %v1105
        %v1121 = vcombine.low %v1112, %v1119
        %v1123 = vunpack.c.l.s4 1966171168
        %v1124 = vunpack.c.0.s8 %v1123
        %v1125 = vlaneseq
        %v1126 = vshrl.u32 %v1125, 7
        %v1127 = vsub.s32 %v1124, %v1126
        %v1128 = vrot.slane %v1120, %v1127
        %v1130 = vunpack.c.l.s4 1966171168
        %v1131 = vunpack.c.0.s8 %v1130
        %v1132 = vlaneseq
        %v1133 = vshrl.u32 %v1132, 7
        %v1134 = vsub.s32 %v1131, %v1133
        %v1135 = vrot.slane %v1121, %v1134
        %v1136 = vcombine.low %v1128, %v1135
        %1138 = vst [vmem:[%s203] sm:$0xff] %v1136
        %s1139 = sand.u32 %s95, 1
        %s1140 = scalar_lea.sflag [#allocation3], %s1139
        %s1141 = sand.u32 %s95, 1
        %s1142 = smul.addr %s1141, 8
        %s1143 = scalar_lea.vmem [#allocation2], %s1142
        %p1144 = scmp.lt.s32.totalorder %s19, 1
        %s1145 = scalar_select %p1144, %s19, 1
        %s1146 = smul.addr %s1145, 8
        %s1147 = scalar_lea.vmem %s4, %s1146
        // Predicated region
        $region33: #{_lambda_.113} parent=31 // pred_check
          %p1148 = pneg %p105
        $region34: #{_lambda_.113} parent=31 // pred_check_branch
          %1150 = sbr.rel (%p1148) target = $region36
        $region35: #{_lambda_.113} parent=31 // pred_region
          %s1152 = ssub.s32 128, 128
          %1153 = vsyncadd %s1140, %s1152
          %s1154 = smul.addr %s19, 8
          %s1155 = smul.addr %s1154, 16
          %s1156 = scalar_lea.hbm %s3, %s1155
          %s1158 = sshll.u32 %s1143, 4
          %s1159 = int_to_ptr.vmem [resolvable:$true] %s1158
          %1161 = dma.vmem_to_hbm [thread:$0]  %s1159, 128, %s1156, %s1140
        $region36: #{_lambda_.113} parent=31 // pred_fallthru
          _
        // Predicated region
        $region37: #{_lambda_.113} parent=31 // pred_check
          %p1162 = pneg %p131
        $region38: #{_lambda_.113} parent=31 // pred_check_branch
          %1164 = sbr.rel (%p1162) target = $region40
        $region39: #{_lambda_.113} parent=31 // pred_region
          _
        $region40: #{_lambda_.113} parent=31 // pred_fallthru
          _
      $region32: #{_lambda_.113} parent=5 // pred_fallthru
        _
      %p1165 = scmp.le.s32.totalorder 2, %s14
      // Predicated region
      $region41: #{_lambda_.113} parent=5 // pred_check
        %p1166 = pneg %p1165
      $region42: #{_lambda_.113} parent=5 // pred_check_branch
        %1168 = sbr.rel (%p1166) target = $region44
      $region43: #{_lambda_.113} parent=5 // pred_region
        %s1169 = ssub.s32 %s14, 2
        // Predicated region
        $region45: #{_lambda_.113} parent=43 // pred_check
          %p1170 = pneg %p111
        $region46: #{_lambda_.113} parent=43 // pred_check_branch
          %1172 = sbr.rel (%p1170) target = $region48
        $region47: #{_lambda_.113} parent=43 // pred_region
          %s1173 = sand.u32 %s96, 1
          %s1174 = scalar_lea.sflag [#allocation3], %s1173
          %s1175 = sand.u32 %s96, 1
          %s1176 = smul.addr %s1175, 8
          %s1177 = scalar_lea.vmem [#allocation2], %s1176
          %1178 = dma.done %s1174, 128
        $region48: #{_lambda_.113} parent=43 // pred_fallthru
          _
        // Predicated region
        $region49: #{_lambda_.113} parent=43 // pred_check
          %p1179 = pneg %p137
        $region50: #{_lambda_.113} parent=43 // pred_check_branch
          %1181 = sbr.rel (%p1179) target = $region52
        $region51: #{_lambda_.113} parent=43 // pred_region
          %p1182 = scmp.lt.s32.totalorder %s20, 1
          %s1183 = scalar_select %p1182, %s20, 1
          %s1184 = smul.addr %s1183, 8
          %s1185 = scalar_lea.vmem %s4, %s1184
        $region52: #{_lambda_.113} parent=43 // pred_fallthru
          _
      $region44: #{_lambda_.113} parent=5 // pred_fallthru
        _
    $region6: #{_lambda_.113} parent=1 // loop_footer
      %s18 = sadd.s32 1, %s14
    $region7: #{_lambda_.113} parent=1 // loop_footer_branch
      %13 = sbr.rel target = $region3
    $region8: #{_lambda_.113} parent=1 // loop_exit
      _
    %1186 = vsyncpa [#allocation3], 1
    %s1187 = scalar_lea.sflag [#allocation3], 1
    %1188 = vsyncpa %s1187, 1

</llo_original>
